<compile_context>
chip_gen: v7x
topology: tpu7x:2x2x1
jax: 0.10.0
libtpu: 0.0.40
codegen_flags: <defaults>
</compile_context>

<pallas_src>
import functools
import math

import jax
import jax.numpy as jnp
from jax.experimental import pallas as pl
from jax.experimental.pallas import tpu as pltpu


def _round_up(x, m):
    return (x + m - 1) // m * m


def _pick_row_tile(hp, w_out, wpad, cin, cout, budget):
    """Largest row tile (multiple of 8, divides hp) whose VMEM plan fits budget."""
    max_rows = min(hp, 256)
    cands = [d for d in range(max_rows, 7, -1) if hp % d == 0 and d % 8 == 0]
    if not cands:  # hp is always a multiple of 8, so this is just a safeguard
        cands = [d for d in range(min(hp, 256), 0, -1) if hp % d == 0]

    xp_b = (hp + 2) * wpad * cin * 2          # resident padded input (bf16), 1 buffer
    w_b = cin * 16 * cout * 2                 # window-merged weights (bf16)
    b_b = 8 * cout * 4                        # bias block (f32)

    def need(th):
        out_b = 4 * th * w_out * cout * 2     # bf16 output block
        acc_b = 4 * th * w_out * cout * 4     # f32 scratch accumulator
        live_b = th * w_out * (cin * 2 + 2 * 4 * cout * 4)   # xs + widest matmul result
        return (2 * xp_b + 2 * w_b + 2 * b_b + 2 * out_b + acc_b + live_b + (2 << 20))

    for th in cands:
        if need(th) <= budget:
            return th, need(th)
    th = cands[-1]
    return th, need(th)


def _upsample_conv_kernel(xp_ref, w_ref, b_ref, o_ref, acc_ref, *,
                          th, w_out, cin, cout):
    """One (batch, row-tile) step of nearest-2x upsample + 3x3 conv.

    xp_ref : (1, Hp+2, Wpad, Cin) bf16  zero-padded NHWC input (full image, resident)
    w_ref  : (Cin, 16*Cout)       bf16  window-merged phase-folded weights
    b_ref  : (8, Cout)            f32   bias replicated to a sublane-aligned block
    o_ref  : (1, 4, TH, W, Cout)  bf16  output, phase-major (p = 2*pi + pj)
    acc_ref: (4, TH*W, Cout)      f32   VMEM accumulator scratch
    """
    t = pl.program_id(1)
    if th % 16 == 0:
        r0 = pl.multiple_of(t * th, 16)
    elif th % 8 == 0:
        r0 = pl.multiple_of(t * th, 8)
    else:
        r0 = t * th

    m = th * w_out
    # Hoisted bias broadcast (JAX does not CSE broadcast_in_dim).
    bias = jnp.broadcast_to(b_ref[0:1, :], (m, cout))

    written = [False, False, False, False]
    off = 0
    for dy in range(3):
        pis = [p for p in (0, 1) if 0 <= dy - p <= 1]
        for dx in range(3):
            pjs = [q for q in (0, 1) if 0 <= dx - q <= 1]
            n = len(pis) * len(pjs)
            # Direct Ref load of the shifted window: the shifted layout is
            # produced by the load itself (no value-slice relayout copies).
            xs = xp_ref[0, pl.ds(r0 + dy, th), pl.ds(dx, w_out), :]
            res = jnp.dot(xs.reshape(m, cin),
                          w_ref[:, off * cout:(off + n) * cout],
                          preferred_element_type=jnp.float32)   # (m, n*Cout) f32
            k = 0
            for pi in pis:
                for pj in pjs:
                    p = 2 * pi + pj
                    chunk = res[:, k * cout:(k + 1) * cout]      # lane-aligned slice
                    if written[p]:
                        acc_ref[p] = acc_ref[p] + chunk
                    else:
                        acc_ref[p] = bias + chunk                # init from bias
                        written[p] = True
                    k += 1
            off += n
    o_ref[0] = acc_ref[...].reshape(4, th, w_out, cout).astype(o_ref.dtype)


def upsample_nearest2x_conv3x3(x, w, b):
    """x: (B, Cin, H, W) f32; w: (Cout, Cin, 3, 3); b: (Cout,) -> (B, Cout, 2H, 2W) f32."""
    B, Cin, H, W = x.shape
    Cout = w.shape[0]

    hp = _round_up(H, 8)                # row padding (garbage rows sliced off)
    wpad = _round_up(W + 2, 8)          # sublane-friendly padded width

    # Chip-aware VMEM budget (64 MiB/TC on v7x, 128 MiB on v5e/v6e).
    try:
        cap = int(getattr(pltpu.get_tpu_info(), "vmem_capacity_bytes", 64 << 20))
    except Exception:
        cap = 64 << 20
    budget = cap * 3 // 4
    th, needed = _pick_row_tile(hp, W, wpad, Cin, Cout, budget)

    # --- thin XLA glue: NCHW -> NHWC, zero pad (+ alignment), bf16 operands ----
    xp = jnp.pad(jnp.transpose(x, (0, 2, 3, 1)),
                 ((0, 0), (1, 1 + hp - H), (1, wpad - (W + 1)), (0, 0))
                 ).astype(jnp.bfloat16)

    # --- fold nearest-2x into the 3x3 kernel, regrouped per input window ------
    # For output phase (pi, pj), tap (ra, cb) touches padded-x window
    # (dy, dx) = (pi+ra, pj+cb) with weight A[pi,ra,:] (x) A[pj,cb,:] applied to
    # the 3x3 taps. Taps sharing a window are concatenated along Cout so each
    # window becomes one wide matmul (N = Cout, 2*Cout or 4*Cout).
    A = jnp.array([[[1., 0., 0.], [0., 1., 1.]],
                   [[1., 1., 0.], [0., 0., 1.]]], dtype=jnp.float32)  # [phase][tap][k]
    wt = jnp.transpose(w, (2, 3, 1, 0)).astype(jnp.float32)           # (ky,kx,Cin,Cout)
    w_fold = jnp.einsum('pak,qbl,klio->paqbio', A, A, wt)             # (2,2,2,2,Cin,Cout)
    cols = []
    for dy in range(3):
        pis = [p for p in (0, 1) if 0 <= dy - p <= 1]
        for dx in range(3):
            pjs = [q for q in (0, 1) if 0 <= dx - q <= 1]
            for pi in pis:
                for pj in pjs:
                    cols.append(w_fold[pi, dy - pi, pj, dx - pj])
    w_eff = jnp.concatenate(cols, axis=-1).astype(jnp.bfloat16)       # (Cin, 16*Cout)

    b8 = jnp.broadcast_to(b.astype(jnp.float32).reshape(1, Cout), (8, Cout))

    vmem_limit = int(min(max(needed, 32 << 20), cap - (2 << 20)))

    out5 = pl.pallas_call(
        functools.partial(_upsample_conv_kernel, th=th, w_out=W, cin=Cin, cout=Cout),
        grid=(B, hp // th),
        in_specs=[
            pl.BlockSpec((1, hp + 2, wpad, Cin), lambda bb, t: (bb, 0, 0, 0)),
            pl.BlockSpec((Cin, 16 * Cout), lambda bb, t: (0, 0)),
            pl.BlockSpec((8, Cout), lambda bb, t: (0, 0)),
        ],
        out_specs=pl.BlockSpec((1, 4, th, W, Cout), lambda bb, t: (bb, 0, t, 0, 0)),
        out_shape=jax.ShapeDtypeStruct((B, 4, hp, W, Cout), jnp.bfloat16),
        scratch_shapes=[pltpu.VMEM((4, th * W, Cout), jnp.float32)],
        compiler_params=pltpu.CompilerParams(
            dimension_semantics=("parallel", "parallel"),
            vmem_limit_bytes=vmem_limit),
    )(xp, w_eff, b8)

    # (b, p=2*pi+pj, oy, ox, c) -> (b, c, 2*oy+pi, 2*ox+pj): single transpose pass.
    y = out5[:, :, :H] if hp > H else out5
    y = y.reshape(B, 2, 2, H, W, Cout)
    y = jnp.transpose(y, (0, 5, 3, 1, 4, 2)).reshape(B, Cout, 2 * H, 2 * W)
    return y.astype(jnp.float32)


# ----------------------------- module wrapper ---------------------------------

def init_upsample(key, in_ch):
    """Matches UpSample.initialize(): xavier_uniform_ weight, zero bias."""
    fan_in = in_ch * 9
    fan_out = in_ch * 9
    a = math.sqrt(6.0 / (fan_in + fan_out))
    w = jax.random.uniform(key, (in_ch, in_ch, 3, 3), jnp.float32, -a, a)
    return {"w": w, "b": jnp.zeros((in_ch,), jnp.float32)}


def upsample_forward(params, x, temb):
    # UpSample.forward ignores temb (kept only for signature parity).
    del temb
    return upsample_nearest2x_conv3x3(x, params["w"], params["b"])


def _reference_upsample_conv(x, w, b):
    """Plain-JAX reference: F.interpolate(nearest, 2x) + Conv2d(3x3, pad=1)."""
    u = jnp.repeat(jnp.repeat(x, 2, axis=2), 2, axis=3)
    y = jax.lax.conv_general_dilated(
        u, w, window_strides=(1, 1), padding=((1, 1), (1, 1)),
        dimension_numbers=("NCHW", "OIHW", "NCHW"),
        precision=jax.lax.Precision.HIGHEST)
    return y + b[None, :, None, None]


# ----------------------------------- main --------------------------------------

if __name__ == "__main__":
    B, C, H, W = 2, 128, 16, 16          # lane-dense channel count (multiple of 128)
    key = jax.random.PRNGKey(0)
    kx, kparam = jax.random.split(key)
    params = init_upsample(kparam, C)
    x = jax.random.normal(kx, (B, C, H, W), jnp.float32)
    temb = jnp.zeros((B, 4 * C), jnp.float32)   # unused by UpSample.forward

    out = jax.jit(upsample_forward)(params, x, temb)
    out = jax.block_until_ready(out)
    assert out.shape == (B, C, 2 * H, 2 * W)
    assert out.dtype == jnp.float32

    # Check the fused window-merged phase decomposition against the literal
    # upsample-then-conv reference (loose tolerance: bf16 MXU operands and
    # bf16 output store with f32 accumulation).
    ref = _reference_upsample_conv(x, params["w"], params["b"])
    err = float(jnp.max(jnp.abs(out - ref)))
    scale = float(jnp.max(jnp.abs(ref))) + 1e-6
    assert err <= 0.05 * scale + 1e-3, f"mismatch: max_abs_err={err}, ref_scale={scale}"
    print("KERNEL_OK")
</pallas_src>

<mosaic_0001>
module attributes {stable_mosaic.version = 11 : i64} {
  func.func @_upsample_conv_kernel(%arg0: i32, %arg1: i32, %arg2: memref<1x18x24x128xbf16, #tpu.memory_space<vmem>>, %arg3: memref<128x2048xbf16, #tpu.memory_space<vmem>>, %arg4: memref<8x128xf32, #tpu.memory_space<vmem>>, %arg5: memref<1x4x16x16x128xbf16, #tpu.memory_space<vmem>>, %arg6: memref<4x256x128xf32, #tpu.memory_space<vmem>>) attributes {dimension_semantics = [#tpu.dimension_semantics<parallel>, #tpu.dimension_semantics<parallel>], iteration_bounds = array<i64: 2, 1>, scalar_prefetch = 0 : i64, scratch_operands = 1 : i64, tpu.core_type = #tpu.core_type<tc>, window_params = [{transform_indices = @transform_0, window_bounds = array<i64: 1, 18, 24, 128>}, {pipeline_mode = #tpu.pipeline_mode<synchronous>, transform_indices = @transform_1, window_bounds = array<i64: 128, 2048>}, {pipeline_mode = #tpu.pipeline_mode<synchronous>, transform_indices = @transform_2, window_bounds = array<i64: 8, 128>}, {transform_indices = @transform_3, window_bounds = array<i64: 1, 4, 16, 16, 128>}]} {
    %c16_i32 = arith.constant 16 : i32
    %0 = arith.muli %arg1, %c16_i32 : i32
    %1 = tpu.assume_multiple %0, 16 : i32
    %c0 = arith.constant 0 : index
    %c0_0 = arith.constant 0 : index
    %2 = vector.load %arg4[%c0, %c0_0] : memref<8x128xf32, #tpu.memory_space<vmem>>, vector<1x128xf32>
    %3 = vector.shape_cast %2 : vector<1x128xf32> to vector<1x128xf32>
    %4 = vector.broadcast %3 : vector<1x128xf32> to vector<256x128xf32>
    %c0_i32 = arith.constant 0 : i32
    %5 = arith.addi %1, %c0_i32 : i32
    %c0_1 = arith.constant 0 : index
    %6 = arith.index_cast %5 : i32 to index
    %c0_2 = arith.constant 0 : index
    %c0_3 = arith.constant 0 : index
    %7 = vector.load %arg2[%c0_1, %6, %c0_2, %c0_3] : memref<1x18x24x128xbf16, #tpu.memory_space<vmem>>, vector<1x16x16x128xbf16>
    %8 = vector.shape_cast %7 : vector<1x16x16x128xbf16> to vector<16x16x128xbf16>
    %9 = vector.shape_cast %8 : vector<16x16x128xbf16> to vector<256x128xbf16>
    %c0_4 = arith.constant 0 : index
    %c0_5 = arith.constant 0 : index
    %10 = vector.load %arg3[%c0_4, %c0_5] : memref<128x2048xbf16, #tpu.memory_space<vmem>>, vector<128x128xbf16>
    %cst = arith.constant dense<0.000000e+00> : vector<256x128xf32>
    %11 = tpu.matmul %9, %10, %cst {dimension_numbers = #tpu.dot_dimension_numbers<[1], [0], [0], [1], [0, 0, 1, 1], [], []>} : vector<256x128xbf16>, vector<128x128xbf16>, vector<256x128xf32> -> vector<256x128xf32>
    %12 = arith.addf %4, %11 : vector<256x128xf32>
    %c0_6 = arith.constant 0 : index
    %c0_7 = arith.constant 0 : index
    %c0_8 = arith.constant 0 : index
    %13 = vector.load %arg6[%c0_6, %c0_7, %c0_8] : memref<4x256x128xf32, #tpu.memory_space<vmem>>, vector<1x256x128xf32>
    %14 = vector.shape_cast %13 : vector<1x256x128xf32> to vector<256x128xf32>
    %15 = vector.shape_cast %12 : vector<256x128xf32> to vector<1x256x128xf32>
    tpu.vector_store %arg6[%c0_6, %c0_7, %c0_8], %15 {strides = array<i32>} : memref<4x256x128xf32, #tpu.memory_space<vmem>>, vector<1x256x128xf32>,
    %c0_i32_9 = arith.constant 0 : i32
    %16 = arith.addi %1, %c0_i32_9 : i32
    %c0_10 = arith.constant 0 : index
    %17 = arith.index_cast %16 : i32 to index
    %c1 = arith.constant 1 : index
    %c0_11 = arith.constant 0 : index
    %18 = vector.load %arg2[%c0_10, %17, %c1, %c0_11] : memref<1x18x24x128xbf16, #tpu.memory_space<vmem>>, vector<1x16x16x128xbf16>
    %19 = vector.shape_cast %18 : vector<1x16x16x128xbf16> to vector<16x16x128xbf16>
    %20 = vector.shape_cast %19 : vector<16x16x128xbf16> to vector<256x128xbf16>
    %c0_12 = arith.constant 0 : index
    %c128 = arith.constant 128 : index
    %21 = vector.load %arg3[%c0_12, %c128] : memref<128x2048xbf16, #tpu.memory_space<vmem>>, vector<128x256xbf16>
    %cst_13 = arith.constant dense<0.000000e+00> : vector<256x256xf32>
    %22 = tpu.matmul %20, %21, %cst_13 {dimension_numbers = #tpu.dot_dimension_numbers<[1], [0], [0], [1], [0, 0, 1, 1], [], []>} : vector<256x128xbf16>, vector<128x256xbf16>, vector<256x256xf32> -> vector<256x256xf32>
    %23 = vector.extract_strided_slice %22 {offsets = [0, 0], sizes = [256, 128], strides = [1, 1]} : vector<256x256xf32> to vector<256x128xf32>
    %c0_14 = arith.constant 0 : index
    %c0_15 = arith.constant 0 : index
    %c0_16 = arith.constant 0 : index
    %24 = vector.load %arg6[%c0_14, %c0_15, %c0_16] : memref<4x256x128xf32, #tpu.memory_space<vmem>>, vector<1x256x128xf32>
    %25 = vector.shape_cast %24 : vector<1x256x128xf32> to vector<256x128xf32>
    %26 = arith.addf %25, %23 : vector<256x128xf32>
    %c0_17 = arith.constant 0 : index
    %c0_18 = arith.constant 0 : index
    %c0_19 = arith.constant 0 : index
    %27 = vector.load %arg6[%c0_17, %c0_18, %c0_19] : memref<4x256x128xf32, #tpu.memory_space<vmem>>, vector<1x256x128xf32>
    %28 = vector.shape_cast %27 : vector<1x256x128xf32> to vector<256x128xf32>
    %29 = vector.shape_cast %26 : vector<256x128xf32> to vector<1x256x128xf32>
    tpu.vector_store %arg6[%c0_17, %c0_18, %c0_19], %29 {strides = array<i32>} : memref<4x256x128xf32, #tpu.memory_space<vmem>>, vector<1x256x128xf32>,
    %30 = vector.extract_strided_slice %22 {offsets = [0, 128], sizes = [256, 128], strides = [1, 1]} : vector<256x256xf32> to vector<256x128xf32>
    %31 = arith.addf %4, %30 : vector<256x128xf32>
    %c1_20 = arith.constant 1 : index
    %c0_21 = arith.constant 0 : index
    %c0_22 = arith.constant 0 : index
    %32 = vector.load %arg6[%c1_20, %c0_21, %c0_22] : memref<4x256x128xf32, #tpu.memory_space<vmem>>, vector<1x256x128xf32>
    %33 = vector.shape_cast %32 : vector<1x256x128xf32> to vector<256x128xf32>
    %34 = vector.shape_cast %31 : vector<256x128xf32> to vector<1x256x128xf32>
    tpu.vector_store %arg6[%c1_20, %c0_21, %c0_22], %34 {strides = array<i32>} : memref<4x256x128xf32, #tpu.memory_space<vmem>>, vector<1x256x128xf32>,
    %c0_i32_23 = arith.constant 0 : i32
    %35 = arith.addi %1, %c0_i32_23 : i32
    %c0_24 = arith.constant 0 : index
    %36 = arith.index_cast %35 : i32 to index
    %c2 = arith.constant 2 : index
    %c0_25 = arith.constant 0 : index
    %37 = vector.load %arg2[%c0_24, %36, %c2, %c0_25] : memref<1x18x24x128xbf16, #tpu.memory_space<vmem>>, vector<1x16x16x128xbf16>
    %38 = vector.shape_cast %37 : vector<1x16x16x128xbf16> to vector<16x16x128xbf16>
    %39 = vector.shape_cast %38 : vector<16x16x128xbf16> to vector<256x128xbf16>
    %c0_26 = arith.constant 0 : index
    %c384 = arith.constant 384 : index
    %40 = vector.load %arg3[%c0_26, %c384] : memref<128x2048xbf16, #tpu.memory_space<vmem>>, vector<128x128xbf16>
    %cst_27 = arith.constant dense<0.000000e+00> : vector<256x128xf32>
    %41 = tpu.matmul %39, %40, %cst_27 {dimension_numbers = #tpu.dot_dimension_numbers<[1], [0], [0], [1], [0, 0, 1, 1], [], []>} : vector<256x128xbf16>, vector<128x128xbf16>, vector<256x128xf32> -> vector<256x128xf32>
    %c1_28 = arith.constant 1 : index
    %c0_29 = arith.constant 0 : index
    %c0_30 = arith.constant 0 : index
    %42 = vector.load %arg6[%c1_28, %c0_29, %c0_30] : memref<4x256x128xf32, #tpu.memory_space<vmem>>, vector<1x256x128xf32>
    %43 = vector.shape_cast %42 : vector<1x256x128xf32> to vector<256x128xf32>
    %44 = arith.addf %43, %41 : vector<256x128xf32>
    %c1_31 = arith.constant 1 : index
    %c0_32 = arith.constant 0 : index
    %c0_33 = arith.constant 0 : index
    %45 = vector.load %arg6[%c1_31, %c0_32, %c0_33] : memref<4x256x128xf32, #tpu.memory_space<vmem>>, vector<1x256x128xf32>
    %46 = vector.shape_cast %45 : vector<1x256x128xf32> to vector<256x128xf32>
    %47 = vector.shape_cast %44 : vector<256x128xf32> to vector<1x256x128xf32>
    tpu.vector_store %arg6[%c1_31, %c0_32, %c0_33], %47 {strides = array<i32>} : memref<4x256x128xf32, #tpu.memory_space<vmem>>, vector<1x256x128xf32>,
    %c1_i32 = arith.constant 1 : i32
    %48 = arith.addi %1, %c1_i32 : i32
    %c0_34 = arith.constant 0 : index
    %49 = arith.index_cast %48 : i32 to index
    %c0_35 = arith.constant 0 : index
    %c0_36 = arith.constant 0 : index
    %50 = vector.load %arg2[%c0_34, %49, %c0_35, %c0_36] : memref<1x18x24x128xbf16, #tpu.memory_space<vmem>>, vector<1x16x16x128xbf16>
    %51 = vector.shape_cast %50 : vector<1x16x16x128xbf16> to vector<16x16x128xbf16>
    %52 = vector.shape_cast %51 : vector<16x16x128xbf16> to vector<256x128xbf16>
    %c0_37 = arith.constant 0 : index
    %c512 = arith.constant 512 : index
    %53 = vector.load %arg3[%c0_37, %c512] : memref<128x2048xbf16, #tpu.memory_space<vmem>>, vector<128x256xbf16>
    %cst_38 = arith.constant dense<0.000000e+00> : vector<256x256xf32>
    %54 = tpu.matmul %52, %53, %cst_38 {dimension_numbers = #tpu.dot_dimension_numbers<[1], [0], [0], [1], [0, 0, 1, 1], [], []>} : vector<256x128xbf16>, vector<128x256xbf16>, vector<256x256xf32> -> vector<256x256xf32>
    %55 = vector.extract_strided_slice %54 {offsets = [0, 0], sizes = [256, 128], strides = [1, 1]} : vector<256x256xf32> to vector<256x128xf32>
    %c0_39 = arith.constant 0 : index
    %c0_40 = arith.constant 0 : index
    %c0_41 = arith.constant 0 : index
    %56 = vector.load %arg6[%c0_39, %c0_40, %c0_41] : memref<4x256x128xf32, #tpu.memory_space<vmem>>, vector<1x256x128xf32>
    %57 = vector.shape_cast %56 : vector<1x256x128xf32> to vector<256x128xf32>
    %58 = arith.addf %57, %55 : vector<256x128xf32>
    %c0_42 = arith.constant 0 : index
    %c0_43 = arith.constant 0 : index
    %c0_44 = arith.constant 0 : index
    %59 = vector.load %arg6[%c0_42, %c0_43, %c0_44] : memref<4x256x128xf32, #tpu.memory_space<vmem>>, vector<1x256x128xf32>
    %60 = vector.shape_cast %59 : vector<1x256x128xf32> to vector<256x128xf32>
    %61 = vector.shape_cast %58 : vector<256x128xf32> to vector<1x256x128xf32>
    tpu.vector_store %arg6[%c0_42, %c0_43, %c0_44], %61 {strides = array<i32>} : memref<4x256x128xf32, #tpu.memory_space<vmem>>, vector<1x256x128xf32>,
    %62 = vector.extract_strided_slice %54 {offsets = [0, 128], sizes = [256, 128], strides = [1, 1]} : vector<256x256xf32> to vector<256x128xf32>
    %63 = arith.addf %4, %62 : vector<256x128xf32>
    %c2_45 = arith.constant 2 : index
    %c0_46 = arith.constant 0 : index
    %c0_47 = arith.constant 0 : index
    %64 = vector.load %arg6[%c2_45, %c0_46, %c0_47] : memref<4x256x128xf32, #tpu.memory_space<vmem>>, vector<1x256x128xf32>
    %65 = vector.shape_cast %64 : vector<1x256x128xf32> to vector<256x128xf32>
    %66 = vector.shape_cast %63 : vector<256x128xf32> to vector<1x256x128xf32>
    tpu.vector_store %arg6[%c2_45, %c0_46, %c0_47], %66 {strides = array<i32>} : memref<4x256x128xf32, #tpu.memory_space<vmem>>, vector<1x256x128xf32>,
    %c1_i32_48 = arith.constant 1 : i32
    %67 = arith.addi %1, %c1_i32_48 : i32
    %c0_49 = arith.constant 0 : index
    %68 = arith.index_cast %67 : i32 to index
    %c1_50 = arith.constant 1 : index
    %c0_51 = arith.constant 0 : index
    %69 = vector.load %arg2[%c0_49, %68, %c1_50, %c0_51] : memref<1x18x24x128xbf16, #tpu.memory_space<vmem>>, vector<1x16x16x128xbf16>
    %70 = vector.shape_cast %69 : vector<1x16x16x128xbf16> to vector<16x16x128xbf16>
    %71 = vector.shape_cast %70 : vector<16x16x128xbf16> to vector<256x128xbf16>
    %c0_52 = arith.constant 0 : index
    %c768 = arith.constant 768 : index
    %72 = vector.load %arg3[%c0_52, %c768] : memref<128x2048xbf16, #tpu.memory_space<vmem>>, vector<128x512xbf16>
    %cst_53 = arith.constant dense<0.000000e+00> : vector<256x512xf32>
    %73 = tpu.matmul %71, %72, %cst_53 {dimension_numbers = #tpu.dot_dimension_numbers<[1], [0], [0], [1], [0, 0, 1, 1], [], []>} : vector<256x128xbf16>, vector<128x512xbf16>, vector<256x512xf32> -> vector<256x512xf32>
    %74 = vector.extract_strided_slice %73 {offsets = [0, 0], sizes = [256, 128], strides = [1, 1]} : vector<256x512xf32> to vector<256x128xf32>
    %c0_54 = arith.constant 0 : index
    %c0_55 = arith.constant 0 : index
    %c0_56 = arith.constant 0 : index
    %75 = vector.load %arg6[%c0_54, %c0_55, %c0_56] : memref<4x256x128xf32, #tpu.memory_space<vmem>>, vector<1x256x128xf32>
    %76 = vector.shape_cast %75 : vector<1x256x128xf32> to vector<256x128xf32>
    %77 = arith.addf %76, %74 : vector<256x128xf32>
    %c0_57 = arith.constant 0 : index
    %c0_58 = arith.constant 0 : index
    %c0_59 = arith.constant 0 : index
    %78 = vector.load %arg6[%c0_57, %c0_58, %c0_59] : memref<4x256x128xf32, #tpu.memory_space<vmem>>, vector<1x256x128xf32>
    %79 = vector.shape_cast %78 : vector<1x256x128xf32> to vector<256x128xf32>
    %80 = vector.shape_cast %77 : vector<256x128xf32> to vector<1x256x128xf32>
    tpu.vector_store %arg6[%c0_57, %c0_58, %c0_59], %80 {strides = array<i32>} : memref<4x256x128xf32, #tpu.memory_space<vmem>>, vector<1x256x128xf32>,
    %81 = vector.extract_strided_slice %73 {offsets = [0, 128], sizes = [256, 128], strides = [1, 1]} : vector<256x512xf32> to vector<256x128xf32>
    %c1_60 = arith.constant 1 : index
    %c0_61 = arith.constant 0 : index
    %c0_62 = arith.constant 0 : index
    %82 = vector.load %arg6[%c1_60, %c0_61, %c0_62] : memref<4x256x128xf32, #tpu.memory_space<vmem>>, vector<1x256x128xf32>
    %83 = vector.shape_cast %82 : vector<1x256x128xf32> to vector<256x128xf32>
    %84 = arith.addf %83, %81 : vector<256x128xf32>
    %c1_63 = arith.constant 1 : index
    %c0_64 = arith.constant 0 : index
    %c0_65 = arith.constant 0 : index
    %85 = vector.load %arg6[%c1_63, %c0_64, %c0_65] : memref<4x256x128xf32, #tpu.memory_space<vmem>>, vector<1x256x128xf32>
    %86 = vector.shape_cast %85 : vector<1x256x128xf32> to vector<256x128xf32>
    %87 = vector.shape_cast %84 : vector<256x128xf32> to vector<1x256x128xf32>
    tpu.vector_store %arg6[%c1_63, %c0_64, %c0_65], %87 {strides = array<i32>} : memref<4x256x128xf32, #tpu.memory_space<vmem>>, vector<1x256x128xf32>,
    %88 = vector.extract_strided_slice %73 {offsets = [0, 256], sizes = [256, 128], strides = [1, 1]} : vector<256x512xf32> to vector<256x128xf32>
    %c2_66 = arith.constant 2 : index
    %c0_67 = arith.constant 0 : index
    %c0_68 = arith.constant 0 : index
    %89 = vector.load %arg6[%c2_66, %c0_67, %c0_68] : memref<4x256x128xf32, #tpu.memory_space<vmem>>, vector<1x256x128xf32>
    %90 = vector.shape_cast %89 : vector<1x256x128xf32> to vector<256x128xf32>
    %91 = arith.addf %90, %88 : vector<256x128xf32>
    %c2_69 = arith.constant 2 : index
    %c0_70 = arith.constant 0 : index
    %c0_71 = arith.constant 0 : index
    %92 = vector.load %arg6[%c2_69, %c0_70, %c0_71] : memref<4x256x128xf32, #tpu.memory_space<vmem>>, vector<1x256x128xf32>
    %93 = vector.shape_cast %92 : vector<1x256x128xf32> to vector<256x128xf32>
    %94 = vector.shape_cast %91 : vector<256x128xf32> to vector<1x256x128xf32>
    tpu.vector_store %arg6[%c2_69, %c0_70, %c0_71], %94 {strides = array<i32>} : memref<4x256x128xf32, #tpu.memory_space<vmem>>, vector<1x256x128xf32>,
    %95 = vector.extract_strided_slice %73 {offsets = [0, 384], sizes = [256, 128], strides = [1, 1]} : vector<256x512xf32> to vector<256x128xf32>
    %96 = arith.addf %4, %95 : vector<256x128xf32>
    %c3 = arith.constant 3 : index
    %c0_72 = arith.constant 0 : index
    %c0_73 = arith.constant 0 : index
    %97 = vector.load %arg6[%c3, %c0_72, %c0_73] : memref<4x256x128xf32, #tpu.memory_space<vmem>>, vector<1x256x128xf32>
    %98 = vector.shape_cast %97 : vector<1x256x128xf32> to vector<256x128xf32>
    %99 = vector.shape_cast %96 : vector<256x128xf32> to vector<1x256x128xf32>
    tpu.vector_store %arg6[%c3, %c0_72, %c0_73], %99 {strides = array<i32>} : memref<4x256x128xf32, #tpu.memory_space<vmem>>, vector<1x256x128xf32>,
    %c1_i32_74 = arith.constant 1 : i32
    %100 = arith.addi %1, %c1_i32_74 : i32
    %c0_75 = arith.constant 0 : index
    %101 = arith.index_cast %100 : i32 to index
    %c2_76 = arith.constant 2 : index
    %c0_77 = arith.constant 0 : index
    %102 = vector.load %arg2[%c0_75, %101, %c2_76, %c0_77] : memref<1x18x24x128xbf16, #tpu.memory_space<vmem>>, vector<1x16x16x128xbf16>
    %103 = vector.shape_cast %102 : vector<1x16x16x128xbf16> to vector<16x16x128xbf16>
    %104 = vector.shape_cast %103 : vector<16x16x128xbf16> to vector<256x128xbf16>
    %c0_78 = arith.constant 0 : index
    %c1280 = arith.constant 1280 : index
    %105 = vector.load %arg3[%c0_78, %c1280] : memref<128x2048xbf16, #tpu.memory_space<vmem>>, vector<128x256xbf16>
    %cst_79 = arith.constant dense<0.000000e+00> : vector<256x256xf32>
    %106 = tpu.matmul %104, %105, %cst_79 {dimension_numbers = #tpu.dot_dimension_numbers<[1], [0], [0], [1], [0, 0, 1, 1], [], []>} : vector<256x128xbf16>, vector<128x256xbf16>, vector<256x256xf32> -> vector<256x256xf32>
    %107 = vector.extract_strided_slice %106 {offsets = [0, 0], sizes = [256, 128], strides = [1, 1]} : vector<256x256xf32> to vector<256x128xf32>
    %c1_80 = arith.constant 1 : index
    %c0_81 = arith.constant 0 : index
    %c0_82 = arith.constant 0 : index
    %108 = vector.load %arg6[%c1_80, %c0_81, %c0_82] : memref<4x256x128xf32, #tpu.memory_space<vmem>>, vector<1x256x128xf32>
    %109 = vector.shape_cast %108 : vector<1x256x128xf32> to vector<256x128xf32>
    %110 = arith.addf %109, %107 : vector<256x128xf32>
    %c1_83 = arith.constant 1 : index
    %c0_84 = arith.constant 0 : index
    %c0_85 = arith.constant 0 : index
    %111 = vector.load %arg6[%c1_83, %c0_84, %c0_85] : memref<4x256x128xf32, #tpu.memory_space<vmem>>, vector<1x256x128xf32>
    %112 = vector.shape_cast %111 : vector<1x256x128xf32> to vector<256x128xf32>
    %113 = vector.shape_cast %110 : vector<256x128xf32> to vector<1x256x128xf32>
    tpu.vector_store %arg6[%c1_83, %c0_84, %c0_85], %113 {strides = array<i32>} : memref<4x256x128xf32, #tpu.memory_space<vmem>>, vector<1x256x128xf32>,
    %114 = vector.extract_strided_slice %106 {offsets = [0, 128], sizes = [256, 128], strides = [1, 1]} : vector<256x256xf32> to vector<256x128xf32>
    %c3_86 = arith.constant 3 : index
    %c0_87 = arith.constant 0 : index
    %c0_88 = arith.constant 0 : index
    %115 = vector.load %arg6[%c3_86, %c0_87, %c0_88] : memref<4x256x128xf32, #tpu.memory_space<vmem>>, vector<1x256x128xf32>
    %116 = vector.shape_cast %115 : vector<1x256x128xf32> to vector<256x128xf32>
    %117 = arith.addf %116, %114 : vector<256x128xf32>
    %c3_89 = arith.constant 3 : index
    %c0_90 = arith.constant 0 : index
    %c0_91 = arith.constant 0 : index
    %118 = vector.load %arg6[%c3_89, %c0_90, %c0_91] : memref<4x256x128xf32, #tpu.memory_space<vmem>>, vector<1x256x128xf32>
    %119 = vector.shape_cast %118 : vector<1x256x128xf32> to vector<256x128xf32>
    %120 = vector.shape_cast %117 : vector<256x128xf32> to vector<1x256x128xf32>
    tpu.vector_store %arg6[%c3_89, %c0_90, %c0_91], %120 {strides = array<i32>} : memref<4x256x128xf32, #tpu.memory_space<vmem>>, vector<1x256x128xf32>,
    %c2_i32 = arith.constant 2 : i32
    %121 = arith.addi %1, %c2_i32 : i32
    %c0_92 = arith.constant 0 : index
    %122 = arith.index_cast %121 : i32 to index
    %c0_93 = arith.constant 0 : index
    %c0_94 = arith.constant 0 : index
    %123 = vector.load %arg2[%c0_92, %122, %c0_93, %c0_94] : memref<1x18x24x128xbf16, #tpu.memory_space<vmem>>, vector<1x16x16x128xbf16>
    %124 = vector.shape_cast %123 : vector<1x16x16x128xbf16> to vector<16x16x128xbf16>
    %125 = vector.shape_cast %124 : vector<16x16x128xbf16> to vector<256x128xbf16>
    %c0_95 = arith.constant 0 : index
    %c1536 = arith.constant 1536 : index
    %126 = vector.load %arg3[%c0_95, %c1536] : memref<128x2048xbf16, #tpu.memory_space<vmem>>, vector<128x128xbf16>
    %cst_96 = arith.constant dense<0.000000e+00> : vector<256x128xf32>
    %127 = tpu.matmul %125, %126, %cst_96 {dimension_numbers = #tpu.dot_dimension_numbers<[1], [0], [0], [1], [0, 0, 1, 1], [], []>} : vector<256x128xbf16>, vector<128x128xbf16>, vector<256x128xf32> -> vector<256x128xf32>
    %c2_97 = arith.constant 2 : index
    %c0_98 = arith.constant 0 : index
    %c0_99 = arith.constant 0 : index
    %128 = vector.load %arg6[%c2_97, %c0_98, %c0_99] : memref<4x256x128xf32, #tpu.memory_space<vmem>>, vector<1x256x128xf32>
    %129 = vector.shape_cast %128 : vector<1x256x128xf32> to vector<256x128xf32>
    %130 = arith.addf %129, %127 : vector<256x128xf32>
    %c2_100 = arith.constant 2 : index
    %c0_101 = arith.constant 0 : index
    %c0_102 = arith.constant 0 : index
    %131 = vector.load %arg6[%c2_100, %c0_101, %c0_102] : memref<4x256x128xf32, #tpu.memory_space<vmem>>, vector<1x256x128xf32>
    %132 = vector.shape_cast %131 : vector<1x256x128xf32> to vector<256x128xf32>
    %133 = vector.shape_cast %130 : vector<256x128xf32> to vector<1x256x128xf32>
    tpu.vector_store %arg6[%c2_100, %c0_101, %c0_102], %133 {strides = array<i32>} : memref<4x256x128xf32, #tpu.memory_space<vmem>>, vector<1x256x128xf32>,
    %c2_i32_103 = arith.constant 2 : i32
    %134 = arith.addi %1, %c2_i32_103 : i32
    %c0_104 = arith.constant 0 : index
    %135 = arith.index_cast %134 : i32 to index
    %c1_105 = arith.constant 1 : index
    %c0_106 = arith.constant 0 : index
    %136 = vector.load %arg2[%c0_104, %135, %c1_105, %c0_106] : memref<1x18x24x128xbf16, #tpu.memory_space<vmem>>, vector<1x16x16x128xbf16>
    %137 = vector.shape_cast %136 : vector<1x16x16x128xbf16> to vector<16x16x128xbf16>
    %138 = vector.shape_cast %137 : vector<16x16x128xbf16> to vector<256x128xbf16>
    %c0_107 = arith.constant 0 : index
    %c1664 = arith.constant 1664 : index
    %139 = vector.load %arg3[%c0_107, %c1664] : memref<128x2048xbf16, #tpu.memory_space<vmem>>, vector<128x256xbf16>
    %cst_108 = arith.constant dense<0.000000e+00> : vector<256x256xf32>
    %140 = tpu.matmul %138, %139, %cst_108 {dimension_numbers = #tpu.dot_dimension_numbers<[1], [0], [0], [1], [0, 0, 1, 1], [], []>} : vector<256x128xbf16>, vector<128x256xbf16>, vector<256x256xf32> -> vector<256x256xf32>
    %141 = vector.extract_strided_slice %140 {offsets = [0, 0], sizes = [256, 128], strides = [1, 1]} : vector<256x256xf32> to vector<256x128xf32>
    %c2_109 = arith.constant 2 : index
    %c0_110 = arith.constant 0 : index
    %c0_111 = arith.constant 0 : index
    %142 = vector.load %arg6[%c2_109, %c0_110, %c0_111] : memref<4x256x128xf32, #tpu.memory_space<vmem>>, vector<1x256x128xf32>
    %143 = vector.shape_cast %142 : vector<1x256x128xf32> to vector<256x128xf32>
    %144 = arith.addf %143, %141 : vector<256x128xf32>
    %c2_112 = arith.constant 2 : index
    %c0_113 = arith.constant 0 : index
    %c0_114 = arith.constant 0 : index
    %145 = vector.load %arg6[%c2_112, %c0_113, %c0_114] : memref<4x256x128xf32, #tpu.memory_space<vmem>>, vector<1x256x128xf32>
    %146 = vector.shape_cast %145 : vector<1x256x128xf32> to vector<256x128xf32>
    %147 = vector.shape_cast %144 : vector<256x128xf32> to vector<1x256x128xf32>
    tpu.vector_store %arg6[%c2_112, %c0_113, %c0_114], %147 {strides = array<i32>} : memref<4x256x128xf32, #tpu.memory_space<vmem>>, vector<1x256x128xf32>,
    %148 = vector.extract_strided_slice %140 {offsets = [0, 128], sizes = [256, 128], strides = [1, 1]} : vector<256x256xf32> to vector<256x128xf32>
    %c3_115 = arith.constant 3 : index
    %c0_116 = arith.constant 0 : index
    %c0_117 = arith.constant 0 : index
    %149 = vector.load %arg6[%c3_115, %c0_116, %c0_117] : memref<4x256x128xf32, #tpu.memory_space<vmem>>, vector<1x256x128xf32>
    %150 = vector.shape_cast %149 : vector<1x256x128xf32> to vector<256x128xf32>
    %151 = arith.addf %150, %148 : vector<256x128xf32>
    %c3_118 = arith.constant 3 : index
    %c0_119 = arith.constant 0 : index
    %c0_120 = arith.constant 0 : index
    %152 = vector.load %arg6[%c3_118, %c0_119, %c0_120] : memref<4x256x128xf32, #tpu.memory_space<vmem>>, vector<1x256x128xf32>
    %153 = vector.shape_cast %152 : vector<1x256x128xf32> to vector<256x128xf32>
    %154 = vector.shape_cast %151 : vector<256x128xf32> to vector<1x256x128xf32>
    tpu.vector_store %arg6[%c3_118, %c0_119, %c0_120], %154 {strides = array<i32>} : memref<4x256x128xf32, #tpu.memory_space<vmem>>, vector<1x256x128xf32>,
    %c2_i32_121 = arith.constant 2 : i32
    %155 = arith.addi %1, %c2_i32_121 : i32
    %c0_122 = arith.constant 0 : index
    %156 = arith.index_cast %155 : i32 to index
    %c2_123 = arith.constant 2 : index
    %c0_124 = arith.constant 0 : index
    %157 = vector.load %arg2[%c0_122, %156, %c2_123, %c0_124] : memref<1x18x24x128xbf16, #tpu.memory_space<vmem>>, vector<1x16x16x128xbf16>
    %158 = vector.shape_cast %157 : vector<1x16x16x128xbf16> to vector<16x16x128xbf16>
    %159 = vector.shape_cast %158 : vector<16x16x128xbf16> to vector<256x128xbf16>
    %c0_125 = arith.constant 0 : index
    %c1920 = arith.constant 1920 : index
    %160 = vector.load %arg3[%c0_125, %c1920] : memref<128x2048xbf16, #tpu.memory_space<vmem>>, vector<128x128xbf16>
    %cst_126 = arith.constant dense<0.000000e+00> : vector<256x128xf32>
    %161 = tpu.matmul %159, %160, %cst_126 {dimension_numbers = #tpu.dot_dimension_numbers<[1], [0], [0], [1], [0, 0, 1, 1], [], []>} : vector<256x128xbf16>, vector<128x128xbf16>, vector<256x128xf32> -> vector<256x128xf32>
    %c3_127 = arith.constant 3 : index
    %c0_128 = arith.constant 0 : index
    %c0_129 = arith.constant 0 : index
    %162 = vector.load %arg6[%c3_127, %c0_128, %c0_129] : memref<4x256x128xf32, #tpu.memory_space<vmem>>, vector<1x256x128xf32>
    %163 = vector.shape_cast %162 : vector<1x256x128xf32> to vector<256x128xf32>
    %164 = arith.addf %163, %161 : vector<256x128xf32>
    %c3_130 = arith.constant 3 : index
    %c0_131 = arith.constant 0 : index
    %c0_132 = arith.constant 0 : index
    %165 = vector.load %arg6[%c3_130, %c0_131, %c0_132] : memref<4x256x128xf32, #tpu.memory_space<vmem>>, vector<1x256x128xf32>
    %166 = vector.shape_cast %165 : vector<1x256x128xf32> to vector<256x128xf32>
    %167 = vector.shape_cast %164 : vector<256x128xf32> to vector<1x256x128xf32>
    tpu.vector_store %arg6[%c3_130, %c0_131, %c0_132], %167 {strides = array<i32>} : memref<4x256x128xf32, #tpu.memory_space<vmem>>, vector<1x256x128xf32>,
    %c0_133 = arith.constant 0 : index
    %c0_134 = arith.constant 0 : index
    %c0_135 = arith.constant 0 : index
    %168 = vector.load %arg6[%c0_133, %c0_134, %c0_135] : memref<4x256x128xf32, #tpu.memory_space<vmem>>, vector<4x256x128xf32>
    %169 = vector.shape_cast %168 : vector<4x256x128xf32> to vector<4x16x16x128xf32>
    %170 = arith.truncf %169 : vector<4x16x16x128xf32> to vector<4x16x16x128xbf16>
    %c0_136 = arith.constant 0 : index
    %c0_137 = arith.constant 0 : index
    %c0_138 = arith.constant 0 : index
    %c0_139 = arith.constant 0 : index
    %c0_140 = arith.constant 0 : index
    %171 = vector.load %arg5[%c0_136, %c0_137, %c0_138, %c0_139, %c0_140] : memref<1x4x16x16x128xbf16, #tpu.memory_space<vmem>>, vector<1x4x16x16x128xbf16>
    %172 = vector.shape_cast %171 : vector<1x4x16x16x128xbf16> to vector<4x16x16x128xbf16>
    %173 = vector.shape_cast %170 : vector<4x16x16x128xbf16> to vector<1x4x16x16x128xbf16>
    tpu.vector_store %arg5[%c0_136, %c0_137, %c0_138, %c0_139, %c0_140], %173 {strides = array<i32>} : memref<1x4x16x16x128xbf16, #tpu.memory_space<vmem>>, vector<1x4x16x16x128xbf16>,
    return
  }
  func.func @transform_0(%arg0: i32, %arg1: i32) -> (i32, i32, i32, i32) {
    %c0_i32 = arith.constant 0 : i32
    %c0_i32_0 = arith.constant 0 : i32
    %c0_i32_1 = arith.constant 0 : i32
    %c0_i32_2 = arith.constant 0 : i32
    return %arg0, %c0_i32, %c0_i32_0, %c0_i32_1 : i32, i32, i32, i32
  }
  func.func @transform_1(%arg0: i32, %arg1: i32) -> (i32, i32) {
    %c0_i32 = arith.constant 0 : i32
    %c0_i32_0 = arith.constant 0 : i32
    %c0_i32_1 = arith.constant 0 : i32
    return %c0_i32, %c0_i32_0 : i32, i32
  }
  func.func @transform_2(%arg0: i32, %arg1: i32) -> (i32, i32) {
    %c0_i32 = arith.constant 0 : i32
    %c0_i32_0 = arith.constant 0 : i32
    %c0_i32_1 = arith.constant 0 : i32
    return %c0_i32, %c0_i32_0 : i32, i32
  }
  func.func @transform_3(%arg0: i32, %arg1: i32) -> (i32, i32, i32, i32, i32) {
    %c0_i32 = arith.constant 0 : i32
    %c0_i32_0 = arith.constant 0 : i32
    %c0_i32_1 = arith.constant 0 : i32
    %c0_i32_2 = arith.constant 0 : i32
    return %arg0, %c0_i32, %arg1, %c0_i32_0, %c0_i32_1 : i32, i32, i32, i32, i32
  }
}

</mosaic_0001>

<llo_original>
// kernel: upsample_forward.1
$region0: #{upsample_forward.1}
  #allocation0 [shape = 'u32[]', space=smem, size = 0x4, offset = 0x4, fixed_abs, tag = 'smem constant byte address 0x4 - core index']
  #allocation1 [shape = 'u32[144,128]{1,0:T(1,128)}', space=vmem, size = 0x12000, scoped, tag = 'internal scratch']
  #allocation2 [shape = 'f32[4,256,128]{2,1,0:T(8,128)}', space=vmem, size = 0x80000, scoped, tag = 'scratch operand']
  %s0 = inlined_call_operand.vmem [shape: bf16[2,18,24,128], index: 0, kind: input, shape index: {}]
  %s1 = inlined_call_operand.vmem [shape: bf16[128,2048], index: 1, kind: input, shape index: {}]
  %s2 = inlined_call_operand.vmem [shape: f32[8,128], index: 2, kind: input, shape index: {}]
  %s3 = inlined_call_operand.vmem [shape: bf16[2,4,16,16,128], index: 3, kind: output, shape index: {}]
  %s4 = sld [smem:[#allocation0]]
  $region45: #{upsample_forward.1} parent=0
    _
  %s6 = ssub.s32 1, %s4
  %s7 = scalar_select 0, %s6, %s4
  loop: start=0, step=1, limit=4
  $region2: #{upsample_forward.1} parent=0 // loop_pre_header
    _
  $region3: #{upsample_forward.1} parent=0 // loop_header
    %s9 = sphi 0, %s13
    %p10 = scmp.ge.s32.totalorder %s9, 4
    %s16 = sphi 0, %s28
    %s17 = sphi 0, %s24
    %s18 = sphi 0, %s16
    %s19 = sphi 0, %s17
    %s20 = sphi 0, %s18
    %s21 = sphi 0, %s19
    %s31 = sphi 0, %s33
    %s34 = sphi 0, %s31
    %s35 = sphi 0, %s34
    %s51 = sphi 0, %s35
    %s55 = sphi 0, %s55
    %s57 = sphi 0, %s55
    %s58 = sphi 0, %s57
    %s72 = sphi 0, %s58
    %s76 = sphi 0, %s76
    %s78 = sphi 0, %s76
    %s79 = sphi 0, %s78
    %s93 = sphi 0, %s79
    %s101 = sphi 0, %s103
    %s104 = sphi 0, %s101
    %s105 = sphi 0, %s104
    %s121 = sphi 0, %s105
  $region4: #{upsample_forward.1} parent=0 // loop_header_branch
    %12 = sbr.rel (%p10) target = $region8
  $region5: #{upsample_forward.1} parent=0 // loop_body
    %s14 = ssub.s32 %s9, 1
    %s15 = ssub.s32 %s9, 2
    %s22 = sadd.s32 1, %s17
    %p23 = scmp.ge.s32.totalorder %s22, 1
    %s24 = scalar_select %p23, 0, %s22
    %s25 = sadd.s32 1, %s16
    %s26 = scalar_select %p23, %s25, %s16
    %p27 = scmp.ge.s32.totalorder %s26, 2
    %s28 = scalar_select %p27, 0, %s26
    %s29 = ssub.s32 %s16, %s28
    %p30 = scmp.eq.s32.totalorder %s29, 0
    %s32 = sadd.s32 %s31, 1
    %s33 = scalar_select %p30, %s31, %s32
    %p36 = pneg %p30
    %p37 = scmp.eq.s32.totalorder %s9, 1
    %p38 = por %p36, %p37
    %p39 = scmp.ne.s32.totalorder %s31, %s34
    %p40 = scmp.eq.s32.totalorder %s9, 0
    %p41 = por %p39, %p40
    %p42 = scmp.ne.s32.totalorder %s31, %s34
    %p43 = scmp.eq.s32.totalorder %s14, 1
    %p44 = por %p42, %p43
    %p45 = scmp.ne.s32.totalorder %s34, %s35
    %p46 = scmp.eq.s32.totalorder %s14, 0
    %p47 = por %p45, %p46
    %p48 = scmp.ne.s32.totalorder %s34, %s35
    %p49 = scmp.eq.s32.totalorder %s15, 1
    %p50 = por %p48, %p49
    %p52 = scmp.ne.s32.totalorder %s35, %s51
    %p53 = scmp.eq.s32.totalorder %s15, 0
    %p54 = por %p52, %p53
    %s56 = sadd.s32 %s55, 1
    %p59 = scmp.eq.s32.totalorder %s9, 1
    %p60 = scmp.ne.s32.totalorder %s55, %s57
    %p61 = scmp.eq.s32.totalorder %s9, 0
    %p62 = por %p60, %p61
    %p63 = scmp.ne.s32.totalorder %s55, %s57
    %p64 = scmp.eq.s32.totalorder %s14, 1
    %p65 = por %p63, %p64
    %p66 = scmp.ne.s32.totalorder %s57, %s58
    %p67 = scmp.eq.s32.totalorder %s14, 0
    %p68 = por %p66, %p67
    %p69 = scmp.ne.s32.totalorder %s57, %s58
    %p70 = scmp.eq.s32.totalorder %s15, 1
    %p71 = por %p69, %p70
    %p73 = scmp.ne.s32.totalorder %s58, %s72
    %p74 = scmp.eq.s32.totalorder %s15, 0
    %p75 = por %p73, %p74
    %s77 = sadd.s32 %s76, 1
    %p80 = scmp.eq.s32.totalorder %s9, 1
    %p81 = scmp.ne.s32.totalorder %s76, %s78
    %p82 = scmp.eq.s32.totalorder %s9, 0
    %p83 = por %p81, %p82
    %p84 = scmp.ne.s32.totalorder %s76, %s78
    %p85 = scmp.eq.s32.totalorder %s14, 1
    %p86 = por %p84, %p85
    %p87 = scmp.ne.s32.totalorder %s78, %s79
    %p88 = scmp.eq.s32.totalorder %s14, 0
    %p89 = por %p87, %p88
    %p90 = scmp.ne.s32.totalorder %s78, %s79
    %p91 = scmp.eq.s32.totalorder %s15, 1
    %p92 = por %p90, %p91
    %p94 = scmp.ne.s32.totalorder %s79, %s93
    %p95 = scmp.eq.s32.totalorder %s15, 0
    %p96 = por %p94, %p95
    %s97 = ssub.s32 %s16, %s28
    %s98 = ssub.s32 %s17, %s24
    %s99 = sor.u32 %s97, %s98
    %p100 = scmp.eq.s32.totalorder %s99, 0
    %s102 = sadd.s32 %s101, 1
    %s103 = scalar_select %p100, %s101, %s102
    %p106 = pneg %p100
    %p107 = scmp.eq.s32.totalorder %s9, 1
    %p108 = por %p106, %p107
    %p109 = scmp.ne.s32.totalorder %s101, %s104
    %p110 = scmp.eq.s32.totalorder %s9, 0
    %p111 = por %p109, %p110
    %p112 = scmp.ne.s32.totalorder %s101, %s104
    %p113 = scmp.eq.s32.totalorder %s14, 1
    %p114 = por %p112, %p113
    %p115 = scmp.ne.s32.totalorder %s104, %s105
    %p116 = scmp.eq.s32.totalorder %s14, 0
    %p117 = por %p115, %p116
    %p118 = scmp.ne.s32.totalorder %s104, %s105
    %p119 = scmp.eq.s32.totalorder %s15, 1
    %p120 = por %p118, %p119
    %p122 = scmp.ne.s32.totalorder %s105, %s121
    %p123 = scmp.eq.s32.totalorder %s15, 0
    %p124 = por %p122, %p123
    %p125 = scmp.le.s32.totalorder 1, %s9
    %p126 = scmp.lt.s32.totalorder %s9, 3
    %p127 = pnand %p125, %p126
    %p128 = pneg %p127
    // Predicated region
    $region9: #{upsample_forward.1} parent=5 // pred_check
      _
    $region10: #{upsample_forward.1} parent=5 // pred_check_branch
      %130 = sbr.rel (%p127) target = $region12
    $region11: #{upsample_forward.1} parent=5 // pred_region
      %s131 = ssub.s32 %s9, 1
      // Predicated region
      $region13: #{upsample_forward.1} parent=11 // pred_check
        %p132 = pneg %p68
      $region14: #{upsample_forward.1} parent=11 // pred_check_branch
        %134 = sbr.rel (%p132) target = $region16
      $region15: #{upsample_forward.1} parent=11 // pred_region
        _
      $region16: #{upsample_forward.1} parent=11 // pred_fallthru
        _
      // Predicated region
      $region17: #{upsample_forward.1} parent=11 // pred_check
        %p135 = pneg %p89
      $region18: #{upsample_forward.1} parent=11 // pred_check_branch
        %137 = sbr.rel (%p135) target = $region20
      $region19: #{upsample_forward.1} parent=11 // pred_region
        _
      $region20: #{upsample_forward.1} parent=11 // pred_fallthru
        _
    $region12: #{upsample_forward.1} parent=5 // pred_fallthru
      _
    %p138 = scmp.lt.s32.totalorder %s9, 2
    // Predicated region
    $region21: #{upsample_forward.1} parent=5 // pred_check
      %p139 = pneg %p138
    $region22: #{upsample_forward.1} parent=5 // pred_check_branch
      %141 = sbr.rel (%p139) target = $region24
    $region23: #{upsample_forward.1} parent=5 // pred_region
      // Predicated region
      $region25: #{upsample_forward.1} parent=23 // pred_check
        %p142 = pneg %p41
      $region26: #{upsample_forward.1} parent=23 // pred_check_branch
        %144 = sbr.rel (%p142) target = $region28
      $region27: #{upsample_forward.1} parent=23 // pred_region
        %p145 = scmp.lt.s32.totalorder %s16, 1
        %s146 = scalar_select %p145, %s16, 1
        %s147 = smul.addr %s146, 54
        %s148 = smul.addr %s147, 4
        %s149 = scalar_lea.vmem %s0, %s148
      $region28: #{upsample_forward.1} parent=23 // pred_fallthru
        _
    $region24: #{upsample_forward.1} parent=5 // pred_fallthru
      _
    %p150 = scmp.le.s32.totalorder 1, %s9
    %p151 = scmp.lt.s32.totalorder %s9, 3
    %p152 = pnand %p150, %p151
    %p153 = pneg %p152
    // Predicated region
    $region29: #{upsample_forward.1} parent=5 // pred_check
      _
    $region30: #{upsample_forward.1} parent=5 // pred_check_branch
      %155 = sbr.rel (%p152) target = $region32
    $region31: #{upsample_forward.1} parent=5 // pred_region
      %s156 = ssub.s32 %s9, 1
      %p157 = scmp.lt.s32.totalorder %s18, 1
      %s158 = scalar_select %p157, %s18, 1
      %s159 = smul.addr %s158, 54
      %s160 = smul.addr %s159, 4
      %s161 = scalar_lea.vmem %s0, %s160
      %p162 = pneg %p47
      %p163 = pneg %p44
      %p164 = pneg %p68
      %p165 = pneg %p65
      %p166 = pneg %p89
      %p167 = pneg %p86
      %p168 = pneg %p117
      %p169 = pneg %p114
      %s170 = smul.u32 16, %s19
      %p171 = scmp.lt.s32.totalorder %s18, 1
      %s172 = scalar_select %p171, %s18, 1
      %p173 = scmp.lt.s32.totalorder %s170, 15
      %s174 = scalar_select %p173, %s170, 15
      %s175 = smul.addr %s174, 2
      %s176 = smul.addr %s172, 128
      %s177 = sadd.s32 %s175, %s176
      %s178 = smul.addr %s177, 4
      %s179 = scalar_lea.vmem %s3, %s178
      %p180 = scmp.lt.s32.totalorder %s18, 1
      %s181 = scalar_select %p180, %s18, 1
      %s182 = smul.addr %s181, 54
      %s183 = smul.addr %s182, 4
      %s184 = scalar_lea.vmem %s0, %s183
      %s185 = smul.u32 16, %s19
      %p186 = scmp.lt.s32.totalorder %s18, 1
      %s187 = scalar_select %p186, %s18, 1
      %p188 = scmp.lt.s32.totalorder %s185, 15
      %s189 = scalar_select %p188, %s185, 15
      %s190 = smul.addr %s189, 2
      %s191 = smul.addr %s187, 128
      %s192 = sadd.s32 %s190, %s191
      %s193 = smul.addr %s192, 4
      %s194 = scalar_lea.vmem %s3, %s193
      %s195 = smul.u32 16, %s19
      %s197 = smul.u32 %s19, 16
      %v198 = vld [vmem:[%s2] sm:$0x1]
      %v199 = vlaneseq
      %v200 = vshrl.u32 %v199, 7
      %v201 = vsub.s32 0, %v200
      %v202 = vrot.slane %v198, %v201
      %s203 = smul.u32 %s197, 3
      %s204 = smul.addr %s203, 4
      %s205 = scalar_lea.vmem %s184, %s204
      %v206 = vld [vmem:[%s205] sm:$0xf]
      %v207 = vld [vmem:[%s205 + $0x4] sm:$0xf]
      %v208 = vld [vmem:[%s205 + $0xc] sm:$0xf]
      %v209 = vld [vmem:[%s205 + $0x10] sm:$0xf]
      %v210 = vld [vmem:[%s205 + $0x18] sm:$0xf]
      %v211 = vld [vmem:[%s205 + $0x1c] sm:$0xf]
      %v212 = vld [vmem:[%s205 + $0x24] sm:$0xf]
      %v213 = vld [vmem:[%s205 + $0x28] sm:$0xf]
      %v214 = vld [vmem:[%s205 + $0x30] sm:$0xf]
      %v215 = vld [vmem:[%s205 + $0x34] sm:$0xf]
      %v216 = vld [vmem:[%s205 + $0x3c] sm:$0xf]
      %v217 = vld [vmem:[%s205 + $0x40] sm:$0xf]
      %v218 = vld [vmem:[%s205 + $0x48] sm:$0xf]
      %v219 = vld [vmem:[%s205 + $0x4c] sm:$0xf]
      %v220 = vld [vmem:[%s205 + $0x54] sm:$0xf]
      %v221 = vld [vmem:[%s205 + $0x58] sm:$0xf]
      %v222 = vld [vmem:[%s205 + $0x60] sm:$0xf]
      %v223 = vld [vmem:[%s205 + $0x64] sm:$0xf]
      %v224 = vld [vmem:[%s205 + $0x6c] sm:$0xf]
      %v225 = vld [vmem:[%s205 + $0x70] sm:$0xf]
      %v226 = vld [vmem:[%s205 + $0x78] sm:$0xf]
      %v227 = vld [vmem:[%s205 + $0x7c] sm:$0xf]
      %v228 = vld [vmem:[%s205 + $0x84] sm:$0xf]
      %v229 = vld [vmem:[%s205 + $0x88] sm:$0xf]
      %v230 = vld [vmem:[%s205 + $0x90] sm:$0xf]
      %v231 = vld [vmem:[%s205 + $0x94] sm:$0xf]
      %v232 = vld [vmem:[%s205 + $0x9c] sm:$0xf]
      %v233 = vld [vmem:[%s205 + $0xa0] sm:$0xf]
      %v234 = vld [vmem:[%s205 + $0xa8] sm:$0xf]
      %v235 = vld [vmem:[%s205 + $0xac] sm:$0xf]
      %v236 = vld [vmem:[%s205 + $0xb4] sm:$0xf]
      %v237 = vld [vmem:[%s205 + $0xb8] sm:$0xf]
      %v238 = vld [vmem:[%s1] sm:$0xf]
      %v239 = vld [vmem:[%s1 + $0x40] sm:$0xf]
      %v240 = vld [vmem:[%s1 + $0x80] sm:$0xf]
      %v241 = vld [vmem:[%s1 + $0xc0] sm:$0xf]
      %v242 = vld [vmem:[%s1 + $0x100] sm:$0xf]
      %v243 = vld [vmem:[%s1 + $0x140] sm:$0xf]
      %v244 = vld [vmem:[%s1 + $0x180] sm:$0xf]
      %v245 = vld [vmem:[%s1 + $0x1c0] sm:$0xf]
      %v246 = vld [vmem:[%s1 + $0x200] sm:$0xf]
      %v247 = vld [vmem:[%s1 + $0x240] sm:$0xf]
      %v248 = vld [vmem:[%s1 + $0x280] sm:$0xf]
      %v249 = vld [vmem:[%s1 + $0x2c0] sm:$0xf]
      %v250 = vld [vmem:[%s1 + $0x300] sm:$0xf]
      %v251 = vld [vmem:[%s1 + $0x340] sm:$0xf]
      %v252 = vld [vmem:[%s1 + $0x380] sm:$0xf]
      %v253 = vld [vmem:[%s1 + $0x3c0] sm:$0xf]
      %v286 = vunpack.c.l.b16 %v206
      %v287 = vunpack.c.l.b16 %v207
      %v288 = vunpack.c.l.b16 %v208
      %v289 = vunpack.c.l.b16 %v209
      %v290 = vunpack.c.l.b16 %v210
      %v291 = vunpack.c.l.b16 %v211
      %v292 = vunpack.c.l.b16 %v212
      %v293 = vunpack.c.l.b16 %v213
      %v294 = vunpack.c.l.b16 %v214
      %v295 = vunpack.c.l.b16 %v215
      %v296 = vunpack.c.l.b16 %v216
      %v297 = vunpack.c.l.b16 %v217
      %v298 = vunpack.c.l.b16 %v218
      %v299 = vunpack.c.l.b16 %v219
      %v300 = vunpack.c.l.b16 %v220
      %v301 = vunpack.c.l.b16 %v221
      %v302 = vunpack.c.l.b16 %v222
      %v303 = vunpack.c.l.b16 %v223
      %v304 = vunpack.c.l.b16 %v224
      %v305 = vunpack.c.l.b16 %v225
      %v306 = vunpack.c.l.b16 %v226
      %v307 = vunpack.c.l.b16 %v227
      %v308 = vunpack.c.l.b16 %v228
      %v309 = vunpack.c.l.b16 %v229
      %v310 = vunpack.c.l.b16 %v230
      %v311 = vunpack.c.l.b16 %v231
      %v312 = vunpack.c.l.b16 %v232
      %v313 = vunpack.c.l.b16 %v233
      %v314 = vunpack.c.l.b16 %v234
      %v315 = vunpack.c.l.b16 %v235
      %v316 = vunpack.c.l.b16 %v236
      %v317 = vunpack.c.l.b16 %v237
      %v318 = vpack.c.b16 %v287, %v286
      %v319 = vpack.c.b16 %v289, %v288
      %v320 = vpack.c.b16 %v291, %v290
      %v321 = vpack.c.b16 %v293, %v292
      %v322 = vpack.c.b16 %v295, %v294
      %v323 = vpack.c.b16 %v297, %v296
      %v324 = vpack.c.b16 %v299, %v298
      %v325 = vpack.c.b16 %v301, %v300
      %v326 = vpack.c.b16 %v303, %v302
      %v327 = vpack.c.b16 %v305, %v304
      %v328 = vpack.c.b16 %v307, %v306
      %v329 = vpack.c.b16 %v309, %v308
      %v330 = vpack.c.b16 %v311, %v310
      %v331 = vpack.c.b16 %v313, %v312
      %v332 = vpack.c.b16 %v315, %v314
      %v333 = vpack.c.b16 %v317, %v316
      %v366 = vunpack.c.l.b16 %v238
      %v367 = vunpack.c.l.b16 %v239
      %v368 = vunpack.c.l.b16 %v240
      %v369 = vunpack.c.l.b16 %v241
      %v370 = vunpack.c.l.b16 %v242
      %v371 = vunpack.c.l.b16 %v243
      %v372 = vunpack.c.l.b16 %v244
      %v373 = vunpack.c.l.b16 %v245
      %v374 = vunpack.c.l.b16 %v246
      %v375 = vunpack.c.l.b16 %v247
      %v376 = vunpack.c.l.b16 %v248
      %v377 = vunpack.c.l.b16 %v249
      %v378 = vunpack.c.l.b16 %v250
      %v379 = vunpack.c.l.b16 %v251
      %v380 = vunpack.c.l.b16 %v252
      %v381 = vunpack.c.l.b16 %v253
      %v382 = vpack.c.b16 %v367, %v366
      %v383 = vpack.c.b16 %v369, %v368
      %v384 = vpack.c.b16 %v371, %v370
      %v385 = vpack.c.b16 %v373, %v372
      %v386 = vpack.c.b16 %v375, %v374
      %v387 = vpack.c.b16 %v377, %v376
      %v388 = vpack.c.b16 %v379, %v378
      %v389 = vpack.c.b16 %v381, %v380
      %398 = vmatprep.subr.bf16.mxu0 0
      %399 = vmatpush1.bf16.msra.mxu0 %v382
      %400 = vmatprep.subr.bf16.mxu0 0
      %401 = vmatpush1.bf16.msra.mxu0 %v383
      %402 = vmatprep.subr.bf16.mxu0 0
      %403 = vmatpush1.bf16.msra.mxu0 %v384
      %404 = vmatprep.subr.bf16.mxu0 0
      %405 = vmatpush1.bf16.msra.mxu0 %v385
      %406 = vmatprep.subr.bf16.mxu0 0
      %407 = vmatpush1.bf16.msra.mxu0 %v386
      %408 = vmatprep.subr.bf16.mxu0 0
      %409 = vmatpush1.bf16.msra.mxu0 %v387
      %410 = vmatprep.subr.bf16.mxu0 0
      %411 = vmatpush1.bf16.msra.mxu0 %v388
      %412 = vmatprep.subr.bf16.mxu0 0
      %413 = vmatpush1.bf16.msra.mxu0 %v389
      %414 = vmatprep.subr.bf16.mxu0 0
      %415 = vmatpush1.bf16.msra.mxu0 0
      %416 = vmatprep.subr.bf16.mxu0 0
      %417 = vmatpush1.bf16.msra.mxu0 0
      %418 = vmatprep.subr.bf16.mxu0 0
      %419 = vmatpush1.bf16.msra.mxu0 0
      %420 = vmatprep.subr.bf16.mxu0 0
      %421 = vmatpush1.bf16.msra.mxu0 0
      %422 = vmatprep.subr.bf16.mxu0 0
      %423 = vmatpush1.bf16.msra.mxu0 0
      %424 = vmatprep.subr.bf16.mxu0 0
      %425 = vmatpush1.bf16.msra.mxu0 0
      %426 = vmatprep.subr.bf16.mxu0 0
      %427 = vmatpush1.bf16.msra.mxu0 0
      %428 = vmatprep.subr.bf16.mxu0 0
      %429 = vmatpush1.bf16.msra.mxu0 0
      %430 = vmatprep.mubr.bf16.mxu0 0
      %431 = vmatmul.mubr.bf16.gmra.mrb[0].mxu0 %v318
      %v432 = vpop.f32.mrb[0].mxu0
      %v433 = vadd.f32 0.0, %v432
      %v434 = vpop.f32.mrb[0].mxu0
      %v435 = vpop.f32.mrb[0].mxu0
      %v436 = vadd.f32 0.0, %v435
      %v437 = vpop.f32.mrb[0].mxu0
      %438 = vmatprep.mubr.bf16.mxu0 0
      %439 = vmatmul.mubr.bf16.gmra.mrb[0].mxu0 %v319
      %v440 = vpop.f32.mrb[0].mxu0
      %v441 = vadd.f32 0.0, %v440
      %v442 = vpop.f32.mrb[0].mxu0
      %v443 = vpop.f32.mrb[0].mxu0
      %v444 = vadd.f32 0.0, %v443
      %v445 = vpop.f32.mrb[0].mxu0
      %446 = vmatprep.mubr.bf16.mxu0 0
      %447 = vmatmul.mubr.bf16.gmra.mrb[0].mxu0 %v320
      %v448 = vpop.f32.mrb[0].mxu0
      %v449 = vadd.f32 0.0, %v448
      %v450 = vpop.f32.mrb[0].mxu0
      %v451 = vpop.f32.mrb[0].mxu0
      %v452 = vadd.f32 0.0, %v451
      %v453 = vpop.f32.mrb[0].mxu0
      %454 = vmatprep.mubr.bf16.mxu0 0
      %455 = vmatmul.mubr.bf16.gmra.mrb[0].mxu0 %v321
      %v456 = vpop.f32.mrb[0].mxu0
      %v457 = vadd.f32 0.0, %v456
      %v458 = vpop.f32.mrb[0].mxu0
      %v459 = vpop.f32.mrb[0].mxu0
      %v460 = vadd.f32 0.0, %v459
      %v461 = vpop.f32.mrb[0].mxu0
      %462 = vmatprep.mubr.bf16.mxu0 0
      %463 = vmatmul.mubr.bf16.gmra.mrb[0].mxu0 %v322
      %v464 = vpop.f32.mrb[0].mxu0
      %v465 = vadd.f32 0.0, %v464
      %v466 = vpop.f32.mrb[0].mxu0
      %v467 = vpop.f32.mrb[0].mxu0
      %v468 = vadd.f32 0.0, %v467
      %v469 = vpop.f32.mrb[0].mxu0
      %470 = vmatprep.mubr.bf16.mxu0 0
      %471 = vmatmul.mubr.bf16.gmra.mrb[0].mxu0 %v323
      %v472 = vpop.f32.mrb[0].mxu0
      %v473 = vadd.f32 0.0, %v472
      %v474 = vpop.f32.mrb[0].mxu0
      %v475 = vpop.f32.mrb[0].mxu0
      %v476 = vadd.f32 0.0, %v475
      %v477 = vpop.f32.mrb[0].mxu0
      %478 = vmatprep.mubr.bf16.mxu0 0
      %479 = vmatmul.mubr.bf16.gmra.mrb[0].mxu0 %v324
      %v480 = vpop.f32.mrb[0].mxu0
      %v481 = vadd.f32 0.0, %v480
      %v482 = vpop.f32.mrb[0].mxu0
      %v483 = vpop.f32.mrb[0].mxu0
      %v484 = vadd.f32 0.0, %v483
      %v485 = vpop.f32.mrb[0].mxu0
      %486 = vmatprep.mubr.bf16.mxu0 0
      %487 = vmatmul.mubr.bf16.gmra.mrb[0].mxu0 %v325
      %v488 = vpop.f32.mrb[0].mxu0
      %v489 = vadd.f32 0.0, %v488
      %v490 = vpop.f32.mrb[0].mxu0
      %v491 = vpop.f32.mrb[0].mxu0
      %v492 = vadd.f32 0.0, %v491
      %v493 = vpop.f32.mrb[0].mxu0
      %494 = vmatprep.mubr.bf16.mxu0 0
      %495 = vmatmul.mubr.bf16.gmra.mrb[0].mxu0 %v326
      %v496 = vpop.f32.mrb[0].mxu0
      %v497 = vadd.f32 0.0, %v496
      %v498 = vpop.f32.mrb[0].mxu0
      %v499 = vpop.f32.mrb[0].mxu0
      %v500 = vadd.f32 0.0, %v499
      %v501 = vpop.f32.mrb[0].mxu0
      %502 = vmatprep.mubr.bf16.mxu0 0
      %503 = vmatmul.mubr.bf16.gmra.mrb[0].mxu0 %v327
      %v504 = vpop.f32.mrb[0].mxu0
      %v505 = vadd.f32 0.0, %v504
      %v506 = vpop.f32.mrb[0].mxu0
      %v507 = vpop.f32.mrb[0].mxu0
      %v508 = vadd.f32 0.0, %v507
      %v509 = vpop.f32.mrb[0].mxu0
      %510 = vmatprep.mubr.bf16.mxu0 0
      %511 = vmatmul.mubr.bf16.gmra.mrb[0].mxu0 %v328
      %v512 = vpop.f32.mrb[0].mxu0
      %v513 = vadd.f32 0.0, %v512
      %v514 = vpop.f32.mrb[0].mxu0
      %v515 = vpop.f32.mrb[0].mxu0
      %v516 = vadd.f32 0.0, %v515
      %v517 = vpop.f32.mrb[0].mxu0
      %518 = vmatprep.mubr.bf16.mxu0 0
      %519 = vmatmul.mubr.bf16.gmra.mrb[0].mxu0 %v329
      %v520 = vpop.f32.mrb[0].mxu0
      %v521 = vadd.f32 0.0, %v520
      %v522 = vpop.f32.mrb[0].mxu0
      %v523 = vpop.f32.mrb[0].mxu0
      %v524 = vadd.f32 0.0, %v523
      %v525 = vpop.f32.mrb[0].mxu0
      %526 = vmatprep.mubr.bf16.mxu0 0
      %527 = vmatmul.mubr.bf16.gmra.mrb[0].mxu0 %v330
      %v528 = vpop.f32.mrb[0].mxu0
      %v529 = vadd.f32 0.0, %v528
      %v530 = vpop.f32.mrb[0].mxu0
      %v531 = vpop.f32.mrb[0].mxu0
      %v532 = vadd.f32 0.0, %v531
      %v533 = vpop.f32.mrb[0].mxu0
      %534 = vmatprep.mubr.bf16.mxu0 0
      %535 = vmatmul.mubr.bf16.gmra.mrb[0].mxu0 %v331
      %v536 = vpop.f32.mrb[0].mxu0
      %v537 = vadd.f32 0.0, %v536
      %v538 = vpop.f32.mrb[0].mxu0
      %v539 = vpop.f32.mrb[0].mxu0
      %v540 = vadd.f32 0.0, %v539
      %v541 = vpop.f32.mrb[0].mxu0
      %542 = vmatprep.mubr.bf16.mxu0 0
      %543 = vmatmul.mubr.bf16.gmra.mrb[0].mxu0 %v332
      %v544 = vpop.f32.mrb[0].mxu0
      %v545 = vadd.f32 0.0, %v544
      %v546 = vpop.f32.mrb[0].mxu0
      %v547 = vpop.f32.mrb[0].mxu0
      %v548 = vadd.f32 0.0, %v547
      %v549 = vpop.f32.mrb[0].mxu0
      %550 = vmatprep.mubr.bf16.mxu0 0
      %551 = vmatmul.mubr.bf16.gmra.mrb[0].mxu0 %v333
      %v552 = vpop.f32.mrb[0].mxu0
      %v553 = vadd.f32 0.0, %v552
      %v554 = vpop.f32.mrb[0].mxu0
      %v555 = vpop.f32.mrb[0].mxu0
      %v556 = vadd.f32 0.0, %v555
      %v557 = vpop.f32.mrb[0].mxu0
      %558 = vdwg.mxu0
      %v559 = vadd.f32 %v202, %v433
      %v560 = vadd.f32 %v202, %v436
      %v561 = vadd.f32 %v202, %v441
      %v562 = vadd.f32 %v202, %v444
      %v563 = vadd.f32 %v202, %v449
      %v564 = vadd.f32 %v202, %v452
      %v565 = vadd.f32 %v202, %v457
      %v566 = vadd.f32 %v202, %v460
      %v567 = vadd.f32 %v202, %v465
      %v568 = vadd.f32 %v202, %v468
      %v569 = vadd.f32 %v202, %v473
      %v570 = vadd.f32 %v202, %v476
      %v571 = vadd.f32 %v202, %v481
      %v572 = vadd.f32 %v202, %v484
      %v573 = vadd.f32 %v202, %v489
      %v574 = vadd.f32 %v202, %v492
      %v575 = vadd.f32 %v202, %v497
      %v576 = vadd.f32 %v202, %v500
      %v577 = vadd.f32 %v202, %v505
      %v578 = vadd.f32 %v202, %v508
      %v579 = vadd.f32 %v202, %v513
      %v580 = vadd.f32 %v202, %v516
      %v581 = vadd.f32 %v202, %v521
      %v582 = vadd.f32 %v202, %v524
      %v583 = vadd.f32 %v202, %v529
      %v584 = vadd.f32 %v202, %v532
      %v585 = vadd.f32 %v202, %v537
      %v586 = vadd.f32 %v202, %v540
      %v587 = vadd.f32 %v202, %v545
      %v588 = vadd.f32 %v202, %v548
      %v589 = vadd.f32 %v202, %v553
      %v590 = vadd.f32 %v202, %v556
      %591 = vst [vmem:[#allocation2] sm:$0xff] %v559
      %592 = vst [vmem:[#allocation2 + $0x8] sm:$0xff] %v560
      %593 = vst [vmem:[#allocation2 + $0x10] sm:$0xff] %v561
      %594 = vst [vmem:[#allocation2 + $0x18] sm:$0xff] %v562
      %595 = vst [vmem:[#allocation2 + $0x20] sm:$0xff] %v563
      %596 = vst [vmem:[#allocation2 + $0x28] sm:$0xff] %v564
      %597 = vst [vmem:[#allocation2 + $0x30] sm:$0xff] %v565
      %598 = vst [vmem:[#allocation2 + $0x38] sm:$0xff] %v566
      %599 = vst [vmem:[#allocation2 + $0x40] sm:$0xff] %v567
      %600 = vst [vmem:[#allocation2 + $0x48] sm:$0xff] %v568
      %601 = vst [vmem:[#allocation2 + $0x50] sm:$0xff] %v569
      %602 = vst [vmem:[#allocation2 + $0x58] sm:$0xff] %v570
      %603 = vst [vmem:[#allocation2 + $0x60] sm:$0xff] %v571
      %604 = vst [vmem:[#allocation2 + $0x68] sm:$0xff] %v572
      %605 = vst [vmem:[#allocation2 + $0x70] sm:$0xff] %v573
      %606 = vst [vmem:[#allocation2 + $0x78] sm:$0xff] %v574
      %607 = vst [vmem:[#allocation2 + $0x80] sm:$0xff] %v575
      %608 = vst [vmem:[#allocation2 + $0x88] sm:$0xff] %v576
      %609 = vst [vmem:[#allocation2 + $0x90] sm:$0xff] %v577
      %610 = vst [vmem:[#allocation2 + $0x98] sm:$0xff] %v578
      %611 = vst [vmem:[#allocation2 + $0xa0] sm:$0xff] %v579
      %612 = vst [vmem:[#allocation2 + $0xa8] sm:$0xff] %v580
      %613 = vst [vmem:[#allocation2 + $0xb0] sm:$0xff] %v581
      %614 = vst [vmem:[#allocation2 + $0xb8] sm:$0xff] %v582
      %615 = vst [vmem:[#allocation2 + $0xc0] sm:$0xff] %v583
      %616 = vst [vmem:[#allocation2 + $0xc8] sm:$0xff] %v584
      %617 = vst [vmem:[#allocation2 + $0xd0] sm:$0xff] %v585
      %618 = vst [vmem:[#allocation2 + $0xd8] sm:$0xff] %v586
      %619 = vst [vmem:[#allocation2 + $0xe0] sm:$0xff] %v587
      %620 = vst [vmem:[#allocation2 + $0xe8] sm:$0xff] %v588
      %621 = vst [vmem:[#allocation2 + $0xf0] sm:$0xff] %v589
      %622 = vst [vmem:[#allocation2 + $0xf8] sm:$0xff] %v590
      %v623 = vld [vmem:[%s205] sm:$0xf]
      %v624 = vld [vmem:[%s205 + $0x4] sm:$0xf]
      %v625 = vld [vmem:[%s205 + $0x8] sm:$0x1]
      %v626 = vld [vmem:[%s205 + $0xc] sm:$0xf]
      %v627 = vld [vmem:[%s205 + $0x10] sm:$0xf]
      %v628 = vld [vmem:[%s205 + $0x14] sm:$0x1]
      %v629 = vld [vmem:[%s205 + $0x18] sm:$0xf]
      %v630 = vld [vmem:[%s205 + $0x1c] sm:$0xf]
      %v631 = vld [vmem:[%s205 + $0x20] sm:$0x1]
      %v632 = vld [vmem:[%s205 + $0x24] sm:$0xf]
      %v633 = vld [vmem:[%s205 + $0x28] sm:$0xf]
      %v634 = vld [vmem:[%s205 + $0x2c] sm:$0x1]
      %v635 = vld [vmem:[%s205 + $0x30] sm:$0xf]
      %v636 = vld [vmem:[%s205 + $0x34] sm:$0xf]
      %v637 = vld [vmem:[%s205 + $0x38] sm:$0x1]
      %v638 = vld [vmem:[%s205 + $0x3c] sm:$0xf]
      %v639 = vld [vmem:[%s205 + $0x40] sm:$0xf]
      %v640 = vld [vmem:[%s205 + $0x44] sm:$0x1]
      %v641 = vld [vmem:[%s205 + $0x48] sm:$0xf]
      %v642 = vld [vmem:[%s205 + $0x4c] sm:$0xf]
      %v643 = vld [vmem:[%s205 + $0x50] sm:$0x1]
      %v644 = vld [vmem:[%s205 + $0x54] sm:$0xf]
      %v645 = vld [vmem:[%s205 + $0x58] sm:$0xf]
      %v646 = vld [vmem:[%s205 + $0x5c] sm:$0x1]
      %v647 = vld [vmem:[%s205 + $0x60] sm:$0xf]
      %v648 = vld [vmem:[%s205 + $0x64] sm:$0xf]
      %v649 = vld [vmem:[%s205 + $0x68] sm:$0x1]
      %v650 = vld [vmem:[%s205 + $0x6c] sm:$0xf]
      %v651 = vld [vmem:[%s205 + $0x70] sm:$0xf]
      %v652 = vld [vmem:[%s205 + $0x74] sm:$0x1]
      %v653 = vld [vmem:[%s205 + $0x78] sm:$0xf]
      %v654 = vld [vmem:[%s205 + $0x7c] sm:$0xf]
      %v655 = vld [vmem:[%s205 + $0x80] sm:$0x1]
      %v656 = vld [vmem:[%s205 + $0x84] sm:$0xf]
      %v657 = vld [vmem:[%s205 + $0x88] sm:$0xf]
      %v658 = vld [vmem:[%s205 + $0x8c] sm:$0x1]
      %v659 = vld [vmem:[%s205 + $0x90] sm:$0xf]
      %v660 = vld [vmem:[%s205 + $0x94] sm:$0xf]
      %v661 = vld [vmem:[%s205 + $0x98] sm:$0x1]
      %v662 = vld [vmem:[%s205 + $0x9c] sm:$0xf]
      %v663 = vld [vmem:[%s205 + $0xa0] sm:$0xf]
      %v664 = vld [vmem:[%s205 + $0xa4] sm:$0x1]
      %v665 = vld [vmem:[%s205 + $0xa8] sm:$0xf]
      %v666 = vld [vmem:[%s205 + $0xac] sm:$0xf]
      %v667 = vld [vmem:[%s205 + $0xb0] sm:$0x1]
      %v668 = vld [vmem:[%s205 + $0xb4] sm:$0xf]
      %v669 = vld [vmem:[%s205 + $0xb8] sm:$0xf]
      %v670 = vld [vmem:[%s205 + $0xbc] sm:$0x1]
      %vm671 = vsmask.f32 3328
      %vm672 = vsmask.f32 7440
      %vm673 = vmor %vm671, %vm672
      %v675 = vshrl.u32 %v623, 16
      %v677 = vrot.slane %v675, 4
      %v678 = vshll.u32 %v623, 16
      %v680 = vrot.slane %v678, 5
      %v681 = vor.u32 %v677, %v680
      %v682 = vrot.slane %v681, 4
      %v684 = vshll.u32 %v624, 16
      %v686 = vrot.slane %v684, 5
      %v687 = vsel %vm673, %v682, %v686
      %v688 = vshrl.u32 %v624, 16
      %v690 = vrot.slane %v688, 4
      %v691 = vor.u32 %v690, %v686
      %v692 = vrot.slane %v691, 4
      %v694 = vshll.u32 %v625, 16
      %v696 = vrot.slane %v694, 5
      %v697 = vsel %vm673, %v692, %v696
      %v699 = vshrl.u32 %v626, 16
      %v701 = vrot.slane %v699, 4
      %v702 = vshll.u32 %v626, 16
      %v704 = vrot.slane %v702, 5
      %v705 = vor.u32 %v701, %v704
      %v706 = vrot.slane %v705, 4
      %v708 = vshll.u32 %v627, 16
      %v710 = vrot.slane %v708, 5
      %v711 = vsel %vm673, %v706, %v710
      %v712 = vshrl.u32 %v627, 16
      %v714 = vrot.slane %v712, 4
      %v715 = vor.u32 %v714, %v710
      %v716 = vrot.slane %v715, 4
      %v718 = vshll.u32 %v628, 16
      %v720 = vrot.slane %v718, 5
      %v721 = vsel %vm673, %v716, %v720
      %v723 = vshrl.u32 %v629, 16
      %v725 = vrot.slane %v723, 4
      %v726 = vshll.u32 %v629, 16
      %v728 = vrot.slane %v726, 5
      %v729 = vor.u32 %v725, %v728
      %v730 = vrot.slane %v729, 4
      %v732 = vshll.u32 %v630, 16
      %v734 = vrot.slane %v732, 5
      %v735 = vsel %vm673, %v730, %v734
      %v736 = vshrl.u32 %v630, 16
      %v738 = vrot.slane %v736, 4
      %v739 = vor.u32 %v738, %v734
      %v740 = vrot.slane %v739, 4
      %v742 = vshll.u32 %v631, 16
      %v744 = vrot.slane %v742, 5
      %v745 = vsel %vm673, %v740, %v744
      %v747 = vshrl.u32 %v632, 16
      %v749 = vrot.slane %v747, 4
      %v750 = vshll.u32 %v632, 16
      %v752 = vrot.slane %v750, 5
      %v753 = vor.u32 %v749, %v752
      %v754 = vrot.slane %v753, 4
      %v756 = vshll.u32 %v633, 16
      %v758 = vrot.slane %v756, 5
      %v759 = vsel %vm673, %v754, %v758
      %v760 = vshrl.u32 %v633, 16
      %v762 = vrot.slane %v760, 4
      %v763 = vor.u32 %v762, %v758
      %v764 = vrot.slane %v763, 4
      %v766 = vshll.u32 %v634, 16
      %v768 = vrot.slane %v766, 5
      %v769 = vsel %vm673, %v764, %v768
      %v771 = vshrl.u32 %v635, 16
      %v773 = vrot.slane %v771, 4
      %v774 = vshll.u32 %v635, 16
      %v776 = vrot.slane %v774, 5
      %v777 = vor.u32 %v773, %v776
      %v778 = vrot.slane %v777, 4
      %v780 = vshll.u32 %v636, 16
      %v782 = vrot.slane %v780, 5
      %v783 = vsel %vm673, %v778, %v782
      %v784 = vshrl.u32 %v636, 16
      %v786 = vrot.slane %v784, 4
      %v787 = vor.u32 %v786, %v782
      %v788 = vrot.slane %v787, 4
      %v790 = vshll.u32 %v637, 16
      %v792 = vrot.slane %v790, 5
      %v793 = vsel %vm673, %v788, %v792
      %v795 = vshrl.u32 %v638, 16
      %v797 = vrot.slane %v795, 4
      %v798 = vshll.u32 %v638, 16
      %v800 = vrot.slane %v798, 5
      %v801 = vor.u32 %v797, %v800
      %v802 = vrot.slane %v801, 4
      %v804 = vshll.u32 %v639, 16
      %v806 = vrot.slane %v804, 5
      %v807 = vsel %vm673, %v802, %v806
      %v808 = vshrl.u32 %v639, 16
      %v810 = vrot.slane %v808, 4
      %v811 = vor.u32 %v810, %v806
      %v812 = vrot.slane %v811, 4
      %v814 = vshll.u32 %v640, 16
      %v816 = vrot.slane %v814, 5
      %v817 = vsel %vm673, %v812, %v816
      %v819 = vshrl.u32 %v641, 16
      %v821 = vrot.slane %v819, 4
      %v822 = vshll.u32 %v641, 16
      %v824 = vrot.slane %v822, 5
      %v825 = vor.u32 %v821, %v824
      %v826 = vrot.slane %v825, 4
      %v828 = vshll.u32 %v642, 16
      %v830 = vrot.slane %v828, 5
      %v831 = vsel %vm673, %v826, %v830
      %v832 = vshrl.u32 %v642, 16
      %v834 = vrot.slane %v832, 4
      %v835 = vor.u32 %v834, %v830
      %v836 = vrot.slane %v835, 4
      %v838 = vshll.u32 %v643, 16
      %v840 = vrot.slane %v838, 5
      %v841 = vsel %vm673, %v836, %v840
      %v843 = vshrl.u32 %v644, 16
      %v845 = vrot.slane %v843, 4
      %v846 = vshll.u32 %v644, 16
      %v848 = vrot.slane %v846, 5
      %v849 = vor.u32 %v845, %v848
      %v850 = vrot.slane %v849, 4
      %v852 = vshll.u32 %v645, 16
      %v854 = vrot.slane %v852, 5
      %v855 = vsel %vm673, %v850, %v854
      %v856 = vshrl.u32 %v645, 16
      %v858 = vrot.slane %v856, 4
      %v859 = vor.u32 %v858, %v854
      %v860 = vrot.slane %v859, 4
      %v862 = vshll.u32 %v646, 16
      %v864 = vrot.slane %v862, 5
      %v865 = vsel %vm673, %v860, %v864
      %v867 = vshrl.u32 %v647, 16
      %v869 = vrot.slane %v867, 4
      %v870 = vshll.u32 %v647, 16
      %v872 = vrot.slane %v870, 5
      %v873 = vor.u32 %v869, %v872
      %v874 = vrot.slane %v873, 4
      %v876 = vshll.u32 %v648, 16
      %v878 = vrot.slane %v876, 5
      %v879 = vsel %vm673, %v874, %v878
      %v880 = vshrl.u32 %v648, 16
      %v882 = vrot.slane %v880, 4
      %v883 = vor.u32 %v882, %v878
      %v884 = vrot.slane %v883, 4
      %v886 = vshll.u32 %v649, 16
      %v888 = vrot.slane %v886, 5
      %v889 = vsel %vm673, %v884, %v888
      %v891 = vshrl.u32 %v650, 16
      %v893 = vrot.slane %v891, 4
      %v894 = vshll.u32 %v650, 16
      %v896 = vrot.slane %v894, 5
      %v897 = vor.u32 %v893, %v896
      %v898 = vrot.slane %v897, 4
      %v900 = vshll.u32 %v651, 16
      %v902 = vrot.slane %v900, 5
      %v903 = vsel %vm673, %v898, %v902
      %v904 = vshrl.u32 %v651, 16
      %v906 = vrot.slane %v904, 4
      %v907 = vor.u32 %v906, %v902
      %v908 = vrot.slane %v907, 4
      %v910 = vshll.u32 %v652, 16
      %v912 = vrot.slane %v910, 5
      %v913 = vsel %vm673, %v908, %v912
      %v915 = vshrl.u32 %v653, 16
      %v917 = vrot.slane %v915, 4
      %v918 = vshll.u32 %v653, 16
      %v920 = vrot.slane %v918, 5
      %v921 = vor.u32 %v917, %v920
      %v922 = vrot.slane %v921, 4
      %v924 = vshll.u32 %v654, 16
      %v926 = vrot.slane %v924, 5
      %v927 = vsel %vm673, %v922, %v926
      %v928 = vshrl.u32 %v654, 16
      %v930 = vrot.slane %v928, 4
      %v931 = vor.u32 %v930, %v926
      %v932 = vrot.slane %v931, 4
      %v934 = vshll.u32 %v655, 16
      %v936 = vrot.slane %v934, 5
      %v937 = vsel %vm673, %v932, %v936
      %v939 = vshrl.u32 %v656, 16
      %v941 = vrot.slane %v939, 4
      %v942 = vshll.u32 %v656, 16
      %v944 = vrot.slane %v942, 5
      %v945 = vor.u32 %v941, %v944
      %v946 = vrot.slane %v945, 4
      %v948 = vshll.u32 %v657, 16
      %v950 = vrot.slane %v948, 5
      %v951 = vsel %vm673, %v946, %v950
      %v952 = vshrl.u32 %v657, 16
      %v954 = vrot.slane %v952, 4
      %v955 = vor.u32 %v954, %v950
      %v956 = vrot.slane %v955, 4
      %v958 = vshll.u32 %v658, 16
      %v960 = vrot.slane %v958, 5
      %v961 = vsel %vm673, %v956, %v960
      %v963 = vshrl.u32 %v659, 16
      %v965 = vrot.slane %v963, 4
      %v966 = vshll.u32 %v659, 16
      %v968 = vrot.slane %v966, 5
      %v969 = vor.u32 %v965, %v968
      %v970 = vrot.slane %v969, 4
      %v972 = vshll.u32 %v660, 16
      %v974 = vrot.slane %v972, 5
      %v975 = vsel %vm673, %v970, %v974
      %v976 = vshrl.u32 %v660, 16
      %v978 = vrot.slane %v976, 4
      %v979 = vor.u32 %v978, %v974
      %v980 = vrot.slane %v979, 4
      %v982 = vshll.u32 %v661, 16
      %v984 = vrot.slane %v982, 5
      %v985 = vsel %vm673, %v980, %v984
      %v987 = vshrl.u32 %v662, 16
      %v989 = vrot.slane %v987, 4
      %v990 = vshll.u32 %v662, 16
      %v992 = vrot.slane %v990, 5
      %v993 = vor.u32 %v989, %v992
      %v994 = vrot.slane %v993, 4
      %v996 = vshll.u32 %v663, 16
      %v998 = vrot.slane %v996, 5
      %v999 = vsel %vm673, %v994, %v998
      %v1000 = vshrl.u32 %v663, 16
      %v1002 = vrot.slane %v1000, 4
      %v1003 = vor.u32 %v1002, %v998
      %v1004 = vrot.slane %v1003, 4
      %v1006 = vshll.u32 %v664, 16
      %v1008 = vrot.slane %v1006, 5
      %v1009 = vsel %vm673, %v1004, %v1008
      %v1011 = vshrl.u32 %v665, 16
      %v1013 = vrot.slane %v1011, 4
      %v1014 = vshll.u32 %v665, 16
      %v1016 = vrot.slane %v1014, 5
      %v1017 = vor.u32 %v1013, %v1016
      %v1018 = vrot.slane %v1017, 4
      %v1020 = vshll.u32 %v666, 16
      %v1022 = vrot.slane %v1020, 5
      %v1023 = vsel %vm673, %v1018, %v1022
      %v1024 = vshrl.u32 %v666, 16
      %v1026 = vrot.slane %v1024, 4
      %v1027 = vor.u32 %v1026, %v1022
      %v1028 = vrot.slane %v1027, 4
      %v1030 = vshll.u32 %v667, 16
      %v1032 = vrot.slane %v1030, 5
      %v1033 = vsel %vm673, %v1028, %v1032
      %v1035 = vshrl.u32 %v668, 16
      %v1037 = vrot.slane %v1035, 4
      %v1038 = vshll.u32 %v668, 16
      %v1040 = vrot.slane %v1038, 5
      %v1041 = vor.u32 %v1037, %v1040
      %v1042 = vrot.slane %v1041, 4
      %v1044 = vshll.u32 %v669, 16
      %v1046 = vrot.slane %v1044, 5
      %v1047 = vsel %vm673, %v1042, %v1046
      %v1048 = vshrl.u32 %v669, 16
      %v1050 = vrot.slane %v1048, 4
      %v1051 = vor.u32 %v1050, %v1046
      %v1052 = vrot.slane %v1051, 4
      %v1054 = vshll.u32 %v670, 16
      %v1056 = vrot.slane %v1054, 5
      %v1057 = vsel %vm673, %v1052, %v1056
      %v1058 = vld [vmem:[%s1 + $0x4] sm:$0xff]
      %v1059 = vld [vmem:[%s1 + $0x44] sm:$0xff]
      %v1060 = vld [vmem:[%s1 + $0x84] sm:$0xff]
      %v1061 = vld [vmem:[%s1 + $0xc4] sm:$0xff]
      %v1062 = vld [vmem:[%s1 + $0x104] sm:$0xff]
      %v1063 = vld [vmem:[%s1 + $0x144] sm:$0xff]
      %v1064 = vld [vmem:[%s1 + $0x184] sm:$0xff]
      %v1065 = vld [vmem:[%s1 + $0x1c4] sm:$0xff]
      %v1066 = vld [vmem:[%s1 + $0x204] sm:$0xff]
      %v1067 = vld [vmem:[%s1 + $0x244] sm:$0xff]
      %v1068 = vld [vmem:[%s1 + $0x284] sm:$0xff]
      %v1069 = vld [vmem:[%s1 + $0x2c4] sm:$0xff]
      %v1070 = vld [vmem:[%s1 + $0x304] sm:$0xff]
      %v1071 = vld [vmem:[%s1 + $0x344] sm:$0xff]
      %v1072 = vld [vmem:[%s1 + $0x384] sm:$0xff]
      %v1073 = vld [vmem:[%s1 + $0x3c4] sm:$0xff]
      %v1074 = vunpack.c.l.b16 %v687
      %v1075 = vunpack.c.l.b16 %v697
      %v1076 = vunpack.c.l.b16 %v711
      %v1077 = vunpack.c.l.b16 %v721
      %v1078 = vunpack.c.l.b16 %v735
      %v1079 = vunpack.c.l.b16 %v745
      %v1080 = vunpack.c.l.b16 %v759
      %v1081 = vunpack.c.l.b16 %v769
      %v1082 = vunpack.c.l.b16 %v783
      %v1083 = vunpack.c.l.b16 %v793
      %v1084 = vunpack.c.l.b16 %v807
      %v1085 = vunpack.c.l.b16 %v817
      %v1086 = vunpack.c.l.b16 %v831
      %v1087 = vunpack.c.l.b16 %v841
      %v1088 = vunpack.c.l.b16 %v855
      %v1089 = vunpack.c.l.b16 %v865
      %v1090 = vunpack.c.l.b16 %v879
      %v1091 = vunpack.c.l.b16 %v889
      %v1092 = vunpack.c.l.b16 %v903
      %v1093 = vunpack.c.l.b16 %v913
      %v1094 = vunpack.c.l.b16 %v927
      %v1095 = vunpack.c.l.b16 %v937
      %v1096 = vunpack.c.l.b16 %v951
      %v1097 = vunpack.c.l.b16 %v961
      %v1098 = vunpack.c.l.b16 %v975
      %v1099 = vunpack.c.l.b16 %v985
      %v1100 = vunpack.c.l.b16 %v999
      %v1101 = vunpack.c.l.b16 %v1009
      %v1102 = vunpack.c.l.b16 %v1023
      %v1103 = vunpack.c.l.b16 %v1033
      %v1104 = vunpack.c.l.b16 %v1047
      %v1105 = vunpack.c.l.b16 %v1057
      %v1106 = vpack.c.b16 %v1075, %v1074
      %v1107 = vpack.c.b16 %v1077, %v1076
      %v1108 = vpack.c.b16 %v1079, %v1078
      %v1109 = vpack.c.b16 %v1081, %v1080
      %v1110 = vpack.c.b16 %v1083, %v1082
      %v1111 = vpack.c.b16 %v1085, %v1084
      %v1112 = vpack.c.b16 %v1087, %v1086
      %v1113 = vpack.c.b16 %v1089, %v1088
      %v1114 = vpack.c.b16 %v1091, %v1090
      %v1115 = vpack.c.b16 %v1093, %v1092
      %v1116 = vpack.c.b16 %v1095, %v1094
      %v1117 = vpack.c.b16 %v1097, %v1096
      %v1118 = vpack.c.b16 %v1099, %v1098
      %v1119 = vpack.c.b16 %v1101, %v1100
      %v1120 = vpack.c.b16 %v1103, %v1102
      %v1121 = vpack.c.b16 %v1105, %v1104
      %v1154 = vunpack.c.l.b16 %v1058
      %v1155 = vunpack.c.h.b16 %v1058
      %v1156 = vunpack.c.l.b16 %v1059
      %v1157 = vunpack.c.h.b16 %v1059
      %v1158 = vunpack.c.l.b16 %v1060
      %v1159 = vunpack.c.h.b16 %v1060
      %v1160 = vunpack.c.l.b16 %v1061
      %v1161 = vunpack.c.h.b16 %v1061
      %v1162 = vunpack.c.l.b16 %v1062
      %v1163 = vunpack.c.h.b16 %v1062
      %v1164 = vunpack.c.l.b16 %v1063
      %v1165 = vunpack.c.h.b16 %v1063
      %v1166 = vunpack.c.l.b16 %v1064
      %v1167 = vunpack.c.h.b16 %v1064
      %v1168 = vunpack.c.l.b16 %v1065
      %v1169 = vunpack.c.h.b16 %v1065
      %v1170 = vunpack.c.l.b16 %v1066
      %v1171 = vunpack.c.h.b16 %v1066
      %v1172 = vunpack.c.l.b16 %v1067
      %v1173 = vunpack.c.h.b16 %v1067
      %v1174 = vunpack.c.l.b16 %v1068
      %v1175 = vunpack.c.h.b16 %v1068
      %v1176 = vunpack.c.l.b16 %v1069
      %v1177 = vunpack.c.h.b16 %v1069
      %v1178 = vunpack.c.l.b16 %v1070
      %v1179 = vunpack.c.h.b16 %v1070
      %v1180 = vunpack.c.l.b16 %v1071
      %v1181 = vunpack.c.h.b16 %v1071
      %v1182 = vunpack.c.l.b16 %v1072
      %v1183 = vunpack.c.h.b16 %v1072
      %v1184 = vunpack.c.l.b16 %v1073
      %v1185 = vunpack.c.h.b16 %v1073
      %v1186 = vpack.c.b16 %v1156, %v1154
      %v1187 = vpack.c.b16 %v1157, %v1155
      %v1188 = vpack.c.b16 %v1160, %v1158
      %v1189 = vpack.c.b16 %v1161, %v1159
      %v1190 = vpack.c.b16 %v1164, %v1162
      %v1191 = vpack.c.b16 %v1165, %v1163
      %v1192 = vpack.c.b16 %v1168, %v1166
      %v1193 = vpack.c.b16 %v1169, %v1167
      %v1194 = vpack.c.b16 %v1172, %v1170
      %v1195 = vpack.c.b16 %v1173, %v1171
      %v1196 = vpack.c.b16 %v1176, %v1174
      %v1197 = vpack.c.b16 %v1177, %v1175
      %v1198 = vpack.c.b16 %v1180, %v1178
      %v1199 = vpack.c.b16 %v1181, %v1179
      %v1200 = vpack.c.b16 %v1184, %v1182
      %v1201 = vpack.c.b16 %v1185, %v1183
      %1218 = vmatprep.subr.bf16.mxu0 %v1187
      %1219 = vmatpush1.bf16.msra.mxu0 %v1186
      %1220 = vmatprep.subr.bf16.mxu0 %v1189
      %1221 = vmatpush1.bf16.msra.mxu0 %v1188
      %1222 = vmatprep.subr.bf16.mxu0 %v1191
      %1223 = vmatpush1.bf16.msra.mxu0 %v1190
      %1224 = vmatprep.subr.bf16.mxu0 %v1193
      %1225 = vmatpush1.bf16.msra.mxu0 %v1192
      %1226 = vmatprep.subr.bf16.mxu0 %v1195
      %1227 = vmatpush1.bf16.msra.mxu0 %v1194
      %1228 = vmatprep.subr.bf16.mxu0 %v1197
      %1229 = vmatpush1.bf16.msra.mxu0 %v1196
      %1230 = vmatprep.subr.bf16.mxu0 %v1199
      %1231 = vmatpush1.bf16.msra.mxu0 %v1198
      %1232 = vmatprep.subr.bf16.mxu0 %v1201
      %1233 = vmatpush1.bf16.msra.mxu0 %v1200
      %1234 = vmatprep.subr.bf16.mxu0 0
      %1235 = vmatpush1.bf16.msra.mxu0 0
      %1236 = vmatprep.subr.bf16.mxu0 0
      %1237 = vmatpush1.bf16.msra.mxu0 0
      %1238 = vmatprep.subr.bf16.mxu0 0
      %1239 = vmatpush1.bf16.msra.mxu0 0
      %1240 = vmatprep.subr.bf16.mxu0 0
      %1241 = vmatpush1.bf16.msra.mxu0 0
      %1242 = vmatprep.subr.bf16.mxu0 0
      %1243 = vmatpush1.bf16.msra.mxu0 0
      %1244 = vmatprep.subr.bf16.mxu0 0
      %1245 = vmatpush1.bf16.msra.mxu0 0
      %1246 = vmatprep.subr.bf16.mxu0 0
      %1247 = vmatpush1.bf16.msra.mxu0 0
      %1248 = vmatprep.subr.bf16.mxu0 0
      %1249 = vmatpush1.bf16.msra.mxu0 0
      %1250 = vmatprep.mubr.bf16.mxu0 0
      %1251 = vmatmul.mubr.bf16.gmra.mrb[0].mxu0 %v1106
      %v1252 = vpop.f32.mrb[0].mxu0
      %v1253 = vadd.f32 0.0, %v1252
      %v1254 = vpop.f32.mrb[0].mxu0
      %v1255 = vadd.f32 0.0, %v1254
      %v1256 = vpop.f32.mrb[0].mxu0
      %v1257 = vadd.f32 0.0, %v1256
      %v1258 = vpop.f32.mrb[0].mxu0
      %v1259 = vadd.f32 0.0, %v1258
      %1260 = vmatprep.mubr.bf16.mxu0 0
      %1261 = vmatmul.mubr.bf16.gmra.mrb[0].mxu0 %v1107
      %v1262 = vpop.f32.mrb[0].mxu0
      %v1263 = vadd.f32 0.0, %v1262
      %v1264 = vpop.f32.mrb[0].mxu0
      %v1265 = vadd.f32 0.0, %v1264
      %v1266 = vpop.f32.mrb[0].mxu0
      %v1267 = vadd.f32 0.0, %v1266
      %v1268 = vpop.f32.mrb[0].mxu0
      %v1269 = vadd.f32 0.0, %v1268
      %1270 = vmatprep.mubr.bf16.mxu0 0
      %1271 = vmatmul.mubr.bf16.gmra.mrb[0].mxu0 %v1108
      %v1272 = vpop.f32.mrb[0].mxu0
      %v1273 = vadd.f32 0.0, %v1272
      %v1274 = vpop.f32.mrb[0].mxu0
      %v1275 = vadd.f32 0.0, %v1274
      %v1276 = vpop.f32.mrb[0].mxu0
      %v1277 = vadd.f32 0.0, %v1276
      %v1278 = vpop.f32.mrb[0].mxu0
      %v1279 = vadd.f32 0.0, %v1278
      %1280 = vmatprep.mubr.bf16.mxu0 0
      %1281 = vmatmul.mubr.bf16.gmra.mrb[0].mxu0 %v1109
      %v1282 = vpop.f32.mrb[0].mxu0
      %v1283 = vadd.f32 0.0, %v1282
      %v1284 = vpop.f32.mrb[0].mxu0
      %v1285 = vadd.f32 0.0, %v1284
      %v1286 = vpop.f32.mrb[0].mxu0
      %v1287 = vadd.f32 0.0, %v1286
      %v1288 = vpop.f32.mrb[0].mxu0
      %v1289 = vadd.f32 0.0, %v1288
      %1290 = vmatprep.mubr.bf16.mxu0 0
      %1291 = vmatmul.mubr.bf16.gmra.mrb[0].mxu0 %v1110
      %v1292 = vpop.f32.mrb[0].mxu0
      %v1293 = vadd.f32 0.0, %v1292
      %v1294 = vpop.f32.mrb[0].mxu0
      %v1295 = vadd.f32 0.0, %v1294
      %v1296 = vpop.f32.mrb[0].mxu0
      %v1297 = vadd.f32 0.0, %v1296
      %v1298 = vpop.f32.mrb[0].mxu0
      %v1299 = vadd.f32 0.0, %v1298
      %1300 = vmatprep.mubr.bf16.mxu0 0
      %1301 = vmatmul.mubr.bf16.gmra.mrb[0].mxu0 %v1111
      %v1302 = vpop.f32.mrb[0].mxu0
      %v1303 = vadd.f32 0.0, %v1302
      %v1304 = vpop.f32.mrb[0].mxu0
      %v1305 = vadd.f32 0.0, %v1304
      %v1306 = vpop.f32.mrb[0].mxu0
      %v1307 = vadd.f32 0.0, %v1306
      %v1308 = vpop.f32.mrb[0].mxu0
      %v1309 = vadd.f32 0.0, %v1308
      %1310 = vmatprep.mubr.bf16.mxu0 0
      %1311 = vmatmul.mubr.bf16.gmra.mrb[0].mxu0 %v1112
      %v1312 = vpop.f32.mrb[0].mxu0
      %v1313 = vadd.f32 0.0, %v1312
      %v1314 = vpop.f32.mrb[0].mxu0
      %v1315 = vadd.f32 0.0, %v1314
      %v1316 = vpop.f32.mrb[0].mxu0
      %v1317 = vadd.f32 0.0, %v1316
      %v1318 = vpop.f32.mrb[0].mxu0
      %v1319 = vadd.f32 0.0, %v1318
      %1320 = vmatprep.mubr.bf16.mxu0 0
      %1321 = vmatmul.mubr.bf16.gmra.mrb[0].mxu0 %v1113
      %v1322 = vpop.f32.mrb[0].mxu0
      %v1323 = vadd.f32 0.0, %v1322
      %v1324 = vpop.f32.mrb[0].mxu0
      %v1325 = vadd.f32 0.0, %v1324
      %v1326 = vpop.f32.mrb[0].mxu0
      %v1327 = vadd.f32 0.0, %v1326
      %v1328 = vpop.f32.mrb[0].mxu0
      %v1329 = vadd.f32 0.0, %v1328
      %1330 = vmatprep.mubr.bf16.mxu0 0
      %1331 = vmatmul.mubr.bf16.gmra.mrb[0].mxu0 %v1114
      %v1332 = vpop.f32.mrb[0].mxu0
      %v1333 = vadd.f32 0.0, %v1332
      %v1334 = vpop.f32.mrb[0].mxu0
      %v1335 = vadd.f32 0.0, %v1334
      %v1336 = vpop.f32.mrb[0].mxu0
      %v1337 = vadd.f32 0.0, %v1336
      %v1338 = vpop.f32.mrb[0].mxu0
      %v1339 = vadd.f32 0.0, %v1338
      %1340 = vmatprep.mubr.bf16.mxu0 0
      %1341 = vmatmul.mubr.bf16.gmra.mrb[0].mxu0 %v1115
      %v1342 = vpop.f32.mrb[0].mxu0
      %v1343 = vadd.f32 0.0, %v1342
      %v1344 = vpop.f32.mrb[0].mxu0
      %v1345 = vadd.f32 0.0, %v1344
      %v1346 = vpop.f32.mrb[0].mxu0
      %v1347 = vadd.f32 0.0, %v1346
      %v1348 = vpop.f32.mrb[0].mxu0
      %v1349 = vadd.f32 0.0, %v1348
      %1350 = vmatprep.mubr.bf16.mxu0 0
      %1351 = vmatmul.mubr.bf16.gmra.mrb[0].mxu0 %v1116
      %v1352 = vpop.f32.mrb[0].mxu0
      %v1353 = vadd.f32 0.0, %v1352
      %v1354 = vpop.f32.mrb[0].mxu0
      %v1355 = vadd.f32 0.0, %v1354
      %v1356 = vpop.f32.mrb[0].mxu0
      %v1357 = vadd.f32 0.0, %v1356
      %v1358 = vpop.f32.mrb[0].mxu0
      %v1359 = vadd.f32 0.0, %v1358
      %1360 = vmatprep.mubr.bf16.mxu0 0
      %1361 = vmatmul.mubr.bf16.gmra.mrb[0].mxu0 %v1117
      %v1362 = vpop.f32.mrb[0].mxu0
      %v1363 = vadd.f32 0.0, %v1362
      %v1364 = vpop.f32.mrb[0].mxu0
      %v1365 = vadd.f32 0.0, %v1364
      %v1366 = vpop.f32.mrb[0].mxu0
      %v1367 = vadd.f32 0.0, %v1366
      %v1368 = vpop.f32.mrb[0].mxu0
      %v1369 = vadd.f32 0.0, %v1368
      %1370 = vmatprep.mubr.bf16.mxu0 0
      %1371 = vmatmul.mubr.bf16.gmra.mrb[0].mxu0 %v1118
      %v1372 = vpop.f32.mrb[0].mxu0
      %v1373 = vadd.f32 0.0, %v1372
      %v1374 = vpop.f32.mrb[0].mxu0
      %v1375 = vadd.f32 0.0, %v1374
      %v1376 = vpop.f32.mrb[0].mxu0
      %v1377 = vadd.f32 0.0, %v1376
      %v1378 = vpop.f32.mrb[0].mxu0
      %v1379 = vadd.f32 0.0, %v1378
      %1380 = vmatprep.mubr.bf16.mxu0 0
      %1381 = vmatmul.mubr.bf16.gmra.mrb[0].mxu0 %v1119
      %v1382 = vpop.f32.mrb[0].mxu0
      %v1383 = vadd.f32 0.0, %v1382
      %v1384 = vpop.f32.mrb[0].mxu0
      %v1385 = vadd.f32 0.0, %v1384
      %v1386 = vpop.f32.mrb[0].mxu0
      %v1387 = vadd.f32 0.0, %v1386
      %v1388 = vpop.f32.mrb[0].mxu0
      %v1389 = vadd.f32 0.0, %v1388
      %1390 = vmatprep.mubr.bf16.mxu0 0
      %1391 = vmatmul.mubr.bf16.gmra.mrb[0].mxu0 %v1120
      %v1392 = vpop.f32.mrb[0].mxu0
      %v1393 = vadd.f32 0.0, %v1392
      %v1394 = vpop.f32.mrb[0].mxu0
      %v1395 = vadd.f32 0.0, %v1394
      %v1396 = vpop.f32.mrb[0].mxu0
      %v1397 = vadd.f32 0.0, %v1396
      %v1398 = vpop.f32.mrb[0].mxu0
      %v1399 = vadd.f32 0.0, %v1398
      %1400 = vmatprep.mubr.bf16.mxu0 0
      %1401 = vmatmul.mubr.bf16.gmra.mrb[0].mxu0 %v1121
      %v1402 = vpop.f32.mrb[0].mxu0
      %v1403 = vadd.f32 0.0, %v1402
      %v1404 = vpop.f32.mrb[0].mxu0
      %v1405 = vadd.f32 0.0, %v1404
      %v1406 = vpop.f32.mrb[0].mxu0
      %v1407 = vadd.f32 0.0, %v1406
      %v1408 = vpop.f32.mrb[0].mxu0
      %v1409 = vadd.f32 0.0, %v1408
      %1410 = vdwg.mxu0
      %v1411 = vld [vmem:[#allocation2] sm:$0xff]
      %v1412 = vld [vmem:[#allocation2 + $0x8] sm:$0xff]
      %v1413 = vld [vmem:[#allocation2 + $0x10] sm:$0xff]
      %v1414 = vld [vmem:[#allocation2 + $0x18] sm:$0xff]
      %v1415 = vld [vmem:[#allocation2 + $0x20] sm:$0xff]
      %v1416 = vld [vmem:[#allocation2 + $0x28] sm:$0xff]
      %v1417 = vld [vmem:[#allocation2 + $0x30] sm:$0xff]
      %v1418 = vld [vmem:[#allocation2 + $0x38] sm:$0xff]
      %v1419 = vld [vmem:[#allocation2 + $0x40] sm:$0xff]
      %v1420 = vld [vmem:[#allocation2 + $0x48] sm:$0xff]
      %v1421 = vld [vmem:[#allocation2 + $0x50] sm:$0xff]
      %v1422 = vld [vmem:[#allocation2 + $0x58] sm:$0xff]
      %v1423 = vld [vmem:[#allocation2 + $0x60] sm:$0xff]
      %v1424 = vld [vmem:[#allocation2 + $0x68] sm:$0xff]
      %v1425 = vld [vmem:[#allocation2 + $0x70] sm:$0xff]
      %v1426 = vld [vmem:[#allocation2 + $0x78] sm:$0xff]
      %v1427 = vld [vmem:[#allocation2 + $0x80] sm:$0xff]
      %v1428 = vld [vmem:[#allocation2 + $0x88] sm:$0xff]
      %v1429 = vld [vmem:[#allocation2 + $0x90] sm:$0xff]
      %v1430 = vld [vmem:[#allocation2 + $0x98] sm:$0xff]
      %v1431 = vld [vmem:[#allocation2 + $0xa0] sm:$0xff]
      %v1432 = vld [vmem:[#allocation2 + $0xa8] sm:$0xff]
      %v1433 = vld [vmem:[#allocation2 + $0xb0] sm:$0xff]
      %v1434 = vld [vmem:[#allocation2 + $0xb8] sm:$0xff]
      %v1435 = vld [vmem:[#allocation2 + $0xc0] sm:$0xff]
      %v1436 = vld [vmem:[#allocation2 + $0xc8] sm:$0xff]
      %v1437 = vld [vmem:[#allocation2 + $0xd0] sm:$0xff]
      %v1438 = vld [vmem:[#allocation2 + $0xd8] sm:$0xff]
      %v1439 = vld [vmem:[#allocation2 + $0xe0] sm:$0xff]
      %v1440 = vld [vmem:[#allocation2 + $0xe8] sm:$0xff]
      %v1441 = vld [vmem:[#allocation2 + $0xf0] sm:$0xff]
      %v1442 = vld [vmem:[#allocation2 + $0xf8] sm:$0xff]
      %v1443 = vadd.f32 %v1411, %v1253
      %v1444 = vadd.f32 %v1412, %v1257
      %v1445 = vadd.f32 %v1413, %v1263
      %v1446 = vadd.f32 %v1414, %v1267
      %v1447 = vadd.f32 %v1415, %v1273
      %v1448 = vadd.f32 %v1416, %v1277
      %v1449 = vadd.f32 %v1417, %v1283
      %v1450 = vadd.f32 %v1418, %v1287
      %v1451 = vadd.f32 %v1419, %v1293
      %v1452 = vadd.f32 %v1420, %v1297
      %v1453 = vadd.f32 %v1421, %v1303
      %v1454 = vadd.f32 %v1422, %v1307
      %v1455 = vadd.f32 %v1423, %v1313
      %v1456 = vadd.f32 %v1424, %v1317
      %v1457 = vadd.f32 %v1425, %v1323
      %v1458 = vadd.f32 %v1426, %v1327
      %v1459 = vadd.f32 %v1427, %v1333
      %v1460 = vadd.f32 %v1428, %v1337
      %v1461 = vadd.f32 %v1429, %v1343
      %v1462 = vadd.f32 %v1430, %v1347
      %v1463 = vadd.f32 %v1431, %v1353
      %v1464 = vadd.f32 %v1432, %v1357
      %v1465 = vadd.f32 %v1433, %v1363
      %v1466 = vadd.f32 %v1434, %v1367
      %v1467 = vadd.f32 %v1435, %v1373
      %v1468 = vadd.f32 %v1436, %v1377
      %v1469 = vadd.f32 %v1437, %v1383
      %v1470 = vadd.f32 %v1438, %v1387
      %v1471 = vadd.f32 %v1439, %v1393
      %v1472 = vadd.f32 %v1440, %v1397
      %v1473 = vadd.f32 %v1441, %v1403
      %v1474 = vadd.f32 %v1442, %v1407
      %1475 = vst [vmem:[#allocation2] sm:$0xff] %v1443
      %1476 = vst [vmem:[#allocation2 + $0x8] sm:$0xff] %v1444
      %1477 = vst [vmem:[#allocation2 + $0x10] sm:$0xff] %v1445
      %1478 = vst [vmem:[#allocation2 + $0x18] sm:$0xff] %v1446
      %1479 = vst [vmem:[#allocation2 + $0x20] sm:$0xff] %v1447
      %1480 = vst [vmem:[#allocation2 + $0x28] sm:$0xff] %v1448
      %1481 = vst [vmem:[#allocation2 + $0x30] sm:$0xff] %v1449
      %1482 = vst [vmem:[#allocation2 + $0x38] sm:$0xff] %v1450
      %1483 = vst [vmem:[#allocation2 + $0x40] sm:$0xff] %v1451
      %1484 = vst [vmem:[#allocation2 + $0x48] sm:$0xff] %v1452
      %1485 = vst [vmem:[#allocation2 + $0x50] sm:$0xff] %v1453
      %1486 = vst [vmem:[#allocation2 + $0x58] sm:$0xff] %v1454
      %1487 = vst [vmem:[#allocation2 + $0x60] sm:$0xff] %v1455
      %1488 = vst [vmem:[#allocation2 + $0x68] sm:$0xff] %v1456
      %1489 = vst [vmem:[#allocation2 + $0x70] sm:$0xff] %v1457
      %1490 = vst [vmem:[#allocation2 + $0x78] sm:$0xff] %v1458
      %1491 = vst [vmem:[#allocation2 + $0x80] sm:$0xff] %v1459
      %1492 = vst [vmem:[#allocation2 + $0x88] sm:$0xff] %v1460
      %1493 = vst [vmem:[#allocation2 + $0x90] sm:$0xff] %v1461
      %1494 = vst [vmem:[#allocation2 + $0x98] sm:$0xff] %v1462
      %1495 = vst [vmem:[#allocation2 + $0xa0] sm:$0xff] %v1463
      %1496 = vst [vmem:[#allocation2 + $0xa8] sm:$0xff] %v1464
      %1497 = vst [vmem:[#allocation2 + $0xb0] sm:$0xff] %v1465
      %1498 = vst [vmem:[#allocation2 + $0xb8] sm:$0xff] %v1466
      %1499 = vst [vmem:[#allocation2 + $0xc0] sm:$0xff] %v1467
      %1500 = vst [vmem:[#allocation2 + $0xc8] sm:$0xff] %v1468
      %1501 = vst [vmem:[#allocation2 + $0xd0] sm:$0xff] %v1469
      %1502 = vst [vmem:[#allocation2 + $0xd8] sm:$0xff] %v1470
      %1503 = vst [vmem:[#allocation2 + $0xe0] sm:$0xff] %v1471
      %1504 = vst [vmem:[#allocation2 + $0xe8] sm:$0xff] %v1472
      %1505 = vst [vmem:[#allocation2 + $0xf0] sm:$0xff] %v1473
      %1506 = vst [vmem:[#allocation2 + $0xf8] sm:$0xff] %v1474
      %v1507 = vadd.f32 %v202, %v1255
      %v1508 = vadd.f32 %v202, %v1259
      %v1509 = vadd.f32 %v202, %v1265
      %v1510 = vadd.f32 %v202, %v1269
      %v1511 = vadd.f32 %v202, %v1275
      %v1512 = vadd.f32 %v202, %v1279
      %v1513 = vadd.f32 %v202, %v1285
      %v1514 = vadd.f32 %v202, %v1289
      %v1515 = vadd.f32 %v202, %v1295
      %v1516 = vadd.f32 %v202, %v1299
      %v1517 = vadd.f32 %v202, %v1305
      %v1518 = vadd.f32 %v202, %v1309
      %v1519 = vadd.f32 %v202, %v1315
      %v1520 = vadd.f32 %v202, %v1319
      %v1521 = vadd.f32 %v202, %v1325
      %v1522 = vadd.f32 %v202, %v1329
      %v1523 = vadd.f32 %v202, %v1335
      %v1524 = vadd.f32 %v202, %v1339
      %v1525 = vadd.f32 %v202, %v1345
      %v1526 = vadd.f32 %v202, %v1349
      %v1527 = vadd.f32 %v202, %v1355
      %v1528 = vadd.f32 %v202, %v1359
      %v1529 = vadd.f32 %v202, %v1365
      %v1530 = vadd.f32 %v202, %v1369
      %v1531 = vadd.f32 %v202, %v1375
      %v1532 = vadd.f32 %v202, %v1379
      %v1533 = vadd.f32 %v202, %v1385
      %v1534 = vadd.f32 %v202, %v1389
      %v1535 = vadd.f32 %v202, %v1395
      %v1536 = vadd.f32 %v202, %v1399
      %v1537 = vadd.f32 %v202, %v1405
      %v1538 = vadd.f32 %v202, %v1409
      %s1539 = scalar_lea.vmem [#allocation2], 256
      %1540 = vst [vmem:[%s1539] sm:$0xff] %v1507
      %1541 = vst [vmem:[%s1539 + $0x8] sm:$0xff] %v1508
      %1542 = vst [vmem:[%s1539 + $0x10] sm:$0xff] %v1509
      %1543 = vst [vmem:[%s1539 + $0x18] sm:$0xff] %v1510
      %1544 = vst [vmem:[%s1539 + $0x20] sm:$0xff] %v1511
      %1545 = vst [vmem:[%s1539 + $0x28] sm:$0xff] %v1512
      %1546 = vst [vmem:[%s1539 + $0x30] sm:$0xff] %v1513
      %1547 = vst [vmem:[%s1539 + $0x38] sm:$0xff] %v1514
      %1548 = vst [vmem:[%s1539 + $0x40] sm:$0xff] %v1515
      %1549 = vst [vmem:[%s1539 + $0x48] sm:$0xff] %v1516
      %1550 = vst [vmem:[%s1539 + $0x50] sm:$0xff] %v1517
      %1551 = vst [vmem:[%s1539 + $0x58] sm:$0xff] %v1518
      %1552 = vst [vmem:[%s1539 + $0x60] sm:$0xff] %v1519
      %1553 = vst [vmem:[%s1539 + $0x68] sm:$0xff] %v1520
      %1554 = vst [vmem:[%s1539 + $0x70] sm:$0xff] %v1521
      %1555 = vst [vmem:[%s1539 + $0x78] sm:$0xff] %v1522
      %1556 = vst [vmem:[%s1539 + $0x80] sm:$0xff] %v1523
      %1557 = vst [vmem:[%s1539 + $0x88] sm:$0xff] %v1524
      %1558 = vst [vmem:[%s1539 + $0x90] sm:$0xff] %v1525
      %1559 = vst [vmem:[%s1539 + $0x98] sm:$0xff] %v1526
      %1560 = vst [vmem:[%s1539 + $0xa0] sm:$0xff] %v1527
      %1561 = vst [vmem:[%s1539 + $0xa8] sm:$0xff] %v1528
      %1562 = vst [vmem:[%s1539 + $0xb0] sm:$0xff] %v1529
      %1563 = vst [vmem:[%s1539 + $0xb8] sm:$0xff] %v1530
      %1564 = vst [vmem:[%s1539 + $0xc0] sm:$0xff] %v1531
      %1565 = vst [vmem:[%s1539 + $0xc8] sm:$0xff] %v1532
      %1566 = vst [vmem:[%s1539 + $0xd0] sm:$0xff] %v1533
      %1567 = vst [vmem:[%s1539 + $0xd8] sm:$0xff] %v1534
      %1568 = vst [vmem:[%s1539 + $0xe0] sm:$0xff] %v1535
      %1569 = vst [vmem:[%s1539 + $0xe8] sm:$0xff] %v1536
      %1570 = vst [vmem:[%s1539 + $0xf0] sm:$0xff] %v1537
      %1571 = vst [vmem:[%s1539 + $0xf8] sm:$0xff] %v1538
      %v1572 = vld [vmem:[%s205] sm:$0xe]
      %v1573 = vld [vmem:[%s205 + $0x4] sm:$0xf]
      %v1574 = vld [vmem:[%s205 + $0x8] sm:$0x1]
      %v1575 = vld [vmem:[%s205 + $0xc] sm:$0xe]
      %v1576 = vld [vmem:[%s205 + $0x10] sm:$0xf]
      %v1577 = vld [vmem:[%s205 + $0x14] sm:$0x1]
      %v1578 = vld [vmem:[%s205 + $0x18] sm:$0xe]
      %v1579 = vld [vmem:[%s205 + $0x1c] sm:$0xf]
      %v1580 = vld [vmem:[%s205 + $0x20] sm:$0x1]
      %v1581 = vld [vmem:[%s205 + $0x24] sm:$0xe]
      %v1582 = vld [vmem:[%s205 + $0x28] sm:$0xf]
      %v1583 = vld [vmem:[%s205 + $0x2c] sm:$0x1]
      %v1584 = vld [vmem:[%s205 + $0x30] sm:$0xe]
      %v1585 = vld [vmem:[%s205 + $0x34] sm:$0xf]
      %v1586 = vld [vmem:[%s205 + $0x38] sm:$0x1]
      %v1587 = vld [vmem:[%s205 + $0x3c] sm:$0xe]
      %v1588 = vld [vmem:[%s205 + $0x40] sm:$0xf]
      %v1589 = vld [vmem:[%s205 + $0x44] sm:$0x1]
      %v1590 = vld [vmem:[%s205 + $0x48] sm:$0xe]
      %v1591 = vld [vmem:[%s205 + $0x4c] sm:$0xf]
      %v1592 = vld [vmem:[%s205 + $0x50] sm:$0x1]
      %v1593 = vld [vmem:[%s205 + $0x54] sm:$0xe]
      %v1594 = vld [vmem:[%s205 + $0x58] sm:$0xf]
      %v1595 = vld [vmem:[%s205 + $0x5c] sm:$0x1]
      %v1596 = vld [vmem:[%s205 + $0x60] sm:$0xe]
      %v1597 = vld [vmem:[%s205 + $0x64] sm:$0xf]
      %v1598 = vld [vmem:[%s205 + $0x68] sm:$0x1]
      %v1599 = vld [vmem:[%s205 + $0x6c] sm:$0xe]
      %v1600 = vld [vmem:[%s205 + $0x70] sm:$0xf]
      %v1601 = vld [vmem:[%s205 + $0x74] sm:$0x1]
      %v1602 = vld [vmem:[%s205 + $0x78] sm:$0xe]
      %v1603 = vld [vmem:[%s205 + $0x7c] sm:$0xf]
      %v1604 = vld [vmem:[%s205 + $0x80] sm:$0x1]
      %v1605 = vld [vmem:[%s205 + $0x84] sm:$0xe]
      %v1606 = vld [vmem:[%s205 + $0x88] sm:$0xf]
      %v1607 = vld [vmem:[%s205 + $0x8c] sm:$0x1]
      %v1608 = vld [vmem:[%s205 + $0x90] sm:$0xe]
      %v1609 = vld [vmem:[%s205 + $0x94] sm:$0xf]
      %v1610 = vld [vmem:[%s205 + $0x98] sm:$0x1]
      %v1611 = vld [vmem:[%s205 + $0x9c] sm:$0xe]
      %v1612 = vld [vmem:[%s205 + $0xa0] sm:$0xf]
      %v1613 = vld [vmem:[%s205 + $0xa4] sm:$0x1]
      %v1614 = vld [vmem:[%s205 + $0xa8] sm:$0xe]
      %v1615 = vld [vmem:[%s205 + $0xac] sm:$0xf]
      %v1616 = vld [vmem:[%s205 + $0xb0] sm:$0x1]
      %v1617 = vld [vmem:[%s205 + $0xb4] sm:$0xe]
      %v1618 = vld [vmem:[%s205 + $0xb8] sm:$0xf]
      %v1619 = vld [vmem:[%s205 + $0xbc] sm:$0x1]
      %vm1668 = vcmask 1042432
      %vm1669 = vcmask 1046532
      %vm1670 = vmor %vm1668, %vm1669
      %v1671 = vrot.slane %v1572, 5
      %v1672 = vrot.slane %v1671, 4
      %v1673 = vrot.slane %v1573, 5
      %v1674 = vsel %vm1670, %v1672, %v1673
      %v1675 = vrot.slane %v1673, 4
      %v1676 = vrot.slane %v1574, 5
      %v1677 = vsel %vm1670, %v1675, %v1676
      %v1678 = vrot.slane %v1575, 5
      %v1679 = vrot.slane %v1678, 4
      %v1680 = vrot.slane %v1576, 5
      %v1681 = vsel %vm1670, %v1679, %v1680
      %v1682 = vrot.slane %v1680, 4
      %v1683 = vrot.slane %v1577, 5
      %v1684 = vsel %vm1670, %v1682, %v1683
      %v1685 = vrot.slane %v1578, 5
      %v1686 = vrot.slane %v1685, 4
      %v1687 = vrot.slane %v1579, 5
      %v1688 = vsel %vm1670, %v1686, %v1687
      %v1689 = vrot.slane %v1687, 4
      %v1690 = vrot.slane %v1580, 5
      %v1691 = vsel %vm1670, %v1689, %v1690
      %v1692 = vrot.slane %v1581, 5
      %v1693 = vrot.slane %v1692, 4
      %v1694 = vrot.slane %v1582, 5
      %v1695 = vsel %vm1670, %v1693, %v1694
      %v1696 = vrot.slane %v1694, 4
      %v1697 = vrot.slane %v1583, 5
      %v1698 = vsel %vm1670, %v1696, %v1697
      %v1699 = vrot.slane %v1584, 5
      %v1700 = vrot.slane %v1699, 4
      %v1701 = vrot.slane %v1585, 5
      %v1702 = vsel %vm1670, %v1700, %v1701
      %v1703 = vrot.slane %v1701, 4
      %v1704 = vrot.slane %v1586, 5
      %v1705 = vsel %vm1670, %v1703, %v1704
      %v1706 = vrot.slane %v1587, 5
      %v1707 = vrot.slane %v1706, 4
      %v1708 = vrot.slane %v1588, 5
      %v1709 = vsel %vm1670, %v1707, %v1708
      %v1710 = vrot.slane %v1708, 4
      %v1711 = vrot.slane %v1589, 5
      %v1712 = vsel %vm1670, %v1710, %v1711
      %v1713 = vrot.slane %v1590, 5
      %v1714 = vrot.slane %v1713, 4
      %v1715 = vrot.slane %v1591, 5
      %v1716 = vsel %vm1670, %v1714, %v1715
      %v1717 = vrot.slane %v1715, 4
      %v1718 = vrot.slane %v1592, 5
      %v1719 = vsel %vm1670, %v1717, %v1718
      %v1720 = vrot.slane %v1593, 5
      %v1721 = vrot.slane %v1720, 4
      %v1722 = vrot.slane %v1594, 5
      %v1723 = vsel %vm1670, %v1721, %v1722
      %v1724 = vrot.slane %v1722, 4
      %v1725 = vrot.slane %v1595, 5
      %v1726 = vsel %vm1670, %v1724, %v1725
      %v1727 = vrot.slane %v1596, 5
      %v1728 = vrot.slane %v1727, 4
      %v1729 = vrot.slane %v1597, 5
      %v1730 = vsel %vm1670, %v1728, %v1729
      %v1731 = vrot.slane %v1729, 4
      %v1732 = vrot.slane %v1598, 5
      %v1733 = vsel %vm1670, %v1731, %v1732
      %v1734 = vrot.slane %v1599, 5
      %v1735 = vrot.slane %v1734, 4
      %v1736 = vrot.slane %v1600, 5
      %v1737 = vsel %vm1670, %v1735, %v1736
      %v1738 = vrot.slane %v1736, 4
      %v1739 = vrot.slane %v1601, 5
      %v1740 = vsel %vm1670, %v1738, %v1739
      %v1741 = vrot.slane %v1602, 5
      %v1742 = vrot.slane %v1741, 4
      %v1743 = vrot.slane %v1603, 5
      %v1744 = vsel %vm1670, %v1742, %v1743
      %v1745 = vrot.slane %v1743, 4
      %v1746 = vrot.slane %v1604, 5
      %v1747 = vsel %vm1670, %v1745, %v1746
      %v1748 = vrot.slane %v1605, 5
      %v1749 = vrot.slane %v1748, 4
      %v1750 = vrot.slane %v1606, 5
      %v1751 = vsel %vm1670, %v1749, %v1750
      %v1752 = vrot.slane %v1750, 4
      %v1753 = vrot.slane %v1607, 5
      %v1754 = vsel %vm1670, %v1752, %v1753
      %v1755 = vrot.slane %v1608, 5
      %v1756 = vrot.slane %v1755, 4
      %v1757 = vrot.slane %v1609, 5
      %v1758 = vsel %vm1670, %v1756, %v1757
      %v1759 = vrot.slane %v1757, 4
      %v1760 = vrot.slane %v1610, 5
      %v1761 = vsel %vm1670, %v1759, %v1760
      %v1762 = vrot.slane %v1611, 5
      %v1763 = vrot.slane %v1762, 4
      %v1764 = vrot.slane %v1612, 5
      %v1765 = vsel %vm1670, %v1763, %v1764
      %v1766 = vrot.slane %v1764, 4
      %v1767 = vrot.slane %v1613, 5
      %v1768 = vsel %vm1670, %v1766, %v1767
      %v1769 = vrot.slane %v1614, 5
      %v1770 = vrot.slane %v1769, 4
      %v1771 = vrot.slane %v1615, 5
      %v1772 = vsel %vm1670, %v1770, %v1771
      %v1773 = vrot.slane %v1771, 4
      %v1774 = vrot.slane %v1616, 5
      %v1775 = vsel %vm1670, %v1773, %v1774
      %v1776 = vrot.slane %v1617, 5
      %v1777 = vrot.slane %v1776, 4
      %v1778 = vrot.slane %v1618, 5
      %v1779 = vsel %vm1670, %v1777, %v1778
      %v1780 = vrot.slane %v1778, 4
      %v1781 = vrot.slane %v1619, 5
      %v1782 = vsel %vm1670, %v1780, %v1781
      %v1783 = vld [vmem:[%s1 + $0xc] sm:$0xf]
      %v1784 = vld [vmem:[%s1 + $0x4c] sm:$0xf]
      %v1785 = vld [vmem:[%s1 + $0x8c] sm:$0xf]
      %v1786 = vld [vmem:[%s1 + $0xcc] sm:$0xf]
      %v1787 = vld [vmem:[%s1 + $0x10c] sm:$0xf]
      %v1788 = vld [vmem:[%s1 + $0x14c] sm:$0xf]
      %v1789 = vld [vmem:[%s1 + $0x18c] sm:$0xf]
      %v1790 = vld [vmem:[%s1 + $0x1cc] sm:$0xf]
      %v1791 = vld [vmem:[%s1 + $0x20c] sm:$0xf]
      %v1792 = vld [vmem:[%s1 + $0x24c] sm:$0xf]
      %v1793 = vld [vmem:[%s1 + $0x28c] sm:$0xf]
      %v1794 = vld [vmem:[%s1 + $0x2cc] sm:$0xf]
      %v1795 = vld [vmem:[%s1 + $0x30c] sm:$0xf]
      %v1796 = vld [vmem:[%s1 + $0x34c] sm:$0xf]
      %v1797 = vld [vmem:[%s1 + $0x38c] sm:$0xf]
      %v1798 = vld [vmem:[%s1 + $0x3cc] sm:$0xf]
      %v1799 = vunpack.c.l.b16 %v1674
      %v1800 = vunpack.c.l.b16 %v1677
      %v1801 = vunpack.c.l.b16 %v1681
      %v1802 = vunpack.c.l.b16 %v1684
      %v1803 = vunpack.c.l.b16 %v1688
      %v1804 = vunpack.c.l.b16 %v1691
      %v1805 = vunpack.c.l.b16 %v1695
      %v1806 = vunpack.c.l.b16 %v1698
      %v1807 = vunpack.c.l.b16 %v1702
      %v1808 = vunpack.c.l.b16 %v1705
      %v1809 = vunpack.c.l.b16 %v1709
      %v1810 = vunpack.c.l.b16 %v1712
      %v1811 = vunpack.c.l.b16 %v1716
      %v1812 = vunpack.c.l.b16 %v1719
      %v1813 = vunpack.c.l.b16 %v1723
      %v1814 = vunpack.c.l.b16 %v1726
      %v1815 = vunpack.c.l.b16 %v1730
      %v1816 = vunpack.c.l.b16 %v1733
      %v1817 = vunpack.c.l.b16 %v1737
      %v1818 = vunpack.c.l.b16 %v1740
      %v1819 = vunpack.c.l.b16 %v1744
      %v1820 = vunpack.c.l.b16 %v1747
      %v1821 = vunpack.c.l.b16 %v1751
      %v1822 = vunpack.c.l.b16 %v1754
      %v1823 = vunpack.c.l.b16 %v1758
      %v1824 = vunpack.c.l.b16 %v1761
      %v1825 = vunpack.c.l.b16 %v1765
      %v1826 = vunpack.c.l.b16 %v1768
      %v1827 = vunpack.c.l.b16 %v1772
      %v1828 = vunpack.c.l.b16 %v1775
      %v1829 = vunpack.c.l.b16 %v1779
      %v1830 = vunpack.c.l.b16 %v1782
      %v1831 = vpack.c.b16 %v1800, %v1799
      %v1832 = vpack.c.b16 %v1802, %v1801
      %v1833 = vpack.c.b16 %v1804, %v1803
      %v1834 = vpack.c.b16 %v1806, %v1805
      %v1835 = vpack.c.b16 %v1808, %v1807
      %v1836 = vpack.c.b16 %v1810, %v1809
      %v1837 = vpack.c.b16 %v1812, %v1811
      %v1838 = vpack.c.b16 %v1814, %v1813
      %v1839 = vpack.c.b16 %v1816, %v1815
      %v1840 = vpack.c.b16 %v1818, %v1817
      %v1841 = vpack.c.b16 %v1820, %v1819
      %v1842 = vpack.c.b16 %v1822, %v1821
      %v1843 = vpack.c.b16 %v1824, %v1823
      %v1844 = vpack.c.b16 %v1826, %v1825
      %v1845 = vpack.c.b16 %v1828, %v1827
      %v1846 = vpack.c.b16 %v1830, %v1829
      %v1879 = vunpack.c.l.b16 %v1783
      %v1880 = vunpack.c.l.b16 %v1784
      %v1881 = vunpack.c.l.b16 %v1785
      %v1882 = vunpack.c.l.b16 %v1786
      %v1883 = vunpack.c.l.b16 %v1787
      %v1884 = vunpack.c.l.b16 %v1788
      %v1885 = vunpack.c.l.b16 %v1789
      %v1886 = vunpack.c.l.b16 %v1790
      %v1887 = vunpack.c.l.b16 %v1791
      %v1888 = vunpack.c.l.b16 %v1792
      %v1889 = vunpack.c.l.b16 %v1793
      %v1890 = vunpack.c.l.b16 %v1794
      %v1891 = vunpack.c.l.b16 %v1795
      %v1892 = vunpack.c.l.b16 %v1796
      %v1893 = vunpack.c.l.b16 %v1797
      %v1894 = vunpack.c.l.b16 %v1798
      %v1895 = vpack.c.b16 %v1880, %v1879
      %v1896 = vpack.c.b16 %v1882, %v1881
      %v1897 = vpack.c.b16 %v1884, %v1883
      %v1898 = vpack.c.b16 %v1886, %v1885
      %v1899 = vpack.c.b16 %v1888, %v1887
      %v1900 = vpack.c.b16 %v1890, %v1889
      %v1901 = vpack.c.b16 %v1892, %v1891
      %v1902 = vpack.c.b16 %v1894, %v1893
      %1911 = vmatprep.subr.bf16.mxu0 0
      %1912 = vmatpush1.bf16.msra.mxu0 %v1895
      %1913 = vmatprep.subr.bf16.mxu0 0
      %1914 = vmatpush1.bf16.msra.mxu0 %v1896
      %1915 = vmatprep.subr.bf16.mxu0 0
      %1916 = vmatpush1.bf16.msra.mxu0 %v1897
      %1917 = vmatprep.subr.bf16.mxu0 0
      %1918 = vmatpush1.bf16.msra.mxu0 %v1898
      %1919 = vmatprep.subr.bf16.mxu0 0
      %1920 = vmatpush1.bf16.msra.mxu0 %v1899
      %1921 = vmatprep.subr.bf16.mxu0 0
      %1922 = vmatpush1.bf16.msra.mxu0 %v1900
      %1923 = vmatprep.subr.bf16.mxu0 0
      %1924 = vmatpush1.bf16.msra.mxu0 %v1901
      %1925 = vmatprep.subr.bf16.mxu0 0
      %1926 = vmatpush1.bf16.msra.mxu0 %v1902
      %1927 = vmatprep.subr.bf16.mxu0 0
      %1928 = vmatpush1.bf16.msra.mxu0 0
      %1929 = vmatprep.subr.bf16.mxu0 0
      %1930 = vmatpush1.bf16.msra.mxu0 0
      %1931 = vmatprep.subr.bf16.mxu0 0
      %1932 = vmatpush1.bf16.msra.mxu0 0
      %1933 = vmatprep.subr.bf16.mxu0 0
      %1934 = vmatpush1.bf16.msra.mxu0 0
      %1935 = vmatprep.subr.bf16.mxu0 0
      %1936 = vmatpush1.bf16.msra.mxu0 0
      %1937 = vmatprep.subr.bf16.mxu0 0
      %1938 = vmatpush1.bf16.msra.mxu0 0
      %1939 = vmatprep.subr.bf16.mxu0 0
      %1940 = vmatpush1.bf16.msra.mxu0 0
      %1941 = vmatprep.subr.bf16.mxu0 0
      %1942 = vmatpush1.bf16.msra.mxu0 0
      %1943 = vmatprep.mubr.bf16.mxu0 0
      %1944 = vmatmul.mubr.bf16.gmra.mrb[0].mxu0 %v1831
      %v1945 = vpop.f32.mrb[0].mxu0
      %v1946 = vadd.f32 0.0, %v1945
      %v1947 = vpop.f32.mrb[0].mxu0
      %v1948 = vpop.f32.mrb[0].mxu0
      %v1949 = vadd.f32 0.0, %v1948
      %v1950 = vpop.f32.mrb[0].mxu0
      %1951 = vmatprep.mubr.bf16.mxu0 0
      %1952 = vmatmul.mubr.bf16.gmra.mrb[0].mxu0 %v1832
      %v1953 = vpop.f32.mrb[0].mxu0
      %v1954 = vadd.f32 0.0, %v1953
      %v1955 = vpop.f32.mrb[0].mxu0
      %v1956 = vpop.f32.mrb[0].mxu0
      %v1957 = vadd.f32 0.0, %v1956
      %v1958 = vpop.f32.mrb[0].mxu0
      %1959 = vmatprep.mubr.bf16.mxu0 0
      %1960 = vmatmul.mubr.bf16.gmra.mrb[0].mxu0 %v1833
      %v1961 = vpop.f32.mrb[0].mxu0
      %v1962 = vadd.f32 0.0, %v1961
      %v1963 = vpop.f32.mrb[0].mxu0
      %v1964 = vpop.f32.mrb[0].mxu0
      %v1965 = vadd.f32 0.0, %v1964
      %v1966 = vpop.f32.mrb[0].mxu0
      %1967 = vmatprep.mubr.bf16.mxu0 0
      %1968 = vmatmul.mubr.bf16.gmra.mrb[0].mxu0 %v1834
      %v1969 = vpop.f32.mrb[0].mxu0
      %v1970 = vadd.f32 0.0, %v1969
      %v1971 = vpop.f32.mrb[0].mxu0
      %v1972 = vpop.f32.mrb[0].mxu0
      %v1973 = vadd.f32 0.0, %v1972
      %v1974 = vpop.f32.mrb[0].mxu0
      %1975 = vmatprep.mubr.bf16.mxu0 0
      %1976 = vmatmul.mubr.bf16.gmra.mrb[0].mxu0 %v1835
      %v1977 = vpop.f32.mrb[0].mxu0
      %v1978 = vadd.f32 0.0, %v1977
      %v1979 = vpop.f32.mrb[0].mxu0
      %v1980 = vpop.f32.mrb[0].mxu0
      %v1981 = vadd.f32 0.0, %v1980
      %v1982 = vpop.f32.mrb[0].mxu0
      %1983 = vmatprep.mubr.bf16.mxu0 0
      %1984 = vmatmul.mubr.bf16.gmra.mrb[0].mxu0 %v1836
      %v1985 = vpop.f32.mrb[0].mxu0
      %v1986 = vadd.f32 0.0, %v1985
      %v1987 = vpop.f32.mrb[0].mxu0
      %v1988 = vpop.f32.mrb[0].mxu0
      %v1989 = vadd.f32 0.0, %v1988
      %v1990 = vpop.f32.mrb[0].mxu0
      %1991 = vmatprep.mubr.bf16.mxu0 0
      %1992 = vmatmul.mubr.bf16.gmra.mrb[0].mxu0 %v1837
      %v1993 = vpop.f32.mrb[0].mxu0
      %v1994 = vadd.f32 0.0, %v1993
      %v1995 = vpop.f32.mrb[0].mxu0
      %v1996 = vpop.f32.mrb[0].mxu0
      %v1997 = vadd.f32 0.0, %v1996
      %v1998 = vpop.f32.mrb[0].mxu0
      %1999 = vmatprep.mubr.bf16.mxu0 0
      %2000 = vmatmul.mubr.bf16.gmra.mrb[0].mxu0 %v1838
      %v2001 = vpop.f32.mrb[0].mxu0
      %v2002 = vadd.f32 0.0, %v2001
      %v2003 = vpop.f32.mrb[0].mxu0
      %v2004 = vpop.f32.mrb[0].mxu0
      %v2005 = vadd.f32 0.0, %v2004
      %v2006 = vpop.f32.mrb[0].mxu0
      %2007 = vmatprep.mubr.bf16.mxu0 0
      %2008 = vmatmul.mubr.bf16.gmra.mrb[0].mxu0 %v1839
      %v2009 = vpop.f32.mrb[0].mxu0
      %v2010 = vadd.f32 0.0, %v2009
      %v2011 = vpop.f32.mrb[0].mxu0
      %v2012 = vpop.f32.mrb[0].mxu0
      %v2013 = vadd.f32 0.0, %v2012
      %v2014 = vpop.f32.mrb[0].mxu0
      %2015 = vmatprep.mubr.bf16.mxu0 0
      %2016 = vmatmul.mubr.bf16.gmra.mrb[0].mxu0 %v1840
      %v2017 = vpop.f32.mrb[0].mxu0
      %v2018 = vadd.f32 0.0, %v2017
      %v2019 = vpop.f32.mrb[0].mxu0
      %v2020 = vpop.f32.mrb[0].mxu0
      %v2021 = vadd.f32 0.0, %v2020
      %v2022 = vpop.f32.mrb[0].mxu0
      %2023 = vmatprep.mubr.bf16.mxu0 0
      %2024 = vmatmul.mubr.bf16.gmra.mrb[0].mxu0 %v1841
      %v2025 = vpop.f32.mrb[0].mxu0
      %v2026 = vadd.f32 0.0, %v2025
      %v2027 = vpop.f32.mrb[0].mxu0
      %v2028 = vpop.f32.mrb[0].mxu0
      %v2029 = vadd.f32 0.0, %v2028
      %v2030 = vpop.f32.mrb[0].mxu0
      %2031 = vmatprep.mubr.bf16.mxu0 0
      %2032 = vmatmul.mubr.bf16.gmra.mrb[0].mxu0 %v1842
      %v2033 = vpop.f32.mrb[0].mxu0
      %v2034 = vadd.f32 0.0, %v2033
      %v2035 = vpop.f32.mrb[0].mxu0
      %v2036 = vpop.f32.mrb[0].mxu0
      %v2037 = vadd.f32 0.0, %v2036
      %v2038 = vpop.f32.mrb[0].mxu0
      %2039 = vmatprep.mubr.bf16.mxu0 0
      %2040 = vmatmul.mubr.bf16.gmra.mrb[0].mxu0 %v1843
      %v2041 = vpop.f32.mrb[0].mxu0
      %v2042 = vadd.f32 0.0, %v2041
      %v2043 = vpop.f32.mrb[0].mxu0
      %v2044 = vpop.f32.mrb[0].mxu0
      %v2045 = vadd.f32 0.0, %v2044
      %v2046 = vpop.f32.mrb[0].mxu0
      %2047 = vmatprep.mubr.bf16.mxu0 0
      %2048 = vmatmul.mubr.bf16.gmra.mrb[0].mxu0 %v1844
      %v2049 = vpop.f32.mrb[0].mxu0
      %v2050 = vadd.f32 0.0, %v2049
      %v2051 = vpop.f32.mrb[0].mxu0
      %v2052 = vpop.f32.mrb[0].mxu0
      %v2053 = vadd.f32 0.0, %v2052
      %v2054 = vpop.f32.mrb[0].mxu0
      %2055 = vmatprep.mubr.bf16.mxu0 0
      %2056 = vmatmul.mubr.bf16.gmra.mrb[0].mxu0 %v1845
      %v2057 = vpop.f32.mrb[0].mxu0
      %v2058 = vadd.f32 0.0, %v2057
      %v2059 = vpop.f32.mrb[0].mxu0
      %v2060 = vpop.f32.mrb[0].mxu0
      %v2061 = vadd.f32 0.0, %v2060
      %v2062 = vpop.f32.mrb[0].mxu0
      %2063 = vmatprep.mubr.bf16.mxu0 0
      %2064 = vmatmul.mubr.bf16.gmra.mrb[0].mxu0 %v1846
      %v2065 = vpop.f32.mrb[0].mxu0
      %v2066 = vadd.f32 0.0, %v2065
      %v2067 = vpop.f32.mrb[0].mxu0
      %v2068 = vpop.f32.mrb[0].mxu0
      %v2069 = vadd.f32 0.0, %v2068
      %v2070 = vpop.f32.mrb[0].mxu0
      %2071 = vdwg.mxu0
      %v2072 = vld [vmem:[%s1539] sm:$0xff]
      %v2073 = vld [vmem:[%s1539 + $0x8] sm:$0xff]
      %v2074 = vld [vmem:[%s1539 + $0x10] sm:$0xff]
      %v2075 = vld [vmem:[%s1539 + $0x18] sm:$0xff]
      %v2076 = vld [vmem:[%s1539 + $0x20] sm:$0xff]
      %v2077 = vld [vmem:[%s1539 + $0x28] sm:$0xff]
      %v2078 = vld [vmem:[%s1539 + $0x30] sm:$0xff]
      %v2079 = vld [vmem:[%s1539 + $0x38] sm:$0xff]
      %v2080 = vld [vmem:[%s1539 + $0x40] sm:$0xff]
      %v2081 = vld [vmem:[%s1539 + $0x48] sm:$0xff]
      %v2082 = vld [vmem:[%s1539 + $0x50] sm:$0xff]
      %v2083 = vld [vmem:[%s1539 + $0x58] sm:$0xff]
      %v2084 = vld [vmem:[%s1539 + $0x60] sm:$0xff]
      %v2085 = vld [vmem:[%s1539 + $0x68] sm:$0xff]
      %v2086 = vld [vmem:[%s1539 + $0x70] sm:$0xff]
      %v2087 = vld [vmem:[%s1539 + $0x78] sm:$0xff]
      %v2088 = vld [vmem:[%s1539 + $0x80] sm:$0xff]
      %v2089 = vld [vmem:[%s1539 + $0x88] sm:$0xff]
      %v2090 = vld [vmem:[%s1539 + $0x90] sm:$0xff]
      %v2091 = vld [vmem:[%s1539 + $0x98] sm:$0xff]
      %v2092 = vld [vmem:[%s1539 + $0xa0] sm:$0xff]
      %v2093 = vld [vmem:[%s1539 + $0xa8] sm:$0xff]
      %v2094 = vld [vmem:[%s1539 + $0xb0] sm:$0xff]
      %v2095 = vld [vmem:[%s1539 + $0xb8] sm:$0xff]
      %v2096 = vld [vmem:[%s1539 + $0xc0] sm:$0xff]
      %v2097 = vld [vmem:[%s1539 + $0xc8] sm:$0xff]
      %v2098 = vld [vmem:[%s1539 + $0xd0] sm:$0xff]
      %v2099 = vld [vmem:[%s1539 + $0xd8] sm:$0xff]
      %v2100 = vld [vmem:[%s1539 + $0xe0] sm:$0xff]
      %v2101 = vld [vmem:[%s1539 + $0xe8] sm:$0xff]
      %v2102 = vld [vmem:[%s1539 + $0xf0] sm:$0xff]
      %v2103 = vld [vmem:[%s1539 + $0xf8] sm:$0xff]
      %v2104 = vadd.f32 %v2072, %v1946
      %v2105 = vadd.f32 %v2073, %v1949
      %v2106 = vadd.f32 %v2074, %v1954
      %v2107 = vadd.f32 %v2075, %v1957
      %v2108 = vadd.f32 %v2076, %v1962
      %v2109 = vadd.f32 %v2077, %v1965
      %v2110 = vadd.f32 %v2078, %v1970
      %v2111 = vadd.f32 %v2079, %v1973
      %v2112 = vadd.f32 %v2080, %v1978
      %v2113 = vadd.f32 %v2081, %v1981
      %v2114 = vadd.f32 %v2082, %v1986
      %v2115 = vadd.f32 %v2083, %v1989
      %v2116 = vadd.f32 %v2084, %v1994
      %v2117 = vadd.f32 %v2085, %v1997
      %v2118 = vadd.f32 %v2086, %v2002
      %v2119 = vadd.f32 %v2087, %v2005
      %v2120 = vadd.f32 %v2088, %v2010
      %v2121 = vadd.f32 %v2089, %v2013
      %v2122 = vadd.f32 %v2090, %v2018
      %v2123 = vadd.f32 %v2091, %v2021
      %v2124 = vadd.f32 %v2092, %v2026
      %v2125 = vadd.f32 %v2093, %v2029
      %v2126 = vadd.f32 %v2094, %v2034
      %v2127 = vadd.f32 %v2095, %v2037
      %v2128 = vadd.f32 %v2096, %v2042
      %v2129 = vadd.f32 %v2097, %v2045
      %v2130 = vadd.f32 %v2098, %v2050
      %v2131 = vadd.f32 %v2099, %v2053
      %v2132 = vadd.f32 %v2100, %v2058
      %v2133 = vadd.f32 %v2101, %v2061
      %v2134 = vadd.f32 %v2102, %v2066
      %v2135 = vadd.f32 %v2103, %v2069
      %2136 = vst [vmem:[%s1539] sm:$0xff] %v2104
      %2137 = vst [vmem:[%s1539 + $0x8] sm:$0xff] %v2105
      %2138 = vst [vmem:[%s1539 + $0x10] sm:$0xff] %v2106
      %2139 = vst [vmem:[%s1539 + $0x18] sm:$0xff] %v2107
      %2140 = vst [vmem:[%s1539 + $0x20] sm:$0xff] %v2108
      %2141 = vst [vmem:[%s1539 + $0x28] sm:$0xff] %v2109
      %2142 = vst [vmem:[%s1539 + $0x30] sm:$0xff] %v2110
      %2143 = vst [vmem:[%s1539 + $0x38] sm:$0xff] %v2111
      %2144 = vst [vmem:[%s1539 + $0x40] sm:$0xff] %v2112
      %2145 = vst [vmem:[%s1539 + $0x48] sm:$0xff] %v2113
      %2146 = vst [vmem:[%s1539 + $0x50] sm:$0xff] %v2114
      %2147 = vst [vmem:[%s1539 + $0x58] sm:$0xff] %v2115
      %2148 = vst [vmem:[%s1539 + $0x60] sm:$0xff] %v2116
      %2149 = vst [vmem:[%s1539 + $0x68] sm:$0xff] %v2117
      %2150 = vst [vmem:[%s1539 + $0x70] sm:$0xff] %v2118
      %2151 = vst [vmem:[%s1539 + $0x78] sm:$0xff] %v2119
      %2152 = vst [vmem:[%s1539 + $0x80] sm:$0xff] %v2120
      %2153 = vst [vmem:[%s1539 + $0x88] sm:$0xff] %v2121
      %2154 = vst [vmem:[%s1539 + $0x90] sm:$0xff] %v2122
      %2155 = vst [vmem:[%s1539 + $0x98] sm:$0xff] %v2123
      %2156 = vst [vmem:[%s1539 + $0xa0] sm:$0xff] %v2124
      %2157 = vst [vmem:[%s1539 + $0xa8] sm:$0xff] %v2125
      %2158 = vst [vmem:[%s1539 + $0xb0] sm:$0xff] %v2126
      %2159 = vst [vmem:[%s1539 + $0xb8] sm:$0xff] %v2127
      %2160 = vst [vmem:[%s1539 + $0xc0] sm:$0xff] %v2128
      %2161 = vst [vmem:[%s1539 + $0xc8] sm:$0xff] %v2129
      %2162 = vst [vmem:[%s1539 + $0xd0] sm:$0xff] %v2130
      %2163 = vst [vmem:[%s1539 + $0xd8] sm:$0xff] %v2131
      %2164 = vst [vmem:[%s1539 + $0xe0] sm:$0xff] %v2132
      %2165 = vst [vmem:[%s1539 + $0xe8] sm:$0xff] %v2133
      %2166 = vst [vmem:[%s1539 + $0xf0] sm:$0xff] %v2134
      %2167 = vst [vmem:[%s1539 + $0xf8] sm:$0xff] %v2135
      %s2168 = sadd.s32 %s197, 1
      %s2169 = smul.u32 %s2168, 3
      %s2170 = smul.addr %s2169, 4
      %s2171 = scalar_lea.vmem %s184, %s2170
      %v2172 = vld [vmem:[%s2171] sm:$0xf]
      %v2173 = vld [vmem:[%s2171 + $0x4] sm:$0xf]
      %v2174 = vld [vmem:[%s2171 + $0xc] sm:$0xf]
      %v2175 = vld [vmem:[%s2171 + $0x10] sm:$0xf]
      %v2176 = vld [vmem:[%s2171 + $0x18] sm:$0xf]
      %v2177 = vld [vmem:[%s2171 + $0x1c] sm:$0xf]
      %v2178 = vld [vmem:[%s2171 + $0x24] sm:$0xf]
      %v2179 = vld [vmem:[%s2171 + $0x28] sm:$0xf]
      %v2180 = vld [vmem:[%s2171 + $0x30] sm:$0xf]
      %v2181 = vld [vmem:[%s2171 + $0x34] sm:$0xf]
      %v2182 = vld [vmem:[%s2171 + $0x3c] sm:$0xf]
      %v2183 = vld [vmem:[%s2171 + $0x40] sm:$0xf]
      %v2184 = vld [vmem:[%s2171 + $0x48] sm:$0xf]
      %v2185 = vld [vmem:[%s2171 + $0x4c] sm:$0xf]
      %v2186 = vld [vmem:[%s2171 + $0x54] sm:$0xf]
      %v2187 = vld [vmem:[%s2171 + $0x58] sm:$0xf]
      %v2188 = vld [vmem:[%s2171 + $0x60] sm:$0xf]
      %v2189 = vld [vmem:[%s2171 + $0x64] sm:$0xf]
      %v2190 = vld [vmem:[%s2171 + $0x6c] sm:$0xf]
      %v2191 = vld [vmem:[%s2171 + $0x70] sm:$0xf]
      %v2192 = vld [vmem:[%s2171 + $0x78] sm:$0xf]
      %v2193 = vld [vmem:[%s2171 + $0x7c] sm:$0xf]
      %v2194 = vld [vmem:[%s2171 + $0x84] sm:$0xf]
      %v2195 = vld [vmem:[%s2171 + $0x88] sm:$0xf]
      %v2196 = vld [vmem:[%s2171 + $0x90] sm:$0xf]
      %v2197 = vld [vmem:[%s2171 + $0x94] sm:$0xf]
      %v2198 = vld [vmem:[%s2171 + $0x9c] sm:$0xf]
      %v2199 = vld [vmem:[%s2171 + $0xa0] sm:$0xf]
      %v2200 = vld [vmem:[%s2171 + $0xa8] sm:$0xf]
      %v2201 = vld [vmem:[%s2171 + $0xac] sm:$0xf]
      %v2202 = vld [vmem:[%s2171 + $0xb4] sm:$0xf]
      %v2203 = vld [vmem:[%s2171 + $0xb8] sm:$0xf]
      %v2204 = vld [vmem:[%s1 + $0x10] sm:$0xff]
      %v2205 = vld [vmem:[%s1 + $0x50] sm:$0xff]
      %v2206 = vld [vmem:[%s1 + $0x90] sm:$0xff]
      %v2207 = vld [vmem:[%s1 + $0xd0] sm:$0xff]
      %v2208 = vld [vmem:[%s1 + $0x110] sm:$0xff]
      %v2209 = vld [vmem:[%s1 + $0x150] sm:$0xff]
      %v2210 = vld [vmem:[%s1 + $0x190] sm:$0xff]
      %v2211 = vld [vmem:[%s1 + $0x1d0] sm:$0xff]
      %v2212 = vld [vmem:[%s1 + $0x210] sm:$0xff]
      %v2213 = vld [vmem:[%s1 + $0x250] sm:$0xff]
      %v2214 = vld [vmem:[%s1 + $0x290] sm:$0xff]
      %v2215 = vld [vmem:[%s1 + $0x2d0] sm:$0xff]
      %v2216 = vld [vmem:[%s1 + $0x310] sm:$0xff]
      %v2217 = vld [vmem:[%s1 + $0x350] sm:$0xff]
      %v2218 = vld [vmem:[%s1 + $0x390] sm:$0xff]
      %v2219 = vld [vmem:[%s1 + $0x3d0] sm:$0xff]
      %v2252 = vunpack.c.l.b16 %v2172
      %v2253 = vunpack.c.l.b16 %v2173
      %v2254 = vunpack.c.l.b16 %v2174
      %v2255 = vunpack.c.l.b16 %v2175
      %v2256 = vunpack.c.l.b16 %v2176
      %v2257 = vunpack.c.l.b16 %v2177
      %v2258 = vunpack.c.l.b16 %v2178
      %v2259 = vunpack.c.l.b16 %v2179
      %v2260 = vunpack.c.l.b16 %v2180
      %v2261 = vunpack.c.l.b16 %v2181
      %v2262 = vunpack.c.l.b16 %v2182
      %v2263 = vunpack.c.l.b16 %v2183
      %v2264 = vunpack.c.l.b16 %v2184
      %v2265 = vunpack.c.l.b16 %v2185
      %v2266 = vunpack.c.l.b16 %v2186
      %v2267 = vunpack.c.l.b16 %v2187
      %v2268 = vunpack.c.l.b16 %v2188
      %v2269 = vunpack.c.l.b16 %v2189
      %v2270 = vunpack.c.l.b16 %v2190
      %v2271 = vunpack.c.l.b16 %v2191
      %v2272 = vunpack.c.l.b16 %v2192
      %v2273 = vunpack.c.l.b16 %v2193
      %v2274 = vunpack.c.l.b16 %v2194
      %v2275 = vunpack.c.l.b16 %v2195
      %v2276 = vunpack.c.l.b16 %v2196
      %v2277 = vunpack.c.l.b16 %v2197
      %v2278 = vunpack.c.l.b16 %v2198
      %v2279 = vunpack.c.l.b16 %v2199
      %v2280 = vunpack.c.l.b16 %v2200
      %v2281 = vunpack.c.l.b16 %v2201
      %v2282 = vunpack.c.l.b16 %v2202
      %v2283 = vunpack.c.l.b16 %v2203
      %v2284 = vpack.c.b16 %v2253, %v2252
      %v2285 = vpack.c.b16 %v2255, %v2254
      %v2286 = vpack.c.b16 %v2257, %v2256
      %v2287 = vpack.c.b16 %v2259, %v2258
      %v2288 = vpack.c.b16 %v2261, %v2260
      %v2289 = vpack.c.b16 %v2263, %v2262
      %v2290 = vpack.c.b16 %v2265, %v2264
      %v2291 = vpack.c.b16 %v2267, %v2266
      %v2292 = vpack.c.b16 %v2269, %v2268
      %v2293 = vpack.c.b16 %v2271, %v2270
      %v2294 = vpack.c.b16 %v2273, %v2272
      %v2295 = vpack.c.b16 %v2275, %v2274
      %v2296 = vpack.c.b16 %v2277, %v2276
      %v2297 = vpack.c.b16 %v2279, %v2278
      %v2298 = vpack.c.b16 %v2281, %v2280
      %v2299 = vpack.c.b16 %v2283, %v2282
      %v2332 = vunpack.c.l.b16 %v2204
      %v2333 = vunpack.c.h.b16 %v2204
      %v2334 = vunpack.c.l.b16 %v2205
      %v2335 = vunpack.c.h.b16 %v2205
      %v2336 = vunpack.c.l.b16 %v2206
      %v2337 = vunpack.c.h.b16 %v2206
      %v2338 = vunpack.c.l.b16 %v2207
      %v2339 = vunpack.c.h.b16 %v2207
      %v2340 = vunpack.c.l.b16 %v2208
      %v2341 = vunpack.c.h.b16 %v2208
      %v2342 = vunpack.c.l.b16 %v2209
      %v2343 = vunpack.c.h.b16 %v2209
      %v2344 = vunpack.c.l.b16 %v2210
      %v2345 = vunpack.c.h.b16 %v2210
      %v2346 = vunpack.c.l.b16 %v2211
      %v2347 = vunpack.c.h.b16 %v2211
      %v2348 = vunpack.c.l.b16 %v2212
      %v2349 = vunpack.c.h.b16 %v2212
      %v2350 = vunpack.c.l.b16 %v2213
      %v2351 = vunpack.c.h.b16 %v2213
      %v2352 = vunpack.c.l.b16 %v2214
      %v2353 = vunpack.c.h.b16 %v2214
      %v2354 = vunpack.c.l.b16 %v2215
      %v2355 = vunpack.c.h.b16 %v2215
      %v2356 = vunpack.c.l.b16 %v2216
      %v2357 = vunpack.c.h.b16 %v2216
      %v2358 = vunpack.c.l.b16 %v2217
      %v2359 = vunpack.c.h.b16 %v2217
      %v2360 = vunpack.c.l.b16 %v2218
      %v2361 = vunpack.c.h.b16 %v2218
      %v2362 = vunpack.c.l.b16 %v2219
      %v2363 = vunpack.c.h.b16 %v2219
      %v2364 = vpack.c.b16 %v2334, %v2332
      %v2365 = vpack.c.b16 %v2335, %v2333
      %v2366 = vpack.c.b16 %v2338, %v2336
      %v2367 = vpack.c.b16 %v2339, %v2337
      %v2368 = vpack.c.b16 %v2342, %v2340
      %v2369 = vpack.c.b16 %v2343, %v2341
      %v2370 = vpack.c.b16 %v2346, %v2344
      %v2371 = vpack.c.b16 %v2347, %v2345
      %v2372 = vpack.c.b16 %v2350, %v2348
      %v2373 = vpack.c.b16 %v2351, %v2349
      %v2374 = vpack.c.b16 %v2354, %v2352
      %v2375 = vpack.c.b16 %v2355, %v2353
      %v2376 = vpack.c.b16 %v2358, %v2356
      %v2377 = vpack.c.b16 %v2359, %v2357
      %v2378 = vpack.c.b16 %v2362, %v2360
      %v2379 = vpack.c.b16 %v2363, %v2361
      %2396 = vmatprep.subr.bf16.mxu0 %v2365
      %2397 = vmatpush1.bf16.msra.mxu0 %v2364
      %2398 = vmatprep.subr.bf16.mxu0 %v2367
      %2399 = vmatpush1.bf16.msra.mxu0 %v2366
      %2400 = vmatprep.subr.bf16.mxu0 %v2369
      %2401 = vmatpush1.bf16.msra.mxu0 %v2368
      %2402 = vmatprep.subr.bf16.mxu0 %v2371
      %2403 = vmatpush1.bf16.msra.mxu0 %v2370
      %2404 = vmatprep.subr.bf16.mxu0 %v2373
      %2405 = vmatpush1.bf16.msra.mxu0 %v2372
      %2406 = vmatprep.subr.bf16.mxu0 %v2375
      %2407 = vmatpush1.bf16.msra.mxu0 %v2374
      %2408 = vmatprep.subr.bf16.mxu0 %v2377
      %2409 = vmatpush1.bf16.msra.mxu0 %v2376
      %2410 = vmatprep.subr.bf16.mxu0 %v2379
      %2411 = vmatpush1.bf16.msra.mxu0 %v2378
      %2412 = vmatprep.subr.bf16.mxu0 0
      %2413 = vmatpush1.bf16.msra.mxu0 0
      %2414 = vmatprep.subr.bf16.mxu0 0
      %2415 = vmatpush1.bf16.msra.mxu0 0
      %2416 = vmatprep.subr.bf16.mxu0 0
      %2417 = vmatpush1.bf16.msra.mxu0 0
      %2418 = vmatprep.subr.bf16.mxu0 0
      %2419 = vmatpush1.bf16.msra.mxu0 0
      %2420 = vmatprep.subr.bf16.mxu0 0
      %2421 = vmatpush1.bf16.msra.mxu0 0
      %2422 = vmatprep.subr.bf16.mxu0 0
      %2423 = vmatpush1.bf16.msra.mxu0 0
      %2424 = vmatprep.subr.bf16.mxu0 0
      %2425 = vmatpush1.bf16.msra.mxu0 0
      %2426 = vmatprep.subr.bf16.mxu0 0
      %2427 = vmatpush1.bf16.msra.mxu0 0
      %2428 = vmatprep.mubr.bf16.mxu0 0
      %2429 = vmatmul.mubr.bf16.gmra.mrb[0].mxu0 %v2284
      %v2430 = vpop.f32.mrb[0].mxu0
      %v2431 = vadd.f32 0.0, %v2430
      %v2432 = vpop.f32.mrb[0].mxu0
      %v2433 = vadd.f32 0.0, %v2432
      %v2434 = vpop.f32.mrb[0].mxu0
      %v2435 = vadd.f32 0.0, %v2434
      %v2436 = vpop.f32.mrb[0].mxu0
      %v2437 = vadd.f32 0.0, %v2436
      %2438 = vmatprep.mubr.bf16.mxu0 0
      %2439 = vmatmul.mubr.bf16.gmra.mrb[0].mxu0 %v2285
      %v2440 = vpop.f32.mrb[0].mxu0
      %v2441 = vadd.f32 0.0, %v2440
      %v2442 = vpop.f32.mrb[0].mxu0
      %v2443 = vadd.f32 0.0, %v2442
      %v2444 = vpop.f32.mrb[0].mxu0
      %v2445 = vadd.f32 0.0, %v2444
      %v2446 = vpop.f32.mrb[0].mxu0
      %v2447 = vadd.f32 0.0, %v2446
      %2448 = vmatprep.mubr.bf16.mxu0 0
      %2449 = vmatmul.mubr.bf16.gmra.mrb[0].mxu0 %v2286
      %v2450 = vpop.f32.mrb[0].mxu0
      %v2451 = vadd.f32 0.0, %v2450
      %v2452 = vpop.f32.mrb[0].mxu0
      %v2453 = vadd.f32 0.0, %v2452
      %v2454 = vpop.f32.mrb[0].mxu0
      %v2455 = vadd.f32 0.0, %v2454
      %v2456 = vpop.f32.mrb[0].mxu0
      %v2457 = vadd.f32 0.0, %v2456
      %2458 = vmatprep.mubr.bf16.mxu0 0
      %2459 = vmatmul.mubr.bf16.gmra.mrb[0].mxu0 %v2287
      %v2460 = vpop.f32.mrb[0].mxu0
      %v2461 = vadd.f32 0.0, %v2460
      %v2462 = vpop.f32.mrb[0].mxu0
      %v2463 = vadd.f32 0.0, %v2462
      %v2464 = vpop.f32.mrb[0].mxu0
      %v2465 = vadd.f32 0.0, %v2464
      %v2466 = vpop.f32.mrb[0].mxu0
      %v2467 = vadd.f32 0.0, %v2466
      %2468 = vmatprep.mubr.bf16.mxu0 0
      %2469 = vmatmul.mubr.bf16.gmra.mrb[0].mxu0 %v2288
      %v2470 = vpop.f32.mrb[0].mxu0
      %v2471 = vadd.f32 0.0, %v2470
      %v2472 = vpop.f32.mrb[0].mxu0
      %v2473 = vadd.f32 0.0, %v2472
      %v2474 = vpop.f32.mrb[0].mxu0
      %v2475 = vadd.f32 0.0, %v2474
      %v2476 = vpop.f32.mrb[0].mxu0
      %v2477 = vadd.f32 0.0, %v2476
      %2478 = vmatprep.mubr.bf16.mxu0 0
      %2479 = vmatmul.mubr.bf16.gmra.mrb[0].mxu0 %v2289
      %v2480 = vpop.f32.mrb[0].mxu0
      %v2481 = vadd.f32 0.0, %v2480
      %v2482 = vpop.f32.mrb[0].mxu0
      %v2483 = vadd.f32 0.0, %v2482
      %v2484 = vpop.f32.mrb[0].mxu0
      %v2485 = vadd.f32 0.0, %v2484
      %v2486 = vpop.f32.mrb[0].mxu0
      %v2487 = vadd.f32 0.0, %v2486
      %2488 = vmatprep.mubr.bf16.mxu0 0
      %2489 = vmatmul.mubr.bf16.gmra.mrb[0].mxu0 %v2290
      %v2490 = vpop.f32.mrb[0].mxu0
      %v2491 = vadd.f32 0.0, %v2490
      %v2492 = vpop.f32.mrb[0].mxu0
      %v2493 = vadd.f32 0.0, %v2492
      %v2494 = vpop.f32.mrb[0].mxu0
      %v2495 = vadd.f32 0.0, %v2494
      %v2496 = vpop.f32.mrb[0].mxu0
      %v2497 = vadd.f32 0.0, %v2496
      %2498 = vmatprep.mubr.bf16.mxu0 0
      %2499 = vmatmul.mubr.bf16.gmra.mrb[0].mxu0 %v2291
      %v2500 = vpop.f32.mrb[0].mxu0
      %v2501 = vadd.f32 0.0, %v2500
      %v2502 = vpop.f32.mrb[0].mxu0
      %v2503 = vadd.f32 0.0, %v2502
      %v2504 = vpop.f32.mrb[0].mxu0
      %v2505 = vadd.f32 0.0, %v2504
      %v2506 = vpop.f32.mrb[0].mxu0
      %v2507 = vadd.f32 0.0, %v2506
      %2508 = vmatprep.mubr.bf16.mxu0 0
      %2509 = vmatmul.mubr.bf16.gmra.mrb[0].mxu0 %v2292
      %v2510 = vpop.f32.mrb[0].mxu0
      %v2511 = vadd.f32 0.0, %v2510
      %v2512 = vpop.f32.mrb[0].mxu0
      %v2513 = vadd.f32 0.0, %v2512
      %v2514 = vpop.f32.mrb[0].mxu0
      %v2515 = vadd.f32 0.0, %v2514
      %v2516 = vpop.f32.mrb[0].mxu0
      %v2517 = vadd.f32 0.0, %v2516
      %2518 = vmatprep.mubr.bf16.mxu0 0
      %2519 = vmatmul.mubr.bf16.gmra.mrb[0].mxu0 %v2293
      %v2520 = vpop.f32.mrb[0].mxu0
      %v2521 = vadd.f32 0.0, %v2520
      %v2522 = vpop.f32.mrb[0].mxu0
      %v2523 = vadd.f32 0.0, %v2522
      %v2524 = vpop.f32.mrb[0].mxu0
      %v2525 = vadd.f32 0.0, %v2524
      %v2526 = vpop.f32.mrb[0].mxu0
      %v2527 = vadd.f32 0.0, %v2526
      %2528 = vmatprep.mubr.bf16.mxu0 0
      %2529 = vmatmul.mubr.bf16.gmra.mrb[0].mxu0 %v2294
      %v2530 = vpop.f32.mrb[0].mxu0
      %v2531 = vadd.f32 0.0, %v2530
      %v2532 = vpop.f32.mrb[0].mxu0
      %v2533 = vadd.f32 0.0, %v2532
      %v2534 = vpop.f32.mrb[0].mxu0
      %v2535 = vadd.f32 0.0, %v2534
      %v2536 = vpop.f32.mrb[0].mxu0
      %v2537 = vadd.f32 0.0, %v2536
      %2538 = vmatprep.mubr.bf16.mxu0 0
      %2539 = vmatmul.mubr.bf16.gmra.mrb[0].mxu0 %v2295
      %v2540 = vpop.f32.mrb[0].mxu0
      %v2541 = vadd.f32 0.0, %v2540
      %v2542 = vpop.f32.mrb[0].mxu0
      %v2543 = vadd.f32 0.0, %v2542
      %v2544 = vpop.f32.mrb[0].mxu0
      %v2545 = vadd.f32 0.0, %v2544
      %v2546 = vpop.f32.mrb[0].mxu0
      %v2547 = vadd.f32 0.0, %v2546
      %2548 = vmatprep.mubr.bf16.mxu0 0
      %2549 = vmatmul.mubr.bf16.gmra.mrb[0].mxu0 %v2296
      %v2550 = vpop.f32.mrb[0].mxu0
      %v2551 = vadd.f32 0.0, %v2550
      %v2552 = vpop.f32.mrb[0].mxu0
      %v2553 = vadd.f32 0.0, %v2552
      %v2554 = vpop.f32.mrb[0].mxu0
      %v2555 = vadd.f32 0.0, %v2554
      %v2556 = vpop.f32.mrb[0].mxu0
      %v2557 = vadd.f32 0.0, %v2556
      %2558 = vmatprep.mubr.bf16.mxu0 0
      %2559 = vmatmul.mubr.bf16.gmra.mrb[0].mxu0 %v2297
      %v2560 = vpop.f32.mrb[0].mxu0
      %v2561 = vadd.f32 0.0, %v2560
      %v2562 = vpop.f32.mrb[0].mxu0
      %v2563 = vadd.f32 0.0, %v2562
      %v2564 = vpop.f32.mrb[0].mxu0
      %v2565 = vadd.f32 0.0, %v2564
      %v2566 = vpop.f32.mrb[0].mxu0
      %v2567 = vadd.f32 0.0, %v2566
      %2568 = vmatprep.mubr.bf16.mxu0 0
      %2569 = vmatmul.mubr.bf16.gmra.mrb[0].mxu0 %v2298
      %v2570 = vpop.f32.mrb[0].mxu0
      %v2571 = vadd.f32 0.0, %v2570
      %v2572 = vpop.f32.mrb[0].mxu0
      %v2573 = vadd.f32 0.0, %v2572
      %v2574 = vpop.f32.mrb[0].mxu0
      %v2575 = vadd.f32 0.0, %v2574
      %v2576 = vpop.f32.mrb[0].mxu0
      %v2577 = vadd.f32 0.0, %v2576
      %2578 = vmatprep.mubr.bf16.mxu0 0
      %2579 = vmatmul.mubr.bf16.gmra.mrb[0].mxu0 %v2299
      %v2580 = vpop.f32.mrb[0].mxu0
      %v2581 = vadd.f32 0.0, %v2580
      %v2582 = vpop.f32.mrb[0].mxu0
      %v2583 = vadd.f32 0.0, %v2582
      %v2584 = vpop.f32.mrb[0].mxu0
      %v2585 = vadd.f32 0.0, %v2584
      %v2586 = vpop.f32.mrb[0].mxu0
      %v2587 = vadd.f32 0.0, %v2586
      %2588 = vdwg.mxu0
      %v2589 = vld [vmem:[#allocation2] sm:$0xff]
      %v2590 = vld [vmem:[#allocation2 + $0x8] sm:$0xff]
      %v2591 = vld [vmem:[#allocation2 + $0x10] sm:$0xff]
      %v2592 = vld [vmem:[#allocation2 + $0x18] sm:$0xff]
      %v2593 = vld [vmem:[#allocation2 + $0x20] sm:$0xff]
      %v2594 = vld [vmem:[#allocation2 + $0x28] sm:$0xff]
      %v2595 = vld [vmem:[#allocation2 + $0x30] sm:$0xff]
      %v2596 = vld [vmem:[#allocation2 + $0x38] sm:$0xff]
      %v2597 = vld [vmem:[#allocation2 + $0x40] sm:$0xff]
      %v2598 = vld [vmem:[#allocation2 + $0x48] sm:$0xff]
      %v2599 = vld [vmem:[#allocation2 + $0x50] sm:$0xff]
      %v2600 = vld [vmem:[#allocation2 + $0x58] sm:$0xff]
      %v2601 = vld [vmem:[#allocation2 + $0x60] sm:$0xff]
      %v2602 = vld [vmem:[#allocation2 + $0x68] sm:$0xff]
      %v2603 = vld [vmem:[#allocation2 + $0x70] sm:$0xff]
      %v2604 = vld [vmem:[#allocation2 + $0x78] sm:$0xff]
      %v2605 = vld [vmem:[#allocation2 + $0x80] sm:$0xff]
      %v2606 = vld [vmem:[#allocation2 + $0x88] sm:$0xff]
      %v2607 = vld [vmem:[#allocation2 + $0x90] sm:$0xff]
      %v2608 = vld [vmem:[#allocation2 + $0x98] sm:$0xff]
      %v2609 = vld [vmem:[#allocation2 + $0xa0] sm:$0xff]
      %v2610 = vld [vmem:[#allocation2 + $0xa8] sm:$0xff]
      %v2611 = vld [vmem:[#allocation2 + $0xb0] sm:$0xff]
      %v2612 = vld [vmem:[#allocation2 + $0xb8] sm:$0xff]
      %v2613 = vld [vmem:[#allocation2 + $0xc0] sm:$0xff]
      %v2614 = vld [vmem:[#allocation2 + $0xc8] sm:$0xff]
      %v2615 = vld [vmem:[#allocation2 + $0xd0] sm:$0xff]
      %v2616 = vld [vmem:[#allocation2 + $0xd8] sm:$0xff]
      %v2617 = vld [vmem:[#allocation2 + $0xe0] sm:$0xff]
      %v2618 = vld [vmem:[#allocation2 + $0xe8] sm:$0xff]
      %v2619 = vld [vmem:[#allocation2 + $0xf0] sm:$0xff]
      %v2620 = vld [vmem:[#allocation2 + $0xf8] sm:$0xff]
      %v2621 = vadd.f32 %v2589, %v2431
      %v2622 = vadd.f32 %v2590, %v2435
      %v2623 = vadd.f32 %v2591, %v2441
      %v2624 = vadd.f32 %v2592, %v2445
      %v2625 = vadd.f32 %v2593, %v2451
      %v2626 = vadd.f32 %v2594, %v2455
      %v2627 = vadd.f32 %v2595, %v2461
      %v2628 = vadd.f32 %v2596, %v2465
      %v2629 = vadd.f32 %v2597, %v2471
      %v2630 = vadd.f32 %v2598, %v2475
      %v2631 = vadd.f32 %v2599, %v2481
      %v2632 = vadd.f32 %v2600, %v2485
      %v2633 = vadd.f32 %v2601, %v2491
      %v2634 = vadd.f32 %v2602, %v2495
      %v2635 = vadd.f32 %v2603, %v2501
      %v2636 = vadd.f32 %v2604, %v2505
      %v2637 = vadd.f32 %v2605, %v2511
      %v2638 = vadd.f32 %v2606, %v2515
      %v2639 = vadd.f32 %v2607, %v2521
      %v2640 = vadd.f32 %v2608, %v2525
      %v2641 = vadd.f32 %v2609, %v2531
      %v2642 = vadd.f32 %v2610, %v2535
      %v2643 = vadd.f32 %v2611, %v2541
      %v2644 = vadd.f32 %v2612, %v2545
      %v2645 = vadd.f32 %v2613, %v2551
      %v2646 = vadd.f32 %v2614, %v2555
      %v2647 = vadd.f32 %v2615, %v2561
      %v2648 = vadd.f32 %v2616, %v2565
      %v2649 = vadd.f32 %v2617, %v2571
      %v2650 = vadd.f32 %v2618, %v2575
      %v2651 = vadd.f32 %v2619, %v2581
      %v2652 = vadd.f32 %v2620, %v2585
      %2653 = vst [vmem:[#allocation2] sm:$0xff] %v2621
      %2654 = vst [vmem:[#allocation2 + $0x8] sm:$0xff] %v2622
      %2655 = vst [vmem:[#allocation2 + $0x10] sm:$0xff] %v2623
      %2656 = vst [vmem:[#allocation2 + $0x18] sm:$0xff] %v2624
      %2657 = vst [vmem:[#allocation2 + $0x20] sm:$0xff] %v2625
      %2658 = vst [vmem:[#allocation2 + $0x28] sm:$0xff] %v2626
      %2659 = vst [vmem:[#allocation2 + $0x30] sm:$0xff] %v2627
      %2660 = vst [vmem:[#allocation2 + $0x38] sm:$0xff] %v2628
      %2661 = vst [vmem:[#allocation2 + $0x40] sm:$0xff] %v2629
      %2662 = vst [vmem:[#allocation2 + $0x48] sm:$0xff] %v2630
      %2663 = vst [vmem:[#allocation2 + $0x50] sm:$0xff] %v2631
      %2664 = vst [vmem:[#allocation2 + $0x58] sm:$0xff] %v2632
      %2665 = vst [vmem:[#allocation2 + $0x60] sm:$0xff] %v2633
      %2666 = vst [vmem:[#allocation2 + $0x68] sm:$0xff] %v2634
      %2667 = vst [vmem:[#allocation2 + $0x70] sm:$0xff] %v2635
      %2668 = vst [vmem:[#allocation2 + $0x78] sm:$0xff] %v2636
      %2669 = vst [vmem:[#allocation2 + $0x80] sm:$0xff] %v2637
      %2670 = vst [vmem:[#allocation2 + $0x88] sm:$0xff] %v2638
      %2671 = vst [vmem:[#allocation2 + $0x90] sm:$0xff] %v2639
      %2672 = vst [vmem:[#allocation2 + $0x98] sm:$0xff] %v2640
      %2673 = vst [vmem:[#allocation2 + $0xa0] sm:$0xff] %v2641
      %2674 = vst [vmem:[#allocation2 + $0xa8] sm:$0xff] %v2642
      %2675 = vst [vmem:[#allocation2 + $0xb0] sm:$0xff] %v2643
      %2676 = vst [vmem:[#allocation2 + $0xb8] sm:$0xff] %v2644
      %2677 = vst [vmem:[#allocation2 + $0xc0] sm:$0xff] %v2645
      %2678 = vst [vmem:[#allocation2 + $0xc8] sm:$0xff] %v2646
      %2679 = vst [vmem:[#allocation2 + $0xd0] sm:$0xff] %v2647
      %2680 = vst [vmem:[#allocation2 + $0xd8] sm:$0xff] %v2648
      %2681 = vst [vmem:[#allocation2 + $0xe0] sm:$0xff] %v2649
      %2682 = vst [vmem:[#allocation2 + $0xe8] sm:$0xff] %v2650
      %2683 = vst [vmem:[#allocation2 + $0xf0] sm:$0xff] %v2651
      %2684 = vst [vmem:[#allocation2 + $0xf8] sm:$0xff] %v2652
      %v2685 = vadd.f32 %v202, %v2433
      %v2686 = vadd.f32 %v202, %v2437
      %v2687 = vadd.f32 %v202, %v2443
      %v2688 = vadd.f32 %v202, %v2447
      %v2689 = vadd.f32 %v202, %v2453
      %v2690 = vadd.f32 %v202, %v2457
      %v2691 = vadd.f32 %v202, %v2463
      %v2692 = vadd.f32 %v202, %v2467
      %v2693 = vadd.f32 %v202, %v2473
      %v2694 = vadd.f32 %v202, %v2477
      %v2695 = vadd.f32 %v202, %v2483
      %v2696 = vadd.f32 %v202, %v2487
      %v2697 = vadd.f32 %v202, %v2493
      %v2698 = vadd.f32 %v202, %v2497
      %v2699 = vadd.f32 %v202, %v2503
      %v2700 = vadd.f32 %v202, %v2507
      %v2701 = vadd.f32 %v202, %v2513
      %v2702 = vadd.f32 %v202, %v2517
      %v2703 = vadd.f32 %v202, %v2523
      %v2704 = vadd.f32 %v202, %v2527
      %v2705 = vadd.f32 %v202, %v2533
      %v2706 = vadd.f32 %v202, %v2537
      %v2707 = vadd.f32 %v202, %v2543
      %v2708 = vadd.f32 %v202, %v2547
      %v2709 = vadd.f32 %v202, %v2553
      %v2710 = vadd.f32 %v202, %v2557
      %v2711 = vadd.f32 %v202, %v2563
      %v2712 = vadd.f32 %v202, %v2567
      %v2713 = vadd.f32 %v202, %v2573
      %v2714 = vadd.f32 %v202, %v2577
      %v2715 = vadd.f32 %v202, %v2583
      %v2716 = vadd.f32 %v202, %v2587
      %s2717 = scalar_lea.vmem [#allocation2], 512
      %2718 = vst [vmem:[%s2717] sm:$0xff] %v2685
      %2719 = vst [vmem:[%s2717 + $0x8] sm:$0xff] %v2686
      %2720 = vst [vmem:[%s2717 + $0x10] sm:$0xff] %v2687
      %2721 = vst [vmem:[%s2717 + $0x18] sm:$0xff] %v2688
      %2722 = vst [vmem:[%s2717 + $0x20] sm:$0xff] %v2689
      %2723 = vst [vmem:[%s2717 + $0x28] sm:$0xff] %v2690
      %2724 = vst [vmem:[%s2717 + $0x30] sm:$0xff] %v2691
      %2725 = vst [vmem:[%s2717 + $0x38] sm:$0xff] %v2692
      %2726 = vst [vmem:[%s2717 + $0x40] sm:$0xff] %v2693
      %2727 = vst [vmem:[%s2717 + $0x48] sm:$0xff] %v2694
      %2728 = vst [vmem:[%s2717 + $0x50] sm:$0xff] %v2695
      %2729 = vst [vmem:[%s2717 + $0x58] sm:$0xff] %v2696
      %2730 = vst [vmem:[%s2717 + $0x60] sm:$0xff] %v2697
      %2731 = vst [vmem:[%s2717 + $0x68] sm:$0xff] %v2698
      %2732 = vst [vmem:[%s2717 + $0x70] sm:$0xff] %v2699
      %2733 = vst [vmem:[%s2717 + $0x78] sm:$0xff] %v2700
      %2734 = vst [vmem:[%s2717 + $0x80] sm:$0xff] %v2701
      %2735 = vst [vmem:[%s2717 + $0x88] sm:$0xff] %v2702
      %2736 = vst [vmem:[%s2717 + $0x90] sm:$0xff] %v2703
      %2737 = vst [vmem:[%s2717 + $0x98] sm:$0xff] %v2704
      %2738 = vst [vmem:[%s2717 + $0xa0] sm:$0xff] %v2705
      %2739 = vst [vmem:[%s2717 + $0xa8] sm:$0xff] %v2706
      %2740 = vst [vmem:[%s2717 + $0xb0] sm:$0xff] %v2707
      %2741 = vst [vmem:[%s2717 + $0xb8] sm:$0xff] %v2708
      %2742 = vst [vmem:[%s2717 + $0xc0] sm:$0xff] %v2709
      %2743 = vst [vmem:[%s2717 + $0xc8] sm:$0xff] %v2710
      %2744 = vst [vmem:[%s2717 + $0xd0] sm:$0xff] %v2711
      %2745 = vst [vmem:[%s2717 + $0xd8] sm:$0xff] %v2712
      %2746 = vst [vmem:[%s2717 + $0xe0] sm:$0xff] %v2713
      %2747 = vst [vmem:[%s2717 + $0xe8] sm:$0xff] %v2714
      %2748 = vst [vmem:[%s2717 + $0xf0] sm:$0xff] %v2715
      %2749 = vst [vmem:[%s2717 + $0xf8] sm:$0xff] %v2716
      %v2750 = vld [vmem:[%s2171] sm:$0xf]
      %v2751 = vld [vmem:[%s2171 + $0x4] sm:$0xf]
      %v2752 = vld [vmem:[%s2171 + $0x8] sm:$0x1]
      %v2753 = vld [vmem:[%s2171 + $0xc] sm:$0xf]
      %v2754 = vld [vmem:[%s2171 + $0x10] sm:$0xf]
      %v2755 = vld [vmem:[%s2171 + $0x14] sm:$0x1]
      %v2756 = vld [vmem:[%s2171 + $0x18] sm:$0xf]
      %v2757 = vld [vmem:[%s2171 + $0x1c] sm:$0xf]
      %v2758 = vld [vmem:[%s2171 + $0x20] sm:$0x1]
      %v2759 = vld [vmem:[%s2171 + $0x24] sm:$0xf]
      %v2760 = vld [vmem:[%s2171 + $0x28] sm:$0xf]
      %v2761 = vld [vmem:[%s2171 + $0x2c] sm:$0x1]
      %v2762 = vld [vmem:[%s2171 + $0x30] sm:$0xf]
      %v2763 = vld [vmem:[%s2171 + $0x34] sm:$0xf]
      %v2764 = vld [vmem:[%s2171 + $0x38] sm:$0x1]
      %v2765 = vld [vmem:[%s2171 + $0x3c] sm:$0xf]
      %v2766 = vld [vmem:[%s2171 + $0x40] sm:$0xf]
      %v2767 = vld [vmem:[%s2171 + $0x44] sm:$0x1]
      %v2768 = vld [vmem:[%s2171 + $0x48] sm:$0xf]
      %v2769 = vld [vmem:[%s2171 + $0x4c] sm:$0xf]
      %v2770 = vld [vmem:[%s2171 + $0x50] sm:$0x1]
      %v2771 = vld [vmem:[%s2171 + $0x54] sm:$0xf]
      %v2772 = vld [vmem:[%s2171 + $0x58] sm:$0xf]
      %v2773 = vld [vmem:[%s2171 + $0x5c] sm:$0x1]
      %v2774 = vld [vmem:[%s2171 + $0x60] sm:$0xf]
      %v2775 = vld [vmem:[%s2171 + $0x64] sm:$0xf]
      %v2776 = vld [vmem:[%s2171 + $0x68] sm:$0x1]
      %v2777 = vld [vmem:[%s2171 + $0x6c] sm:$0xf]
      %v2778 = vld [vmem:[%s2171 + $0x70] sm:$0xf]
      %v2779 = vld [vmem:[%s2171 + $0x74] sm:$0x1]
      %v2780 = vld [vmem:[%s2171 + $0x78] sm:$0xf]
      %v2781 = vld [vmem:[%s2171 + $0x7c] sm:$0xf]
      %v2782 = vld [vmem:[%s2171 + $0x80] sm:$0x1]
      %v2783 = vld [vmem:[%s2171 + $0x84] sm:$0xf]
      %v2784 = vld [vmem:[%s2171 + $0x88] sm:$0xf]
      %v2785 = vld [vmem:[%s2171 + $0x8c] sm:$0x1]
      %v2786 = vld [vmem:[%s2171 + $0x90] sm:$0xf]
      %v2787 = vld [vmem:[%s2171 + $0x94] sm:$0xf]
      %v2788 = vld [vmem:[%s2171 + $0x98] sm:$0x1]
      %v2789 = vld [vmem:[%s2171 + $0x9c] sm:$0xf]
      %v2790 = vld [vmem:[%s2171 + $0xa0] sm:$0xf]
      %v2791 = vld [vmem:[%s2171 + $0xa4] sm:$0x1]
      %v2792 = vld [vmem:[%s2171 + $0xa8] sm:$0xf]
      %v2793 = vld [vmem:[%s2171 + $0xac] sm:$0xf]
      %v2794 = vld [vmem:[%s2171 + $0xb0] sm:$0x1]
      %v2795 = vld [vmem:[%s2171 + $0xb4] sm:$0xf]
      %v2796 = vld [vmem:[%s2171 + $0xb8] sm:$0xf]
      %v2797 = vld [vmem:[%s2171 + $0xbc] sm:$0x1]
      %v2799 = vshrl.u32 %v2750, 16
      %v2801 = vrot.slane %v2799, 4
      %v2802 = vshll.u32 %v2750, 16
      %v2804 = vrot.slane %v2802, 5
      %v2805 = vor.u32 %v2801, %v2804
      %v2806 = vrot.slane %v2805, 4
      %v2808 = vshll.u32 %v2751, 16
      %v2810 = vrot.slane %v2808, 5
      %v2811 = vsel %vm673, %v2806, %v2810
      %v2812 = vshrl.u32 %v2751, 16
      %v2814 = vrot.slane %v2812, 4
      %v2815 = vor.u32 %v2814, %v2810
      %v2816 = vrot.slane %v2815, 4
      %v2818 = vshll.u32 %v2752, 16
      %v2820 = vrot.slane %v2818, 5
      %v2821 = vsel %vm673, %v2816, %v2820
      %v2823 = vshrl.u32 %v2753, 16
      %v2825 = vrot.slane %v2823, 4
      %v2826 = vshll.u32 %v2753, 16
      %v2828 = vrot.slane %v2826, 5
      %v2829 = vor.u32 %v2825, %v2828
      %v2830 = vrot.slane %v2829, 4
      %v2832 = vshll.u32 %v2754, 16
      %v2834 = vrot.slane %v2832, 5
      %v2835 = vsel %vm673, %v2830, %v2834
      %v2836 = vshrl.u32 %v2754, 16
      %v2838 = vrot.slane %v2836, 4
      %v2839 = vor.u32 %v2838, %v2834
      %v2840 = vrot.slane %v2839, 4
      %v2842 = vshll.u32 %v2755, 16
      %v2844 = vrot.slane %v2842, 5
      %v2845 = vsel %vm673, %v2840, %v2844
      %v2847 = vshrl.u32 %v2756, 16
      %v2849 = vrot.slane %v2847, 4
      %v2850 = vshll.u32 %v2756, 16
      %v2852 = vrot.slane %v2850, 5
      %v2853 = vor.u32 %v2849, %v2852
      %v2854 = vrot.slane %v2853, 4
      %v2856 = vshll.u32 %v2757, 16
      %v2858 = vrot.slane %v2856, 5
      %v2859 = vsel %vm673, %v2854, %v2858
      %v2860 = vshrl.u32 %v2757, 16
      %v2862 = vrot.slane %v2860, 4
      %v2863 = vor.u32 %v2862, %v2858
      %v2864 = vrot.slane %v2863, 4
      %v2866 = vshll.u32 %v2758, 16
      %v2868 = vrot.slane %v2866, 5
      %v2869 = vsel %vm673, %v2864, %v2868
      %v2871 = vshrl.u32 %v2759, 16
      %v2873 = vrot.slane %v2871, 4
      %v2874 = vshll.u32 %v2759, 16
      %v2876 = vrot.slane %v2874, 5
      %v2877 = vor.u32 %v2873, %v2876
      %v2878 = vrot.slane %v2877, 4
      %v2880 = vshll.u32 %v2760, 16
      %v2882 = vrot.slane %v2880, 5
      %v2883 = vsel %vm673, %v2878, %v2882
      %v2884 = vshrl.u32 %v2760, 16
      %v2886 = vrot.slane %v2884, 4
      %v2887 = vor.u32 %v2886, %v2882
      %v2888 = vrot.slane %v2887, 4
      %v2890 = vshll.u32 %v2761, 16
      %v2892 = vrot.slane %v2890, 5
      %v2893 = vsel %vm673, %v2888, %v2892
      %v2895 = vshrl.u32 %v2762, 16
      %v2897 = vrot.slane %v2895, 4
      %v2898 = vshll.u32 %v2762, 16
      %v2900 = vrot.slane %v2898, 5
      %v2901 = vor.u32 %v2897, %v2900
      %v2902 = vrot.slane %v2901, 4
      %v2904 = vshll.u32 %v2763, 16
      %v2906 = vrot.slane %v2904, 5
      %v2907 = vsel %vm673, %v2902, %v2906
      %v2908 = vshrl.u32 %v2763, 16
      %v2910 = vrot.slane %v2908, 4
      %v2911 = vor.u32 %v2910, %v2906
      %v2912 = vrot.slane %v2911, 4
      %v2914 = vshll.u32 %v2764, 16
      %v2916 = vrot.slane %v2914, 5
      %v2917 = vsel %vm673, %v2912, %v2916
      %v2919 = vshrl.u32 %v2765, 16
      %v2921 = vrot.slane %v2919, 4
      %v2922 = vshll.u32 %v2765, 16
      %v2924 = vrot.slane %v2922, 5
      %v2925 = vor.u32 %v2921, %v2924
      %v2926 = vrot.slane %v2925, 4
      %v2928 = vshll.u32 %v2766, 16
      %v2930 = vrot.slane %v2928, 5
      %v2931 = vsel %vm673, %v2926, %v2930
      %v2932 = vshrl.u32 %v2766, 16
      %v2934 = vrot.slane %v2932, 4
      %v2935 = vor.u32 %v2934, %v2930
      %v2936 = vrot.slane %v2935, 4
      %v2938 = vshll.u32 %v2767, 16
      %v2940 = vrot.slane %v2938, 5
      %v2941 = vsel %vm673, %v2936, %v2940
      %v2943 = vshrl.u32 %v2768, 16
      %v2945 = vrot.slane %v2943, 4
      %v2946 = vshll.u32 %v2768, 16
      %v2948 = vrot.slane %v2946, 5
      %v2949 = vor.u32 %v2945, %v2948
      %v2950 = vrot.slane %v2949, 4
      %v2952 = vshll.u32 %v2769, 16
      %v2954 = vrot.slane %v2952, 5
      %v2955 = vsel %vm673, %v2950, %v2954
      %v2956 = vshrl.u32 %v2769, 16
      %v2958 = vrot.slane %v2956, 4
      %v2959 = vor.u32 %v2958, %v2954
      %v2960 = vrot.slane %v2959, 4
      %v2962 = vshll.u32 %v2770, 16
      %v2964 = vrot.slane %v2962, 5
      %v2965 = vsel %vm673, %v2960, %v2964
      %v2967 = vshrl.u32 %v2771, 16
      %v2969 = vrot.slane %v2967, 4
      %v2970 = vshll.u32 %v2771, 16
      %v2972 = vrot.slane %v2970, 5
      %v2973 = vor.u32 %v2969, %v2972
      %v2974 = vrot.slane %v2973, 4
      %v2976 = vshll.u32 %v2772, 16
      %v2978 = vrot.slane %v2976, 5
      %v2979 = vsel %vm673, %v2974, %v2978
      %v2980 = vshrl.u32 %v2772, 16
      %v2982 = vrot.slane %v2980, 4
      %v2983 = vor.u32 %v2982, %v2978
      %v2984 = vrot.slane %v2983, 4
      %v2986 = vshll.u32 %v2773, 16
      %v2988 = vrot.slane %v2986, 5
      %v2989 = vsel %vm673, %v2984, %v2988
      %v2991 = vshrl.u32 %v2774, 16
      %v2993 = vrot.slane %v2991, 4
      %v2994 = vshll.u32 %v2774, 16
      %v2996 = vrot.slane %v2994, 5
      %v2997 = vor.u32 %v2993, %v2996
      %v2998 = vrot.slane %v2997, 4
      %v3000 = vshll.u32 %v2775, 16
      %v3002 = vrot.slane %v3000, 5
      %v3003 = vsel %vm673, %v2998, %v3002
      %v3004 = vshrl.u32 %v2775, 16
      %v3006 = vrot.slane %v3004, 4
      %v3007 = vor.u32 %v3006, %v3002
      %v3008 = vrot.slane %v3007, 4
      %v3010 = vshll.u32 %v2776, 16
      %v3012 = vrot.slane %v3010, 5
      %v3013 = vsel %vm673, %v3008, %v3012
      %v3015 = vshrl.u32 %v2777, 16
      %v3017 = vrot.slane %v3015, 4
      %v3018 = vshll.u32 %v2777, 16
      %v3020 = vrot.slane %v3018, 5
      %v3021 = vor.u32 %v3017, %v3020
      %v3022 = vrot.slane %v3021, 4
      %v3024 = vshll.u32 %v2778, 16
      %v3026 = vrot.slane %v3024, 5
      %v3027 = vsel %vm673, %v3022, %v3026
      %v3028 = vshrl.u32 %v2778, 16
      %v3030 = vrot.slane %v3028, 4
      %v3031 = vor.u32 %v3030, %v3026
      %v3032 = vrot.slane %v3031, 4
      %v3034 = vshll.u32 %v2779, 16
      %v3036 = vrot.slane %v3034, 5
      %v3037 = vsel %vm673, %v3032, %v3036
      %v3039 = vshrl.u32 %v2780, 16
      %v3041 = vrot.slane %v3039, 4
      %v3042 = vshll.u32 %v2780, 16
      %v3044 = vrot.slane %v3042, 5
      %v3045 = vor.u32 %v3041, %v3044
      %v3046 = vrot.slane %v3045, 4
      %v3048 = vshll.u32 %v2781, 16
      %v3050 = vrot.slane %v3048, 5
      %v3051 = vsel %vm673, %v3046, %v3050
      %v3052 = vshrl.u32 %v2781, 16
      %v3054 = vrot.slane %v3052, 4
      %v3055 = vor.u32 %v3054, %v3050
      %v3056 = vrot.slane %v3055, 4
      %v3058 = vshll.u32 %v2782, 16
      %v3060 = vrot.slane %v3058, 5
      %v3061 = vsel %vm673, %v3056, %v3060
      %v3063 = vshrl.u32 %v2783, 16
      %v3065 = vrot.slane %v3063, 4
      %v3066 = vshll.u32 %v2783, 16
      %v3068 = vrot.slane %v3066, 5
      %v3069 = vor.u32 %v3065, %v3068
      %v3070 = vrot.slane %v3069, 4
      %v3072 = vshll.u32 %v2784, 16
      %v3074 = vrot.slane %v3072, 5
      %v3075 = vsel %vm673, %v3070, %v3074
      %v3076 = vshrl.u32 %v2784, 16
      %v3078 = vrot.slane %v3076, 4
      %v3079 = vor.u32 %v3078, %v3074
      %v3080 = vrot.slane %v3079, 4
      %v3082 = vshll.u32 %v2785, 16
      %v3084 = vrot.slane %v3082, 5
      %v3085 = vsel %vm673, %v3080, %v3084
      %v3087 = vshrl.u32 %v2786, 16
      %v3089 = vrot.slane %v3087, 4
      %v3090 = vshll.u32 %v2786, 16
      %v3092 = vrot.slane %v3090, 5
      %v3093 = vor.u32 %v3089, %v3092
      %v3094 = vrot.slane %v3093, 4
      %v3096 = vshll.u32 %v2787, 16
      %v3098 = vrot.slane %v3096, 5
      %v3099 = vsel %vm673, %v3094, %v3098
      %v3100 = vshrl.u32 %v2787, 16
      %v3102 = vrot.slane %v3100, 4
      %v3103 = vor.u32 %v3102, %v3098
      %v3104 = vrot.slane %v3103, 4
      %v3106 = vshll.u32 %v2788, 16
      %v3108 = vrot.slane %v3106, 5
      %v3109 = vsel %vm673, %v3104, %v3108
      %v3111 = vshrl.u32 %v2789, 16
      %v3113 = vrot.slane %v3111, 4
      %v3114 = vshll.u32 %v2789, 16
      %v3116 = vrot.slane %v3114, 5
      %v3117 = vor.u32 %v3113, %v3116
      %v3118 = vrot.slane %v3117, 4
      %v3120 = vshll.u32 %v2790, 16
      %v3122 = vrot.slane %v3120, 5
      %v3123 = vsel %vm673, %v3118, %v3122
      %v3124 = vshrl.u32 %v2790, 16
      %v3126 = vrot.slane %v3124, 4
      %v3127 = vor.u32 %v3126, %v3122
      %v3128 = vrot.slane %v3127, 4
      %v3130 = vshll.u32 %v2791, 16
      %v3132 = vrot.slane %v3130, 5
      %v3133 = vsel %vm673, %v3128, %v3132
      %v3135 = vshrl.u32 %v2792, 16
      %v3137 = vrot.slane %v3135, 4
      %v3138 = vshll.u32 %v2792, 16
      %v3140 = vrot.slane %v3138, 5
      %v3141 = vor.u32 %v3137, %v3140
      %v3142 = vrot.slane %v3141, 4
      %v3144 = vshll.u32 %v2793, 16
      %v3146 = vrot.slane %v3144, 5
      %v3147 = vsel %vm673, %v3142, %v3146
      %v3148 = vshrl.u32 %v2793, 16
      %v3150 = vrot.slane %v3148, 4
      %v3151 = vor.u32 %v3150, %v3146
      %v3152 = vrot.slane %v3151, 4
      %v3154 = vshll.u32 %v2794, 16
      %v3156 = vrot.slane %v3154, 5
      %v3157 = vsel %vm673, %v3152, %v3156
      %v3159 = vshrl.u32 %v2795, 16
      %v3161 = vrot.slane %v3159, 4
      %v3162 = vshll.u32 %v2795, 16
      %v3164 = vrot.slane %v3162, 5
      %v3165 = vor.u32 %v3161, %v3164
      %v3166 = vrot.slane %v3165, 4
      %v3168 = vshll.u32 %v2796, 16
      %v3170 = vrot.slane %v3168, 5
      %v3171 = vsel %vm673, %v3166, %v3170
      %v3172 = vshrl.u32 %v2796, 16
      %v3174 = vrot.slane %v3172, 4
      %v3175 = vor.u32 %v3174, %v3170
      %v3176 = vrot.slane %v3175, 4
      %v3178 = vshll.u32 %v2797, 16
      %v3180 = vrot.slane %v3178, 5
      %v3181 = vsel %vm673, %v3176, %v3180
      %v3182 = vld [vmem:[%s1 + $0x18] sm:$0xff]
      %v3183 = vld [vmem:[%s1 + $0x20] sm:$0xff]
      %v3184 = vld [vmem:[%s1 + $0x58] sm:$0xff]
      %v3185 = vld [vmem:[%s1 + $0x60] sm:$0xff]
      %v3186 = vld [vmem:[%s1 + $0x98] sm:$0xff]
      %v3187 = vld [vmem:[%s1 + $0xa0] sm:$0xff]
      %v3188 = vld [vmem:[%s1 + $0xd8] sm:$0xff]
      %v3189 = vld [vmem:[%s1 + $0xe0] sm:$0xff]
      %v3190 = vld [vmem:[%s1 + $0x118] sm:$0xff]
      %v3191 = vld [vmem:[%s1 + $0x120] sm:$0xff]
      %v3192 = vld [vmem:[%s1 + $0x158] sm:$0xff]
      %v3193 = vld [vmem:[%s1 + $0x160] sm:$0xff]
      %v3194 = vld [vmem:[%s1 + $0x198] sm:$0xff]
      %v3195 = vld [vmem:[%s1 + $0x1a0] sm:$0xff]
      %v3196 = vld [vmem:[%s1 + $0x1d8] sm:$0xff]
      %v3197 = vld [vmem:[%s1 + $0x1e0] sm:$0xff]
      %v3198 = vld [vmem:[%s1 + $0x218] sm:$0xff]
      %v3199 = vld [vmem:[%s1 + $0x220] sm:$0xff]
      %v3200 = vld [vmem:[%s1 + $0x258] sm:$0xff]
      %v3201 = vld [vmem:[%s1 + $0x260] sm:$0xff]
      %v3202 = vld [vmem:[%s1 + $0x298] sm:$0xff]
      %v3203 = vld [vmem:[%s1 + $0x2a0] sm:$0xff]
      %v3204 = vld [vmem:[%s1 + $0x2d8] sm:$0xff]
      %v3205 = vld [vmem:[%s1 + $0x2e0] sm:$0xff]
      %v3206 = vld [vmem:[%s1 + $0x318] sm:$0xff]
      %v3207 = vld [vmem:[%s1 + $0x320] sm:$0xff]
      %v3208 = vld [vmem:[%s1 + $0x358] sm:$0xff]
      %v3209 = vld [vmem:[%s1 + $0x360] sm:$0xff]
      %v3210 = vld [vmem:[%s1 + $0x398] sm:$0xff]
      %v3211 = vld [vmem:[%s1 + $0x3a0] sm:$0xff]
      %v3212 = vld [vmem:[%s1 + $0x3d8] sm:$0xff]
      %v3213 = vld [vmem:[%s1 + $0x3e0] sm:$0xff]
      %v3214 = vunpack.c.l.b16 %v2811
      %v3215 = vunpack.c.l.b16 %v2821
      %v3216 = vunpack.c.l.b16 %v2835
      %v3217 = vunpack.c.l.b16 %v2845
      %v3218 = vunpack.c.l.b16 %v2859
      %v3219 = vunpack.c.l.b16 %v2869
      %v3220 = vunpack.c.l.b16 %v2883
      %v3221 = vunpack.c.l.b16 %v2893
      %v3222 = vunpack.c.l.b16 %v2907
      %v3223 = vunpack.c.l.b16 %v2917
      %v3224 = vunpack.c.l.b16 %v2931
      %v3225 = vunpack.c.l.b16 %v2941
      %v3226 = vunpack.c.l.b16 %v2955
      %v3227 = vunpack.c.l.b16 %v2965
      %v3228 = vunpack.c.l.b16 %v2979
      %v3229 = vunpack.c.l.b16 %v2989
      %v3230 = vunpack.c.l.b16 %v3003
      %v3231 = vunpack.c.l.b16 %v3013
      %v3232 = vunpack.c.l.b16 %v3027
      %v3233 = vunpack.c.l.b16 %v3037
      %v3234 = vunpack.c.l.b16 %v3051
      %v3235 = vunpack.c.l.b16 %v3061
      %v3236 = vunpack.c.l.b16 %v3075
      %v3237 = vunpack.c.l.b16 %v3085
      %v3238 = vunpack.c.l.b16 %v3099
      %v3239 = vunpack.c.l.b16 %v3109
      %v3240 = vunpack.c.l.b16 %v3123
      %v3241 = vunpack.c.l.b16 %v3133
      %v3242 = vunpack.c.l.b16 %v3147
      %v3243 = vunpack.c.l.b16 %v3157
      %v3244 = vunpack.c.l.b16 %v3171
      %v3245 = vunpack.c.l.b16 %v3181
      %v3246 = vpack.c.b16 %v3215, %v3214
      %v3247 = vpack.c.b16 %v3217, %v3216
      %v3248 = vpack.c.b16 %v3219, %v3218
      %v3249 = vpack.c.b16 %v3221, %v3220
      %v3250 = vpack.c.b16 %v3223, %v3222
      %v3251 = vpack.c.b16 %v3225, %v3224
      %v3252 = vpack.c.b16 %v3227, %v3226
      %v3253 = vpack.c.b16 %v3229, %v3228
      %v3254 = vpack.c.b16 %v3231, %v3230
      %v3255 = vpack.c.b16 %v3233, %v3232
      %v3256 = vpack.c.b16 %v3235, %v3234
      %v3257 = vpack.c.b16 %v3237, %v3236
      %v3258 = vpack.c.b16 %v3239, %v3238
      %v3259 = vpack.c.b16 %v3241, %v3240
      %v3260 = vpack.c.b16 %v3243, %v3242
      %v3261 = vpack.c.b16 %v3245, %v3244
      %v3310 = vunpack.c.l.b16 %v3182
      %v3311 = vunpack.c.h.b16 %v3182
      %v3312 = vunpack.c.l.b16 %v3183
      %v3313 = vunpack.c.h.b16 %v3183
      %v3314 = vunpack.c.l.b16 %v3184
      %v3315 = vunpack.c.h.b16 %v3184
      %v3316 = vunpack.c.l.b16 %v3185
      %v3317 = vunpack.c.h.b16 %v3185
      %v3318 = vunpack.c.l.b16 %v3186
      %v3319 = vunpack.c.h.b16 %v3186
      %v3320 = vunpack.c.l.b16 %v3187
      %v3321 = vunpack.c.h.b16 %v3187
      %v3322 = vunpack.c.l.b16 %v3188
      %v3323 = vunpack.c.h.b16 %v3188
      %v3324 = vunpack.c.l.b16 %v3189
      %v3325 = vunpack.c.h.b16 %v3189
      %v3326 = vunpack.c.l.b16 %v3190
      %v3327 = vunpack.c.h.b16 %v3190
      %v3328 = vunpack.c.l.b16 %v3191
      %v3329 = vunpack.c.h.b16 %v3191
      %v3330 = vunpack.c.l.b16 %v3192
      %v3331 = vunpack.c.h.b16 %v3192
      %v3332 = vunpack.c.l.b16 %v3193
      %v3333 = vunpack.c.h.b16 %v3193
      %v3334 = vunpack.c.l.b16 %v3194
      %v3335 = vunpack.c.h.b16 %v3194
      %v3336 = vunpack.c.l.b16 %v3195
      %v3337 = vunpack.c.h.b16 %v3195
      %v3338 = vunpack.c.l.b16 %v3196
      %v3339 = vunpack.c.h.b16 %v3196
      %v3340 = vunpack.c.l.b16 %v3197
      %v3341 = vunpack.c.h.b16 %v3197
      %v3342 = vunpack.c.l.b16 %v3198
      %v3343 = vunpack.c.h.b16 %v3198
      %v3344 = vunpack.c.l.b16 %v3199
      %v3345 = vunpack.c.h.b16 %v3199
      %v3346 = vunpack.c.l.b16 %v3200
      %v3347 = vunpack.c.h.b16 %v3200
      %v3348 = vunpack.c.l.b16 %v3201
      %v3349 = vunpack.c.h.b16 %v3201
      %v3350 = vunpack.c.l.b16 %v3202
      %v3351 = vunpack.c.h.b16 %v3202
      %v3352 = vunpack.c.l.b16 %v3203
      %v3353 = vunpack.c.h.b16 %v3203
      %v3354 = vunpack.c.l.b16 %v3204
      %v3355 = vunpack.c.h.b16 %v3204
      %v3356 = vunpack.c.l.b16 %v3205
      %v3357 = vunpack.c.h.b16 %v3205
      %v3358 = vunpack.c.l.b16 %v3206
      %v3359 = vunpack.c.h.b16 %v3206
      %v3360 = vunpack.c.l.b16 %v3207
      %v3361 = vunpack.c.h.b16 %v3207
      %v3362 = vunpack.c.l.b16 %v3208
      %v3363 = vunpack.c.h.b16 %v3208
      %v3364 = vunpack.c.l.b16 %v3209
      %v3365 = vunpack.c.h.b16 %v3209
      %v3366 = vunpack.c.l.b16 %v3210
      %v3367 = vunpack.c.h.b16 %v3210
      %v3368 = vunpack.c.l.b16 %v3211
      %v3369 = vunpack.c.h.b16 %v3211
      %v3370 = vunpack.c.l.b16 %v3212
      %v3371 = vunpack.c.h.b16 %v3212
      %v3372 = vunpack.c.l.b16 %v3213
      %v3373 = vunpack.c.h.b16 %v3213
      %v3374 = vpack.c.b16 %v3314, %v3310
      %v3375 = vpack.c.b16 %v3315, %v3311
      %v3376 = vpack.c.b16 %v3316, %v3312
      %v3377 = vpack.c.b16 %v3317, %v3313
      %v3378 = vpack.c.b16 %v3322, %v3318
      %v3379 = vpack.c.b16 %v3323, %v3319
      %v3380 = vpack.c.b16 %v3324, %v3320
      %v3381 = vpack.c.b16 %v3325, %v3321
      %v3382 = vpack.c.b16 %v3330, %v3326
      %v3383 = vpack.c.b16 %v3331, %v3327
      %v3384 = vpack.c.b16 %v3332, %v3328
      %v3385 = vpack.c.b16 %v3333, %v3329
      %v3386 = vpack.c.b16 %v3338, %v3334
      %v3387 = vpack.c.b16 %v3339, %v3335
      %v3388 = vpack.c.b16 %v3340, %v3336
      %v3389 = vpack.c.b16 %v3341, %v3337
      %v3390 = vpack.c.b16 %v3346, %v3342
      %v3391 = vpack.c.b16 %v3347, %v3343
      %v3392 = vpack.c.b16 %v3348, %v3344
      %v3393 = vpack.c.b16 %v3349, %v3345
      %v3394 = vpack.c.b16 %v3354, %v3350
      %v3395 = vpack.c.b16 %v3355, %v3351
      %v3396 = vpack.c.b16 %v3356, %v3352
      %v3397 = vpack.c.b16 %v3357, %v3353
      %v3398 = vpack.c.b16 %v3362, %v3358
      %v3399 = vpack.c.b16 %v3363, %v3359
      %v3400 = vpack.c.b16 %v3364, %v3360
      %v3401 = vpack.c.b16 %v3365, %v3361
      %v3402 = vpack.c.b16 %v3370, %v3366
      %v3403 = vpack.c.b16 %v3371, %v3367
      %v3404 = vpack.c.b16 %v3372, %v3368
      %v3405 = vpack.c.b16 %v3373, %v3369
      %3438 = vmatprep.subr.bf16.mxu0 %v3375
      %3439 = vmatpush1.bf16.msra.mxu0 %v3374
      %3440 = vmatprep.subr.bf16.mxu0 %v3379
      %3441 = vmatpush1.bf16.msra.mxu0 %v3378
      %3442 = vmatprep.subr.bf16.mxu0 %v3383
      %3443 = vmatpush1.bf16.msra.mxu0 %v3382
      %3444 = vmatprep.subr.bf16.mxu0 %v3387
      %3445 = vmatpush1.bf16.msra.mxu0 %v3386
      %3446 = vmatprep.subr.bf16.mxu0 %v3391
      %3447 = vmatpush1.bf16.msra.mxu0 %v3390
      %3448 = vmatprep.subr.bf16.mxu0 %v3395
      %3449 = vmatpush1.bf16.msra.mxu0 %v3394
      %3450 = vmatprep.subr.bf16.mxu0 %v3399
      %3451 = vmatpush1.bf16.msra.mxu0 %v3398
      %3452 = vmatprep.subr.bf16.mxu0 %v3403
      %3453 = vmatpush1.bf16.msra.mxu0 %v3402
      %3454 = vmatprep.subr.bf16.mxu0 0
      %3455 = vmatpush1.bf16.msra.mxu0 0
      %3456 = vmatprep.subr.bf16.mxu0 0
      %3457 = vmatpush1.bf16.msra.mxu0 0
      %3458 = vmatprep.subr.bf16.mxu0 0
      %3459 = vmatpush1.bf16.msra.mxu0 0
      %3460 = vmatprep.subr.bf16.mxu0 0
      %3461 = vmatpush1.bf16.msra.mxu0 0
      %3462 = vmatprep.subr.bf16.mxu0 0
      %3463 = vmatpush1.bf16.msra.mxu0 0
      %3464 = vmatprep.subr.bf16.mxu0 0
      %3465 = vmatpush1.bf16.msra.mxu0 0
      %3466 = vmatprep.subr.bf16.mxu0 0
      %3467 = vmatpush1.bf16.msra.mxu0 0
      %3468 = vmatprep.subr.bf16.mxu0 0
      %3469 = vmatpush1.bf16.msra.mxu0 0
      %3470 = vmatprep.mubr.bf16.mxu0 0
      %3471 = vmatmul.mubr.bf16.gmra.mrb[0].mxu0 %v3246
      %v3472 = vpop.f32.mrb[0].mxu0
      %v3473 = vadd.f32 0.0, %v3472
      %v3474 = vpop.f32.mrb[0].mxu0
      %v3475 = vadd.f32 0.0, %v3474
      %v3476 = vpop.f32.mrb[0].mxu0
      %v3477 = vadd.f32 0.0, %v3476
      %v3478 = vpop.f32.mrb[0].mxu0
      %v3479 = vadd.f32 0.0, %v3478
      %3480 = vmatprep.mubr.bf16.mxu0 0
      %3481 = vmatmul.mubr.bf16.gmra.mrb[0].mxu0 %v3247
      %v3482 = vpop.f32.mrb[0].mxu0
      %v3483 = vadd.f32 0.0, %v3482
      %v3484 = vpop.f32.mrb[0].mxu0
      %v3485 = vadd.f32 0.0, %v3484
      %v3486 = vpop.f32.mrb[0].mxu0
      %v3487 = vadd.f32 0.0, %v3486
      %v3488 = vpop.f32.mrb[0].mxu0
      %v3489 = vadd.f32 0.0, %v3488
      %3490 = vmatprep.mubr.bf16.mxu0 0
      %3491 = vmatmul.mubr.bf16.gmra.mrb[0].mxu0 %v3248
      %v3492 = vpop.f32.mrb[0].mxu0
      %v3493 = vadd.f32 0.0, %v3492
      %v3494 = vpop.f32.mrb[0].mxu0
      %v3495 = vadd.f32 0.0, %v3494
      %v3496 = vpop.f32.mrb[0].mxu0
      %v3497 = vadd.f32 0.0, %v3496
      %v3498 = vpop.f32.mrb[0].mxu0
      %v3499 = vadd.f32 0.0, %v3498
      %3500 = vmatprep.mubr.bf16.mxu0 0
      %3501 = vmatmul.mubr.bf16.gmra.mrb[0].mxu0 %v3249
      %v3502 = vpop.f32.mrb[0].mxu0
      %v3503 = vadd.f32 0.0, %v3502
      %v3504 = vpop.f32.mrb[0].mxu0
      %v3505 = vadd.f32 0.0, %v3504
      %v3506 = vpop.f32.mrb[0].mxu0
      %v3507 = vadd.f32 0.0, %v3506
      %v3508 = vpop.f32.mrb[0].mxu0
      %v3509 = vadd.f32 0.0, %v3508
      %3510 = vmatprep.mubr.bf16.mxu0 0
      %3511 = vmatmul.mubr.bf16.gmra.mrb[0].mxu0 %v3250
      %v3512 = vpop.f32.mrb[0].mxu0
      %v3513 = vadd.f32 0.0, %v3512
      %v3514 = vpop.f32.mrb[0].mxu0
      %v3515 = vadd.f32 0.0, %v3514
      %v3516 = vpop.f32.mrb[0].mxu0
      %v3517 = vadd.f32 0.0, %v3516
      %v3518 = vpop.f32.mrb[0].mxu0
      %v3519 = vadd.f32 0.0, %v3518
      %3520 = vmatprep.mubr.bf16.mxu0 0
      %3521 = vmatmul.mubr.bf16.gmra.mrb[0].mxu0 %v3251
      %v3522 = vpop.f32.mrb[0].mxu0
      %v3523 = vadd.f32 0.0, %v3522
      %v3524 = vpop.f32.mrb[0].mxu0
      %v3525 = vadd.f32 0.0, %v3524
      %v3526 = vpop.f32.mrb[0].mxu0
      %v3527 = vadd.f32 0.0, %v3526
      %v3528 = vpop.f32.mrb[0].mxu0
      %v3529 = vadd.f32 0.0, %v3528
      %3530 = vmatprep.mubr.bf16.mxu0 0
      %3531 = vmatmul.mubr.bf16.gmra.mrb[0].mxu0 %v3252
      %v3532 = vpop.f32.mrb[0].mxu0
      %v3533 = vadd.f32 0.0, %v3532
      %v3534 = vpop.f32.mrb[0].mxu0
      %v3535 = vadd.f32 0.0, %v3534
      %v3536 = vpop.f32.mrb[0].mxu0
      %v3537 = vadd.f32 0.0, %v3536
      %v3538 = vpop.f32.mrb[0].mxu0
      %v3539 = vadd.f32 0.0, %v3538
      %3540 = vmatprep.mubr.bf16.mxu0 0
      %3541 = vmatmul.mubr.bf16.gmra.mrb[0].mxu0 %v3253
      %v3542 = vpop.f32.mrb[0].mxu0
      %v3543 = vadd.f32 0.0, %v3542
      %v3544 = vpop.f32.mrb[0].mxu0
      %v3545 = vadd.f32 0.0, %v3544
      %v3546 = vpop.f32.mrb[0].mxu0
      %v3547 = vadd.f32 0.0, %v3546
      %v3548 = vpop.f32.mrb[0].mxu0
      %v3549 = vadd.f32 0.0, %v3548
      %3550 = vmatprep.mubr.bf16.mxu0 0
      %3551 = vmatmul.mubr.bf16.gmra.mrb[0].mxu0 %v3254
      %v3552 = vpop.f32.mrb[0].mxu0
      %v3553 = vadd.f32 0.0, %v3552
      %v3554 = vpop.f32.mrb[0].mxu0
      %v3555 = vadd.f32 0.0, %v3554
      %v3556 = vpop.f32.mrb[0].mxu0
      %v3557 = vadd.f32 0.0, %v3556
      %v3558 = vpop.f32.mrb[0].mxu0
      %v3559 = vadd.f32 0.0, %v3558
      %3560 = vmatprep.mubr.bf16.mxu0 0
      %3561 = vmatmul.mubr.bf16.gmra.mrb[0].mxu0 %v3255
      %v3562 = vpop.f32.mrb[0].mxu0
      %v3563 = vadd.f32 0.0, %v3562
      %v3564 = vpop.f32.mrb[0].mxu0
      %v3565 = vadd.f32 0.0, %v3564
      %v3566 = vpop.f32.mrb[0].mxu0
      %v3567 = vadd.f32 0.0, %v3566
      %v3568 = vpop.f32.mrb[0].mxu0
      %v3569 = vadd.f32 0.0, %v3568
      %3570 = vmatprep.mubr.bf16.mxu0 0
      %3571 = vmatmul.mubr.bf16.gmra.mrb[0].mxu0 %v3256
      %v3572 = vpop.f32.mrb[0].mxu0
      %v3573 = vadd.f32 0.0, %v3572
      %v3574 = vpop.f32.mrb[0].mxu0
      %v3575 = vadd.f32 0.0, %v3574
      %v3576 = vpop.f32.mrb[0].mxu0
      %v3577 = vadd.f32 0.0, %v3576
      %v3578 = vpop.f32.mrb[0].mxu0
      %v3579 = vadd.f32 0.0, %v3578
      %3580 = vmatprep.mubr.bf16.mxu0 0
      %3581 = vmatmul.mubr.bf16.gmra.mrb[0].mxu0 %v3257
      %v3582 = vpop.f32.mrb[0].mxu0
      %v3583 = vadd.f32 0.0, %v3582
      %v3584 = vpop.f32.mrb[0].mxu0
      %v3585 = vadd.f32 0.0, %v3584
      %v3586 = vpop.f32.mrb[0].mxu0
      %v3587 = vadd.f32 0.0, %v3586
      %v3588 = vpop.f32.mrb[0].mxu0
      %v3589 = vadd.f32 0.0, %v3588
      %3590 = vmatprep.mubr.bf16.mxu0 0
      %3591 = vmatmul.mubr.bf16.gmra.mrb[0].mxu0 %v3258
      %v3592 = vpop.f32.mrb[0].mxu0
      %v3593 = vadd.f32 0.0, %v3592
      %v3594 = vpop.f32.mrb[0].mxu0
      %v3595 = vadd.f32 0.0, %v3594
      %v3596 = vpop.f32.mrb[0].mxu0
      %v3597 = vadd.f32 0.0, %v3596
      %v3598 = vpop.f32.mrb[0].mxu0
      %v3599 = vadd.f32 0.0, %v3598
      %3600 = vmatprep.mubr.bf16.mxu0 0
      %3601 = vmatmul.mubr.bf16.gmra.mrb[0].mxu0 %v3259
      %v3602 = vpop.f32.mrb[0].mxu0
      %v3603 = vadd.f32 0.0, %v3602
      %v3604 = vpop.f32.mrb[0].mxu0
      %v3605 = vadd.f32 0.0, %v3604
      %v3606 = vpop.f32.mrb[0].mxu0
      %v3607 = vadd.f32 0.0, %v3606
      %v3608 = vpop.f32.mrb[0].mxu0
      %v3609 = vadd.f32 0.0, %v3608
      %3610 = vmatprep.mubr.bf16.mxu0 0
      %3611 = vmatmul.mubr.bf16.gmra.mrb[0].mxu0 %v3260
      %v3612 = vpop.f32.mrb[0].mxu0
      %v3613 = vadd.f32 0.0, %v3612
      %v3614 = vpop.f32.mrb[0].mxu0
      %v3615 = vadd.f32 0.0, %v3614
      %v3616 = vpop.f32.mrb[0].mxu0
      %v3617 = vadd.f32 0.0, %v3616
      %v3618 = vpop.f32.mrb[0].mxu0
      %v3619 = vadd.f32 0.0, %v3618
      %3620 = vmatprep.mubr.bf16.mxu0 0
      %3621 = vmatmul.mubr.bf16.gmra.mrb[0].mxu0 %v3261
      %v3622 = vpop.f32.mrb[0].mxu0
      %v3623 = vadd.f32 0.0, %v3622
      %v3624 = vpop.f32.mrb[0].mxu0
      %v3625 = vadd.f32 0.0, %v3624
      %v3626 = vpop.f32.mrb[0].mxu0
      %v3627 = vadd.f32 0.0, %v3626
      %v3628 = vpop.f32.mrb[0].mxu0
      %v3629 = vadd.f32 0.0, %v3628
      %3630 = vdwg.mxu0
      %3631 = vmatprep.subr.bf16.mxu0 %v3377
      %3632 = vmatpush1.bf16.msra.mxu0 %v3376
      %3633 = vmatprep.subr.bf16.mxu0 %v3381
      %3634 = vmatpush1.bf16.msra.mxu0 %v3380
      %3635 = vmatprep.subr.bf16.mxu0 %v3385
      %3636 = vmatpush1.bf16.msra.mxu0 %v3384
      %3637 = vmatprep.subr.bf16.mxu0 %v3389
      %3638 = vmatpush1.bf16.msra.mxu0 %v3388
      %3639 = vmatprep.subr.bf16.mxu0 %v3393
      %3640 = vmatpush1.bf16.msra.mxu0 %v3392
      %3641 = vmatprep.subr.bf16.mxu0 %v3397
      %3642 = vmatpush1.bf16.msra.mxu0 %v3396
      %3643 = vmatprep.subr.bf16.mxu0 %v3401
      %3644 = vmatpush1.bf16.msra.mxu0 %v3400
      %3645 = vmatprep.subr.bf16.mxu0 %v3405
      %3646 = vmatpush1.bf16.msra.mxu0 %v3404
      %3647 = vmatprep.subr.bf16.mxu0 0
      %3648 = vmatpush1.bf16.msra.mxu0 0
      %3649 = vmatprep.subr.bf16.mxu0 0
      %3650 = vmatpush1.bf16.msra.mxu0 0
      %3651 = vmatprep.subr.bf16.mxu0 0
      %3652 = vmatpush1.bf16.msra.mxu0 0
      %3653 = vmatprep.subr.bf16.mxu0 0
      %3654 = vmatpush1.bf16.msra.mxu0 0
      %3655 = vmatprep.subr.bf16.mxu0 0
      %3656 = vmatpush1.bf16.msra.mxu0 0
      %3657 = vmatprep.subr.bf16.mxu0 0
      %3658 = vmatpush1.bf16.msra.mxu0 0
      %3659 = vmatprep.subr.bf16.mxu0 0
      %3660 = vmatpush1.bf16.msra.mxu0 0
      %3661 = vmatprep.subr.bf16.mxu0 0
      %3662 = vmatpush1.bf16.msra.mxu0 0
      %3663 = vmatprep.mubr.bf16.mxu0 0
      %3664 = vmatmul.mubr.bf16.gmra.mrb[0].mxu0 %v3246
      %v3665 = vpop.f32.mrb[0].mxu0
      %v3666 = vadd.f32 0.0, %v3665
      %v3667 = vpop.f32.mrb[0].mxu0
      %v3668 = vadd.f32 0.0, %v3667
      %v3669 = vpop.f32.mrb[0].mxu0
      %v3670 = vadd.f32 0.0, %v3669
      %v3671 = vpop.f32.mrb[0].mxu0
      %v3672 = vadd.f32 0.0, %v3671
      %3673 = vmatprep.mubr.bf16.mxu0 0
      %3674 = vmatmul.mubr.bf16.gmra.mrb[0].mxu0 %v3247
      %v3675 = vpop.f32.mrb[0].mxu0
      %v3676 = vadd.f32 0.0, %v3675
      %v3677 = vpop.f32.mrb[0].mxu0
      %v3678 = vadd.f32 0.0, %v3677
      %v3679 = vpop.f32.mrb[0].mxu0
      %v3680 = vadd.f32 0.0, %v3679
      %v3681 = vpop.f32.mrb[0].mxu0
      %v3682 = vadd.f32 0.0, %v3681
      %3683 = vmatprep.mubr.bf16.mxu0 0
      %3684 = vmatmul.mubr.bf16.gmra.mrb[0].mxu0 %v3248
      %v3685 = vpop.f32.mrb[0].mxu0
      %v3686 = vadd.f32 0.0, %v3685
      %v3687 = vpop.f32.mrb[0].mxu0
      %v3688 = vadd.f32 0.0, %v3687
      %v3689 = vpop.f32.mrb[0].mxu0
      %v3690 = vadd.f32 0.0, %v3689
      %v3691 = vpop.f32.mrb[0].mxu0
      %v3692 = vadd.f32 0.0, %v3691
      %3693 = vmatprep.mubr.bf16.mxu0 0
      %3694 = vmatmul.mubr.bf16.gmra.mrb[0].mxu0 %v3249
      %v3695 = vpop.f32.mrb[0].mxu0
      %v3696 = vadd.f32 0.0, %v3695
      %v3697 = vpop.f32.mrb[0].mxu0
      %v3698 = vadd.f32 0.0, %v3697
      %v3699 = vpop.f32.mrb[0].mxu0
      %v3700 = vadd.f32 0.0, %v3699
      %v3701 = vpop.f32.mrb[0].mxu0
      %v3702 = vadd.f32 0.0, %v3701
      %3703 = vmatprep.mubr.bf16.mxu0 0
      %3704 = vmatmul.mubr.bf16.gmra.mrb[0].mxu0 %v3250
      %v3705 = vpop.f32.mrb[0].mxu0
      %v3706 = vadd.f32 0.0, %v3705
      %v3707 = vpop.f32.mrb[0].mxu0
      %v3708 = vadd.f32 0.0, %v3707
      %v3709 = vpop.f32.mrb[0].mxu0
      %v3710 = vadd.f32 0.0, %v3709
      %v3711 = vpop.f32.mrb[0].mxu0
      %v3712 = vadd.f32 0.0, %v3711
      %3713 = vmatprep.mubr.bf16.mxu0 0
      %3714 = vmatmul.mubr.bf16.gmra.mrb[0].mxu0 %v3251
      %v3715 = vpop.f32.mrb[0].mxu0
      %v3716 = vadd.f32 0.0, %v3715
      %v3717 = vpop.f32.mrb[0].mxu0
      %v3718 = vadd.f32 0.0, %v3717
      %v3719 = vpop.f32.mrb[0].mxu0
      %v3720 = vadd.f32 0.0, %v3719
      %v3721 = vpop.f32.mrb[0].mxu0
      %v3722 = vadd.f32 0.0, %v3721
      %3723 = vmatprep.mubr.bf16.mxu0 0
      %3724 = vmatmul.mubr.bf16.gmra.mrb[0].mxu0 %v3252
      %v3725 = vpop.f32.mrb[0].mxu0
      %v3726 = vadd.f32 0.0, %v3725
      %v3727 = vpop.f32.mrb[0].mxu0
      %v3728 = vadd.f32 0.0, %v3727
      %v3729 = vpop.f32.mrb[0].mxu0
      %v3730 = vadd.f32 0.0, %v3729
      %v3731 = vpop.f32.mrb[0].mxu0
      %v3732 = vadd.f32 0.0, %v3731
      %3733 = vmatprep.mubr.bf16.mxu0 0
      %3734 = vmatmul.mubr.bf16.gmra.mrb[0].mxu0 %v3253
      %v3735 = vpop.f32.mrb[0].mxu0
      %v3736 = vadd.f32 0.0, %v3735
      %v3737 = vpop.f32.mrb[0].mxu0
      %v3738 = vadd.f32 0.0, %v3737
      %v3739 = vpop.f32.mrb[0].mxu0
      %v3740 = vadd.f32 0.0, %v3739
      %v3741 = vpop.f32.mrb[0].mxu0
      %v3742 = vadd.f32 0.0, %v3741
      %3743 = vmatprep.mubr.bf16.mxu0 0
      %3744 = vmatmul.mubr.bf16.gmra.mrb[0].mxu0 %v3254
      %v3745 = vpop.f32.mrb[0].mxu0
      %v3746 = vadd.f32 0.0, %v3745
      %v3747 = vpop.f32.mrb[0].mxu0
      %v3748 = vadd.f32 0.0, %v3747
      %v3749 = vpop.f32.mrb[0].mxu0
      %v3750 = vadd.f32 0.0, %v3749
      %v3751 = vpop.f32.mrb[0].mxu0
      %v3752 = vadd.f32 0.0, %v3751
      %3753 = vmatprep.mubr.bf16.mxu0 0
      %3754 = vmatmul.mubr.bf16.gmra.mrb[0].mxu0 %v3255
      %v3755 = vpop.f32.mrb[0].mxu0
      %v3756 = vadd.f32 0.0, %v3755
      %v3757 = vpop.f32.mrb[0].mxu0
      %v3758 = vadd.f32 0.0, %v3757
      %v3759 = vpop.f32.mrb[0].mxu0
      %v3760 = vadd.f32 0.0, %v3759
      %v3761 = vpop.f32.mrb[0].mxu0
      %v3762 = vadd.f32 0.0, %v3761
      %3763 = vmatprep.mubr.bf16.mxu0 0
      %3764 = vmatmul.mubr.bf16.gmra.mrb[0].mxu0 %v3256
      %v3765 = vpop.f32.mrb[0].mxu0
      %v3766 = vadd.f32 0.0, %v3765
      %v3767 = vpop.f32.mrb[0].mxu0
      %v3768 = vadd.f32 0.0, %v3767
      %v3769 = vpop.f32.mrb[0].mxu0
      %v3770 = vadd.f32 0.0, %v3769
      %v3771 = vpop.f32.mrb[0].mxu0
      %v3772 = vadd.f32 0.0, %v3771
      %3773 = vmatprep.mubr.bf16.mxu0 0
      %3774 = vmatmul.mubr.bf16.gmra.mrb[0].mxu0 %v3257
      %v3775 = vpop.f32.mrb[0].mxu0
      %v3776 = vadd.f32 0.0, %v3775
      %v3777 = vpop.f32.mrb[0].mxu0
      %v3778 = vadd.f32 0.0, %v3777
      %v3779 = vpop.f32.mrb[0].mxu0
      %v3780 = vadd.f32 0.0, %v3779
      %v3781 = vpop.f32.mrb[0].mxu0
      %v3782 = vadd.f32 0.0, %v3781
      %3783 = vmatprep.mubr.bf16.mxu0 0
      %3784 = vmatmul.mubr.bf16.gmra.mrb[0].mxu0 %v3258
      %v3785 = vpop.f32.mrb[0].mxu0
      %v3786 = vadd.f32 0.0, %v3785
      %v3787 = vpop.f32.mrb[0].mxu0
      %v3788 = vadd.f32 0.0, %v3787
      %v3789 = vpop.f32.mrb[0].mxu0
      %v3790 = vadd.f32 0.0, %v3789
      %v3791 = vpop.f32.mrb[0].mxu0
      %v3792 = vadd.f32 0.0, %v3791
      %3793 = vmatprep.mubr.bf16.mxu0 0
      %3794 = vmatmul.mubr.bf16.gmra.mrb[0].mxu0 %v3259
      %v3795 = vpop.f32.mrb[0].mxu0
      %v3796 = vadd.f32 0.0, %v3795
      %v3797 = vpop.f32.mrb[0].mxu0
      %v3798 = vadd.f32 0.0, %v3797
      %v3799 = vpop.f32.mrb[0].mxu0
      %v3800 = vadd.f32 0.0, %v3799
      %v3801 = vpop.f32.mrb[0].mxu0
      %v3802 = vadd.f32 0.0, %v3801
      %3803 = vmatprep.mubr.bf16.mxu0 0
      %3804 = vmatmul.mubr.bf16.gmra.mrb[0].mxu0 %v3260
      %v3805 = vpop.f32.mrb[0].mxu0
      %v3806 = vadd.f32 0.0, %v3805
      %v3807 = vpop.f32.mrb[0].mxu0
      %v3808 = vadd.f32 0.0, %v3807
      %v3809 = vpop.f32.mrb[0].mxu0
      %v3810 = vadd.f32 0.0, %v3809
      %v3811 = vpop.f32.mrb[0].mxu0
      %v3812 = vadd.f32 0.0, %v3811
      %3813 = vmatprep.mubr.bf16.mxu0 0
      %3814 = vmatmul.mubr.bf16.gmra.mrb[0].mxu0 %v3261
      %v3815 = vpop.f32.mrb[0].mxu0
      %v3816 = vadd.f32 0.0, %v3815
      %v3817 = vpop.f32.mrb[0].mxu0
      %v3818 = vadd.f32 0.0, %v3817
      %v3819 = vpop.f32.mrb[0].mxu0
      %v3820 = vadd.f32 0.0, %v3819
      %v3821 = vpop.f32.mrb[0].mxu0
      %v3822 = vadd.f32 0.0, %v3821
      %3823 = vdwg.mxu0
      %v3824 = vld [vmem:[#allocation2] sm:$0xff]
      %v3825 = vld [vmem:[#allocation2 + $0x8] sm:$0xff]
      %v3826 = vld [vmem:[#allocation2 + $0x10] sm:$0xff]
      %v3827 = vld [vmem:[#allocation2 + $0x18] sm:$0xff]
      %v3828 = vld [vmem:[#allocation2 + $0x20] sm:$0xff]
      %v3829 = vld [vmem:[#allocation2 + $0x28] sm:$0xff]
      %v3830 = vld [vmem:[#allocation2 + $0x30] sm:$0xff]
      %v3831 = vld [vmem:[#allocation2 + $0x38] sm:$0xff]
      %v3832 = vld [vmem:[#allocation2 + $0x40] sm:$0xff]
      %v3833 = vld [vmem:[#allocation2 + $0x48] sm:$0xff]
      %v3834 = vld [vmem:[#allocation2 + $0x50] sm:$0xff]
      %v3835 = vld [vmem:[#allocation2 + $0x58] sm:$0xff]
      %v3836 = vld [vmem:[#allocation2 + $0x60] sm:$0xff]
      %v3837 = vld [vmem:[#allocation2 + $0x68] sm:$0xff]
      %v3838 = vld [vmem:[#allocation2 + $0x70] sm:$0xff]
      %v3839 = vld [vmem:[#allocation2 + $0x78] sm:$0xff]
      %v3840 = vld [vmem:[#allocation2 + $0x80] sm:$0xff]
      %v3841 = vld [vmem:[#allocation2 + $0x88] sm:$0xff]
      %v3842 = vld [vmem:[#allocation2 + $0x90] sm:$0xff]
      %v3843 = vld [vmem:[#allocation2 + $0x98] sm:$0xff]
      %v3844 = vld [vmem:[#allocation2 + $0xa0] sm:$0xff]
      %v3845 = vld [vmem:[#allocation2 + $0xa8] sm:$0xff]
      %v3846 = vld [vmem:[#allocation2 + $0xb0] sm:$0xff]
      %v3847 = vld [vmem:[#allocation2 + $0xb8] sm:$0xff]
      %v3848 = vld [vmem:[#allocation2 + $0xc0] sm:$0xff]
      %v3849 = vld [vmem:[#allocation2 + $0xc8] sm:$0xff]
      %v3850 = vld [vmem:[#allocation2 + $0xd0] sm:$0xff]
      %v3851 = vld [vmem:[#allocation2 + $0xd8] sm:$0xff]
      %v3852 = vld [vmem:[#allocation2 + $0xe0] sm:$0xff]
      %v3853 = vld [vmem:[#allocation2 + $0xe8] sm:$0xff]
      %v3854 = vld [vmem:[#allocation2 + $0xf0] sm:$0xff]
      %v3855 = vld [vmem:[#allocation2 + $0xf8] sm:$0xff]
      %v3856 = vadd.f32 %v3824, %v3473
      %v3857 = vadd.f32 %v3825, %v3477
      %v3858 = vadd.f32 %v3826, %v3483
      %v3859 = vadd.f32 %v3827, %v3487
      %v3860 = vadd.f32 %v3828, %v3493
      %v3861 = vadd.f32 %v3829, %v3497
      %v3862 = vadd.f32 %v3830, %v3503
      %v3863 = vadd.f32 %v3831, %v3507
      %v3864 = vadd.f32 %v3832, %v3513
      %v3865 = vadd.f32 %v3833, %v3517
      %v3866 = vadd.f32 %v3834, %v3523
      %v3867 = vadd.f32 %v3835, %v3527
      %v3868 = vadd.f32 %v3836, %v3533
      %v3869 = vadd.f32 %v3837, %v3537
      %v3870 = vadd.f32 %v3838, %v3543
      %v3871 = vadd.f32 %v3839, %v3547
      %v3872 = vadd.f32 %v3840, %v3553
      %v3873 = vadd.f32 %v3841, %v3557
      %v3874 = vadd.f32 %v3842, %v3563
      %v3875 = vadd.f32 %v3843, %v3567
      %v3876 = vadd.f32 %v3844, %v3573
      %v3877 = vadd.f32 %v3845, %v3577
      %v3878 = vadd.f32 %v3846, %v3583
      %v3879 = vadd.f32 %v3847, %v3587
      %v3880 = vadd.f32 %v3848, %v3593
      %v3881 = vadd.f32 %v3849, %v3597
      %v3882 = vadd.f32 %v3850, %v3603
      %v3883 = vadd.f32 %v3851, %v3607
      %v3884 = vadd.f32 %v3852, %v3613
      %v3885 = vadd.f32 %v3853, %v3617
      %v3886 = vadd.f32 %v3854, %v3623
      %v3887 = vadd.f32 %v3855, %v3627
      %3888 = vst [vmem:[#allocation2] sm:$0xff] %v3856
      %3889 = vst [vmem:[#allocation2 + $0x8] sm:$0xff] %v3857
      %3890 = vst [vmem:[#allocation2 + $0x10] sm:$0xff] %v3858
      %3891 = vst [vmem:[#allocation2 + $0x18] sm:$0xff] %v3859
      %3892 = vst [vmem:[#allocation2 + $0x20] sm:$0xff] %v3860
      %3893 = vst [vmem:[#allocation2 + $0x28] sm:$0xff] %v3861
      %3894 = vst [vmem:[#allocation2 + $0x30] sm:$0xff] %v3862
      %3895 = vst [vmem:[#allocation2 + $0x38] sm:$0xff] %v3863
      %3896 = vst [vmem:[#allocation2 + $0x40] sm:$0xff] %v3864
      %3897 = vst [vmem:[#allocation2 + $0x48] sm:$0xff] %v3865
      %3898 = vst [vmem:[#allocation2 + $0x50] sm:$0xff] %v3866
      %3899 = vst [vmem:[#allocation2 + $0x58] sm:$0xff] %v3867
      %3900 = vst [vmem:[#allocation2 + $0x60] sm:$0xff] %v3868
      %3901 = vst [vmem:[#allocation2 + $0x68] sm:$0xff] %v3869
      %3902 = vst [vmem:[#allocation2 + $0x70] sm:$0xff] %v3870
      %3903 = vst [vmem:[#allocation2 + $0x78] sm:$0xff] %v3871
      %3904 = vst [vmem:[#allocation2 + $0x80] sm:$0xff] %v3872
      %3905 = vst [vmem:[#allocation2 + $0x88] sm:$0xff] %v3873
      %3906 = vst [vmem:[#allocation2 + $0x90] sm:$0xff] %v3874
      %3907 = vst [vmem:[#allocation2 + $0x98] sm:$0xff] %v3875
      %3908 = vst [vmem:[#allocation2 + $0xa0] sm:$0xff] %v3876
      %3909 = vst [vmem:[#allocation2 + $0xa8] sm:$0xff] %v3877
      %3910 = vst [vmem:[#allocation2 + $0xb0] sm:$0xff] %v3878
      %3911 = vst [vmem:[#allocation2 + $0xb8] sm:$0xff] %v3879
      %3912 = vst [vmem:[#allocation2 + $0xc0] sm:$0xff] %v3880
      %3913 = vst [vmem:[#allocation2 + $0xc8] sm:$0xff] %v3881
      %3914 = vst [vmem:[#allocation2 + $0xd0] sm:$0xff] %v3882
      %3915 = vst [vmem:[#allocation2 + $0xd8] sm:$0xff] %v3883
      %3916 = vst [vmem:[#allocation2 + $0xe0] sm:$0xff] %v3884
      %3917 = vst [vmem:[#allocation2 + $0xe8] sm:$0xff] %v3885
      %3918 = vst [vmem:[#allocation2 + $0xf0] sm:$0xff] %v3886
      %3919 = vst [vmem:[#allocation2 + $0xf8] sm:$0xff] %v3887
      %v3920 = vld [vmem:[%s1539] sm:$0xff]
      %v3921 = vld [vmem:[%s1539 + $0x8] sm:$0xff]
      %v3922 = vld [vmem:[%s1539 + $0x10] sm:$0xff]
      %v3923 = vld [vmem:[%s1539 + $0x18] sm:$0xff]
      %v3924 = vld [vmem:[%s1539 + $0x20] sm:$0xff]
      %v3925 = vld [vmem:[%s1539 + $0x28] sm:$0xff]
      %v3926 = vld [vmem:[%s1539 + $0x30] sm:$0xff]
      %v3927 = vld [vmem:[%s1539 + $0x38] sm:$0xff]
      %v3928 = vld [vmem:[%s1539 + $0x40] sm:$0xff]
      %v3929 = vld [vmem:[%s1539 + $0x48] sm:$0xff]
      %v3930 = vld [vmem:[%s1539 + $0x50] sm:$0xff]
      %v3931 = vld [vmem:[%s1539 + $0x58] sm:$0xff]
      %v3932 = vld [vmem:[%s1539 + $0x60] sm:$0xff]
      %v3933 = vld [vmem:[%s1539 + $0x68] sm:$0xff]
      %v3934 = vld [vmem:[%s1539 + $0x70] sm:$0xff]
      %v3935 = vld [vmem:[%s1539 + $0x78] sm:$0xff]
      %v3936 = vld [vmem:[%s1539 + $0x80] sm:$0xff]
      %v3937 = vld [vmem:[%s1539 + $0x88] sm:$0xff]
      %v3938 = vld [vmem:[%s1539 + $0x90] sm:$0xff]
      %v3939 = vld [vmem:[%s1539 + $0x98] sm:$0xff]
      %v3940 = vld [vmem:[%s1539 + $0xa0] sm:$0xff]
      %v3941 = vld [vmem:[%s1539 + $0xa8] sm:$0xff]
      %v3942 = vld [vmem:[%s1539 + $0xb0] sm:$0xff]
      %v3943 = vld [vmem:[%s1539 + $0xb8] sm:$0xff]
      %v3944 = vld [vmem:[%s1539 + $0xc0] sm:$0xff]
      %v3945 = vld [vmem:[%s1539 + $0xc8] sm:$0xff]
      %v3946 = vld [vmem:[%s1539 + $0xd0] sm:$0xff]
      %v3947 = vld [vmem:[%s1539 + $0xd8] sm:$0xff]
      %v3948 = vld [vmem:[%s1539 + $0xe0] sm:$0xff]
      %v3949 = vld [vmem:[%s1539 + $0xe8] sm:$0xff]
      %v3950 = vld [vmem:[%s1539 + $0xf0] sm:$0xff]
      %v3951 = vld [vmem:[%s1539 + $0xf8] sm:$0xff]
      %v3952 = vadd.f32 %v3920, %v3475
      %v3953 = vadd.f32 %v3921, %v3479
      %v3954 = vadd.f32 %v3922, %v3485
      %v3955 = vadd.f32 %v3923, %v3489
      %v3956 = vadd.f32 %v3924, %v3495
      %v3957 = vadd.f32 %v3925, %v3499
      %v3958 = vadd.f32 %v3926, %v3505
      %v3959 = vadd.f32 %v3927, %v3509
      %v3960 = vadd.f32 %v3928, %v3515
      %v3961 = vadd.f32 %v3929, %v3519
      %v3962 = vadd.f32 %v3930, %v3525
      %v3963 = vadd.f32 %v3931, %v3529
      %v3964 = vadd.f32 %v3932, %v3535
      %v3965 = vadd.f32 %v3933, %v3539
      %v3966 = vadd.f32 %v3934, %v3545
      %v3967 = vadd.f32 %v3935, %v3549
      %v3968 = vadd.f32 %v3936, %v3555
      %v3969 = vadd.f32 %v3937, %v3559
      %v3970 = vadd.f32 %v3938, %v3565
      %v3971 = vadd.f32 %v3939, %v3569
      %v3972 = vadd.f32 %v3940, %v3575
      %v3973 = vadd.f32 %v3941, %v3579
      %v3974 = vadd.f32 %v3942, %v3585
      %v3975 = vadd.f32 %v3943, %v3589
      %v3976 = vadd.f32 %v3944, %v3595
      %v3977 = vadd.f32 %v3945, %v3599
      %v3978 = vadd.f32 %v3946, %v3605
      %v3979 = vadd.f32 %v3947, %v3609
      %v3980 = vadd.f32 %v3948, %v3615
      %v3981 = vadd.f32 %v3949, %v3619
      %v3982 = vadd.f32 %v3950, %v3625
      %v3983 = vadd.f32 %v3951, %v3629
      %3984 = vst [vmem:[%s1539] sm:$0xff] %v3952
      %3985 = vst [vmem:[%s1539 + $0x8] sm:$0xff] %v3953
      %3986 = vst [vmem:[%s1539 + $0x10] sm:$0xff] %v3954
      %3987 = vst [vmem:[%s1539 + $0x18] sm:$0xff] %v3955
      %3988 = vst [vmem:[%s1539 + $0x20] sm:$0xff] %v3956
      %3989 = vst [vmem:[%s1539 + $0x28] sm:$0xff] %v3957
      %3990 = vst [vmem:[%s1539 + $0x30] sm:$0xff] %v3958
      %3991 = vst [vmem:[%s1539 + $0x38] sm:$0xff] %v3959
      %3992 = vst [vmem:[%s1539 + $0x40] sm:$0xff] %v3960
      %3993 = vst [vmem:[%s1539 + $0x48] sm:$0xff] %v3961
      %3994 = vst [vmem:[%s1539 + $0x50] sm:$0xff] %v3962
      %3995 = vst [vmem:[%s1539 + $0x58] sm:$0xff] %v3963
      %3996 = vst [vmem:[%s1539 + $0x60] sm:$0xff] %v3964
      %3997 = vst [vmem:[%s1539 + $0x68] sm:$0xff] %v3965
      %3998 = vst [vmem:[%s1539 + $0x70] sm:$0xff] %v3966
      %3999 = vst [vmem:[%s1539 + $0x78] sm:$0xff] %v3967
      %4000 = vst [vmem:[%s1539 + $0x80] sm:$0xff] %v3968
      %4001 = vst [vmem:[%s1539 + $0x88] sm:$0xff] %v3969
      %4002 = vst [vmem:[%s1539 + $0x90] sm:$0xff] %v3970
      %4003 = vst [vmem:[%s1539 + $0x98] sm:$0xff] %v3971
      %4004 = vst [vmem:[%s1539 + $0xa0] sm:$0xff] %v3972
      %4005 = vst [vmem:[%s1539 + $0xa8] sm:$0xff] %v3973
      %4006 = vst [vmem:[%s1539 + $0xb0] sm:$0xff] %v3974
      %4007 = vst [vmem:[%s1539 + $0xb8] sm:$0xff] %v3975
      %4008 = vst [vmem:[%s1539 + $0xc0] sm:$0xff] %v3976
      %4009 = vst [vmem:[%s1539 + $0xc8] sm:$0xff] %v3977
      %4010 = vst [vmem:[%s1539 + $0xd0] sm:$0xff] %v3978
      %4011 = vst [vmem:[%s1539 + $0xd8] sm:$0xff] %v3979
      %4012 = vst [vmem:[%s1539 + $0xe0] sm:$0xff] %v3980
      %4013 = vst [vmem:[%s1539 + $0xe8] sm:$0xff] %v3981
      %4014 = vst [vmem:[%s1539 + $0xf0] sm:$0xff] %v3982
      %4015 = vst [vmem:[%s1539 + $0xf8] sm:$0xff] %v3983
      %v4016 = vld [vmem:[%s2717] sm:$0xff]
      %v4017 = vld [vmem:[%s2717 + $0x8] sm:$0xff]
      %v4018 = vld [vmem:[%s2717 + $0x10] sm:$0xff]
      %v4019 = vld [vmem:[%s2717 + $0x18] sm:$0xff]
      %v4020 = vld [vmem:[%s2717 + $0x20] sm:$0xff]
      %v4021 = vld [vmem:[%s2717 + $0x28] sm:$0xff]
      %v4022 = vld [vmem:[%s2717 + $0x30] sm:$0xff]
      %v4023 = vld [vmem:[%s2717 + $0x38] sm:$0xff]
      %v4024 = vld [vmem:[%s2717 + $0x40] sm:$0xff]
      %v4025 = vld [vmem:[%s2717 + $0x48] sm:$0xff]
      %v4026 = vld [vmem:[%s2717 + $0x50] sm:$0xff]
      %v4027 = vld [vmem:[%s2717 + $0x58] sm:$0xff]
      %v4028 = vld [vmem:[%s2717 + $0x60] sm:$0xff]
      %v4029 = vld [vmem:[%s2717 + $0x68] sm:$0xff]
      %v4030 = vld [vmem:[%s2717 + $0x70] sm:$0xff]
      %v4031 = vld [vmem:[%s2717 + $0x78] sm:$0xff]
      %v4032 = vld [vmem:[%s2717 + $0x80] sm:$0xff]
      %v4033 = vld [vmem:[%s2717 + $0x88] sm:$0xff]
      %v4034 = vld [vmem:[%s2717 + $0x90] sm:$0xff]
      %v4035 = vld [vmem:[%s2717 + $0x98] sm:$0xff]
      %v4036 = vld [vmem:[%s2717 + $0xa0] sm:$0xff]
      %v4037 = vld [vmem:[%s2717 + $0xa8] sm:$0xff]
      %v4038 = vld [vmem:[%s2717 + $0xb0] sm:$0xff]
      %v4039 = vld [vmem:[%s2717 + $0xb8] sm:$0xff]
      %v4040 = vld [vmem:[%s2717 + $0xc0] sm:$0xff]
      %v4041 = vld [vmem:[%s2717 + $0xc8] sm:$0xff]
      %v4042 = vld [vmem:[%s2717 + $0xd0] sm:$0xff]
      %v4043 = vld [vmem:[%s2717 + $0xd8] sm:$0xff]
      %v4044 = vld [vmem:[%s2717 + $0xe0] sm:$0xff]
      %v4045 = vld [vmem:[%s2717 + $0xe8] sm:$0xff]
      %v4046 = vld [vmem:[%s2717 + $0xf0] sm:$0xff]
      %v4047 = vld [vmem:[%s2717 + $0xf8] sm:$0xff]
      %v4048 = vadd.f32 %v4016, %v3666
      %v4049 = vadd.f32 %v4017, %v3670
      %v4050 = vadd.f32 %v4018, %v3676
      %v4051 = vadd.f32 %v4019, %v3680
      %v4052 = vadd.f32 %v4020, %v3686
      %v4053 = vadd.f32 %v4021, %v3690
      %v4054 = vadd.f32 %v4022, %v3696
      %v4055 = vadd.f32 %v4023, %v3700
      %v4056 = vadd.f32 %v4024, %v3706
      %v4057 = vadd.f32 %v4025, %v3710
      %v4058 = vadd.f32 %v4026, %v3716
      %v4059 = vadd.f32 %v4027, %v3720
      %v4060 = vadd.f32 %v4028, %v3726
      %v4061 = vadd.f32 %v4029, %v3730
      %v4062 = vadd.f32 %v4030, %v3736
      %v4063 = vadd.f32 %v4031, %v3740
      %v4064 = vadd.f32 %v4032, %v3746
      %v4065 = vadd.f32 %v4033, %v3750
      %v4066 = vadd.f32 %v4034, %v3756
      %v4067 = vadd.f32 %v4035, %v3760
      %v4068 = vadd.f32 %v4036, %v3766
      %v4069 = vadd.f32 %v4037, %v3770
      %v4070 = vadd.f32 %v4038, %v3776
      %v4071 = vadd.f32 %v4039, %v3780
      %v4072 = vadd.f32 %v4040, %v3786
      %v4073 = vadd.f32 %v4041, %v3790
      %v4074 = vadd.f32 %v4042, %v3796
      %v4075 = vadd.f32 %v4043, %v3800
      %v4076 = vadd.f32 %v4044, %v3806
      %v4077 = vadd.f32 %v4045, %v3810
      %v4078 = vadd.f32 %v4046, %v3816
      %v4079 = vadd.f32 %v4047, %v3820
      %4080 = vst [vmem:[%s2717] sm:$0xff] %v4048
      %4081 = vst [vmem:[%s2717 + $0x8] sm:$0xff] %v4049
      %4082 = vst [vmem:[%s2717 + $0x10] sm:$0xff] %v4050
      %4083 = vst [vmem:[%s2717 + $0x18] sm:$0xff] %v4051
      %4084 = vst [vmem:[%s2717 + $0x20] sm:$0xff] %v4052
      %4085 = vst [vmem:[%s2717 + $0x28] sm:$0xff] %v4053
      %4086 = vst [vmem:[%s2717 + $0x30] sm:$0xff] %v4054
      %4087 = vst [vmem:[%s2717 + $0x38] sm:$0xff] %v4055
      %4088 = vst [vmem:[%s2717 + $0x40] sm:$0xff] %v4056
      %4089 = vst [vmem:[%s2717 + $0x48] sm:$0xff] %v4057
      %4090 = vst [vmem:[%s2717 + $0x50] sm:$0xff] %v4058
      %4091 = vst [vmem:[%s2717 + $0x58] sm:$0xff] %v4059
      %4092 = vst [vmem:[%s2717 + $0x60] sm:$0xff] %v4060
      %4093 = vst [vmem:[%s2717 + $0x68] sm:$0xff] %v4061
      %4094 = vst [vmem:[%s2717 + $0x70] sm:$0xff] %v4062
      %4095 = vst [vmem:[%s2717 + $0x78] sm:$0xff] %v4063
      %4096 = vst [vmem:[%s2717 + $0x80] sm:$0xff] %v4064
      %4097 = vst [vmem:[%s2717 + $0x88] sm:$0xff] %v4065
      %4098 = vst [vmem:[%s2717 + $0x90] sm:$0xff] %v4066
      %4099 = vst [vmem:[%s2717 + $0x98] sm:$0xff] %v4067
      %4100 = vst [vmem:[%s2717 + $0xa0] sm:$0xff] %v4068
      %4101 = vst [vmem:[%s2717 + $0xa8] sm:$0xff] %v4069
      %4102 = vst [vmem:[%s2717 + $0xb0] sm:$0xff] %v4070
      %4103 = vst [vmem:[%s2717 + $0xb8] sm:$0xff] %v4071
      %4104 = vst [vmem:[%s2717 + $0xc0] sm:$0xff] %v4072
      %4105 = vst [vmem:[%s2717 + $0xc8] sm:$0xff] %v4073
      %4106 = vst [vmem:[%s2717 + $0xd0] sm:$0xff] %v4074
      %4107 = vst [vmem:[%s2717 + $0xd8] sm:$0xff] %v4075
      %4108 = vst [vmem:[%s2717 + $0xe0] sm:$0xff] %v4076
      %4109 = vst [vmem:[%s2717 + $0xe8] sm:$0xff] %v4077
      %4110 = vst [vmem:[%s2717 + $0xf0] sm:$0xff] %v4078
      %4111 = vst [vmem:[%s2717 + $0xf8] sm:$0xff] %v4079
      %v4112 = vadd.f32 %v202, %v3668
      %v4113 = vadd.f32 %v202, %v3672
      %v4114 = vadd.f32 %v202, %v3678
      %v4115 = vadd.f32 %v202, %v3682
      %v4116 = vadd.f32 %v202, %v3688
      %v4117 = vadd.f32 %v202, %v3692
      %v4118 = vadd.f32 %v202, %v3698
      %v4119 = vadd.f32 %v202, %v3702
      %v4120 = vadd.f32 %v202, %v3708
      %v4121 = vadd.f32 %v202, %v3712
      %v4122 = vadd.f32 %v202, %v3718
      %v4123 = vadd.f32 %v202, %v3722
      %v4124 = vadd.f32 %v202, %v3728
      %v4125 = vadd.f32 %v202, %v3732
      %v4126 = vadd.f32 %v202, %v3738
      %v4127 = vadd.f32 %v202, %v3742
      %v4128 = vadd.f32 %v202, %v3748
      %v4129 = vadd.f32 %v202, %v3752
      %v4130 = vadd.f32 %v202, %v3758
      %v4131 = vadd.f32 %v202, %v3762
      %v4132 = vadd.f32 %v202, %v3768
      %v4133 = vadd.f32 %v202, %v3772
      %v4134 = vadd.f32 %v202, %v3778
      %v4135 = vadd.f32 %v202, %v3782
      %v4136 = vadd.f32 %v202, %v3788
      %v4137 = vadd.f32 %v202, %v3792
      %v4138 = vadd.f32 %v202, %v3798
      %v4139 = vadd.f32 %v202, %v3802
      %v4140 = vadd.f32 %v202, %v3808
      %v4141 = vadd.f32 %v202, %v3812
      %v4142 = vadd.f32 %v202, %v3818
      %v4143 = vadd.f32 %v202, %v3822
      %s4144 = scalar_lea.vmem [#allocation2], 768
      %4145 = vst [vmem:[%s4144] sm:$0xff] %v4112
      %4146 = vst [vmem:[%s4144 + $0x8] sm:$0xff] %v4113
      %4147 = vst [vmem:[%s4144 + $0x10] sm:$0xff] %v4114
      %4148 = vst [vmem:[%s4144 + $0x18] sm:$0xff] %v4115
      %4149 = vst [vmem:[%s4144 + $0x20] sm:$0xff] %v4116
      %4150 = vst [vmem:[%s4144 + $0x28] sm:$0xff] %v4117
      %4151 = vst [vmem:[%s4144 + $0x30] sm:$0xff] %v4118
      %4152 = vst [vmem:[%s4144 + $0x38] sm:$0xff] %v4119
      %4153 = vst [vmem:[%s4144 + $0x40] sm:$0xff] %v4120
      %4154 = vst [vmem:[%s4144 + $0x48] sm:$0xff] %v4121
      %4155 = vst [vmem:[%s4144 + $0x50] sm:$0xff] %v4122
      %4156 = vst [vmem:[%s4144 + $0x58] sm:$0xff] %v4123
      %4157 = vst [vmem:[%s4144 + $0x60] sm:$0xff] %v4124
      %4158 = vst [vmem:[%s4144 + $0x68] sm:$0xff] %v4125
      %4159 = vst [vmem:[%s4144 + $0x70] sm:$0xff] %v4126
      %4160 = vst [vmem:[%s4144 + $0x78] sm:$0xff] %v4127
      %4161 = vst [vmem:[%s4144 + $0x80] sm:$0xff] %v4128
      %4162 = vst [vmem:[%s4144 + $0x88] sm:$0xff] %v4129
      %4163 = vst [vmem:[%s4144 + $0x90] sm:$0xff] %v4130
      %4164 = vst [vmem:[%s4144 + $0x98] sm:$0xff] %v4131
      %4165 = vst [vmem:[%s4144 + $0xa0] sm:$0xff] %v4132
      %4166 = vst [vmem:[%s4144 + $0xa8] sm:$0xff] %v4133
      %4167 = vst [vmem:[%s4144 + $0xb0] sm:$0xff] %v4134
      %4168 = vst [vmem:[%s4144 + $0xb8] sm:$0xff] %v4135
      %4169 = vst [vmem:[%s4144 + $0xc0] sm:$0xff] %v4136
      %4170 = vst [vmem:[%s4144 + $0xc8] sm:$0xff] %v4137
      %4171 = vst [vmem:[%s4144 + $0xd0] sm:$0xff] %v4138
      %4172 = vst [vmem:[%s4144 + $0xd8] sm:$0xff] %v4139
      %4173 = vst [vmem:[%s4144 + $0xe0] sm:$0xff] %v4140
      %4174 = vst [vmem:[%s4144 + $0xe8] sm:$0xff] %v4141
      %4175 = vst [vmem:[%s4144 + $0xf0] sm:$0xff] %v4142
      %4176 = vst [vmem:[%s4144 + $0xf8] sm:$0xff] %v4143
      %v4177 = vld [vmem:[%s2171] sm:$0xe]
      %v4178 = vld [vmem:[%s2171 + $0x4] sm:$0xf]
      %v4179 = vld [vmem:[%s2171 + $0x8] sm:$0x1]
      %v4180 = vld [vmem:[%s2171 + $0xc] sm:$0xe]
      %v4181 = vld [vmem:[%s2171 + $0x10] sm:$0xf]
      %v4182 = vld [vmem:[%s2171 + $0x14] sm:$0x1]
      %v4183 = vld [vmem:[%s2171 + $0x18] sm:$0xe]
      %v4184 = vld [vmem:[%s2171 + $0x1c] sm:$0xf]
      %v4185 = vld [vmem:[%s2171 + $0x20] sm:$0x1]
      %v4186 = vld [vmem:[%s2171 + $0x24] sm:$0xe]
      %v4187 = vld [vmem:[%s2171 + $0x28] sm:$0xf]
      %v4188 = vld [vmem:[%s2171 + $0x2c] sm:$0x1]
      %v4189 = vld [vmem:[%s2171 + $0x30] sm:$0xe]
      %v4190 = vld [vmem:[%s2171 + $0x34] sm:$0xf]
      %v4191 = vld [vmem:[%s2171 + $0x38] sm:$0x1]
      %v4192 = vld [vmem:[%s2171 + $0x3c] sm:$0xe]
      %v4193 = vld [vmem:[%s2171 + $0x40] sm:$0xf]
      %v4194 = vld [vmem:[%s2171 + $0x44] sm:$0x1]
      %v4195 = vld [vmem:[%s2171 + $0x48] sm:$0xe]
      %v4196 = vld [vmem:[%s2171 + $0x4c] sm:$0xf]
      %v4197 = vld [vmem:[%s2171 + $0x50] sm:$0x1]
      %v4198 = vld [vmem:[%s2171 + $0x54] sm:$0xe]
      %v4199 = vld [vmem:[%s2171 + $0x58] sm:$0xf]
      %v4200 = vld [vmem:[%s2171 + $0x5c] sm:$0x1]
      %v4201 = vld [vmem:[%s2171 + $0x60] sm:$0xe]
      %v4202 = vld [vmem:[%s2171 + $0x64] sm:$0xf]
      %v4203 = vld [vmem:[%s2171 + $0x68] sm:$0x1]
      %v4204 = vld [vmem:[%s2171 + $0x6c] sm:$0xe]
      %v4205 = vld [vmem:[%s2171 + $0x70] sm:$0xf]
      %v4206 = vld [vmem:[%s2171 + $0x74] sm:$0x1]
      %v4207 = vld [vmem:[%s2171 + $0x78] sm:$0xe]
      %v4208 = vld [vmem:[%s2171 + $0x7c] sm:$0xf]
      %v4209 = vld [vmem:[%s2171 + $0x80] sm:$0x1]
      %v4210 = vld [vmem:[%s2171 + $0x84] sm:$0xe]
      %v4211 = vld [vmem:[%s2171 + $0x88] sm:$0xf]
      %v4212 = vld [vmem:[%s2171 + $0x8c] sm:$0x1]
      %v4213 = vld [vmem:[%s2171 + $0x90] sm:$0xe]
      %v4214 = vld [vmem:[%s2171 + $0x94] sm:$0xf]
      %v4215 = vld [vmem:[%s2171 + $0x98] sm:$0x1]
      %v4216 = vld [vmem:[%s2171 + $0x9c] sm:$0xe]
      %v4217 = vld [vmem:[%s2171 + $0xa0] sm:$0xf]
      %v4218 = vld [vmem:[%s2171 + $0xa4] sm:$0x1]
      %v4219 = vld [vmem:[%s2171 + $0xa8] sm:$0xe]
      %v4220 = vld [vmem:[%s2171 + $0xac] sm:$0xf]
      %v4221 = vld [vmem:[%s2171 + $0xb0] sm:$0x1]
      %v4222 = vld [vmem:[%s2171 + $0xb4] sm:$0xe]
      %v4223 = vld [vmem:[%s2171 + $0xb8] sm:$0xf]
      %v4224 = vld [vmem:[%s2171 + $0xbc] sm:$0x1]
      %v4273 = vrot.slane %v4177, 5
      %v4274 = vrot.slane %v4273, 4
      %v4275 = vrot.slane %v4178, 5
      %v4276 = vsel %vm1670, %v4274, %v4275
      %v4277 = vrot.slane %v4275, 4
      %v4278 = vrot.slane %v4179, 5
      %v4279 = vsel %vm1670, %v4277, %v4278
      %v4280 = vrot.slane %v4180, 5
      %v4281 = vrot.slane %v4280, 4
      %v4282 = vrot.slane %v4181, 5
      %v4283 = vsel %vm1670, %v4281, %v4282
      %v4284 = vrot.slane %v4282, 4
      %v4285 = vrot.slane %v4182, 5
      %v4286 = vsel %vm1670, %v4284, %v4285
      %v4287 = vrot.slane %v4183, 5
      %v4288 = vrot.slane %v4287, 4
      %v4289 = vrot.slane %v4184, 5
      %v4290 = vsel %vm1670, %v4288, %v4289
      %v4291 = vrot.slane %v4289, 4
      %v4292 = vrot.slane %v4185, 5
      %v4293 = vsel %vm1670, %v4291, %v4292
      %v4294 = vrot.slane %v4186, 5
      %v4295 = vrot.slane %v4294, 4
      %v4296 = vrot.slane %v4187, 5
      %v4297 = vsel %vm1670, %v4295, %v4296
      %v4298 = vrot.slane %v4296, 4
      %v4299 = vrot.slane %v4188, 5
      %v4300 = vsel %vm1670, %v4298, %v4299
      %v4301 = vrot.slane %v4189, 5
      %v4302 = vrot.slane %v4301, 4
      %v4303 = vrot.slane %v4190, 5
      %v4304 = vsel %vm1670, %v4302, %v4303
      %v4305 = vrot.slane %v4303, 4
      %v4306 = vrot.slane %v4191, 5
      %v4307 = vsel %vm1670, %v4305, %v4306
      %v4308 = vrot.slane %v4192, 5
      %v4309 = vrot.slane %v4308, 4
      %v4310 = vrot.slane %v4193, 5
      %v4311 = vsel %vm1670, %v4309, %v4310
      %v4312 = vrot.slane %v4310, 4
      %v4313 = vrot.slane %v4194, 5
      %v4314 = vsel %vm1670, %v4312, %v4313
      %v4315 = vrot.slane %v4195, 5
      %v4316 = vrot.slane %v4315, 4
      %v4317 = vrot.slane %v4196, 5
      %v4318 = vsel %vm1670, %v4316, %v4317
      %v4319 = vrot.slane %v4317, 4
      %v4320 = vrot.slane %v4197, 5
      %v4321 = vsel %vm1670, %v4319, %v4320
      %v4322 = vrot.slane %v4198, 5
      %v4323 = vrot.slane %v4322, 4
      %v4324 = vrot.slane %v4199, 5
      %v4325 = vsel %vm1670, %v4323, %v4324
      %v4326 = vrot.slane %v4324, 4
      %v4327 = vrot.slane %v4200, 5
      %v4328 = vsel %vm1670, %v4326, %v4327
      %v4329 = vrot.slane %v4201, 5
      %v4330 = vrot.slane %v4329, 4
      %v4331 = vrot.slane %v4202, 5
      %v4332 = vsel %vm1670, %v4330, %v4331
      %v4333 = vrot.slane %v4331, 4
      %v4334 = vrot.slane %v4203, 5
      %v4335 = vsel %vm1670, %v4333, %v4334
      %v4336 = vrot.slane %v4204, 5
      %v4337 = vrot.slane %v4336, 4
      %v4338 = vrot.slane %v4205, 5
      %v4339 = vsel %vm1670, %v4337, %v4338
      %v4340 = vrot.slane %v4338, 4
      %v4341 = vrot.slane %v4206, 5
      %v4342 = vsel %vm1670, %v4340, %v4341
      %v4343 = vrot.slane %v4207, 5
      %v4344 = vrot.slane %v4343, 4
      %v4345 = vrot.slane %v4208, 5
      %v4346 = vsel %vm1670, %v4344, %v4345
      %v4347 = vrot.slane %v4345, 4
      %v4348 = vrot.slane %v4209, 5
      %v4349 = vsel %vm1670, %v4347, %v4348
      %v4350 = vrot.slane %v4210, 5
      %v4351 = vrot.slane %v4350, 4
      %v4352 = vrot.slane %v4211, 5
      %v4353 = vsel %vm1670, %v4351, %v4352
      %v4354 = vrot.slane %v4352, 4
      %v4355 = vrot.slane %v4212, 5
      %v4356 = vsel %vm1670, %v4354, %v4355
      %v4357 = vrot.slane %v4213, 5
      %v4358 = vrot.slane %v4357, 4
      %v4359 = vrot.slane %v4214, 5
      %v4360 = vsel %vm1670, %v4358, %v4359
      %v4361 = vrot.slane %v4359, 4
      %v4362 = vrot.slane %v4215, 5
      %v4363 = vsel %vm1670, %v4361, %v4362
      %v4364 = vrot.slane %v4216, 5
      %v4365 = vrot.slane %v4364, 4
      %v4366 = vrot.slane %v4217, 5
      %v4367 = vsel %vm1670, %v4365, %v4366
      %v4368 = vrot.slane %v4366, 4
      %v4369 = vrot.slane %v4218, 5
      %v4370 = vsel %vm1670, %v4368, %v4369
      %v4371 = vrot.slane %v4219, 5
      %v4372 = vrot.slane %v4371, 4
      %v4373 = vrot.slane %v4220, 5
      %v4374 = vsel %vm1670, %v4372, %v4373
      %v4375 = vrot.slane %v4373, 4
      %v4376 = vrot.slane %v4221, 5
      %v4377 = vsel %vm1670, %v4375, %v4376
      %v4378 = vrot.slane %v4222, 5
      %v4379 = vrot.slane %v4378, 4
      %v4380 = vrot.slane %v4223, 5
      %v4381 = vsel %vm1670, %v4379, %v4380
      %v4382 = vrot.slane %v4380, 4
      %v4383 = vrot.slane %v4224, 5
      %v4384 = vsel %vm1670, %v4382, %v4383
      %v4385 = vld [vmem:[%s1 + $0x28] sm:$0xff]
      %v4386 = vld [vmem:[%s1 + $0x68] sm:$0xff]
      %v4387 = vld [vmem:[%s1 + $0xa8] sm:$0xff]
      %v4388 = vld [vmem:[%s1 + $0xe8] sm:$0xff]
      %v4389 = vld [vmem:[%s1 + $0x128] sm:$0xff]
      %v4390 = vld [vmem:[%s1 + $0x168] sm:$0xff]
      %v4391 = vld [vmem:[%s1 + $0x1a8] sm:$0xff]
      %v4392 = vld [vmem:[%s1 + $0x1e8] sm:$0xff]
      %v4393 = vld [vmem:[%s1 + $0x228] sm:$0xff]
      %v4394 = vld [vmem:[%s1 + $0x268] sm:$0xff]
      %v4395 = vld [vmem:[%s1 + $0x2a8] sm:$0xff]
      %v4396 = vld [vmem:[%s1 + $0x2e8] sm:$0xff]
      %v4397 = vld [vmem:[%s1 + $0x328] sm:$0xff]
      %v4398 = vld [vmem:[%s1 + $0x368] sm:$0xff]
      %v4399 = vld [vmem:[%s1 + $0x3a8] sm:$0xff]
      %v4400 = vld [vmem:[%s1 + $0x3e8] sm:$0xff]
      %v4401 = vunpack.c.l.b16 %v4276
      %v4402 = vunpack.c.l.b16 %v4279
      %v4403 = vunpack.c.l.b16 %v4283
      %v4404 = vunpack.c.l.b16 %v4286
      %v4405 = vunpack.c.l.b16 %v4290
      %v4406 = vunpack.c.l.b16 %v4293
      %v4407 = vunpack.c.l.b16 %v4297
      %v4408 = vunpack.c.l.b16 %v4300
      %v4409 = vunpack.c.l.b16 %v4304
      %v4410 = vunpack.c.l.b16 %v4307
      %v4411 = vunpack.c.l.b16 %v4311
      %v4412 = vunpack.c.l.b16 %v4314
      %v4413 = vunpack.c.l.b16 %v4318
      %v4414 = vunpack.c.l.b16 %v4321
      %v4415 = vunpack.c.l.b16 %v4325
      %v4416 = vunpack.c.l.b16 %v4328
      %v4417 = vunpack.c.l.b16 %v4332
      %v4418 = vunpack.c.l.b16 %v4335
      %v4419 = vunpack.c.l.b16 %v4339
      %v4420 = vunpack.c.l.b16 %v4342
      %v4421 = vunpack.c.l.b16 %v4346
      %v4422 = vunpack.c.l.b16 %v4349
      %v4423 = vunpack.c.l.b16 %v4353
      %v4424 = vunpack.c.l.b16 %v4356
      %v4425 = vunpack.c.l.b16 %v4360
      %v4426 = vunpack.c.l.b16 %v4363
      %v4427 = vunpack.c.l.b16 %v4367
      %v4428 = vunpack.c.l.b16 %v4370
      %v4429 = vunpack.c.l.b16 %v4374
      %v4430 = vunpack.c.l.b16 %v4377
      %v4431 = vunpack.c.l.b16 %v4381
      %v4432 = vunpack.c.l.b16 %v4384
      %v4433 = vpack.c.b16 %v4402, %v4401
      %v4434 = vpack.c.b16 %v4404, %v4403
      %v4435 = vpack.c.b16 %v4406, %v4405
      %v4436 = vpack.c.b16 %v4408, %v4407
      %v4437 = vpack.c.b16 %v4410, %v4409
      %v4438 = vpack.c.b16 %v4412, %v4411
      %v4439 = vpack.c.b16 %v4414, %v4413
      %v4440 = vpack.c.b16 %v4416, %v4415
      %v4441 = vpack.c.b16 %v4418, %v4417
      %v4442 = vpack.c.b16 %v4420, %v4419
      %v4443 = vpack.c.b16 %v4422, %v4421
      %v4444 = vpack.c.b16 %v4424, %v4423
      %v4445 = vpack.c.b16 %v4426, %v4425
      %v4446 = vpack.c.b16 %v4428, %v4427
      %v4447 = vpack.c.b16 %v4430, %v4429
      %v4448 = vpack.c.b16 %v4432, %v4431
      %v4481 = vunpack.c.l.b16 %v4385
      %v4482 = vunpack.c.h.b16 %v4385
      %v4483 = vunpack.c.l.b16 %v4386
      %v4484 = vunpack.c.h.b16 %v4386
      %v4485 = vunpack.c.l.b16 %v4387
      %v4486 = vunpack.c.h.b16 %v4387
      %v4487 = vunpack.c.l.b16 %v4388
      %v4488 = vunpack.c.h.b16 %v4388
      %v4489 = vunpack.c.l.b16 %v4389
      %v4490 = vunpack.c.h.b16 %v4389
      %v4491 = vunpack.c.l.b16 %v4390
      %v4492 = vunpack.c.h.b16 %v4390
      %v4493 = vunpack.c.l.b16 %v4391
      %v4494 = vunpack.c.h.b16 %v4391
      %v4495 = vunpack.c.l.b16 %v4392
      %v4496 = vunpack.c.h.b16 %v4392
      %v4497 = vunpack.c.l.b16 %v4393
      %v4498 = vunpack.c.h.b16 %v4393
      %v4499 = vunpack.c.l.b16 %v4394
      %v4500 = vunpack.c.h.b16 %v4394
      %v4501 = vunpack.c.l.b16 %v4395
      %v4502 = vunpack.c.h.b16 %v4395
      %v4503 = vunpack.c.l.b16 %v4396
      %v4504 = vunpack.c.h.b16 %v4396
      %v4505 = vunpack.c.l.b16 %v4397
      %v4506 = vunpack.c.h.b16 %v4397
      %v4507 = vunpack.c.l.b16 %v4398
      %v4508 = vunpack.c.h.b16 %v4398
      %v4509 = vunpack.c.l.b16 %v4399
      %v4510 = vunpack.c.h.b16 %v4399
      %v4511 = vunpack.c.l.b16 %v4400
      %v4512 = vunpack.c.h.b16 %v4400
      %v4513 = vpack.c.b16 %v4483, %v4481
      %v4514 = vpack.c.b16 %v4484, %v4482
      %v4515 = vpack.c.b16 %v4487, %v4485
      %v4516 = vpack.c.b16 %v4488, %v4486
      %v4517 = vpack.c.b16 %v4491, %v4489
      %v4518 = vpack.c.b16 %v4492, %v4490
      %v4519 = vpack.c.b16 %v4495, %v4493
      %v4520 = vpack.c.b16 %v4496, %v4494
      %v4521 = vpack.c.b16 %v4499, %v4497
      %v4522 = vpack.c.b16 %v4500, %v4498
      %v4523 = vpack.c.b16 %v4503, %v4501
      %v4524 = vpack.c.b16 %v4504, %v4502
      %v4525 = vpack.c.b16 %v4507, %v4505
      %v4526 = vpack.c.b16 %v4508, %v4506
      %v4527 = vpack.c.b16 %v4511, %v4509
      %v4528 = vpack.c.b16 %v4512, %v4510
      %4545 = vmatprep.subr.bf16.mxu0 %v4514
      %4546 = vmatpush1.bf16.msra.mxu0 %v4513
      %4547 = vmatprep.subr.bf16.mxu0 %v4516
      %4548 = vmatpush1.bf16.msra.mxu0 %v4515
      %4549 = vmatprep.subr.bf16.mxu0 %v4518
      %4550 = vmatpush1.bf16.msra.mxu0 %v4517
      %4551 = vmatprep.subr.bf16.mxu0 %v4520
      %4552 = vmatpush1.bf16.msra.mxu0 %v4519
      %4553 = vmatprep.subr.bf16.mxu0 %v4522
      %4554 = vmatpush1.bf16.msra.mxu0 %v4521
      %4555 = vmatprep.subr.bf16.mxu0 %v4524
      %4556 = vmatpush1.bf16.msra.mxu0 %v4523
      %4557 = vmatprep.subr.bf16.mxu0 %v4526
      %4558 = vmatpush1.bf16.msra.mxu0 %v4525
      %4559 = vmatprep.subr.bf16.mxu0 %v4528
      %4560 = vmatpush1.bf16.msra.mxu0 %v4527
      %4561 = vmatprep.subr.bf16.mxu0 0
      %4562 = vmatpush1.bf16.msra.mxu0 0
      %4563 = vmatprep.subr.bf16.mxu0 0
      %4564 = vmatpush1.bf16.msra.mxu0 0
      %4565 = vmatprep.subr.bf16.mxu0 0
      %4566 = vmatpush1.bf16.msra.mxu0 0
      %4567 = vmatprep.subr.bf16.mxu0 0
      %4568 = vmatpush1.bf16.msra.mxu0 0
      %4569 = vmatprep.subr.bf16.mxu0 0
      %4570 = vmatpush1.bf16.msra.mxu0 0
      %4571 = vmatprep.subr.bf16.mxu0 0
      %4572 = vmatpush1.bf16.msra.mxu0 0
      %4573 = vmatprep.subr.bf16.mxu0 0
      %4574 = vmatpush1.bf16.msra.mxu0 0
      %4575 = vmatprep.subr.bf16.mxu0 0
      %4576 = vmatpush1.bf16.msra.mxu0 0
      %4577 = vmatprep.mubr.bf16.mxu0 0
      %4578 = vmatmul.mubr.bf16.gmra.mrb[0].mxu0 %v4433
      %v4579 = vpop.f32.mrb[0].mxu0
      %v4580 = vadd.f32 0.0, %v4579
      %v4581 = vpop.f32.mrb[0].mxu0
      %v4582 = vadd.f32 0.0, %v4581
      %v4583 = vpop.f32.mrb[0].mxu0
      %v4584 = vadd.f32 0.0, %v4583
      %v4585 = vpop.f32.mrb[0].mxu0
      %v4586 = vadd.f32 0.0, %v4585
      %4587 = vmatprep.mubr.bf16.mxu0 0
      %4588 = vmatmul.mubr.bf16.gmra.mrb[0].mxu0 %v4434
      %v4589 = vpop.f32.mrb[0].mxu0
      %v4590 = vadd.f32 0.0, %v4589
      %v4591 = vpop.f32.mrb[0].mxu0
      %v4592 = vadd.f32 0.0, %v4591
      %v4593 = vpop.f32.mrb[0].mxu0
      %v4594 = vadd.f32 0.0, %v4593
      %v4595 = vpop.f32.mrb[0].mxu0
      %v4596 = vadd.f32 0.0, %v4595
      %4597 = vmatprep.mubr.bf16.mxu0 0
      %4598 = vmatmul.mubr.bf16.gmra.mrb[0].mxu0 %v4435
      %v4599 = vpop.f32.mrb[0].mxu0
      %v4600 = vadd.f32 0.0, %v4599
      %v4601 = vpop.f32.mrb[0].mxu0
      %v4602 = vadd.f32 0.0, %v4601
      %v4603 = vpop.f32.mrb[0].mxu0
      %v4604 = vadd.f32 0.0, %v4603
      %v4605 = vpop.f32.mrb[0].mxu0
      %v4606 = vadd.f32 0.0, %v4605
      %4607 = vmatprep.mubr.bf16.mxu0 0
      %4608 = vmatmul.mubr.bf16.gmra.mrb[0].mxu0 %v4436
      %v4609 = vpop.f32.mrb[0].mxu0
      %v4610 = vadd.f32 0.0, %v4609
      %v4611 = vpop.f32.mrb[0].mxu0
      %v4612 = vadd.f32 0.0, %v4611
      %v4613 = vpop.f32.mrb[0].mxu0
      %v4614 = vadd.f32 0.0, %v4613
      %v4615 = vpop.f32.mrb[0].mxu0
      %v4616 = vadd.f32 0.0, %v4615
      %4617 = vmatprep.mubr.bf16.mxu0 0
      %4618 = vmatmul.mubr.bf16.gmra.mrb[0].mxu0 %v4437
      %v4619 = vpop.f32.mrb[0].mxu0
      %v4620 = vadd.f32 0.0, %v4619
      %v4621 = vpop.f32.mrb[0].mxu0
      %v4622 = vadd.f32 0.0, %v4621
      %v4623 = vpop.f32.mrb[0].mxu0
      %v4624 = vadd.f32 0.0, %v4623
      %v4625 = vpop.f32.mrb[0].mxu0
      %v4626 = vadd.f32 0.0, %v4625
      %4627 = vmatprep.mubr.bf16.mxu0 0
      %4628 = vmatmul.mubr.bf16.gmra.mrb[0].mxu0 %v4438
      %v4629 = vpop.f32.mrb[0].mxu0
      %v4630 = vadd.f32 0.0, %v4629
      %v4631 = vpop.f32.mrb[0].mxu0
      %v4632 = vadd.f32 0.0, %v4631
      %v4633 = vpop.f32.mrb[0].mxu0
      %v4634 = vadd.f32 0.0, %v4633
      %v4635 = vpop.f32.mrb[0].mxu0
      %v4636 = vadd.f32 0.0, %v4635
      %4637 = vmatprep.mubr.bf16.mxu0 0
      %4638 = vmatmul.mubr.bf16.gmra.mrb[0].mxu0 %v4439
      %v4639 = vpop.f32.mrb[0].mxu0
      %v4640 = vadd.f32 0.0, %v4639
      %v4641 = vpop.f32.mrb[0].mxu0
      %v4642 = vadd.f32 0.0, %v4641
      %v4643 = vpop.f32.mrb[0].mxu0
      %v4644 = vadd.f32 0.0, %v4643
      %v4645 = vpop.f32.mrb[0].mxu0
      %v4646 = vadd.f32 0.0, %v4645
      %4647 = vmatprep.mubr.bf16.mxu0 0
      %4648 = vmatmul.mubr.bf16.gmra.mrb[0].mxu0 %v4440
      %v4649 = vpop.f32.mrb[0].mxu0
      %v4650 = vadd.f32 0.0, %v4649
      %v4651 = vpop.f32.mrb[0].mxu0
      %v4652 = vadd.f32 0.0, %v4651
      %v4653 = vpop.f32.mrb[0].mxu0
      %v4654 = vadd.f32 0.0, %v4653
      %v4655 = vpop.f32.mrb[0].mxu0
      %v4656 = vadd.f32 0.0, %v4655
      %4657 = vmatprep.mubr.bf16.mxu0 0
      %4658 = vmatmul.mubr.bf16.gmra.mrb[0].mxu0 %v4441
      %v4659 = vpop.f32.mrb[0].mxu0
      %v4660 = vadd.f32 0.0, %v4659
      %v4661 = vpop.f32.mrb[0].mxu0
      %v4662 = vadd.f32 0.0, %v4661
      %v4663 = vpop.f32.mrb[0].mxu0
      %v4664 = vadd.f32 0.0, %v4663
      %v4665 = vpop.f32.mrb[0].mxu0
      %v4666 = vadd.f32 0.0, %v4665
      %4667 = vmatprep.mubr.bf16.mxu0 0
      %4668 = vmatmul.mubr.bf16.gmra.mrb[0].mxu0 %v4442
      %v4669 = vpop.f32.mrb[0].mxu0
      %v4670 = vadd.f32 0.0, %v4669
      %v4671 = vpop.f32.mrb[0].mxu0
      %v4672 = vadd.f32 0.0, %v4671
      %v4673 = vpop.f32.mrb[0].mxu0
      %v4674 = vadd.f32 0.0, %v4673
      %v4675 = vpop.f32.mrb[0].mxu0
      %v4676 = vadd.f32 0.0, %v4675
      %4677 = vmatprep.mubr.bf16.mxu0 0
      %4678 = vmatmul.mubr.bf16.gmra.mrb[0].mxu0 %v4443
      %v4679 = vpop.f32.mrb[0].mxu0
      %v4680 = vadd.f32 0.0, %v4679
      %v4681 = vpop.f32.mrb[0].mxu0
      %v4682 = vadd.f32 0.0, %v4681
      %v4683 = vpop.f32.mrb[0].mxu0
      %v4684 = vadd.f32 0.0, %v4683
      %v4685 = vpop.f32.mrb[0].mxu0
      %v4686 = vadd.f32 0.0, %v4685
      %4687 = vmatprep.mubr.bf16.mxu0 0
      %4688 = vmatmul.mubr.bf16.gmra.mrb[0].mxu0 %v4444
      %v4689 = vpop.f32.mrb[0].mxu0
      %v4690 = vadd.f32 0.0, %v4689
      %v4691 = vpop.f32.mrb[0].mxu0
      %v4692 = vadd.f32 0.0, %v4691
      %v4693 = vpop.f32.mrb[0].mxu0
      %v4694 = vadd.f32 0.0, %v4693
      %v4695 = vpop.f32.mrb[0].mxu0
      %v4696 = vadd.f32 0.0, %v4695
      %4697 = vmatprep.mubr.bf16.mxu0 0
      %4698 = vmatmul.mubr.bf16.gmra.mrb[0].mxu0 %v4445
      %v4699 = vpop.f32.mrb[0].mxu0
      %v4700 = vadd.f32 0.0, %v4699
      %v4701 = vpop.f32.mrb[0].mxu0
      %v4702 = vadd.f32 0.0, %v4701
      %v4703 = vpop.f32.mrb[0].mxu0
      %v4704 = vadd.f32 0.0, %v4703
      %v4705 = vpop.f32.mrb[0].mxu0
      %v4706 = vadd.f32 0.0, %v4705
      %4707 = vmatprep.mubr.bf16.mxu0 0
      %4708 = vmatmul.mubr.bf16.gmra.mrb[0].mxu0 %v4446
      %v4709 = vpop.f32.mrb[0].mxu0
      %v4710 = vadd.f32 0.0, %v4709
      %v4711 = vpop.f32.mrb[0].mxu0
      %v4712 = vadd.f32 0.0, %v4711
      %v4713 = vpop.f32.mrb[0].mxu0
      %v4714 = vadd.f32 0.0, %v4713
      %v4715 = vpop.f32.mrb[0].mxu0
      %v4716 = vadd.f32 0.0, %v4715
      %4717 = vmatprep.mubr.bf16.mxu0 0
      %4718 = vmatmul.mubr.bf16.gmra.mrb[0].mxu0 %v4447
      %v4719 = vpop.f32.mrb[0].mxu0
      %v4720 = vadd.f32 0.0, %v4719
      %v4721 = vpop.f32.mrb[0].mxu0
      %v4722 = vadd.f32 0.0, %v4721
      %v4723 = vpop.f32.mrb[0].mxu0
      %v4724 = vadd.f32 0.0, %v4723
      %v4725 = vpop.f32.mrb[0].mxu0
      %v4726 = vadd.f32 0.0, %v4725
      %4727 = vmatprep.mubr.bf16.mxu0 0
      %4728 = vmatmul.mubr.bf16.gmra.mrb[0].mxu0 %v4448
      %v4729 = vpop.f32.mrb[0].mxu0
      %v4730 = vadd.f32 0.0, %v4729
      %v4731 = vpop.f32.mrb[0].mxu0
      %v4732 = vadd.f32 0.0, %v4731
      %v4733 = vpop.f32.mrb[0].mxu0
      %v4734 = vadd.f32 0.0, %v4733
      %v4735 = vpop.f32.mrb[0].mxu0
      %v4736 = vadd.f32 0.0, %v4735
      %4737 = vdwg.mxu0
      %v4738 = vld [vmem:[%s1539] sm:$0xff]
      %v4739 = vld [vmem:[%s1539 + $0x8] sm:$0xff]
      %v4740 = vld [vmem:[%s1539 + $0x10] sm:$0xff]
      %v4741 = vld [vmem:[%s1539 + $0x18] sm:$0xff]
      %v4742 = vld [vmem:[%s1539 + $0x20] sm:$0xff]
      %v4743 = vld [vmem:[%s1539 + $0x28] sm:$0xff]
      %v4744 = vld [vmem:[%s1539 + $0x30] sm:$0xff]
      %v4745 = vld [vmem:[%s1539 + $0x38] sm:$0xff]
      %v4746 = vld [vmem:[%s1539 + $0x40] sm:$0xff]
      %v4747 = vld [vmem:[%s1539 + $0x48] sm:$0xff]
      %v4748 = vld [vmem:[%s1539 + $0x50] sm:$0xff]
      %v4749 = vld [vmem:[%s1539 + $0x58] sm:$0xff]
      %v4750 = vld [vmem:[%s1539 + $0x60] sm:$0xff]
      %v4751 = vld [vmem:[%s1539 + $0x68] sm:$0xff]
      %v4752 = vld [vmem:[%s1539 + $0x70] sm:$0xff]
      %v4753 = vld [vmem:[%s1539 + $0x78] sm:$0xff]
      %v4754 = vld [vmem:[%s1539 + $0x80] sm:$0xff]
      %v4755 = vld [vmem:[%s1539 + $0x88] sm:$0xff]
      %v4756 = vld [vmem:[%s1539 + $0x90] sm:$0xff]
      %v4757 = vld [vmem:[%s1539 + $0x98] sm:$0xff]
      %v4758 = vld [vmem:[%s1539 + $0xa0] sm:$0xff]
      %v4759 = vld [vmem:[%s1539 + $0xa8] sm:$0xff]
      %v4760 = vld [vmem:[%s1539 + $0xb0] sm:$0xff]
      %v4761 = vld [vmem:[%s1539 + $0xb8] sm:$0xff]
      %v4762 = vld [vmem:[%s1539 + $0xc0] sm:$0xff]
      %v4763 = vld [vmem:[%s1539 + $0xc8] sm:$0xff]
      %v4764 = vld [vmem:[%s1539 + $0xd0] sm:$0xff]
      %v4765 = vld [vmem:[%s1539 + $0xd8] sm:$0xff]
      %v4766 = vld [vmem:[%s1539 + $0xe0] sm:$0xff]
      %v4767 = vld [vmem:[%s1539 + $0xe8] sm:$0xff]
      %v4768 = vld [vmem:[%s1539 + $0xf0] sm:$0xff]
      %v4769 = vld [vmem:[%s1539 + $0xf8] sm:$0xff]
      %v4770 = vadd.f32 %v4738, %v4580
      %v4771 = vadd.f32 %v4739, %v4584
      %v4772 = vadd.f32 %v4740, %v4590
      %v4773 = vadd.f32 %v4741, %v4594
      %v4774 = vadd.f32 %v4742, %v4600
      %v4775 = vadd.f32 %v4743, %v4604
      %v4776 = vadd.f32 %v4744, %v4610
      %v4777 = vadd.f32 %v4745, %v4614
      %v4778 = vadd.f32 %v4746, %v4620
      %v4779 = vadd.f32 %v4747, %v4624
      %v4780 = vadd.f32 %v4748, %v4630
      %v4781 = vadd.f32 %v4749, %v4634
      %v4782 = vadd.f32 %v4750, %v4640
      %v4783 = vadd.f32 %v4751, %v4644
      %v4784 = vadd.f32 %v4752, %v4650
      %v4785 = vadd.f32 %v4753, %v4654
      %v4786 = vadd.f32 %v4754, %v4660
      %v4787 = vadd.f32 %v4755, %v4664
      %v4788 = vadd.f32 %v4756, %v4670
      %v4789 = vadd.f32 %v4757, %v4674
      %v4790 = vadd.f32 %v4758, %v4680
      %v4791 = vadd.f32 %v4759, %v4684
      %v4792 = vadd.f32 %v4760, %v4690
      %v4793 = vadd.f32 %v4761, %v4694
      %v4794 = vadd.f32 %v4762, %v4700
      %v4795 = vadd.f32 %v4763, %v4704
      %v4796 = vadd.f32 %v4764, %v4710
      %v4797 = vadd.f32 %v4765, %v4714
      %v4798 = vadd.f32 %v4766, %v4720
      %v4799 = vadd.f32 %v4767, %v4724
      %v4800 = vadd.f32 %v4768, %v4730
      %v4801 = vadd.f32 %v4769, %v4734
      %4802 = vst [vmem:[%s1539] sm:$0xff] %v4770
      %4803 = vst [vmem:[%s1539 + $0x8] sm:$0xff] %v4771
      %4804 = vst [vmem:[%s1539 + $0x10] sm:$0xff] %v4772
      %4805 = vst [vmem:[%s1539 + $0x18] sm:$0xff] %v4773
      %4806 = vst [vmem:[%s1539 + $0x20] sm:$0xff] %v4774
      %4807 = vst [vmem:[%s1539 + $0x28] sm:$0xff] %v4775
      %4808 = vst [vmem:[%s1539 + $0x30] sm:$0xff] %v4776
      %4809 = vst [vmem:[%s1539 + $0x38] sm:$0xff] %v4777
      %4810 = vst [vmem:[%s1539 + $0x40] sm:$0xff] %v4778
      %4811 = vst [vmem:[%s1539 + $0x48] sm:$0xff] %v4779
      %4812 = vst [vmem:[%s1539 + $0x50] sm:$0xff] %v4780
      %4813 = vst [vmem:[%s1539 + $0x58] sm:$0xff] %v4781
      %4814 = vst [vmem:[%s1539 + $0x60] sm:$0xff] %v4782
      %4815 = vst [vmem:[%s1539 + $0x68] sm:$0xff] %v4783
      %4816 = vst [vmem:[%s1539 + $0x70] sm:$0xff] %v4784
      %4817 = vst [vmem:[%s1539 + $0x78] sm:$0xff] %v4785
      %4818 = vst [vmem:[%s1539 + $0x80] sm:$0xff] %v4786
      %4819 = vst [vmem:[%s1539 + $0x88] sm:$0xff] %v4787
      %4820 = vst [vmem:[%s1539 + $0x90] sm:$0xff] %v4788
      %4821 = vst [vmem:[%s1539 + $0x98] sm:$0xff] %v4789
      %4822 = vst [vmem:[%s1539 + $0xa0] sm:$0xff] %v4790
      %4823 = vst [vmem:[%s1539 + $0xa8] sm:$0xff] %v4791
      %4824 = vst [vmem:[%s1539 + $0xb0] sm:$0xff] %v4792
      %4825 = vst [vmem:[%s1539 + $0xb8] sm:$0xff] %v4793
      %4826 = vst [vmem:[%s1539 + $0xc0] sm:$0xff] %v4794
      %4827 = vst [vmem:[%s1539 + $0xc8] sm:$0xff] %v4795
      %4828 = vst [vmem:[%s1539 + $0xd0] sm:$0xff] %v4796
      %4829 = vst [vmem:[%s1539 + $0xd8] sm:$0xff] %v4797
      %4830 = vst [vmem:[%s1539 + $0xe0] sm:$0xff] %v4798
      %4831 = vst [vmem:[%s1539 + $0xe8] sm:$0xff] %v4799
      %4832 = vst [vmem:[%s1539 + $0xf0] sm:$0xff] %v4800
      %4833 = vst [vmem:[%s1539 + $0xf8] sm:$0xff] %v4801
      %v4834 = vld [vmem:[%s4144] sm:$0xff]
      %v4835 = vld [vmem:[%s4144 + $0x8] sm:$0xff]
      %v4836 = vld [vmem:[%s4144 + $0x10] sm:$0xff]
      %v4837 = vld [vmem:[%s4144 + $0x18] sm:$0xff]
      %v4838 = vld [vmem:[%s4144 + $0x20] sm:$0xff]
      %v4839 = vld [vmem:[%s4144 + $0x28] sm:$0xff]
      %v4840 = vld [vmem:[%s4144 + $0x30] sm:$0xff]
      %v4841 = vld [vmem:[%s4144 + $0x38] sm:$0xff]
      %v4842 = vld [vmem:[%s4144 + $0x40] sm:$0xff]
      %v4843 = vld [vmem:[%s4144 + $0x48] sm:$0xff]
      %v4844 = vld [vmem:[%s4144 + $0x50] sm:$0xff]
      %v4845 = vld [vmem:[%s4144 + $0x58] sm:$0xff]
      %v4846 = vld [vmem:[%s4144 + $0x60] sm:$0xff]
      %v4847 = vld [vmem:[%s4144 + $0x68] sm:$0xff]
      %v4848 = vld [vmem:[%s4144 + $0x70] sm:$0xff]
      %v4849 = vld [vmem:[%s4144 + $0x78] sm:$0xff]
      %v4850 = vld [vmem:[%s4144 + $0x80] sm:$0xff]
      %v4851 = vld [vmem:[%s4144 + $0x88] sm:$0xff]
      %v4852 = vld [vmem:[%s4144 + $0x90] sm:$0xff]
      %v4853 = vld [vmem:[%s4144 + $0x98] sm:$0xff]
      %v4854 = vld [vmem:[%s4144 + $0xa0] sm:$0xff]
      %v4855 = vld [vmem:[%s4144 + $0xa8] sm:$0xff]
      %v4856 = vld [vmem:[%s4144 + $0xb0] sm:$0xff]
      %v4857 = vld [vmem:[%s4144 + $0xb8] sm:$0xff]
      %v4858 = vld [vmem:[%s4144 + $0xc0] sm:$0xff]
      %v4859 = vld [vmem:[%s4144 + $0xc8] sm:$0xff]
      %v4860 = vld [vmem:[%s4144 + $0xd0] sm:$0xff]
      %v4861 = vld [vmem:[%s4144 + $0xd8] sm:$0xff]
      %v4862 = vld [vmem:[%s4144 + $0xe0] sm:$0xff]
      %v4863 = vld [vmem:[%s4144 + $0xe8] sm:$0xff]
      %v4864 = vld [vmem:[%s4144 + $0xf0] sm:$0xff]
      %v4865 = vld [vmem:[%s4144 + $0xf8] sm:$0xff]
      %v4866 = vadd.f32 %v4834, %v4582
      %v4867 = vadd.f32 %v4835, %v4586
      %v4868 = vadd.f32 %v4836, %v4592
      %v4869 = vadd.f32 %v4837, %v4596
      %v4870 = vadd.f32 %v4838, %v4602
      %v4871 = vadd.f32 %v4839, %v4606
      %v4872 = vadd.f32 %v4840, %v4612
      %v4873 = vadd.f32 %v4841, %v4616
      %v4874 = vadd.f32 %v4842, %v4622
      %v4875 = vadd.f32 %v4843, %v4626
      %v4876 = vadd.f32 %v4844, %v4632
      %v4877 = vadd.f32 %v4845, %v4636
      %v4878 = vadd.f32 %v4846, %v4642
      %v4879 = vadd.f32 %v4847, %v4646
      %v4880 = vadd.f32 %v4848, %v4652
      %v4881 = vadd.f32 %v4849, %v4656
      %v4882 = vadd.f32 %v4850, %v4662
      %v4883 = vadd.f32 %v4851, %v4666
      %v4884 = vadd.f32 %v4852, %v4672
      %v4885 = vadd.f32 %v4853, %v4676
      %v4886 = vadd.f32 %v4854, %v4682
      %v4887 = vadd.f32 %v4855, %v4686
      %v4888 = vadd.f32 %v4856, %v4692
      %v4889 = vadd.f32 %v4857, %v4696
      %v4890 = vadd.f32 %v4858, %v4702
      %v4891 = vadd.f32 %v4859, %v4706
      %v4892 = vadd.f32 %v4860, %v4712
      %v4893 = vadd.f32 %v4861, %v4716
      %v4894 = vadd.f32 %v4862, %v4722
      %v4895 = vadd.f32 %v4863, %v4726
      %v4896 = vadd.f32 %v4864, %v4732
      %v4897 = vadd.f32 %v4865, %v4736
      %4898 = vst [vmem:[%s4144] sm:$0xff] %v4866
      %4899 = vst [vmem:[%s4144 + $0x8] sm:$0xff] %v4867
      %4900 = vst [vmem:[%s4144 + $0x10] sm:$0xff] %v4868
      %4901 = vst [vmem:[%s4144 + $0x18] sm:$0xff] %v4869
      %4902 = vst [vmem:[%s4144 + $0x20] sm:$0xff] %v4870
      %4903 = vst [vmem:[%s4144 + $0x28] sm:$0xff] %v4871
      %4904 = vst [vmem:[%s4144 + $0x30] sm:$0xff] %v4872
      %4905 = vst [vmem:[%s4144 + $0x38] sm:$0xff] %v4873
      %4906 = vst [vmem:[%s4144 + $0x40] sm:$0xff] %v4874
      %4907 = vst [vmem:[%s4144 + $0x48] sm:$0xff] %v4875
      %4908 = vst [vmem:[%s4144 + $0x50] sm:$0xff] %v4876
      %4909 = vst [vmem:[%s4144 + $0x58] sm:$0xff] %v4877
      %4910 = vst [vmem:[%s4144 + $0x60] sm:$0xff] %v4878
      %4911 = vst [vmem:[%s4144 + $0x68] sm:$0xff] %v4879
      %4912 = vst [vmem:[%s4144 + $0x70] sm:$0xff] %v4880
      %4913 = vst [vmem:[%s4144 + $0x78] sm:$0xff] %v4881
      %4914 = vst [vmem:[%s4144 + $0x80] sm:$0xff] %v4882
      %4915 = vst [vmem:[%s4144 + $0x88] sm:$0xff] %v4883
      %4916 = vst [vmem:[%s4144 + $0x90] sm:$0xff] %v4884
      %4917 = vst [vmem:[%s4144 + $0x98] sm:$0xff] %v4885
      %4918 = vst [vmem:[%s4144 + $0xa0] sm:$0xff] %v4886
      %4919 = vst [vmem:[%s4144 + $0xa8] sm:$0xff] %v4887
      %4920 = vst [vmem:[%s4144 + $0xb0] sm:$0xff] %v4888
      %4921 = vst [vmem:[%s4144 + $0xb8] sm:$0xff] %v4889
      %4922 = vst [vmem:[%s4144 + $0xc0] sm:$0xff] %v4890
      %4923 = vst [vmem:[%s4144 + $0xc8] sm:$0xff] %v4891
      %4924 = vst [vmem:[%s4144 + $0xd0] sm:$0xff] %v4892
      %4925 = vst [vmem:[%s4144 + $0xd8] sm:$0xff] %v4893
      %4926 = vst [vmem:[%s4144 + $0xe0] sm:$0xff] %v4894
      %4927 = vst [vmem:[%s4144 + $0xe8] sm:$0xff] %v4895
      %4928 = vst [vmem:[%s4144 + $0xf0] sm:$0xff] %v4896
      %4929 = vst [vmem:[%s4144 + $0xf8] sm:$0xff] %v4897
      %s4930 = sadd.s32 %s197, 2
      %s4931 = smul.u32 %s4930, 3
      %s4932 = smul.addr %s4931, 4
      %s4933 = scalar_lea.vmem %s184, %s4932
      %v4934 = vld [vmem:[%s4933] sm:$0xf]
      %v4935 = vld [vmem:[%s4933 + $0x4] sm:$0xf]
      %v4936 = vld [vmem:[%s4933 + $0xc] sm:$0xf]
      %v4937 = vld [vmem:[%s4933 + $0x10] sm:$0xf]
      %v4938 = vld [vmem:[%s4933 + $0x18] sm:$0xf]
      %v4939 = vld [vmem:[%s4933 + $0x1c] sm:$0xf]
      %v4940 = vld [vmem:[%s4933 + $0x24] sm:$0xf]
      %v4941 = vld [vmem:[%s4933 + $0x28] sm:$0xf]
      %v4942 = vld [vmem:[%s4933 + $0x30] sm:$0xf]
      %v4943 = vld [vmem:[%s4933 + $0x34] sm:$0xf]
      %v4944 = vld [vmem:[%s4933 + $0x3c] sm:$0xf]
      %v4945 = vld [vmem:[%s4933 + $0x40] sm:$0xf]
      %v4946 = vld [vmem:[%s4933 + $0x48] sm:$0xf]
      %v4947 = vld [vmem:[%s4933 + $0x4c] sm:$0xf]
      %v4948 = vld [vmem:[%s4933 + $0x54] sm:$0xf]
      %v4949 = vld [vmem:[%s4933 + $0x58] sm:$0xf]
      %v4950 = vld [vmem:[%s4933 + $0x60] sm:$0xf]
      %v4951 = vld [vmem:[%s4933 + $0x64] sm:$0xf]
      %v4952 = vld [vmem:[%s4933 + $0x6c] sm:$0xf]
      %v4953 = vld [vmem:[%s4933 + $0x70] sm:$0xf]
      %v4954 = vld [vmem:[%s4933 + $0x78] sm:$0xf]
      %v4955 = vld [vmem:[%s4933 + $0x7c] sm:$0xf]
      %v4956 = vld [vmem:[%s4933 + $0x84] sm:$0xf]
      %v4957 = vld [vmem:[%s4933 + $0x88] sm:$0xf]
      %v4958 = vld [vmem:[%s4933 + $0x90] sm:$0xf]
      %v4959 = vld [vmem:[%s4933 + $0x94] sm:$0xf]
      %v4960 = vld [vmem:[%s4933 + $0x9c] sm:$0xf]
      %v4961 = vld [vmem:[%s4933 + $0xa0] sm:$0xf]
      %v4962 = vld [vmem:[%s4933 + $0xa8] sm:$0xf]
      %v4963 = vld [vmem:[%s4933 + $0xac] sm:$0xf]
      %v4964 = vld [vmem:[%s4933 + $0xb4] sm:$0xf]
      %v4965 = vld [vmem:[%s4933 + $0xb8] sm:$0xf]
      %v4966 = vld [vmem:[%s1 + $0x30] sm:$0xf]
      %v4967 = vld [vmem:[%s1 + $0x70] sm:$0xf]
      %v4968 = vld [vmem:[%s1 + $0xb0] sm:$0xf]
      %v4969 = vld [vmem:[%s1 + $0xf0] sm:$0xf]
      %v4970 = vld [vmem:[%s1 + $0x130] sm:$0xf]
      %v4971 = vld [vmem:[%s1 + $0x170] sm:$0xf]
      %v4972 = vld [vmem:[%s1 + $0x1b0] sm:$0xf]
      %v4973 = vld [vmem:[%s1 + $0x1f0] sm:$0xf]
      %v4974 = vld [vmem:[%s1 + $0x230] sm:$0xf]
      %v4975 = vld [vmem:[%s1 + $0x270] sm:$0xf]
      %v4976 = vld [vmem:[%s1 + $0x2b0] sm:$0xf]
      %v4977 = vld [vmem:[%s1 + $0x2f0] sm:$0xf]
      %v4978 = vld [vmem:[%s1 + $0x330] sm:$0xf]
      %v4979 = vld [vmem:[%s1 + $0x370] sm:$0xf]
      %v4980 = vld [vmem:[%s1 + $0x3b0] sm:$0xf]
      %v4981 = vld [vmem:[%s1 + $0x3f0] sm:$0xf]
      %v5014 = vunpack.c.l.b16 %v4934
      %v5015 = vunpack.c.l.b16 %v4935
      %v5016 = vunpack.c.l.b16 %v4936
      %v5017 = vunpack.c.l.b16 %v4937
      %v5018 = vunpack.c.l.b16 %v4938
      %v5019 = vunpack.c.l.b16 %v4939
      %v5020 = vunpack.c.l.b16 %v4940
      %v5021 = vunpack.c.l.b16 %v4941
      %v5022 = vunpack.c.l.b16 %v4942
      %v5023 = vunpack.c.l.b16 %v4943
      %v5024 = vunpack.c.l.b16 %v4944
      %v5025 = vunpack.c.l.b16 %v4945
      %v5026 = vunpack.c.l.b16 %v4946
      %v5027 = vunpack.c.l.b16 %v4947
      %v5028 = vunpack.c.l.b16 %v4948
      %v5029 = vunpack.c.l.b16 %v4949
      %v5030 = vunpack.c.l.b16 %v4950
      %v5031 = vunpack.c.l.b16 %v4951
      %v5032 = vunpack.c.l.b16 %v4952
      %v5033 = vunpack.c.l.b16 %v4953
      %v5034 = vunpack.c.l.b16 %v4954
      %v5035 = vunpack.c.l.b16 %v4955
      %v5036 = vunpack.c.l.b16 %v4956
      %v5037 = vunpack.c.l.b16 %v4957
      %v5038 = vunpack.c.l.b16 %v4958
      %v5039 = vunpack.c.l.b16 %v4959
      %v5040 = vunpack.c.l.b16 %v4960
      %v5041 = vunpack.c.l.b16 %v4961
      %v5042 = vunpack.c.l.b16 %v4962
      %v5043 = vunpack.c.l.b16 %v4963
      %v5044 = vunpack.c.l.b16 %v4964
      %v5045 = vunpack.c.l.b16 %v4965
      %v5046 = vpack.c.b16 %v5015, %v5014
      %v5047 = vpack.c.b16 %v5017, %v5016
      %v5048 = vpack.c.b16 %v5019, %v5018
      %v5049 = vpack.c.b16 %v5021, %v5020
      %v5050 = vpack.c.b16 %v5023, %v5022
      %v5051 = vpack.c.b16 %v5025, %v5024
      %v5052 = vpack.c.b16 %v5027, %v5026
      %v5053 = vpack.c.b16 %v5029, %v5028
      %v5054 = vpack.c.b16 %v5031, %v5030
      %v5055 = vpack.c.b16 %v5033, %v5032
      %v5056 = vpack.c.b16 %v5035, %v5034
      %v5057 = vpack.c.b16 %v5037, %v5036
      %v5058 = vpack.c.b16 %v5039, %v5038
      %v5059 = vpack.c.b16 %v5041, %v5040
      %v5060 = vpack.c.b16 %v5043, %v5042
      %v5061 = vpack.c.b16 %v5045, %v5044
      %v5094 = vunpack.c.l.b16 %v4966
      %v5095 = vunpack.c.l.b16 %v4967
      %v5096 = vunpack.c.l.b16 %v4968
      %v5097 = vunpack.c.l.b16 %v4969
      %v5098 = vunpack.c.l.b16 %v4970
      %v5099 = vunpack.c.l.b16 %v4971
      %v5100 = vunpack.c.l.b16 %v4972
      %v5101 = vunpack.c.l.b16 %v4973
      %v5102 = vunpack.c.l.b16 %v4974
      %v5103 = vunpack.c.l.b16 %v4975
      %v5104 = vunpack.c.l.b16 %v4976
      %v5105 = vunpack.c.l.b16 %v4977
      %v5106 = vunpack.c.l.b16 %v4978
      %v5107 = vunpack.c.l.b16 %v4979
      %v5108 = vunpack.c.l.b16 %v4980
      %v5109 = vunpack.c.l.b16 %v4981
      %v5110 = vpack.c.b16 %v5095, %v5094
      %v5111 = vpack.c.b16 %v5097, %v5096
      %v5112 = vpack.c.b16 %v5099, %v5098
      %v5113 = vpack.c.b16 %v5101, %v5100
      %v5114 = vpack.c.b16 %v5103, %v5102
      %v5115 = vpack.c.b16 %v5105, %v5104
      %v5116 = vpack.c.b16 %v5107, %v5106
      %v5117 = vpack.c.b16 %v5109, %v5108
      %5126 = vmatprep.subr.bf16.mxu0 0
      %5127 = vmatpush1.bf16.msra.mxu0 %v5110
      %5128 = vmatprep.subr.bf16.mxu0 0
      %5129 = vmatpush1.bf16.msra.mxu0 %v5111
      %5130 = vmatprep.subr.bf16.mxu0 0
      %5131 = vmatpush1.bf16.msra.mxu0 %v5112
      %5132 = vmatprep.subr.bf16.mxu0 0
      %5133 = vmatpush1.bf16.msra.mxu0 %v5113
      %5134 = vmatprep.subr.bf16.mxu0 0
      %5135 = vmatpush1.bf16.msra.mxu0 %v5114
      %5136 = vmatprep.subr.bf16.mxu0 0
      %5137 = vmatpush1.bf16.msra.mxu0 %v5115
      %5138 = vmatprep.subr.bf16.mxu0 0
      %5139 = vmatpush1.bf16.msra.mxu0 %v5116
      %5140 = vmatprep.subr.bf16.mxu0 0
      %5141 = vmatpush1.bf16.msra.mxu0 %v5117
      %5142 = vmatprep.subr.bf16.mxu0 0
      %5143 = vmatpush1.bf16.msra.mxu0 0
      %5144 = vmatprep.subr.bf16.mxu0 0
      %5145 = vmatpush1.bf16.msra.mxu0 0
      %5146 = vmatprep.subr.bf16.mxu0 0
      %5147 = vmatpush1.bf16.msra.mxu0 0
      %5148 = vmatprep.subr.bf16.mxu0 0
      %5149 = vmatpush1.bf16.msra.mxu0 0
      %5150 = vmatprep.subr.bf16.mxu0 0
      %5151 = vmatpush1.bf16.msra.mxu0 0
      %5152 = vmatprep.subr.bf16.mxu0 0
      %5153 = vmatpush1.bf16.msra.mxu0 0
      %5154 = vmatprep.subr.bf16.mxu0 0
      %5155 = vmatpush1.bf16.msra.mxu0 0
      %5156 = vmatprep.subr.bf16.mxu0 0
      %5157 = vmatpush1.bf16.msra.mxu0 0
      %5158 = vmatprep.mubr.bf16.mxu0 0
      %5159 = vmatmul.mubr.bf16.gmra.mrb[0].mxu0 %v5046
      %v5160 = vpop.f32.mrb[0].mxu0
      %v5161 = vadd.f32 0.0, %v5160
      %v5162 = vpop.f32.mrb[0].mxu0
      %v5163 = vpop.f32.mrb[0].mxu0
      %v5164 = vadd.f32 0.0, %v5163
      %v5165 = vpop.f32.mrb[0].mxu0
      %5166 = vmatprep.mubr.bf16.mxu0 0
      %5167 = vmatmul.mubr.bf16.gmra.mrb[0].mxu0 %v5047
      %v5168 = vpop.f32.mrb[0].mxu0
      %v5169 = vadd.f32 0.0, %v5168
      %v5170 = vpop.f32.mrb[0].mxu0
      %v5171 = vpop.f32.mrb[0].mxu0
      %v5172 = vadd.f32 0.0, %v5171
      %v5173 = vpop.f32.mrb[0].mxu0
      %5174 = vmatprep.mubr.bf16.mxu0 0
      %5175 = vmatmul.mubr.bf16.gmra.mrb[0].mxu0 %v5048
      %v5176 = vpop.f32.mrb[0].mxu0
      %v5177 = vadd.f32 0.0, %v5176
      %v5178 = vpop.f32.mrb[0].mxu0
      %v5179 = vpop.f32.mrb[0].mxu0
      %v5180 = vadd.f32 0.0, %v5179
      %v5181 = vpop.f32.mrb[0].mxu0
      %5182 = vmatprep.mubr.bf16.mxu0 0
      %5183 = vmatmul.mubr.bf16.gmra.mrb[0].mxu0 %v5049
      %v5184 = vpop.f32.mrb[0].mxu0
      %v5185 = vadd.f32 0.0, %v5184
      %v5186 = vpop.f32.mrb[0].mxu0
      %v5187 = vpop.f32.mrb[0].mxu0
      %v5188 = vadd.f32 0.0, %v5187
      %v5189 = vpop.f32.mrb[0].mxu0
      %5190 = vmatprep.mubr.bf16.mxu0 0
      %5191 = vmatmul.mubr.bf16.gmra.mrb[0].mxu0 %v5050
      %v5192 = vpop.f32.mrb[0].mxu0
      %v5193 = vadd.f32 0.0, %v5192
      %v5194 = vpop.f32.mrb[0].mxu0
      %v5195 = vpop.f32.mrb[0].mxu0
      %v5196 = vadd.f32 0.0, %v5195
      %v5197 = vpop.f32.mrb[0].mxu0
      %5198 = vmatprep.mubr.bf16.mxu0 0
      %5199 = vmatmul.mubr.bf16.gmra.mrb[0].mxu0 %v5051
      %v5200 = vpop.f32.mrb[0].mxu0
      %v5201 = vadd.f32 0.0, %v5200
      %v5202 = vpop.f32.mrb[0].mxu0
      %v5203 = vpop.f32.mrb[0].mxu0
      %v5204 = vadd.f32 0.0, %v5203
      %v5205 = vpop.f32.mrb[0].mxu0
      %5206 = vmatprep.mubr.bf16.mxu0 0
      %5207 = vmatmul.mubr.bf16.gmra.mrb[0].mxu0 %v5052
      %v5208 = vpop.f32.mrb[0].mxu0
      %v5209 = vadd.f32 0.0, %v5208
      %v5210 = vpop.f32.mrb[0].mxu0
      %v5211 = vpop.f32.mrb[0].mxu0
      %v5212 = vadd.f32 0.0, %v5211
      %v5213 = vpop.f32.mrb[0].mxu0
      %5214 = vmatprep.mubr.bf16.mxu0 0
      %5215 = vmatmul.mubr.bf16.gmra.mrb[0].mxu0 %v5053
      %v5216 = vpop.f32.mrb[0].mxu0
      %v5217 = vadd.f32 0.0, %v5216
      %v5218 = vpop.f32.mrb[0].mxu0
      %v5219 = vpop.f32.mrb[0].mxu0
      %v5220 = vadd.f32 0.0, %v5219
      %v5221 = vpop.f32.mrb[0].mxu0
      %5222 = vmatprep.mubr.bf16.mxu0 0
      %5223 = vmatmul.mubr.bf16.gmra.mrb[0].mxu0 %v5054
      %v5224 = vpop.f32.mrb[0].mxu0
      %v5225 = vadd.f32 0.0, %v5224
      %v5226 = vpop.f32.mrb[0].mxu0
      %v5227 = vpop.f32.mrb[0].mxu0
      %v5228 = vadd.f32 0.0, %v5227
      %v5229 = vpop.f32.mrb[0].mxu0
      %5230 = vmatprep.mubr.bf16.mxu0 0
      %5231 = vmatmul.mubr.bf16.gmra.mrb[0].mxu0 %v5055
      %v5232 = vpop.f32.mrb[0].mxu0
      %v5233 = vadd.f32 0.0, %v5232
      %v5234 = vpop.f32.mrb[0].mxu0
      %v5235 = vpop.f32.mrb[0].mxu0
      %v5236 = vadd.f32 0.0, %v5235
      %v5237 = vpop.f32.mrb[0].mxu0
      %5238 = vmatprep.mubr.bf16.mxu0 0
      %5239 = vmatmul.mubr.bf16.gmra.mrb[0].mxu0 %v5056
      %v5240 = vpop.f32.mrb[0].mxu0
      %v5241 = vadd.f32 0.0, %v5240
      %v5242 = vpop.f32.mrb[0].mxu0
      %v5243 = vpop.f32.mrb[0].mxu0
      %v5244 = vadd.f32 0.0, %v5243
      %v5245 = vpop.f32.mrb[0].mxu0
      %5246 = vmatprep.mubr.bf16.mxu0 0
      %5247 = vmatmul.mubr.bf16.gmra.mrb[0].mxu0 %v5057
      %v5248 = vpop.f32.mrb[0].mxu0
      %v5249 = vadd.f32 0.0, %v5248
      %v5250 = vpop.f32.mrb[0].mxu0
      %v5251 = vpop.f32.mrb[0].mxu0
      %v5252 = vadd.f32 0.0, %v5251
      %v5253 = vpop.f32.mrb[0].mxu0
      %5254 = vmatprep.mubr.bf16.mxu0 0
      %5255 = vmatmul.mubr.bf16.gmra.mrb[0].mxu0 %v5058
      %v5256 = vpop.f32.mrb[0].mxu0
      %v5257 = vadd.f32 0.0, %v5256
      %v5258 = vpop.f32.mrb[0].mxu0
      %v5259 = vpop.f32.mrb[0].mxu0
      %v5260 = vadd.f32 0.0, %v5259
      %v5261 = vpop.f32.mrb[0].mxu0
      %5262 = vmatprep.mubr.bf16.mxu0 0
      %5263 = vmatmul.mubr.bf16.gmra.mrb[0].mxu0 %v5059
      %v5264 = vpop.f32.mrb[0].mxu0
      %v5265 = vadd.f32 0.0, %v5264
      %v5266 = vpop.f32.mrb[0].mxu0
      %v5267 = vpop.f32.mrb[0].mxu0
      %v5268 = vadd.f32 0.0, %v5267
      %v5269 = vpop.f32.mrb[0].mxu0
      %5270 = vmatprep.mubr.bf16.mxu0 0
      %5271 = vmatmul.mubr.bf16.gmra.mrb[0].mxu0 %v5060
      %v5272 = vpop.f32.mrb[0].mxu0
      %v5273 = vadd.f32 0.0, %v5272
      %v5274 = vpop.f32.mrb[0].mxu0
      %v5275 = vpop.f32.mrb[0].mxu0
      %v5276 = vadd.f32 0.0, %v5275
      %v5277 = vpop.f32.mrb[0].mxu0
      %5278 = vmatprep.mubr.bf16.mxu0 0
      %5279 = vmatmul.mubr.bf16.gmra.mrb[0].mxu0 %v5061
      %v5280 = vpop.f32.mrb[0].mxu0
      %v5281 = vadd.f32 0.0, %v5280
      %v5282 = vpop.f32.mrb[0].mxu0
      %v5283 = vpop.f32.mrb[0].mxu0
      %v5284 = vadd.f32 0.0, %v5283
      %v5285 = vpop.f32.mrb[0].mxu0
      %5286 = vdwg.mxu0
      %v5287 = vld [vmem:[%s2717] sm:$0xff]
      %v5288 = vld [vmem:[%s2717 + $0x8] sm:$0xff]
      %v5289 = vld [vmem:[%s2717 + $0x10] sm:$0xff]
      %v5290 = vld [vmem:[%s2717 + $0x18] sm:$0xff]
      %v5291 = vld [vmem:[%s2717 + $0x20] sm:$0xff]
      %v5292 = vld [vmem:[%s2717 + $0x28] sm:$0xff]
      %v5293 = vld [vmem:[%s2717 + $0x30] sm:$0xff]
      %v5294 = vld [vmem:[%s2717 + $0x38] sm:$0xff]
      %v5295 = vld [vmem:[%s2717 + $0x40] sm:$0xff]
      %v5296 = vld [vmem:[%s2717 + $0x48] sm:$0xff]
      %v5297 = vld [vmem:[%s2717 + $0x50] sm:$0xff]
      %v5298 = vld [vmem:[%s2717 + $0x58] sm:$0xff]
      %v5299 = vld [vmem:[%s2717 + $0x60] sm:$0xff]
      %v5300 = vld [vmem:[%s2717 + $0x68] sm:$0xff]
      %v5301 = vld [vmem:[%s2717 + $0x70] sm:$0xff]
      %v5302 = vld [vmem:[%s2717 + $0x78] sm:$0xff]
      %v5303 = vld [vmem:[%s2717 + $0x80] sm:$0xff]
      %v5304 = vld [vmem:[%s2717 + $0x88] sm:$0xff]
      %v5305 = vld [vmem:[%s2717 + $0x90] sm:$0xff]
      %v5306 = vld [vmem:[%s2717 + $0x98] sm:$0xff]
      %v5307 = vld [vmem:[%s2717 + $0xa0] sm:$0xff]
      %v5308 = vld [vmem:[%s2717 + $0xa8] sm:$0xff]
      %v5309 = vld [vmem:[%s2717 + $0xb0] sm:$0xff]
      %v5310 = vld [vmem:[%s2717 + $0xb8] sm:$0xff]
      %v5311 = vld [vmem:[%s2717 + $0xc0] sm:$0xff]
      %v5312 = vld [vmem:[%s2717 + $0xc8] sm:$0xff]
      %v5313 = vld [vmem:[%s2717 + $0xd0] sm:$0xff]
      %v5314 = vld [vmem:[%s2717 + $0xd8] sm:$0xff]
      %v5315 = vld [vmem:[%s2717 + $0xe0] sm:$0xff]
      %v5316 = vld [vmem:[%s2717 + $0xe8] sm:$0xff]
      %v5317 = vld [vmem:[%s2717 + $0xf0] sm:$0xff]
      %v5318 = vld [vmem:[%s2717 + $0xf8] sm:$0xff]
      %v5319 = vadd.f32 %v5287, %v5161
      %v5320 = vadd.f32 %v5288, %v5164
      %v5321 = vadd.f32 %v5289, %v5169
      %v5322 = vadd.f32 %v5290, %v5172
      %v5323 = vadd.f32 %v5291, %v5177
      %v5324 = vadd.f32 %v5292, %v5180
      %v5325 = vadd.f32 %v5293, %v5185
      %v5326 = vadd.f32 %v5294, %v5188
      %v5327 = vadd.f32 %v5295, %v5193
      %v5328 = vadd.f32 %v5296, %v5196
      %v5329 = vadd.f32 %v5297, %v5201
      %v5330 = vadd.f32 %v5298, %v5204
      %v5331 = vadd.f32 %v5299, %v5209
      %v5332 = vadd.f32 %v5300, %v5212
      %v5333 = vadd.f32 %v5301, %v5217
      %v5334 = vadd.f32 %v5302, %v5220
      %v5335 = vadd.f32 %v5303, %v5225
      %v5336 = vadd.f32 %v5304, %v5228
      %v5337 = vadd.f32 %v5305, %v5233
      %v5338 = vadd.f32 %v5306, %v5236
      %v5339 = vadd.f32 %v5307, %v5241
      %v5340 = vadd.f32 %v5308, %v5244
      %v5341 = vadd.f32 %v5309, %v5249
      %v5342 = vadd.f32 %v5310, %v5252
      %v5343 = vadd.f32 %v5311, %v5257
      %v5344 = vadd.f32 %v5312, %v5260
      %v5345 = vadd.f32 %v5313, %v5265
      %v5346 = vadd.f32 %v5314, %v5268
      %v5347 = vadd.f32 %v5315, %v5273
      %v5348 = vadd.f32 %v5316, %v5276
      %v5349 = vadd.f32 %v5317, %v5281
      %v5350 = vadd.f32 %v5318, %v5284
      %5351 = vst [vmem:[%s2717] sm:$0xff] %v5319
      %5352 = vst [vmem:[%s2717 + $0x8] sm:$0xff] %v5320
      %5353 = vst [vmem:[%s2717 + $0x10] sm:$0xff] %v5321
      %5354 = vst [vmem:[%s2717 + $0x18] sm:$0xff] %v5322
      %5355 = vst [vmem:[%s2717 + $0x20] sm:$0xff] %v5323
      %5356 = vst [vmem:[%s2717 + $0x28] sm:$0xff] %v5324
      %5357 = vst [vmem:[%s2717 + $0x30] sm:$0xff] %v5325
      %5358 = vst [vmem:[%s2717 + $0x38] sm:$0xff] %v5326
      %5359 = vst [vmem:[%s2717 + $0x40] sm:$0xff] %v5327
      %5360 = vst [vmem:[%s2717 + $0x48] sm:$0xff] %v5328
      %5361 = vst [vmem:[%s2717 + $0x50] sm:$0xff] %v5329
      %5362 = vst [vmem:[%s2717 + $0x58] sm:$0xff] %v5330
      %5363 = vst [vmem:[%s2717 + $0x60] sm:$0xff] %v5331
      %5364 = vst [vmem:[%s2717 + $0x68] sm:$0xff] %v5332
      %5365 = vst [vmem:[%s2717 + $0x70] sm:$0xff] %v5333
      %5366 = vst [vmem:[%s2717 + $0x78] sm:$0xff] %v5334
      %5367 = vst [vmem:[%s2717 + $0x80] sm:$0xff] %v5335
      %5368 = vst [vmem:[%s2717 + $0x88] sm:$0xff] %v5336
      %5369 = vst [vmem:[%s2717 + $0x90] sm:$0xff] %v5337
      %5370 = vst [vmem:[%s2717 + $0x98] sm:$0xff] %v5338
      %5371 = vst [vmem:[%s2717 + $0xa0] sm:$0xff] %v5339
      %5372 = vst [vmem:[%s2717 + $0xa8] sm:$0xff] %v5340
      %5373 = vst [vmem:[%s2717 + $0xb0] sm:$0xff] %v5341
      %5374 = vst [vmem:[%s2717 + $0xb8] sm:$0xff] %v5342
      %5375 = vst [vmem:[%s2717 + $0xc0] sm:$0xff] %v5343
      %5376 = vst [vmem:[%s2717 + $0xc8] sm:$0xff] %v5344
      %5377 = vst [vmem:[%s2717 + $0xd0] sm:$0xff] %v5345
      %5378 = vst [vmem:[%s2717 + $0xd8] sm:$0xff] %v5346
      %5379 = vst [vmem:[%s2717 + $0xe0] sm:$0xff] %v5347
      %5380 = vst [vmem:[%s2717 + $0xe8] sm:$0xff] %v5348
      %5381 = vst [vmem:[%s2717 + $0xf0] sm:$0xff] %v5349
      %5382 = vst [vmem:[%s2717 + $0xf8] sm:$0xff] %v5350
      %v5383 = vld [vmem:[%s4933] sm:$0xf]
      %v5384 = vld [vmem:[%s4933 + $0x4] sm:$0xf]
      %v5385 = vld [vmem:[%s4933 + $0x8] sm:$0x1]
      %v5386 = vld [vmem:[%s4933 + $0xc] sm:$0xf]
      %v5387 = vld [vmem:[%s4933 + $0x10] sm:$0xf]
      %v5388 = vld [vmem:[%s4933 + $0x14] sm:$0x1]
      %v5389 = vld [vmem:[%s4933 + $0x18] sm:$0xf]
      %v5390 = vld [vmem:[%s4933 + $0x1c] sm:$0xf]
      %v5391 = vld [vmem:[%s4933 + $0x20] sm:$0x1]
      %v5392 = vld [vmem:[%s4933 + $0x24] sm:$0xf]
      %v5393 = vld [vmem:[%s4933 + $0x28] sm:$0xf]
      %v5394 = vld [vmem:[%s4933 + $0x2c] sm:$0x1]
      %v5395 = vld [vmem:[%s4933 + $0x30] sm:$0xf]
      %v5396 = vld [vmem:[%s4933 + $0x34] sm:$0xf]
      %v5397 = vld [vmem:[%s4933 + $0x38] sm:$0x1]
      %v5398 = vld [vmem:[%s4933 + $0x3c] sm:$0xf]
      %v5399 = vld [vmem:[%s4933 + $0x40] sm:$0xf]
      %v5400 = vld [vmem:[%s4933 + $0x44] sm:$0x1]
      %v5401 = vld [vmem:[%s4933 + $0x48] sm:$0xf]
      %v5402 = vld [vmem:[%s4933 + $0x4c] sm:$0xf]
      %v5403 = vld [vmem:[%s4933 + $0x50] sm:$0x1]
      %v5404 = vld [vmem:[%s4933 + $0x54] sm:$0xf]
      %v5405 = vld [vmem:[%s4933 + $0x58] sm:$0xf]
      %v5406 = vld [vmem:[%s4933 + $0x5c] sm:$0x1]
      %v5407 = vld [vmem:[%s4933 + $0x60] sm:$0xf]
      %v5408 = vld [vmem:[%s4933 + $0x64] sm:$0xf]
      %v5409 = vld [vmem:[%s4933 + $0x68] sm:$0x1]
      %v5410 = vld [vmem:[%s4933 + $0x6c] sm:$0xf]
      %v5411 = vld [vmem:[%s4933 + $0x70] sm:$0xf]
      %v5412 = vld [vmem:[%s4933 + $0x74] sm:$0x1]
      %v5413 = vld [vmem:[%s4933 + $0x78] sm:$0xf]
      %v5414 = vld [vmem:[%s4933 + $0x7c] sm:$0xf]
      %v5415 = vld [vmem:[%s4933 + $0x80] sm:$0x1]
      %v5416 = vld [vmem:[%s4933 + $0x84] sm:$0xf]
      %v5417 = vld [vmem:[%s4933 + $0x88] sm:$0xf]
      %v5418 = vld [vmem:[%s4933 + $0x8c] sm:$0x1]
      %v5419 = vld [vmem:[%s4933 + $0x90] sm:$0xf]
      %v5420 = vld [vmem:[%s4933 + $0x94] sm:$0xf]
      %v5421 = vld [vmem:[%s4933 + $0x98] sm:$0x1]
      %v5422 = vld [vmem:[%s4933 + $0x9c] sm:$0xf]
      %v5423 = vld [vmem:[%s4933 + $0xa0] sm:$0xf]
      %v5424 = vld [vmem:[%s4933 + $0xa4] sm:$0x1]
      %v5425 = vld [vmem:[%s4933 + $0xa8] sm:$0xf]
      %v5426 = vld [vmem:[%s4933 + $0xac] sm:$0xf]
      %v5427 = vld [vmem:[%s4933 + $0xb0] sm:$0x1]
      %v5428 = vld [vmem:[%s4933 + $0xb4] sm:$0xf]
      %v5429 = vld [vmem:[%s4933 + $0xb8] sm:$0xf]
      %v5430 = vld [vmem:[%s4933 + $0xbc] sm:$0x1]
      %v5432 = vshrl.u32 %v5383, 16
      %v5434 = vrot.slane %v5432, 4
      %v5435 = vshll.u32 %v5383, 16
      %v5437 = vrot.slane %v5435, 5
      %v5438 = vor.u32 %v5434, %v5437
      %v5439 = vrot.slane %v5438, 4
      %v5441 = vshll.u32 %v5384, 16
      %v5443 = vrot.slane %v5441, 5
      %v5444 = vsel %vm673, %v5439, %v5443
      %v5445 = vshrl.u32 %v5384, 16
      %v5447 = vrot.slane %v5445, 4
      %v5448 = vor.u32 %v5447, %v5443
      %v5449 = vrot.slane %v5448, 4
      %v5451 = vshll.u32 %v5385, 16
      %v5453 = vrot.slane %v5451, 5
      %v5454 = vsel %vm673, %v5449, %v5453
      %v5456 = vshrl.u32 %v5386, 16
      %v5458 = vrot.slane %v5456, 4
      %v5459 = vshll.u32 %v5386, 16
      %v5461 = vrot.slane %v5459, 5
      %v5462 = vor.u32 %v5458, %v5461
      %v5463 = vrot.slane %v5462, 4
      %v5465 = vshll.u32 %v5387, 16
      %v5467 = vrot.slane %v5465, 5
      %v5468 = vsel %vm673, %v5463, %v5467
      %v5469 = vshrl.u32 %v5387, 16
      %v5471 = vrot.slane %v5469, 4
      %v5472 = vor.u32 %v5471, %v5467
      %v5473 = vrot.slane %v5472, 4
      %v5475 = vshll.u32 %v5388, 16
      %v5477 = vrot.slane %v5475, 5
      %v5478 = vsel %vm673, %v5473, %v5477
      %v5480 = vshrl.u32 %v5389, 16
      %v5482 = vrot.slane %v5480, 4
      %v5483 = vshll.u32 %v5389, 16
      %v5485 = vrot.slane %v5483, 5
      %v5486 = vor.u32 %v5482, %v5485
      %v5487 = vrot.slane %v5486, 4
      %v5489 = vshll.u32 %v5390, 16
      %v5491 = vrot.slane %v5489, 5
      %v5492 = vsel %vm673, %v5487, %v5491
      %v5493 = vshrl.u32 %v5390, 16
      %v5495 = vrot.slane %v5493, 4
      %v5496 = vor.u32 %v5495, %v5491
      %v5497 = vrot.slane %v5496, 4
      %v5499 = vshll.u32 %v5391, 16
      %v5501 = vrot.slane %v5499, 5
      %v5502 = vsel %vm673, %v5497, %v5501
      %v5504 = vshrl.u32 %v5392, 16
      %v5506 = vrot.slane %v5504, 4
      %v5507 = vshll.u32 %v5392, 16
      %v5509 = vrot.slane %v5507, 5
      %v5510 = vor.u32 %v5506, %v5509
      %v5511 = vrot.slane %v5510, 4
      %v5513 = vshll.u32 %v5393, 16
      %v5515 = vrot.slane %v5513, 5
      %v5516 = vsel %vm673, %v5511, %v5515
      %v5517 = vshrl.u32 %v5393, 16
      %v5519 = vrot.slane %v5517, 4
      %v5520 = vor.u32 %v5519, %v5515
      %v5521 = vrot.slane %v5520, 4
      %v5523 = vshll.u32 %v5394, 16
      %v5525 = vrot.slane %v5523, 5
      %v5526 = vsel %vm673, %v5521, %v5525
      %v5528 = vshrl.u32 %v5395, 16
      %v5530 = vrot.slane %v5528, 4
      %v5531 = vshll.u32 %v5395, 16
      %v5533 = vrot.slane %v5531, 5
      %v5534 = vor.u32 %v5530, %v5533
      %v5535 = vrot.slane %v5534, 4
      %v5537 = vshll.u32 %v5396, 16
      %v5539 = vrot.slane %v5537, 5
      %v5540 = vsel %vm673, %v5535, %v5539
      %v5541 = vshrl.u32 %v5396, 16
      %v5543 = vrot.slane %v5541, 4
      %v5544 = vor.u32 %v5543, %v5539
      %v5545 = vrot.slane %v5544, 4
      %v5547 = vshll.u32 %v5397, 16
      %v5549 = vrot.slane %v5547, 5
      %v5550 = vsel %vm673, %v5545, %v5549
      %v5552 = vshrl.u32 %v5398, 16
      %v5554 = vrot.slane %v5552, 4
      %v5555 = vshll.u32 %v5398, 16
      %v5557 = vrot.slane %v5555, 5
      %v5558 = vor.u32 %v5554, %v5557
      %v5559 = vrot.slane %v5558, 4
      %v5561 = vshll.u32 %v5399, 16
      %v5563 = vrot.slane %v5561, 5
      %v5564 = vsel %vm673, %v5559, %v5563
      %v5565 = vshrl.u32 %v5399, 16
      %v5567 = vrot.slane %v5565, 4
      %v5568 = vor.u32 %v5567, %v5563
      %v5569 = vrot.slane %v5568, 4
      %v5571 = vshll.u32 %v5400, 16
      %v5573 = vrot.slane %v5571, 5
      %v5574 = vsel %vm673, %v5569, %v5573
      %v5576 = vshrl.u32 %v5401, 16
      %v5578 = vrot.slane %v5576, 4
      %v5579 = vshll.u32 %v5401, 16
      %v5581 = vrot.slane %v5579, 5
      %v5582 = vor.u32 %v5578, %v5581
      %v5583 = vrot.slane %v5582, 4
      %v5585 = vshll.u32 %v5402, 16
      %v5587 = vrot.slane %v5585, 5
      %v5588 = vsel %vm673, %v5583, %v5587
      %v5589 = vshrl.u32 %v5402, 16
      %v5591 = vrot.slane %v5589, 4
      %v5592 = vor.u32 %v5591, %v5587
      %v5593 = vrot.slane %v5592, 4
      %v5595 = vshll.u32 %v5403, 16
      %v5597 = vrot.slane %v5595, 5
      %v5598 = vsel %vm673, %v5593, %v5597
      %v5600 = vshrl.u32 %v5404, 16
      %v5602 = vrot.slane %v5600, 4
      %v5603 = vshll.u32 %v5404, 16
      %v5605 = vrot.slane %v5603, 5
      %v5606 = vor.u32 %v5602, %v5605
      %v5607 = vrot.slane %v5606, 4
      %v5609 = vshll.u32 %v5405, 16
      %v5611 = vrot.slane %v5609, 5
      %v5612 = vsel %vm673, %v5607, %v5611
      %v5613 = vshrl.u32 %v5405, 16
      %v5615 = vrot.slane %v5613, 4
      %v5616 = vor.u32 %v5615, %v5611
      %v5617 = vrot.slane %v5616, 4
      %v5619 = vshll.u32 %v5406, 16
      %v5621 = vrot.slane %v5619, 5
      %v5622 = vsel %vm673, %v5617, %v5621
      %v5624 = vshrl.u32 %v5407, 16
      %v5626 = vrot.slane %v5624, 4
      %v5627 = vshll.u32 %v5407, 16
      %v5629 = vrot.slane %v5627, 5
      %v5630 = vor.u32 %v5626, %v5629
      %v5631 = vrot.slane %v5630, 4
      %v5633 = vshll.u32 %v5408, 16
      %v5635 = vrot.slane %v5633, 5
      %v5636 = vsel %vm673, %v5631, %v5635
      %v5637 = vshrl.u32 %v5408, 16
      %v5639 = vrot.slane %v5637, 4
      %v5640 = vor.u32 %v5639, %v5635
      %v5641 = vrot.slane %v5640, 4
      %v5643 = vshll.u32 %v5409, 16
      %v5645 = vrot.slane %v5643, 5
      %v5646 = vsel %vm673, %v5641, %v5645
      %v5648 = vshrl.u32 %v5410, 16
      %v5650 = vrot.slane %v5648, 4
      %v5651 = vshll.u32 %v5410, 16
      %v5653 = vrot.slane %v5651, 5
      %v5654 = vor.u32 %v5650, %v5653
      %v5655 = vrot.slane %v5654, 4
      %v5657 = vshll.u32 %v5411, 16
      %v5659 = vrot.slane %v5657, 5
      %v5660 = vsel %vm673, %v5655, %v5659
      %v5661 = vshrl.u32 %v5411, 16
      %v5663 = vrot.slane %v5661, 4
      %v5664 = vor.u32 %v5663, %v5659
      %v5665 = vrot.slane %v5664, 4
      %v5667 = vshll.u32 %v5412, 16
      %v5669 = vrot.slane %v5667, 5
      %v5670 = vsel %vm673, %v5665, %v5669
      %v5672 = vshrl.u32 %v5413, 16
      %v5674 = vrot.slane %v5672, 4
      %v5675 = vshll.u32 %v5413, 16
      %v5677 = vrot.slane %v5675, 5
      %v5678 = vor.u32 %v5674, %v5677
      %v5679 = vrot.slane %v5678, 4
      %v5681 = vshll.u32 %v5414, 16
      %v5683 = vrot.slane %v5681, 5
      %v5684 = vsel %vm673, %v5679, %v5683
      %v5685 = vshrl.u32 %v5414, 16
      %v5687 = vrot.slane %v5685, 4
      %v5688 = vor.u32 %v5687, %v5683
      %v5689 = vrot.slane %v5688, 4
      %v5691 = vshll.u32 %v5415, 16
      %v5693 = vrot.slane %v5691, 5
      %v5694 = vsel %vm673, %v5689, %v5693
      %v5696 = vshrl.u32 %v5416, 16
      %v5698 = vrot.slane %v5696, 4
      %v5699 = vshll.u32 %v5416, 16
      %v5701 = vrot.slane %v5699, 5
      %v5702 = vor.u32 %v5698, %v5701
      %v5703 = vrot.slane %v5702, 4
      %v5705 = vshll.u32 %v5417, 16
      %v5707 = vrot.slane %v5705, 5
      %v5708 = vsel %vm673, %v5703, %v5707
      %v5709 = vshrl.u32 %v5417, 16
      %v5711 = vrot.slane %v5709, 4
      %v5712 = vor.u32 %v5711, %v5707
      %v5713 = vrot.slane %v5712, 4
      %v5715 = vshll.u32 %v5418, 16
      %v5717 = vrot.slane %v5715, 5
      %v5718 = vsel %vm673, %v5713, %v5717
      %v5720 = vshrl.u32 %v5419, 16
      %v5722 = vrot.slane %v5720, 4
      %v5723 = vshll.u32 %v5419, 16
      %v5725 = vrot.slane %v5723, 5
      %v5726 = vor.u32 %v5722, %v5725
      %v5727 = vrot.slane %v5726, 4
      %v5729 = vshll.u32 %v5420, 16
      %v5731 = vrot.slane %v5729, 5
      %v5732 = vsel %vm673, %v5727, %v5731
      %v5733 = vshrl.u32 %v5420, 16
      %v5735 = vrot.slane %v5733, 4
      %v5736 = vor.u32 %v5735, %v5731
      %v5737 = vrot.slane %v5736, 4
      %v5739 = vshll.u32 %v5421, 16
      %v5741 = vrot.slane %v5739, 5
      %v5742 = vsel %vm673, %v5737, %v5741
      %v5744 = vshrl.u32 %v5422, 16
      %v5746 = vrot.slane %v5744, 4
      %v5747 = vshll.u32 %v5422, 16
      %v5749 = vrot.slane %v5747, 5
      %v5750 = vor.u32 %v5746, %v5749
      %v5751 = vrot.slane %v5750, 4
      %v5753 = vshll.u32 %v5423, 16
      %v5755 = vrot.slane %v5753, 5
      %v5756 = vsel %vm673, %v5751, %v5755
      %v5757 = vshrl.u32 %v5423, 16
      %v5759 = vrot.slane %v5757, 4
      %v5760 = vor.u32 %v5759, %v5755
      %v5761 = vrot.slane %v5760, 4
      %v5763 = vshll.u32 %v5424, 16
      %v5765 = vrot.slane %v5763, 5
      %v5766 = vsel %vm673, %v5761, %v5765
      %v5768 = vshrl.u32 %v5425, 16
      %v5770 = vrot.slane %v5768, 4
      %v5771 = vshll.u32 %v5425, 16
      %v5773 = vrot.slane %v5771, 5
      %v5774 = vor.u32 %v5770, %v5773
      %v5775 = vrot.slane %v5774, 4
      %v5777 = vshll.u32 %v5426, 16
      %v5779 = vrot.slane %v5777, 5
      %v5780 = vsel %vm673, %v5775, %v5779
      %v5781 = vshrl.u32 %v5426, 16
      %v5783 = vrot.slane %v5781, 4
      %v5784 = vor.u32 %v5783, %v5779
      %v5785 = vrot.slane %v5784, 4
      %v5787 = vshll.u32 %v5427, 16
      %v5789 = vrot.slane %v5787, 5
      %v5790 = vsel %vm673, %v5785, %v5789
      %v5792 = vshrl.u32 %v5428, 16
      %v5794 = vrot.slane %v5792, 4
      %v5795 = vshll.u32 %v5428, 16
      %v5797 = vrot.slane %v5795, 5
      %v5798 = vor.u32 %v5794, %v5797
      %v5799 = vrot.slane %v5798, 4
      %v5801 = vshll.u32 %v5429, 16
      %v5803 = vrot.slane %v5801, 5
      %v5804 = vsel %vm673, %v5799, %v5803
      %v5805 = vshrl.u32 %v5429, 16
      %v5807 = vrot.slane %v5805, 4
      %v5808 = vor.u32 %v5807, %v5803
      %v5809 = vrot.slane %v5808, 4
      %v5811 = vshll.u32 %v5430, 16
      %v5813 = vrot.slane %v5811, 5
      %v5814 = vsel %vm673, %v5809, %v5813
      %v5815 = vld [vmem:[%s1 + $0x34] sm:$0xff]
      %v5816 = vld [vmem:[%s1 + $0x74] sm:$0xff]
      %v5817 = vld [vmem:[%s1 + $0xb4] sm:$0xff]
      %v5818 = vld [vmem:[%s1 + $0xf4] sm:$0xff]
      %v5819 = vld [vmem:[%s1 + $0x134] sm:$0xff]
      %v5820 = vld [vmem:[%s1 + $0x174] sm:$0xff]
      %v5821 = vld [vmem:[%s1 + $0x1b4] sm:$0xff]
      %v5822 = vld [vmem:[%s1 + $0x1f4] sm:$0xff]
      %v5823 = vld [vmem:[%s1 + $0x234] sm:$0xff]
      %v5824 = vld [vmem:[%s1 + $0x274] sm:$0xff]
      %v5825 = vld [vmem:[%s1 + $0x2b4] sm:$0xff]
      %v5826 = vld [vmem:[%s1 + $0x2f4] sm:$0xff]
      %v5827 = vld [vmem:[%s1 + $0x334] sm:$0xff]
      %v5828 = vld [vmem:[%s1 + $0x374] sm:$0xff]
      %v5829 = vld [vmem:[%s1 + $0x3b4] sm:$0xff]
      %v5830 = vld [vmem:[%s1 + $0x3f4] sm:$0xff]
      %v5831 = vunpack.c.l.b16 %v5444
      %v5832 = vunpack.c.l.b16 %v5454
      %v5833 = vunpack.c.l.b16 %v5468
      %v5834 = vunpack.c.l.b16 %v5478
      %v5835 = vunpack.c.l.b16 %v5492
      %v5836 = vunpack.c.l.b16 %v5502
      %v5837 = vunpack.c.l.b16 %v5516
      %v5838 = vunpack.c.l.b16 %v5526
      %v5839 = vunpack.c.l.b16 %v5540
      %v5840 = vunpack.c.l.b16 %v5550
      %v5841 = vunpack.c.l.b16 %v5564
      %v5842 = vunpack.c.l.b16 %v5574
      %v5843 = vunpack.c.l.b16 %v5588
      %v5844 = vunpack.c.l.b16 %v5598
      %v5845 = vunpack.c.l.b16 %v5612
      %v5846 = vunpack.c.l.b16 %v5622
      %v5847 = vunpack.c.l.b16 %v5636
      %v5848 = vunpack.c.l.b16 %v5646
      %v5849 = vunpack.c.l.b16 %v5660
      %v5850 = vunpack.c.l.b16 %v5670
      %v5851 = vunpack.c.l.b16 %v5684
      %v5852 = vunpack.c.l.b16 %v5694
      %v5853 = vunpack.c.l.b16 %v5708
      %v5854 = vunpack.c.l.b16 %v5718
      %v5855 = vunpack.c.l.b16 %v5732
      %v5856 = vunpack.c.l.b16 %v5742
      %v5857 = vunpack.c.l.b16 %v5756
      %v5858 = vunpack.c.l.b16 %v5766
      %v5859 = vunpack.c.l.b16 %v5780
      %v5860 = vunpack.c.l.b16 %v5790
      %v5861 = vunpack.c.l.b16 %v5804
      %v5862 = vunpack.c.l.b16 %v5814
      %v5863 = vpack.c.b16 %v5832, %v5831
      %v5864 = vpack.c.b16 %v5834, %v5833
      %v5865 = vpack.c.b16 %v5836, %v5835
      %v5866 = vpack.c.b16 %v5838, %v5837
      %v5867 = vpack.c.b16 %v5840, %v5839
      %v5868 = vpack.c.b16 %v5842, %v5841
      %v5869 = vpack.c.b16 %v5844, %v5843
      %v5870 = vpack.c.b16 %v5846, %v5845
      %v5871 = vpack.c.b16 %v5848, %v5847
      %v5872 = vpack.c.b16 %v5850, %v5849
      %v5873 = vpack.c.b16 %v5852, %v5851
      %v5874 = vpack.c.b16 %v5854, %v5853
      %v5875 = vpack.c.b16 %v5856, %v5855
      %v5876 = vpack.c.b16 %v5858, %v5857
      %v5877 = vpack.c.b16 %v5860, %v5859
      %v5878 = vpack.c.b16 %v5862, %v5861
      %v5911 = vunpack.c.l.b16 %v5815
      %v5912 = vunpack.c.h.b16 %v5815
      %v5913 = vunpack.c.l.b16 %v5816
      %v5914 = vunpack.c.h.b16 %v5816
      %v5915 = vunpack.c.l.b16 %v5817
      %v5916 = vunpack.c.h.b16 %v5817
      %v5917 = vunpack.c.l.b16 %v5818
      %v5918 = vunpack.c.h.b16 %v5818
      %v5919 = vunpack.c.l.b16 %v5819
      %v5920 = vunpack.c.h.b16 %v5819
      %v5921 = vunpack.c.l.b16 %v5820
      %v5922 = vunpack.c.h.b16 %v5820
      %v5923 = vunpack.c.l.b16 %v5821
      %v5924 = vunpack.c.h.b16 %v5821
      %v5925 = vunpack.c.l.b16 %v5822
      %v5926 = vunpack.c.h.b16 %v5822
      %v5927 = vunpack.c.l.b16 %v5823
      %v5928 = vunpack.c.h.b16 %v5823
      %v5929 = vunpack.c.l.b16 %v5824
      %v5930 = vunpack.c.h.b16 %v5824
      %v5931 = vunpack.c.l.b16 %v5825
      %v5932 = vunpack.c.h.b16 %v5825
      %v5933 = vunpack.c.l.b16 %v5826
      %v5934 = vunpack.c.h.b16 %v5826
      %v5935 = vunpack.c.l.b16 %v5827
      %v5936 = vunpack.c.h.b16 %v5827
      %v5937 = vunpack.c.l.b16 %v5828
      %v5938 = vunpack.c.h.b16 %v5828
      %v5939 = vunpack.c.l.b16 %v5829
      %v5940 = vunpack.c.h.b16 %v5829
      %v5941 = vunpack.c.l.b16 %v5830
      %v5942 = vunpack.c.h.b16 %v5830
      %v5943 = vpack.c.b16 %v5913, %v5911
      %v5944 = vpack.c.b16 %v5914, %v5912
      %v5945 = vpack.c.b16 %v5917, %v5915
      %v5946 = vpack.c.b16 %v5918, %v5916
      %v5947 = vpack.c.b16 %v5921, %v5919
      %v5948 = vpack.c.b16 %v5922, %v5920
      %v5949 = vpack.c.b16 %v5925, %v5923
      %v5950 = vpack.c.b16 %v5926, %v5924
      %v5951 = vpack.c.b16 %v5929, %v5927
      %v5952 = vpack.c.b16 %v5930, %v5928
      %v5953 = vpack.c.b16 %v5933, %v5931
      %v5954 = vpack.c.b16 %v5934, %v5932
      %v5955 = vpack.c.b16 %v5937, %v5935
      %v5956 = vpack.c.b16 %v5938, %v5936
      %v5957 = vpack.c.b16 %v5941, %v5939
      %v5958 = vpack.c.b16 %v5942, %v5940
      %5975 = vmatprep.subr.bf16.mxu0 %v5944
      %5976 = vmatpush1.bf16.msra.mxu0 %v5943
      %5977 = vmatprep.subr.bf16.mxu0 %v5946
      %5978 = vmatpush1.bf16.msra.mxu0 %v5945
      %5979 = vmatprep.subr.bf16.mxu0 %v5948
      %5980 = vmatpush1.bf16.msra.mxu0 %v5947
      %5981 = vmatprep.subr.bf16.mxu0 %v5950
      %5982 = vmatpush1.bf16.msra.mxu0 %v5949
      %5983 = vmatprep.subr.bf16.mxu0 %v5952
      %5984 = vmatpush1.bf16.msra.mxu0 %v5951
      %5985 = vmatprep.subr.bf16.mxu0 %v5954
      %5986 = vmatpush1.bf16.msra.mxu0 %v5953
      %5987 = vmatprep.subr.bf16.mxu0 %v5956
      %5988 = vmatpush1.bf16.msra.mxu0 %v5955
      %5989 = vmatprep.subr.bf16.mxu0 %v5958
      %5990 = vmatpush1.bf16.msra.mxu0 %v5957
      %5991 = vmatprep.subr.bf16.mxu0 0
      %5992 = vmatpush1.bf16.msra.mxu0 0
      %5993 = vmatprep.subr.bf16.mxu0 0
      %5994 = vmatpush1.bf16.msra.mxu0 0
      %5995 = vmatprep.subr.bf16.mxu0 0
      %5996 = vmatpush1.bf16.msra.mxu0 0
      %5997 = vmatprep.subr.bf16.mxu0 0
      %5998 = vmatpush1.bf16.msra.mxu0 0
      %5999 = vmatprep.subr.bf16.mxu0 0
      %6000 = vmatpush1.bf16.msra.mxu0 0
      %6001 = vmatprep.subr.bf16.mxu0 0
      %6002 = vmatpush1.bf16.msra.mxu0 0
      %6003 = vmatprep.subr.bf16.mxu0 0
      %6004 = vmatpush1.bf16.msra.mxu0 0
      %6005 = vmatprep.subr.bf16.mxu0 0
      %6006 = vmatpush1.bf16.msra.mxu0 0
      %6007 = vmatprep.mubr.bf16.mxu0 0
      %6008 = vmatmul.mubr.bf16.gmra.mrb[0].mxu0 %v5863
      %v6009 = vpop.f32.mrb[0].mxu0
      %v6010 = vadd.f32 0.0, %v6009
      %v6011 = vpop.f32.mrb[0].mxu0
      %v6012 = vadd.f32 0.0, %v6011
      %v6013 = vpop.f32.mrb[0].mxu0
      %v6014 = vadd.f32 0.0, %v6013
      %v6015 = vpop.f32.mrb[0].mxu0
      %v6016 = vadd.f32 0.0, %v6015
      %6017 = vmatprep.mubr.bf16.mxu0 0
      %6018 = vmatmul.mubr.bf16.gmra.mrb[0].mxu0 %v5864
      %v6019 = vpop.f32.mrb[0].mxu0
      %v6020 = vadd.f32 0.0, %v6019
      %v6021 = vpop.f32.mrb[0].mxu0
      %v6022 = vadd.f32 0.0, %v6021
      %v6023 = vpop.f32.mrb[0].mxu0
      %v6024 = vadd.f32 0.0, %v6023
      %v6025 = vpop.f32.mrb[0].mxu0
      %v6026 = vadd.f32 0.0, %v6025
      %6027 = vmatprep.mubr.bf16.mxu0 0
      %6028 = vmatmul.mubr.bf16.gmra.mrb[0].mxu0 %v5865
      %v6029 = vpop.f32.mrb[0].mxu0
      %v6030 = vadd.f32 0.0, %v6029
      %v6031 = vpop.f32.mrb[0].mxu0
      %v6032 = vadd.f32 0.0, %v6031
      %v6033 = vpop.f32.mrb[0].mxu0
      %v6034 = vadd.f32 0.0, %v6033
      %v6035 = vpop.f32.mrb[0].mxu0
      %v6036 = vadd.f32 0.0, %v6035
      %6037 = vmatprep.mubr.bf16.mxu0 0
      %6038 = vmatmul.mubr.bf16.gmra.mrb[0].mxu0 %v5866
      %v6039 = vpop.f32.mrb[0].mxu0
      %v6040 = vadd.f32 0.0, %v6039
      %v6041 = vpop.f32.mrb[0].mxu0
      %v6042 = vadd.f32 0.0, %v6041
      %v6043 = vpop.f32.mrb[0].mxu0
      %v6044 = vadd.f32 0.0, %v6043
      %v6045 = vpop.f32.mrb[0].mxu0
      %v6046 = vadd.f32 0.0, %v6045
      %6047 = vmatprep.mubr.bf16.mxu0 0
      %6048 = vmatmul.mubr.bf16.gmra.mrb[0].mxu0 %v5867
      %v6049 = vpop.f32.mrb[0].mxu0
      %v6050 = vadd.f32 0.0, %v6049
      %v6051 = vpop.f32.mrb[0].mxu0
      %v6052 = vadd.f32 0.0, %v6051
      %v6053 = vpop.f32.mrb[0].mxu0
      %v6054 = vadd.f32 0.0, %v6053
      %v6055 = vpop.f32.mrb[0].mxu0
      %v6056 = vadd.f32 0.0, %v6055
      %6057 = vmatprep.mubr.bf16.mxu0 0
      %6058 = vmatmul.mubr.bf16.gmra.mrb[0].mxu0 %v5868
      %v6059 = vpop.f32.mrb[0].mxu0
      %v6060 = vadd.f32 0.0, %v6059
      %v6061 = vpop.f32.mrb[0].mxu0
      %v6062 = vadd.f32 0.0, %v6061
      %v6063 = vpop.f32.mrb[0].mxu0
      %v6064 = vadd.f32 0.0, %v6063
      %v6065 = vpop.f32.mrb[0].mxu0
      %v6066 = vadd.f32 0.0, %v6065
      %6067 = vmatprep.mubr.bf16.mxu0 0
      %6068 = vmatmul.mubr.bf16.gmra.mrb[0].mxu0 %v5869
      %v6069 = vpop.f32.mrb[0].mxu0
      %v6070 = vadd.f32 0.0, %v6069
      %v6071 = vpop.f32.mrb[0].mxu0
      %v6072 = vadd.f32 0.0, %v6071
      %v6073 = vpop.f32.mrb[0].mxu0
      %v6074 = vadd.f32 0.0, %v6073
      %v6075 = vpop.f32.mrb[0].mxu0
      %v6076 = vadd.f32 0.0, %v6075
      %6077 = vmatprep.mubr.bf16.mxu0 0
      %6078 = vmatmul.mubr.bf16.gmra.mrb[0].mxu0 %v5870
      %v6079 = vpop.f32.mrb[0].mxu0
      %v6080 = vadd.f32 0.0, %v6079
      %v6081 = vpop.f32.mrb[0].mxu0
      %v6082 = vadd.f32 0.0, %v6081
      %v6083 = vpop.f32.mrb[0].mxu0
      %v6084 = vadd.f32 0.0, %v6083
      %v6085 = vpop.f32.mrb[0].mxu0
      %v6086 = vadd.f32 0.0, %v6085
      %6087 = vmatprep.mubr.bf16.mxu0 0
      %6088 = vmatmul.mubr.bf16.gmra.mrb[0].mxu0 %v5871
      %v6089 = vpop.f32.mrb[0].mxu0
      %v6090 = vadd.f32 0.0, %v6089
      %v6091 = vpop.f32.mrb[0].mxu0
      %v6092 = vadd.f32 0.0, %v6091
      %v6093 = vpop.f32.mrb[0].mxu0
      %v6094 = vadd.f32 0.0, %v6093
      %v6095 = vpop.f32.mrb[0].mxu0
      %v6096 = vadd.f32 0.0, %v6095
      %6097 = vmatprep.mubr.bf16.mxu0 0
      %6098 = vmatmul.mubr.bf16.gmra.mrb[0].mxu0 %v5872
      %v6099 = vpop.f32.mrb[0].mxu0
      %v6100 = vadd.f32 0.0, %v6099
      %v6101 = vpop.f32.mrb[0].mxu0
      %v6102 = vadd.f32 0.0, %v6101
      %v6103 = vpop.f32.mrb[0].mxu0
      %v6104 = vadd.f32 0.0, %v6103
      %v6105 = vpop.f32.mrb[0].mxu0
      %v6106 = vadd.f32 0.0, %v6105
      %6107 = vmatprep.mubr.bf16.mxu0 0
      %6108 = vmatmul.mubr.bf16.gmra.mrb[0].mxu0 %v5873
      %v6109 = vpop.f32.mrb[0].mxu0
      %v6110 = vadd.f32 0.0, %v6109
      %v6111 = vpop.f32.mrb[0].mxu0
      %v6112 = vadd.f32 0.0, %v6111
      %v6113 = vpop.f32.mrb[0].mxu0
      %v6114 = vadd.f32 0.0, %v6113
      %v6115 = vpop.f32.mrb[0].mxu0
      %v6116 = vadd.f32 0.0, %v6115
      %6117 = vmatprep.mubr.bf16.mxu0 0
      %6118 = vmatmul.mubr.bf16.gmra.mrb[0].mxu0 %v5874
      %v6119 = vpop.f32.mrb[0].mxu0
      %v6120 = vadd.f32 0.0, %v6119
      %v6121 = vpop.f32.mrb[0].mxu0
      %v6122 = vadd.f32 0.0, %v6121
      %v6123 = vpop.f32.mrb[0].mxu0
      %v6124 = vadd.f32 0.0, %v6123
      %v6125 = vpop.f32.mrb[0].mxu0
      %v6126 = vadd.f32 0.0, %v6125
      %6127 = vmatprep.mubr.bf16.mxu0 0
      %6128 = vmatmul.mubr.bf16.gmra.mrb[0].mxu0 %v5875
      %v6129 = vpop.f32.mrb[0].mxu0
      %v6130 = vadd.f32 0.0, %v6129
      %v6131 = vpop.f32.mrb[0].mxu0
      %v6132 = vadd.f32 0.0, %v6131
      %v6133 = vpop.f32.mrb[0].mxu0
      %v6134 = vadd.f32 0.0, %v6133
      %v6135 = vpop.f32.mrb[0].mxu0
      %v6136 = vadd.f32 0.0, %v6135
      %6137 = vmatprep.mubr.bf16.mxu0 0
      %6138 = vmatmul.mubr.bf16.gmra.mrb[0].mxu0 %v5876
      %v6139 = vpop.f32.mrb[0].mxu0
      %v6140 = vadd.f32 0.0, %v6139
      %v6141 = vpop.f32.mrb[0].mxu0
      %v6142 = vadd.f32 0.0, %v6141
      %v6143 = vpop.f32.mrb[0].mxu0
      %v6144 = vadd.f32 0.0, %v6143
      %v6145 = vpop.f32.mrb[0].mxu0
      %v6146 = vadd.f32 0.0, %v6145
      %6147 = vmatprep.mubr.bf16.mxu0 0
      %6148 = vmatmul.mubr.bf16.gmra.mrb[0].mxu0 %v5877
      %v6149 = vpop.f32.mrb[0].mxu0
      %v6150 = vadd.f32 0.0, %v6149
      %v6151 = vpop.f32.mrb[0].mxu0
      %v6152 = vadd.f32 0.0, %v6151
      %v6153 = vpop.f32.mrb[0].mxu0
      %v6154 = vadd.f32 0.0, %v6153
      %v6155 = vpop.f32.mrb[0].mxu0
      %v6156 = vadd.f32 0.0, %v6155
      %6157 = vmatprep.mubr.bf16.mxu0 0
      %6158 = vmatmul.mubr.bf16.gmra.mrb[0].mxu0 %v5878
      %v6159 = vpop.f32.mrb[0].mxu0
      %v6160 = vadd.f32 0.0, %v6159
      %v6161 = vpop.f32.mrb[0].mxu0
      %v6162 = vadd.f32 0.0, %v6161
      %v6163 = vpop.f32.mrb[0].mxu0
      %v6164 = vadd.f32 0.0, %v6163
      %v6165 = vpop.f32.mrb[0].mxu0
      %v6166 = vadd.f32 0.0, %v6165
      %6167 = vdwg.mxu0
      %v6168 = vld [vmem:[%s2717] sm:$0xff]
      %v6169 = vld [vmem:[%s2717 + $0x8] sm:$0xff]
      %v6170 = vld [vmem:[%s2717 + $0x10] sm:$0xff]
      %v6171 = vld [vmem:[%s2717 + $0x18] sm:$0xff]
      %v6172 = vld [vmem:[%s2717 + $0x20] sm:$0xff]
      %v6173 = vld [vmem:[%s2717 + $0x28] sm:$0xff]
      %v6174 = vld [vmem:[%s2717 + $0x30] sm:$0xff]
      %v6175 = vld [vmem:[%s2717 + $0x38] sm:$0xff]
      %v6176 = vld [vmem:[%s2717 + $0x40] sm:$0xff]
      %v6177 = vld [vmem:[%s2717 + $0x48] sm:$0xff]
      %v6178 = vld [vmem:[%s2717 + $0x50] sm:$0xff]
      %v6179 = vld [vmem:[%s2717 + $0x58] sm:$0xff]
      %v6180 = vld [vmem:[%s2717 + $0x60] sm:$0xff]
      %v6181 = vld [vmem:[%s2717 + $0x68] sm:$0xff]
      %v6182 = vld [vmem:[%s2717 + $0x70] sm:$0xff]
      %v6183 = vld [vmem:[%s2717 + $0x78] sm:$0xff]
      %v6184 = vld [vmem:[%s2717 + $0x80] sm:$0xff]
      %v6185 = vld [vmem:[%s2717 + $0x88] sm:$0xff]
      %v6186 = vld [vmem:[%s2717 + $0x90] sm:$0xff]
      %v6187 = vld [vmem:[%s2717 + $0x98] sm:$0xff]
      %v6188 = vld [vmem:[%s2717 + $0xa0] sm:$0xff]
      %v6189 = vld [vmem:[%s2717 + $0xa8] sm:$0xff]
      %v6190 = vld [vmem:[%s2717 + $0xb0] sm:$0xff]
      %v6191 = vld [vmem:[%s2717 + $0xb8] sm:$0xff]
      %v6192 = vld [vmem:[%s2717 + $0xc0] sm:$0xff]
      %v6193 = vld [vmem:[%s2717 + $0xc8] sm:$0xff]
      %v6194 = vld [vmem:[%s2717 + $0xd0] sm:$0xff]
      %v6195 = vld [vmem:[%s2717 + $0xd8] sm:$0xff]
      %v6196 = vld [vmem:[%s2717 + $0xe0] sm:$0xff]
      %v6197 = vld [vmem:[%s2717 + $0xe8] sm:$0xff]
      %v6198 = vld [vmem:[%s2717 + $0xf0] sm:$0xff]
      %v6199 = vld [vmem:[%s2717 + $0xf8] sm:$0xff]
      %v6200 = vadd.f32 %v6168, %v6010
      %v6201 = vadd.f32 %v6169, %v6014
      %v6202 = vadd.f32 %v6170, %v6020
      %v6203 = vadd.f32 %v6171, %v6024
      %v6204 = vadd.f32 %v6172, %v6030
      %v6205 = vadd.f32 %v6173, %v6034
      %v6206 = vadd.f32 %v6174, %v6040
      %v6207 = vadd.f32 %v6175, %v6044
      %v6208 = vadd.f32 %v6176, %v6050
      %v6209 = vadd.f32 %v6177, %v6054
      %v6210 = vadd.f32 %v6178, %v6060
      %v6211 = vadd.f32 %v6179, %v6064
      %v6212 = vadd.f32 %v6180, %v6070
      %v6213 = vadd.f32 %v6181, %v6074
      %v6214 = vadd.f32 %v6182, %v6080
      %v6215 = vadd.f32 %v6183, %v6084
      %v6216 = vadd.f32 %v6184, %v6090
      %v6217 = vadd.f32 %v6185, %v6094
      %v6218 = vadd.f32 %v6186, %v6100
      %v6219 = vadd.f32 %v6187, %v6104
      %v6220 = vadd.f32 %v6188, %v6110
      %v6221 = vadd.f32 %v6189, %v6114
      %v6222 = vadd.f32 %v6190, %v6120
      %v6223 = vadd.f32 %v6191, %v6124
      %v6224 = vadd.f32 %v6192, %v6130
      %v6225 = vadd.f32 %v6193, %v6134
      %v6226 = vadd.f32 %v6194, %v6140
      %v6227 = vadd.f32 %v6195, %v6144
      %v6228 = vadd.f32 %v6196, %v6150
      %v6229 = vadd.f32 %v6197, %v6154
      %v6230 = vadd.f32 %v6198, %v6160
      %v6231 = vadd.f32 %v6199, %v6164
      %6232 = vst [vmem:[%s2717] sm:$0xff] %v6200
      %6233 = vst [vmem:[%s2717 + $0x8] sm:$0xff] %v6201
      %6234 = vst [vmem:[%s2717 + $0x10] sm:$0xff] %v6202
      %6235 = vst [vmem:[%s2717 + $0x18] sm:$0xff] %v6203
      %6236 = vst [vmem:[%s2717 + $0x20] sm:$0xff] %v6204
      %6237 = vst [vmem:[%s2717 + $0x28] sm:$0xff] %v6205
      %6238 = vst [vmem:[%s2717 + $0x30] sm:$0xff] %v6206
      %6239 = vst [vmem:[%s2717 + $0x38] sm:$0xff] %v6207
      %6240 = vst [vmem:[%s2717 + $0x40] sm:$0xff] %v6208
      %6241 = vst [vmem:[%s2717 + $0x48] sm:$0xff] %v6209
      %6242 = vst [vmem:[%s2717 + $0x50] sm:$0xff] %v6210
      %6243 = vst [vmem:[%s2717 + $0x58] sm:$0xff] %v6211
      %6244 = vst [vmem:[%s2717 + $0x60] sm:$0xff] %v6212
      %6245 = vst [vmem:[%s2717 + $0x68] sm:$0xff] %v6213
      %6246 = vst [vmem:[%s2717 + $0x70] sm:$0xff] %v6214
      %6247 = vst [vmem:[%s2717 + $0x78] sm:$0xff] %v6215
      %6248 = vst [vmem:[%s2717 + $0x80] sm:$0xff] %v6216
      %6249 = vst [vmem:[%s2717 + $0x88] sm:$0xff] %v6217
      %6250 = vst [vmem:[%s2717 + $0x90] sm:$0xff] %v6218
      %6251 = vst [vmem:[%s2717 + $0x98] sm:$0xff] %v6219
      %6252 = vst [vmem:[%s2717 + $0xa0] sm:$0xff] %v6220
      %6253 = vst [vmem:[%s2717 + $0xa8] sm:$0xff] %v6221
      %6254 = vst [vmem:[%s2717 + $0xb0] sm:$0xff] %v6222
      %6255 = vst [vmem:[%s2717 + $0xb8] sm:$0xff] %v6223
      %6256 = vst [vmem:[%s2717 + $0xc0] sm:$0xff] %v6224
      %6257 = vst [vmem:[%s2717 + $0xc8] sm:$0xff] %v6225
      %6258 = vst [vmem:[%s2717 + $0xd0] sm:$0xff] %v6226
      %6259 = vst [vmem:[%s2717 + $0xd8] sm:$0xff] %v6227
      %6260 = vst [vmem:[%s2717 + $0xe0] sm:$0xff] %v6228
      %6261 = vst [vmem:[%s2717 + $0xe8] sm:$0xff] %v6229
      %6262 = vst [vmem:[%s2717 + $0xf0] sm:$0xff] %v6230
      %6263 = vst [vmem:[%s2717 + $0xf8] sm:$0xff] %v6231
      %v6264 = vld [vmem:[%s4144] sm:$0xff]
      %v6265 = vld [vmem:[%s4144 + $0x8] sm:$0xff]
      %v6266 = vld [vmem:[%s4144 + $0x10] sm:$0xff]
      %v6267 = vld [vmem:[%s4144 + $0x18] sm:$0xff]
      %v6268 = vld [vmem:[%s4144 + $0x20] sm:$0xff]
      %v6269 = vld [vmem:[%s4144 + $0x28] sm:$0xff]
      %v6270 = vld [vmem:[%s4144 + $0x30] sm:$0xff]
      %v6271 = vld [vmem:[%s4144 + $0x38] sm:$0xff]
      %v6272 = vld [vmem:[%s4144 + $0x40] sm:$0xff]
      %v6273 = vld [vmem:[%s4144 + $0x48] sm:$0xff]
      %v6274 = vld [vmem:[%s4144 + $0x50] sm:$0xff]
      %v6275 = vld [vmem:[%s4144 + $0x58] sm:$0xff]
      %v6276 = vld [vmem:[%s4144 + $0x60] sm:$0xff]
      %v6277 = vld [vmem:[%s4144 + $0x68] sm:$0xff]
      %v6278 = vld [vmem:[%s4144 + $0x70] sm:$0xff]
      %v6279 = vld [vmem:[%s4144 + $0x78] sm:$0xff]
      %v6280 = vld [vmem:[%s4144 + $0x80] sm:$0xff]
      %v6281 = vld [vmem:[%s4144 + $0x88] sm:$0xff]
      %v6282 = vld [vmem:[%s4144 + $0x90] sm:$0xff]
      %v6283 = vld [vmem:[%s4144 + $0x98] sm:$0xff]
      %v6284 = vld [vmem:[%s4144 + $0xa0] sm:$0xff]
      %v6285 = vld [vmem:[%s4144 + $0xa8] sm:$0xff]
      %v6286 = vld [vmem:[%s4144 + $0xb0] sm:$0xff]
      %v6287 = vld [vmem:[%s4144 + $0xb8] sm:$0xff]
      %v6288 = vld [vmem:[%s4144 + $0xc0] sm:$0xff]
      %v6289 = vld [vmem:[%s4144 + $0xc8] sm:$0xff]
      %v6290 = vld [vmem:[%s4144 + $0xd0] sm:$0xff]
      %v6291 = vld [vmem:[%s4144 + $0xd8] sm:$0xff]
      %v6292 = vld [vmem:[%s4144 + $0xe0] sm:$0xff]
      %v6293 = vld [vmem:[%s4144 + $0xe8] sm:$0xff]
      %v6294 = vld [vmem:[%s4144 + $0xf0] sm:$0xff]
      %v6295 = vld [vmem:[%s4144 + $0xf8] sm:$0xff]
      %v6296 = vadd.f32 %v6264, %v6012
      %v6297 = vadd.f32 %v6265, %v6016
      %v6298 = vadd.f32 %v6266, %v6022
      %v6299 = vadd.f32 %v6267, %v6026
      %v6300 = vadd.f32 %v6268, %v6032
      %v6301 = vadd.f32 %v6269, %v6036
      %v6302 = vadd.f32 %v6270, %v6042
      %v6303 = vadd.f32 %v6271, %v6046
      %v6304 = vadd.f32 %v6272, %v6052
      %v6305 = vadd.f32 %v6273, %v6056
      %v6306 = vadd.f32 %v6274, %v6062
      %v6307 = vadd.f32 %v6275, %v6066
      %v6308 = vadd.f32 %v6276, %v6072
      %v6309 = vadd.f32 %v6277, %v6076
      %v6310 = vadd.f32 %v6278, %v6082
      %v6311 = vadd.f32 %v6279, %v6086
      %v6312 = vadd.f32 %v6280, %v6092
      %v6313 = vadd.f32 %v6281, %v6096
      %v6314 = vadd.f32 %v6282, %v6102
      %v6315 = vadd.f32 %v6283, %v6106
      %v6316 = vadd.f32 %v6284, %v6112
      %v6317 = vadd.f32 %v6285, %v6116
      %v6318 = vadd.f32 %v6286, %v6122
      %v6319 = vadd.f32 %v6287, %v6126
      %v6320 = vadd.f32 %v6288, %v6132
      %v6321 = vadd.f32 %v6289, %v6136
      %v6322 = vadd.f32 %v6290, %v6142
      %v6323 = vadd.f32 %v6291, %v6146
      %v6324 = vadd.f32 %v6292, %v6152
      %v6325 = vadd.f32 %v6293, %v6156
      %v6326 = vadd.f32 %v6294, %v6162
      %v6327 = vadd.f32 %v6295, %v6166
      %6328 = vst [vmem:[%s4144] sm:$0xff] %v6296
      %6329 = vst [vmem:[%s4144 + $0x8] sm:$0xff] %v6297
      %6330 = vst [vmem:[%s4144 + $0x10] sm:$0xff] %v6298
      %6331 = vst [vmem:[%s4144 + $0x18] sm:$0xff] %v6299
      %6332 = vst [vmem:[%s4144 + $0x20] sm:$0xff] %v6300
      %6333 = vst [vmem:[%s4144 + $0x28] sm:$0xff] %v6301
      %6334 = vst [vmem:[%s4144 + $0x30] sm:$0xff] %v6302
      %6335 = vst [vmem:[%s4144 + $0x38] sm:$0xff] %v6303
      %6336 = vst [vmem:[%s4144 + $0x40] sm:$0xff] %v6304
      %6337 = vst [vmem:[%s4144 + $0x48] sm:$0xff] %v6305
      %6338 = vst [vmem:[%s4144 + $0x50] sm:$0xff] %v6306
      %6339 = vst [vmem:[%s4144 + $0x58] sm:$0xff] %v6307
      %6340 = vst [vmem:[%s4144 + $0x60] sm:$0xff] %v6308
      %6341 = vst [vmem:[%s4144 + $0x68] sm:$0xff] %v6309
      %6342 = vst [vmem:[%s4144 + $0x70] sm:$0xff] %v6310
      %6343 = vst [vmem:[%s4144 + $0x78] sm:$0xff] %v6311
      %6344 = vst [vmem:[%s4144 + $0x80] sm:$0xff] %v6312
      %6345 = vst [vmem:[%s4144 + $0x88] sm:$0xff] %v6313
      %6346 = vst [vmem:[%s4144 + $0x90] sm:$0xff] %v6314
      %6347 = vst [vmem:[%s4144 + $0x98] sm:$0xff] %v6315
      %6348 = vst [vmem:[%s4144 + $0xa0] sm:$0xff] %v6316
      %6349 = vst [vmem:[%s4144 + $0xa8] sm:$0xff] %v6317
      %6350 = vst [vmem:[%s4144 + $0xb0] sm:$0xff] %v6318
      %6351 = vst [vmem:[%s4144 + $0xb8] sm:$0xff] %v6319
      %6352 = vst [vmem:[%s4144 + $0xc0] sm:$0xff] %v6320
      %6353 = vst [vmem:[%s4144 + $0xc8] sm:$0xff] %v6321
      %6354 = vst [vmem:[%s4144 + $0xd0] sm:$0xff] %v6322
      %6355 = vst [vmem:[%s4144 + $0xd8] sm:$0xff] %v6323
      %6356 = vst [vmem:[%s4144 + $0xe0] sm:$0xff] %v6324
      %6357 = vst [vmem:[%s4144 + $0xe8] sm:$0xff] %v6325
      %6358 = vst [vmem:[%s4144 + $0xf0] sm:$0xff] %v6326
      %6359 = vst [vmem:[%s4144 + $0xf8] sm:$0xff] %v6327
      %v6360 = vld [vmem:[%s4933] sm:$0xe]
      %v6361 = vld [vmem:[%s4933 + $0x4] sm:$0xf]
      %v6362 = vld [vmem:[%s4933 + $0x8] sm:$0x1]
      %v6363 = vld [vmem:[%s4933 + $0xc] sm:$0xe]
      %v6364 = vld [vmem:[%s4933 + $0x10] sm:$0xf]
      %v6365 = vld [vmem:[%s4933 + $0x14] sm:$0x1]
      %v6366 = vld [vmem:[%s4933 + $0x18] sm:$0xe]
      %v6367 = vld [vmem:[%s4933 + $0x1c] sm:$0xf]
      %v6368 = vld [vmem:[%s4933 + $0x20] sm:$0x1]
      %v6369 = vld [vmem:[%s4933 + $0x24] sm:$0xe]
      %v6370 = vld [vmem:[%s4933 + $0x28] sm:$0xf]
      %v6371 = vld [vmem:[%s4933 + $0x2c] sm:$0x1]
      %v6372 = vld [vmem:[%s4933 + $0x30] sm:$0xe]
      %v6373 = vld [vmem:[%s4933 + $0x34] sm:$0xf]
      %v6374 = vld [vmem:[%s4933 + $0x38] sm:$0x1]
      %v6375 = vld [vmem:[%s4933 + $0x3c] sm:$0xe]
      %v6376 = vld [vmem:[%s4933 + $0x40] sm:$0xf]
      %v6377 = vld [vmem:[%s4933 + $0x44] sm:$0x1]
      %v6378 = vld [vmem:[%s4933 + $0x48] sm:$0xe]
      %v6379 = vld [vmem:[%s4933 + $0x4c] sm:$0xf]
      %v6380 = vld [vmem:[%s4933 + $0x50] sm:$0x1]
      %v6381 = vld [vmem:[%s4933 + $0x54] sm:$0xe]
      %v6382 = vld [vmem:[%s4933 + $0x58] sm:$0xf]
      %v6383 = vld [vmem:[%s4933 + $0x5c] sm:$0x1]
      %v6384 = vld [vmem:[%s4933 + $0x60] sm:$0xe]
      %v6385 = vld [vmem:[%s4933 + $0x64] sm:$0xf]
      %v6386 = vld [vmem:[%s4933 + $0x68] sm:$0x1]
      %v6387 = vld [vmem:[%s4933 + $0x6c] sm:$0xe]
      %v6388 = vld [vmem:[%s4933 + $0x70] sm:$0xf]
      %v6389 = vld [vmem:[%s4933 + $0x74] sm:$0x1]
      %v6390 = vld [vmem:[%s4933 + $0x78] sm:$0xe]
      %v6391 = vld [vmem:[%s4933 + $0x7c] sm:$0xf]
      %v6392 = vld [vmem:[%s4933 + $0x80] sm:$0x1]
      %v6393 = vld [vmem:[%s4933 + $0x84] sm:$0xe]
      %v6394 = vld [vmem:[%s4933 + $0x88] sm:$0xf]
      %v6395 = vld [vmem:[%s4933 + $0x8c] sm:$0x1]
      %v6396 = vld [vmem:[%s4933 + $0x90] sm:$0xe]
      %v6397 = vld [vmem:[%s4933 + $0x94] sm:$0xf]
      %v6398 = vld [vmem:[%s4933 + $0x98] sm:$0x1]
      %v6399 = vld [vmem:[%s4933 + $0x9c] sm:$0xe]
      %v6400 = vld [vmem:[%s4933 + $0xa0] sm:$0xf]
      %v6401 = vld [vmem:[%s4933 + $0xa4] sm:$0x1]
      %v6402 = vld [vmem:[%s4933 + $0xa8] sm:$0xe]
      %v6403 = vld [vmem:[%s4933 + $0xac] sm:$0xf]
      %v6404 = vld [vmem:[%s4933 + $0xb0] sm:$0x1]
      %v6405 = vld [vmem:[%s4933 + $0xb4] sm:$0xe]
      %v6406 = vld [vmem:[%s4933 + $0xb8] sm:$0xf]
      %v6407 = vld [vmem:[%s4933 + $0xbc] sm:$0x1]
      %v6456 = vrot.slane %v6360, 5
      %v6457 = vrot.slane %v6456, 4
      %v6458 = vrot.slane %v6361, 5
      %v6459 = vsel %vm1670, %v6457, %v6458
      %v6460 = vrot.slane %v6458, 4
      %v6461 = vrot.slane %v6362, 5
      %v6462 = vsel %vm1670, %v6460, %v6461
      %v6463 = vrot.slane %v6363, 5
      %v6464 = vrot.slane %v6463, 4
      %v6465 = vrot.slane %v6364, 5
      %v6466 = vsel %vm1670, %v6464, %v6465
      %v6467 = vrot.slane %v6465, 4
      %v6468 = vrot.slane %v6365, 5
      %v6469 = vsel %vm1670, %v6467, %v6468
      %v6470 = vrot.slane %v6366, 5
      %v6471 = vrot.slane %v6470, 4
      %v6472 = vrot.slane %v6367, 5
      %v6473 = vsel %vm1670, %v6471, %v6472
      %v6474 = vrot.slane %v6472, 4
      %v6475 = vrot.slane %v6368, 5
      %v6476 = vsel %vm1670, %v6474, %v6475
      %v6477 = vrot.slane %v6369, 5
      %v6478 = vrot.slane %v6477, 4
      %v6479 = vrot.slane %v6370, 5
      %v6480 = vsel %vm1670, %v6478, %v6479
      %v6481 = vrot.slane %v6479, 4
      %v6482 = vrot.slane %v6371, 5
      %v6483 = vsel %vm1670, %v6481, %v6482
      %v6484 = vrot.slane %v6372, 5
      %v6485 = vrot.slane %v6484, 4
      %v6486 = vrot.slane %v6373, 5
      %v6487 = vsel %vm1670, %v6485, %v6486
      %v6488 = vrot.slane %v6486, 4
      %v6489 = vrot.slane %v6374, 5
      %v6490 = vsel %vm1670, %v6488, %v6489
      %v6491 = vrot.slane %v6375, 5
      %v6492 = vrot.slane %v6491, 4
      %v6493 = vrot.slane %v6376, 5
      %v6494 = vsel %vm1670, %v6492, %v6493
      %v6495 = vrot.slane %v6493, 4
      %v6496 = vrot.slane %v6377, 5
      %v6497 = vsel %vm1670, %v6495, %v6496
      %v6498 = vrot.slane %v6378, 5
      %v6499 = vrot.slane %v6498, 4
      %v6500 = vrot.slane %v6379, 5
      %v6501 = vsel %vm1670, %v6499, %v6500
      %v6502 = vrot.slane %v6500, 4
      %v6503 = vrot.slane %v6380, 5
      %v6504 = vsel %vm1670, %v6502, %v6503
      %v6505 = vrot.slane %v6381, 5
      %v6506 = vrot.slane %v6505, 4
      %v6507 = vrot.slane %v6382, 5
      %v6508 = vsel %vm1670, %v6506, %v6507
      %v6509 = vrot.slane %v6507, 4
      %v6510 = vrot.slane %v6383, 5
      %v6511 = vsel %vm1670, %v6509, %v6510
      %v6512 = vrot.slane %v6384, 5
      %v6513 = vrot.slane %v6512, 4
      %v6514 = vrot.slane %v6385, 5
      %v6515 = vsel %vm1670, %v6513, %v6514
      %v6516 = vrot.slane %v6514, 4
      %v6517 = vrot.slane %v6386, 5
      %v6518 = vsel %vm1670, %v6516, %v6517
      %v6519 = vrot.slane %v6387, 5
      %v6520 = vrot.slane %v6519, 4
      %v6521 = vrot.slane %v6388, 5
      %v6522 = vsel %vm1670, %v6520, %v6521
      %v6523 = vrot.slane %v6521, 4
      %v6524 = vrot.slane %v6389, 5
      %v6525 = vsel %vm1670, %v6523, %v6524
      %v6526 = vrot.slane %v6390, 5
      %v6527 = vrot.slane %v6526, 4
      %v6528 = vrot.slane %v6391, 5
      %v6529 = vsel %vm1670, %v6527, %v6528
      %v6530 = vrot.slane %v6528, 4
      %v6531 = vrot.slane %v6392, 5
      %v6532 = vsel %vm1670, %v6530, %v6531
      %v6533 = vrot.slane %v6393, 5
      %v6534 = vrot.slane %v6533, 4
      %v6535 = vrot.slane %v6394, 5
      %v6536 = vsel %vm1670, %v6534, %v6535
      %v6537 = vrot.slane %v6535, 4
      %v6538 = vrot.slane %v6395, 5
      %v6539 = vsel %vm1670, %v6537, %v6538
      %v6540 = vrot.slane %v6396, 5
      %v6541 = vrot.slane %v6540, 4
      %v6542 = vrot.slane %v6397, 5
      %v6543 = vsel %vm1670, %v6541, %v6542
      %v6544 = vrot.slane %v6542, 4
      %v6545 = vrot.slane %v6398, 5
      %v6546 = vsel %vm1670, %v6544, %v6545
      %v6547 = vrot.slane %v6399, 5
      %v6548 = vrot.slane %v6547, 4
      %v6549 = vrot.slane %v6400, 5
      %v6550 = vsel %vm1670, %v6548, %v6549
      %v6551 = vrot.slane %v6549, 4
      %v6552 = vrot.slane %v6401, 5
      %v6553 = vsel %vm1670, %v6551, %v6552
      %v6554 = vrot.slane %v6402, 5
      %v6555 = vrot.slane %v6554, 4
      %v6556 = vrot.slane %v6403, 5
      %v6557 = vsel %vm1670, %v6555, %v6556
      %v6558 = vrot.slane %v6556, 4
      %v6559 = vrot.slane %v6404, 5
      %v6560 = vsel %vm1670, %v6558, %v6559
      %v6561 = vrot.slane %v6405, 5
      %v6562 = vrot.slane %v6561, 4
      %v6563 = vrot.slane %v6406, 5
      %v6564 = vsel %vm1670, %v6562, %v6563
      %v6565 = vrot.slane %v6563, 4
      %v6566 = vrot.slane %v6407, 5
      %v6567 = vsel %vm1670, %v6565, %v6566
      %v6568 = vld [vmem:[%s1 + $0x3c] sm:$0xf]
      %v6569 = vld [vmem:[%s1 + $0x7c] sm:$0xf]
      %v6570 = vld [vmem:[%s1 + $0xbc] sm:$0xf]
      %v6571 = vld [vmem:[%s1 + $0xfc] sm:$0xf]
      %v6572 = vld [vmem:[%s1 + $0x13c] sm:$0xf]
      %v6573 = vld [vmem:[%s1 + $0x17c] sm:$0xf]
      %v6574 = vld [vmem:[%s1 + $0x1bc] sm:$0xf]
      %v6575 = vld [vmem:[%s1 + $0x1fc] sm:$0xf]
      %v6576 = vld [vmem:[%s1 + $0x23c] sm:$0xf]
      %v6577 = vld [vmem:[%s1 + $0x27c] sm:$0xf]
      %v6578 = vld [vmem:[%s1 + $0x2bc] sm:$0xf]
      %v6579 = vld [vmem:[%s1 + $0x2fc] sm:$0xf]
      %v6580 = vld [vmem:[%s1 + $0x33c] sm:$0xf]
      %v6581 = vld [vmem:[%s1 + $0x37c] sm:$0xf]
      %v6582 = vld [vmem:[%s1 + $0x3bc] sm:$0xf]
      %v6583 = vld [vmem:[%s1 + $0x3fc] sm:$0xf]
      %v6584 = vunpack.c.l.b16 %v6459
      %v6585 = vunpack.c.l.b16 %v6462
      %v6586 = vunpack.c.l.b16 %v6466
      %v6587 = vunpack.c.l.b16 %v6469
      %v6588 = vunpack.c.l.b16 %v6473
      %v6589 = vunpack.c.l.b16 %v6476
      %v6590 = vunpack.c.l.b16 %v6480
      %v6591 = vunpack.c.l.b16 %v6483
      %v6592 = vunpack.c.l.b16 %v6487
      %v6593 = vunpack.c.l.b16 %v6490
      %v6594 = vunpack.c.l.b16 %v6494
      %v6595 = vunpack.c.l.b16 %v6497
      %v6596 = vunpack.c.l.b16 %v6501
      %v6597 = vunpack.c.l.b16 %v6504
      %v6598 = vunpack.c.l.b16 %v6508
      %v6599 = vunpack.c.l.b16 %v6511
      %v6600 = vunpack.c.l.b16 %v6515
      %v6601 = vunpack.c.l.b16 %v6518
      %v6602 = vunpack.c.l.b16 %v6522
      %v6603 = vunpack.c.l.b16 %v6525
      %v6604 = vunpack.c.l.b16 %v6529
      %v6605 = vunpack.c.l.b16 %v6532
      %v6606 = vunpack.c.l.b16 %v6536
      %v6607 = vunpack.c.l.b16 %v6539
      %v6608 = vunpack.c.l.b16 %v6543
      %v6609 = vunpack.c.l.b16 %v6546
      %v6610 = vunpack.c.l.b16 %v6550
      %v6611 = vunpack.c.l.b16 %v6553
      %v6612 = vunpack.c.l.b16 %v6557
      %v6613 = vunpack.c.l.b16 %v6560
      %v6614 = vunpack.c.l.b16 %v6564
      %v6615 = vunpack.c.l.b16 %v6567
      %v6616 = vpack.c.b16 %v6585, %v6584
      %v6617 = vpack.c.b16 %v6587, %v6586
      %v6618 = vpack.c.b16 %v6589, %v6588
      %v6619 = vpack.c.b16 %v6591, %v6590
      %v6620 = vpack.c.b16 %v6593, %v6592
      %v6621 = vpack.c.b16 %v6595, %v6594
      %v6622 = vpack.c.b16 %v6597, %v6596
      %v6623 = vpack.c.b16 %v6599, %v6598
      %v6624 = vpack.c.b16 %v6601, %v6600
      %v6625 = vpack.c.b16 %v6603, %v6602
      %v6626 = vpack.c.b16 %v6605, %v6604
      %v6627 = vpack.c.b16 %v6607, %v6606
      %v6628 = vpack.c.b16 %v6609, %v6608
      %v6629 = vpack.c.b16 %v6611, %v6610
      %v6630 = vpack.c.b16 %v6613, %v6612
      %v6631 = vpack.c.b16 %v6615, %v6614
      %v6664 = vunpack.c.l.b16 %v6568
      %v6665 = vunpack.c.l.b16 %v6569
      %v6666 = vunpack.c.l.b16 %v6570
      %v6667 = vunpack.c.l.b16 %v6571
      %v6668 = vunpack.c.l.b16 %v6572
      %v6669 = vunpack.c.l.b16 %v6573
      %v6670 = vunpack.c.l.b16 %v6574
      %v6671 = vunpack.c.l.b16 %v6575
      %v6672 = vunpack.c.l.b16 %v6576
      %v6673 = vunpack.c.l.b16 %v6577
      %v6674 = vunpack.c.l.b16 %v6578
      %v6675 = vunpack.c.l.b16 %v6579
      %v6676 = vunpack.c.l.b16 %v6580
      %v6677 = vunpack.c.l.b16 %v6581
      %v6678 = vunpack.c.l.b16 %v6582
      %v6679 = vunpack.c.l.b16 %v6583
      %v6680 = vpack.c.b16 %v6665, %v6664
      %v6681 = vpack.c.b16 %v6667, %v6666
      %v6682 = vpack.c.b16 %v6669, %v6668
      %v6683 = vpack.c.b16 %v6671, %v6670
      %v6684 = vpack.c.b16 %v6673, %v6672
      %v6685 = vpack.c.b16 %v6675, %v6674
      %v6686 = vpack.c.b16 %v6677, %v6676
      %v6687 = vpack.c.b16 %v6679, %v6678
      %6696 = vmatprep.subr.bf16.mxu0 0
      %6697 = vmatpush1.bf16.msra.mxu0 %v6680
      %6698 = vmatprep.subr.bf16.mxu0 0
      %6699 = vmatpush1.bf16.msra.mxu0 %v6681
      %6700 = vmatprep.subr.bf16.mxu0 0
      %6701 = vmatpush1.bf16.msra.mxu0 %v6682
      %6702 = vmatprep.subr.bf16.mxu0 0
      %6703 = vmatpush1.bf16.msra.mxu0 %v6683
      %6704 = vmatprep.subr.bf16.mxu0 0
      %6705 = vmatpush1.bf16.msra.mxu0 %v6684
      %6706 = vmatprep.subr.bf16.mxu0 0
      %6707 = vmatpush1.bf16.msra.mxu0 %v6685
      %6708 = vmatprep.subr.bf16.mxu0 0
      %6709 = vmatpush1.bf16.msra.mxu0 %v6686
      %6710 = vmatprep.subr.bf16.mxu0 0
      %6711 = vmatpush1.bf16.msra.mxu0 %v6687
      %6712 = vmatprep.subr.bf16.mxu0 0
      %6713 = vmatpush1.bf16.msra.mxu0 0
      %6714 = vmatprep.subr.bf16.mxu0 0
      %6715 = vmatpush1.bf16.msra.mxu0 0
      %6716 = vmatprep.subr.bf16.mxu0 0
      %6717 = vmatpush1.bf16.msra.mxu0 0
      %6718 = vmatprep.subr.bf16.mxu0 0
      %6719 = vmatpush1.bf16.msra.mxu0 0
      %6720 = vmatprep.subr.bf16.mxu0 0
      %6721 = vmatpush1.bf16.msra.mxu0 0
      %6722 = vmatprep.subr.bf16.mxu0 0
      %6723 = vmatpush1.bf16.msra.mxu0 0
      %6724 = vmatprep.subr.bf16.mxu0 0
      %6725 = vmatpush1.bf16.msra.mxu0 0
      %6726 = vmatprep.subr.bf16.mxu0 0
      %6727 = vmatpush1.bf16.msra.mxu0 0
      %6728 = vmatprep.mubr.bf16.mxu0 0
      %6729 = vmatmul.mubr.bf16.gmra.mrb[0].mxu0 %v6616
      %v6730 = vpop.f32.mrb[0].mxu0
      %v6731 = vadd.f32 0.0, %v6730
      %v6732 = vpop.f32.mrb[0].mxu0
      %v6733 = vpop.f32.mrb[0].mxu0
      %v6734 = vadd.f32 0.0, %v6733
      %v6735 = vpop.f32.mrb[0].mxu0
      %6736 = vmatprep.mubr.bf16.mxu0 0
      %6737 = vmatmul.mubr.bf16.gmra.mrb[0].mxu0 %v6617
      %v6738 = vpop.f32.mrb[0].mxu0
      %v6739 = vadd.f32 0.0, %v6738
      %v6740 = vpop.f32.mrb[0].mxu0
      %v6741 = vpop.f32.mrb[0].mxu0
      %v6742 = vadd.f32 0.0, %v6741
      %v6743 = vpop.f32.mrb[0].mxu0
      %6744 = vmatprep.mubr.bf16.mxu0 0
      %6745 = vmatmul.mubr.bf16.gmra.mrb[0].mxu0 %v6618
      %v6746 = vpop.f32.mrb[0].mxu0
      %v6747 = vadd.f32 0.0, %v6746
      %v6748 = vpop.f32.mrb[0].mxu0
      %v6749 = vpop.f32.mrb[0].mxu0
      %v6750 = vadd.f32 0.0, %v6749
      %v6751 = vpop.f32.mrb[0].mxu0
      %6752 = vmatprep.mubr.bf16.mxu0 0
      %6753 = vmatmul.mubr.bf16.gmra.mrb[0].mxu0 %v6619
      %v6754 = vpop.f32.mrb[0].mxu0
      %v6755 = vadd.f32 0.0, %v6754
      %v6756 = vpop.f32.mrb[0].mxu0
      %v6757 = vpop.f32.mrb[0].mxu0
      %v6758 = vadd.f32 0.0, %v6757
      %v6759 = vpop.f32.mrb[0].mxu0
      %6760 = vmatprep.mubr.bf16.mxu0 0
      %6761 = vmatmul.mubr.bf16.gmra.mrb[0].mxu0 %v6620
      %v6762 = vpop.f32.mrb[0].mxu0
      %v6763 = vadd.f32 0.0, %v6762
      %v6764 = vpop.f32.mrb[0].mxu0
      %v6765 = vpop.f32.mrb[0].mxu0
      %v6766 = vadd.f32 0.0, %v6765
      %v6767 = vpop.f32.mrb[0].mxu0
      %6768 = vmatprep.mubr.bf16.mxu0 0
      %6769 = vmatmul.mubr.bf16.gmra.mrb[0].mxu0 %v6621
      %v6770 = vpop.f32.mrb[0].mxu0
      %v6771 = vadd.f32 0.0, %v6770
      %v6772 = vpop.f32.mrb[0].mxu0
      %v6773 = vpop.f32.mrb[0].mxu0
      %v6774 = vadd.f32 0.0, %v6773
      %v6775 = vpop.f32.mrb[0].mxu0
      %6776 = vmatprep.mubr.bf16.mxu0 0
      %6777 = vmatmul.mubr.bf16.gmra.mrb[0].mxu0 %v6622
      %v6778 = vpop.f32.mrb[0].mxu0
      %v6779 = vadd.f32 0.0, %v6778
      %v6780 = vpop.f32.mrb[0].mxu0
      %v6781 = vpop.f32.mrb[0].mxu0
      %v6782 = vadd.f32 0.0, %v6781
      %v6783 = vpop.f32.mrb[0].mxu0
      %6784 = vmatprep.mubr.bf16.mxu0 0
      %6785 = vmatmul.mubr.bf16.gmra.mrb[0].mxu0 %v6623
      %v6786 = vpop.f32.mrb[0].mxu0
      %v6787 = vadd.f32 0.0, %v6786
      %v6788 = vpop.f32.mrb[0].mxu0
      %v6789 = vpop.f32.mrb[0].mxu0
      %v6790 = vadd.f32 0.0, %v6789
      %v6791 = vpop.f32.mrb[0].mxu0
      %6792 = vmatprep.mubr.bf16.mxu0 0
      %6793 = vmatmul.mubr.bf16.gmra.mrb[0].mxu0 %v6624
      %v6794 = vpop.f32.mrb[0].mxu0
      %v6795 = vadd.f32 0.0, %v6794
      %v6796 = vpop.f32.mrb[0].mxu0
      %v6797 = vpop.f32.mrb[0].mxu0
      %v6798 = vadd.f32 0.0, %v6797
      %v6799 = vpop.f32.mrb[0].mxu0
      %6800 = vmatprep.mubr.bf16.mxu0 0
      %6801 = vmatmul.mubr.bf16.gmra.mrb[0].mxu0 %v6625
      %v6802 = vpop.f32.mrb[0].mxu0
      %v6803 = vadd.f32 0.0, %v6802
      %v6804 = vpop.f32.mrb[0].mxu0
      %v6805 = vpop.f32.mrb[0].mxu0
      %v6806 = vadd.f32 0.0, %v6805
      %v6807 = vpop.f32.mrb[0].mxu0
      %6808 = vmatprep.mubr.bf16.mxu0 0
      %6809 = vmatmul.mubr.bf16.gmra.mrb[0].mxu0 %v6626
      %v6810 = vpop.f32.mrb[0].mxu0
      %v6811 = vadd.f32 0.0, %v6810
      %v6812 = vpop.f32.mrb[0].mxu0
      %v6813 = vpop.f32.mrb[0].mxu0
      %v6814 = vadd.f32 0.0, %v6813
      %v6815 = vpop.f32.mrb[0].mxu0
      %6816 = vmatprep.mubr.bf16.mxu0 0
      %6817 = vmatmul.mubr.bf16.gmra.mrb[0].mxu0 %v6627
      %v6818 = vpop.f32.mrb[0].mxu0
      %v6819 = vadd.f32 0.0, %v6818
      %v6820 = vpop.f32.mrb[0].mxu0
      %v6821 = vpop.f32.mrb[0].mxu0
      %v6822 = vadd.f32 0.0, %v6821
      %v6823 = vpop.f32.mrb[0].mxu0
      %6824 = vmatprep.mubr.bf16.mxu0 0
      %6825 = vmatmul.mubr.bf16.gmra.mrb[0].mxu0 %v6628
      %v6826 = vpop.f32.mrb[0].mxu0
      %v6827 = vadd.f32 0.0, %v6826
      %v6828 = vpop.f32.mrb[0].mxu0
      %v6829 = vpop.f32.mrb[0].mxu0
      %v6830 = vadd.f32 0.0, %v6829
      %v6831 = vpop.f32.mrb[0].mxu0
      %6832 = vmatprep.mubr.bf16.mxu0 0
      %6833 = vmatmul.mubr.bf16.gmra.mrb[0].mxu0 %v6629
      %v6834 = vpop.f32.mrb[0].mxu0
      %v6835 = vadd.f32 0.0, %v6834
      %v6836 = vpop.f32.mrb[0].mxu0
      %v6837 = vpop.f32.mrb[0].mxu0
      %v6838 = vadd.f32 0.0, %v6837
      %v6839 = vpop.f32.mrb[0].mxu0
      %6840 = vmatprep.mubr.bf16.mxu0 0
      %6841 = vmatmul.mubr.bf16.gmra.mrb[0].mxu0 %v6630
      %v6842 = vpop.f32.mrb[0].mxu0
      %v6843 = vadd.f32 0.0, %v6842
      %v6844 = vpop.f32.mrb[0].mxu0
      %v6845 = vpop.f32.mrb[0].mxu0
      %v6846 = vadd.f32 0.0, %v6845
      %v6847 = vpop.f32.mrb[0].mxu0
      %6848 = vmatprep.mubr.bf16.mxu0 0
      %6849 = vmatmul.mubr.bf16.gmra.mrb[0].mxu0 %v6631
      %v6850 = vpop.f32.mrb[0].mxu0
      %v6851 = vadd.f32 0.0, %v6850
      %v6852 = vpop.f32.mrb[0].mxu0
      %v6853 = vpop.f32.mrb[0].mxu0
      %v6854 = vadd.f32 0.0, %v6853
      %v6855 = vpop.f32.mrb[0].mxu0
      %6856 = vdwg.mxu0
      %v6857 = vld [vmem:[%s4144] sm:$0xff]
      %v6858 = vld [vmem:[%s4144 + $0x8] sm:$0xff]
      %v6859 = vld [vmem:[%s4144 + $0x10] sm:$0xff]
      %v6860 = vld [vmem:[%s4144 + $0x18] sm:$0xff]
      %v6861 = vld [vmem:[%s4144 + $0x20] sm:$0xff]
      %v6862 = vld [vmem:[%s4144 + $0x28] sm:$0xff]
      %v6863 = vld [vmem:[%s4144 + $0x30] sm:$0xff]
      %v6864 = vld [vmem:[%s4144 + $0x38] sm:$0xff]
      %v6865 = vld [vmem:[%s4144 + $0x40] sm:$0xff]
      %v6866 = vld [vmem:[%s4144 + $0x48] sm:$0xff]
      %v6867 = vld [vmem:[%s4144 + $0x50] sm:$0xff]
      %v6868 = vld [vmem:[%s4144 + $0x58] sm:$0xff]
      %v6869 = vld [vmem:[%s4144 + $0x60] sm:$0xff]
      %v6870 = vld [vmem:[%s4144 + $0x68] sm:$0xff]
      %v6871 = vld [vmem:[%s4144 + $0x70] sm:$0xff]
      %v6872 = vld [vmem:[%s4144 + $0x78] sm:$0xff]
      %v6873 = vld [vmem:[%s4144 + $0x80] sm:$0xff]
      %v6874 = vld [vmem:[%s4144 + $0x88] sm:$0xff]
      %v6875 = vld [vmem:[%s4144 + $0x90] sm:$0xff]
      %v6876 = vld [vmem:[%s4144 + $0x98] sm:$0xff]
      %v6877 = vld [vmem:[%s4144 + $0xa0] sm:$0xff]
      %v6878 = vld [vmem:[%s4144 + $0xa8] sm:$0xff]
      %v6879 = vld [vmem:[%s4144 + $0xb0] sm:$0xff]
      %v6880 = vld [vmem:[%s4144 + $0xb8] sm:$0xff]
      %v6881 = vld [vmem:[%s4144 + $0xc0] sm:$0xff]
      %v6882 = vld [vmem:[%s4144 + $0xc8] sm:$0xff]
      %v6883 = vld [vmem:[%s4144 + $0xd0] sm:$0xff]
      %v6884 = vld [vmem:[%s4144 + $0xd8] sm:$0xff]
      %v6885 = vld [vmem:[%s4144 + $0xe0] sm:$0xff]
      %v6886 = vld [vmem:[%s4144 + $0xe8] sm:$0xff]
      %v6887 = vld [vmem:[%s4144 + $0xf0] sm:$0xff]
      %v6888 = vld [vmem:[%s4144 + $0xf8] sm:$0xff]
      %v6889 = vadd.f32 %v6857, %v6731
      %v6890 = vadd.f32 %v6858, %v6734
      %v6891 = vadd.f32 %v6859, %v6739
      %v6892 = vadd.f32 %v6860, %v6742
      %v6893 = vadd.f32 %v6861, %v6747
      %v6894 = vadd.f32 %v6862, %v6750
      %v6895 = vadd.f32 %v6863, %v6755
      %v6896 = vadd.f32 %v6864, %v6758
      %v6897 = vadd.f32 %v6865, %v6763
      %v6898 = vadd.f32 %v6866, %v6766
      %v6899 = vadd.f32 %v6867, %v6771
      %v6900 = vadd.f32 %v6868, %v6774
      %v6901 = vadd.f32 %v6869, %v6779
      %v6902 = vadd.f32 %v6870, %v6782
      %v6903 = vadd.f32 %v6871, %v6787
      %v6904 = vadd.f32 %v6872, %v6790
      %v6905 = vadd.f32 %v6873, %v6795
      %v6906 = vadd.f32 %v6874, %v6798
      %v6907 = vadd.f32 %v6875, %v6803
      %v6908 = vadd.f32 %v6876, %v6806
      %v6909 = vadd.f32 %v6877, %v6811
      %v6910 = vadd.f32 %v6878, %v6814
      %v6911 = vadd.f32 %v6879, %v6819
      %v6912 = vadd.f32 %v6880, %v6822
      %v6913 = vadd.f32 %v6881, %v6827
      %v6914 = vadd.f32 %v6882, %v6830
      %v6915 = vadd.f32 %v6883, %v6835
      %v6916 = vadd.f32 %v6884, %v6838
      %v6917 = vadd.f32 %v6885, %v6843
      %v6918 = vadd.f32 %v6886, %v6846
      %v6919 = vadd.f32 %v6887, %v6851
      %v6920 = vadd.f32 %v6888, %v6854
      %6921 = vst [vmem:[%s4144] sm:$0xff] %v6889
      %6922 = vst [vmem:[%s4144 + $0x8] sm:$0xff] %v6890
      %6923 = vst [vmem:[%s4144 + $0x10] sm:$0xff] %v6891
      %6924 = vst [vmem:[%s4144 + $0x18] sm:$0xff] %v6892
      %6925 = vst [vmem:[%s4144 + $0x20] sm:$0xff] %v6893
      %6926 = vst [vmem:[%s4144 + $0x28] sm:$0xff] %v6894
      %6927 = vst [vmem:[%s4144 + $0x30] sm:$0xff] %v6895
      %6928 = vst [vmem:[%s4144 + $0x38] sm:$0xff] %v6896
      %6929 = vst [vmem:[%s4144 + $0x40] sm:$0xff] %v6897
      %6930 = vst [vmem:[%s4144 + $0x48] sm:$0xff] %v6898
      %6931 = vst [vmem:[%s4144 + $0x50] sm:$0xff] %v6899
      %6932 = vst [vmem:[%s4144 + $0x58] sm:$0xff] %v6900
      %6933 = vst [vmem:[%s4144 + $0x60] sm:$0xff] %v6901
      %6934 = vst [vmem:[%s4144 + $0x68] sm:$0xff] %v6902
      %6935 = vst [vmem:[%s4144 + $0x70] sm:$0xff] %v6903
      %6936 = vst [vmem:[%s4144 + $0x78] sm:$0xff] %v6904
      %6937 = vst [vmem:[%s4144 + $0x80] sm:$0xff] %v6905
      %6938 = vst [vmem:[%s4144 + $0x88] sm:$0xff] %v6906
      %6939 = vst [vmem:[%s4144 + $0x90] sm:$0xff] %v6907
      %6940 = vst [vmem:[%s4144 + $0x98] sm:$0xff] %v6908
      %6941 = vst [vmem:[%s4144 + $0xa0] sm:$0xff] %v6909
      %6942 = vst [vmem:[%s4144 + $0xa8] sm:$0xff] %v6910
      %6943 = vst [vmem:[%s4144 + $0xb0] sm:$0xff] %v6911
      %6944 = vst [vmem:[%s4144 + $0xb8] sm:$0xff] %v6912
      %6945 = vst [vmem:[%s4144 + $0xc0] sm:$0xff] %v6913
      %6946 = vst [vmem:[%s4144 + $0xc8] sm:$0xff] %v6914
      %6947 = vst [vmem:[%s4144 + $0xd0] sm:$0xff] %v6915
      %6948 = vst [vmem:[%s4144 + $0xd8] sm:$0xff] %v6916
      %6949 = vst [vmem:[%s4144 + $0xe0] sm:$0xff] %v6917
      %6950 = vst [vmem:[%s4144 + $0xe8] sm:$0xff] %v6918
      %6951 = vst [vmem:[%s4144 + $0xf0] sm:$0xff] %v6919
      %6952 = vst [vmem:[%s4144 + $0xf8] sm:$0xff] %v6920
      %v6953 = vld [vmem:[#allocation2] sm:$0xff]
      %v6954 = vld [vmem:[#allocation2 + $0x8] sm:$0xff]
      %v6955 = vld [vmem:[#allocation2 + $0x10] sm:$0xff]
      %v6956 = vld [vmem:[#allocation2 + $0x18] sm:$0xff]
      %v6957 = vld [vmem:[#allocation2 + $0x20] sm:$0xff]
      %v6958 = vld [vmem:[#allocation2 + $0x28] sm:$0xff]
      %v6959 = vld [vmem:[#allocation2 + $0x30] sm:$0xff]
      %v6960 = vld [vmem:[#allocation2 + $0x38] sm:$0xff]
      %v6961 = vld [vmem:[#allocation2 + $0x40] sm:$0xff]
      %v6962 = vld [vmem:[#allocation2 + $0x48] sm:$0xff]
      %v6963 = vld [vmem:[#allocation2 + $0x50] sm:$0xff]
      %v6964 = vld [vmem:[#allocation2 + $0x58] sm:$0xff]
      %v6965 = vld [vmem:[#allocation2 + $0x60] sm:$0xff]
      %v6966 = vld [vmem:[#allocation2 + $0x68] sm:$0xff]
      %v6967 = vld [vmem:[#allocation2 + $0x70] sm:$0xff]
      %v6968 = vld [vmem:[#allocation2 + $0x78] sm:$0xff]
      %v6969 = vld [vmem:[#allocation2 + $0x80] sm:$0xff]
      %v6970 = vld [vmem:[#allocation2 + $0x88] sm:$0xff]
      %v6971 = vld [vmem:[#allocation2 + $0x90] sm:$0xff]
      %v6972 = vld [vmem:[#allocation2 + $0x98] sm:$0xff]
      %v6973 = vld [vmem:[#allocation2 + $0xa0] sm:$0xff]
      %v6974 = vld [vmem:[#allocation2 + $0xa8] sm:$0xff]
      %v6975 = vld [vmem:[#allocation2 + $0xb0] sm:$0xff]
      %v6976 = vld [vmem:[#allocation2 + $0xb8] sm:$0xff]
      %v6977 = vld [vmem:[#allocation2 + $0xc0] sm:$0xff]
      %v6978 = vld [vmem:[#allocation2 + $0xc8] sm:$0xff]
      %v6979 = vld [vmem:[#allocation2 + $0xd0] sm:$0xff]
      %v6980 = vld [vmem:[#allocation2 + $0xd8] sm:$0xff]
      %v6981 = vld [vmem:[#allocation2 + $0xe0] sm:$0xff]
      %v6982 = vld [vmem:[#allocation2 + $0xe8] sm:$0xff]
      %v6983 = vld [vmem:[#allocation2 + $0xf0] sm:$0xff]
      %v6984 = vld [vmem:[#allocation2 + $0xf8] sm:$0xff]
      %v6985 = vld [vmem:[#allocation2 + $0x100] sm:$0xff]
      %v6986 = vld [vmem:[#allocation2 + $0x108] sm:$0xff]
      %v6987 = vld [vmem:[#allocation2 + $0x110] sm:$0xff]
      %v6988 = vld [vmem:[#allocation2 + $0x118] sm:$0xff]
      %v6989 = vld [vmem:[#allocation2 + $0x120] sm:$0xff]
      %v6990 = vld [vmem:[#allocation2 + $0x128] sm:$0xff]
      %v6991 = vld [vmem:[#allocation2 + $0x130] sm:$0xff]
      %v6992 = vld [vmem:[#allocation2 + $0x138] sm:$0xff]
      %v6993 = vld [vmem:[#allocation2 + $0x140] sm:$0xff]
      %v6994 = vld [vmem:[#allocation2 + $0x148] sm:$0xff]
      %v6995 = vld [vmem:[#allocation2 + $0x150] sm:$0xff]
      %v6996 = vld [vmem:[#allocation2 + $0x158] sm:$0xff]
      %v6997 = vld [vmem:[#allocation2 + $0x160] sm:$0xff]
      %v6998 = vld [vmem:[#allocation2 + $0x168] sm:$0xff]
      %v6999 = vld [vmem:[#allocation2 + $0x170] sm:$0xff]
      %v7000 = vld [vmem:[#allocation2 + $0x178] sm:$0xff]
      %v7001 = vld [vmem:[#allocation2 + $0x180] sm:$0xff]
      %v7002 = vld [vmem:[#allocation2 + $0x188] sm:$0xff]
      %v7003 = vld [vmem:[#allocation2 + $0x190] sm:$0xff]
      %v7004 = vld [vmem:[#allocation2 + $0x198] sm:$0xff]
      %v7005 = vld [vmem:[#allocation2 + $0x1a0] sm:$0xff]
      %v7006 = vld [vmem:[#allocation2 + $0x1a8] sm:$0xff]
      %v7007 = vld [vmem:[#allocation2 + $0x1b0] sm:$0xff]
      %v7008 = vld [vmem:[#allocation2 + $0x1b8] sm:$0xff]
      %v7009 = vld [vmem:[#allocation2 + $0x1c0] sm:$0xff]
      %v7010 = vld [vmem:[#allocation2 + $0x1c8] sm:$0xff]
      %v7011 = vld [vmem:[#allocation2 + $0x1d0] sm:$0xff]
      %v7012 = vld [vmem:[#allocation2 + $0x1d8] sm:$0xff]
      %v7013 = vld [vmem:[#allocation2 + $0x1e0] sm:$0xff]
      %v7014 = vld [vmem:[#allocation2 + $0x1e8] sm:$0xff]
      %v7015 = vld [vmem:[#allocation2 + $0x1f0] sm:$0xff]
      %v7016 = vld [vmem:[#allocation2 + $0x1f8] sm:$0xff]
      %v7017 = vld [vmem:[#allocation2 + $0x200] sm:$0xff]
      %v7018 = vld [vmem:[#allocation2 + $0x208] sm:$0xff]
      %v7019 = vld [vmem:[#allocation2 + $0x210] sm:$0xff]
      %v7020 = vld [vmem:[#allocation2 + $0x218] sm:$0xff]
      %v7021 = vld [vmem:[#allocation2 + $0x220] sm:$0xff]
      %v7022 = vld [vmem:[#allocation2 + $0x228] sm:$0xff]
      %v7023 = vld [vmem:[#allocation2 + $0x230] sm:$0xff]
      %v7024 = vld [vmem:[#allocation2 + $0x238] sm:$0xff]
      %v7025 = vld [vmem:[#allocation2 + $0x240] sm:$0xff]
      %v7026 = vld [vmem:[#allocation2 + $0x248] sm:$0xff]
      %v7027 = vld [vmem:[#allocation2 + $0x250] sm:$0xff]
      %v7028 = vld [vmem:[#allocation2 + $0x258] sm:$0xff]
      %v7029 = vld [vmem:[#allocation2 + $0x260] sm:$0xff]
      %v7030 = vld [vmem:[#allocation2 + $0x268] sm:$0xff]
      %v7031 = vld [vmem:[#allocation2 + $0x270] sm:$0xff]
      %v7032 = vld [vmem:[#allocation2 + $0x278] sm:$0xff]
      %v7033 = vld [vmem:[#allocation2 + $0x280] sm:$0xff]
      %v7034 = vld [vmem:[#allocation2 + $0x288] sm:$0xff]
      %v7035 = vld [vmem:[#allocation2 + $0x290] sm:$0xff]
      %v7036 = vld [vmem:[#allocation2 + $0x298] sm:$0xff]
      %v7037 = vld [vmem:[#allocation2 + $0x2a0] sm:$0xff]
      %v7038 = vld [vmem:[#allocation2 + $0x2a8] sm:$0xff]
      %v7039 = vld [vmem:[#allocation2 + $0x2b0] sm:$0xff]
      %v7040 = vld [vmem:[#allocation2 + $0x2b8] sm:$0xff]
      %v7041 = vld [vmem:[#allocation2 + $0x2c0] sm:$0xff]
      %v7042 = vld [vmem:[#allocation2 + $0x2c8] sm:$0xff]
      %v7043 = vld [vmem:[#allocation2 + $0x2d0] sm:$0xff]
      %v7044 = vld [vmem:[#allocation2 + $0x2d8] sm:$0xff]
      %v7045 = vld [vmem:[#allocation2 + $0x2e0] sm:$0xff]
      %v7046 = vld [vmem:[#allocation2 + $0x2e8] sm:$0xff]
      %v7047 = vld [vmem:[#allocation2 + $0x2f0] sm:$0xff]
      %v7048 = vld [vmem:[#allocation2 + $0x2f8] sm:$0xff]
      %v7049 = vld [vmem:[#allocation2 + $0x300] sm:$0xff]
      %v7050 = vld [vmem:[#allocation2 + $0x308] sm:$0xff]
      %v7051 = vld [vmem:[#allocation2 + $0x310] sm:$0xff]
      %v7052 = vld [vmem:[#allocation2 + $0x318] sm:$0xff]
      %v7053 = vld [vmem:[#allocation2 + $0x320] sm:$0xff]
      %v7054 = vld [vmem:[#allocation2 + $0x328] sm:$0xff]
      %v7055 = vld [vmem:[#allocation2 + $0x330] sm:$0xff]
      %v7056 = vld [vmem:[#allocation2 + $0x338] sm:$0xff]
      %v7057 = vld [vmem:[#allocation2 + $0x340] sm:$0xff]
      %v7058 = vld [vmem:[#allocation2 + $0x348] sm:$0xff]
      %v7059 = vld [vmem:[#allocation2 + $0x350] sm:$0xff]
      %v7060 = vld [vmem:[#allocation2 + $0x358] sm:$0xff]
      %v7061 = vld [vmem:[#allocation2 + $0x360] sm:$0xff]
      %v7062 = vld [vmem:[#allocation2 + $0x368] sm:$0xff]
      %v7063 = vld [vmem:[#allocation2 + $0x370] sm:$0xff]
      %v7064 = vld [vmem:[#allocation2 + $0x378] sm:$0xff]
      %v7065 = vld [vmem:[#allocation2 + $0x380] sm:$0xff]
      %v7066 = vld [vmem:[#allocation2 + $0x388] sm:$0xff]
      %v7067 = vld [vmem:[#allocation2 + $0x390] sm:$0xff]
      %v7068 = vld [vmem:[#allocation2 + $0x398] sm:$0xff]
      %v7069 = vld [vmem:[#allocation2 + $0x3a0] sm:$0xff]
      %v7070 = vld [vmem:[#allocation2 + $0x3a8] sm:$0xff]
      %v7071 = vld [vmem:[#allocation2 + $0x3b0] sm:$0xff]
      %v7072 = vld [vmem:[#allocation2 + $0x3b8] sm:$0xff]
      %v7073 = vld [vmem:[#allocation2 + $0x3c0] sm:$0xff]
      %v7074 = vld [vmem:[#allocation2 + $0x3c8] sm:$0xff]
      %v7075 = vld [vmem:[#allocation2 + $0x3d0] sm:$0xff]
      %v7076 = vld [vmem:[#allocation2 + $0x3d8] sm:$0xff]
      %v7077 = vld [vmem:[#allocation2 + $0x3e0] sm:$0xff]
      %v7078 = vld [vmem:[#allocation2 + $0x3e8] sm:$0xff]
      %v7079 = vld [vmem:[#allocation2 + $0x3f0] sm:$0xff]
      %v7080 = vld [vmem:[#allocation2 + $0x3f8] sm:$0xff]
      %v7081 = vpack.c.bf16 %v6954, %v6953
      %v7082 = vpack.c.bf16 %v6956, %v6955
      %v7083 = vpack.c.bf16 %v6958, %v6957
      %v7084 = vpack.c.bf16 %v6960, %v6959
      %v7085 = vpack.c.bf16 %v6962, %v6961
      %v7086 = vpack.c.bf16 %v6964, %v6963
      %v7087 = vpack.c.bf16 %v6966, %v6965
      %v7088 = vpack.c.bf16 %v6968, %v6967
      %v7089 = vpack.c.bf16 %v6970, %v6969
      %v7090 = vpack.c.bf16 %v6972, %v6971
      %v7091 = vpack.c.bf16 %v6974, %v6973
      %v7092 = vpack.c.bf16 %v6976, %v6975
      %v7093 = vpack.c.bf16 %v6978, %v6977
      %v7094 = vpack.c.bf16 %v6980, %v6979
      %v7095 = vpack.c.bf16 %v6982, %v6981
      %v7096 = vpack.c.bf16 %v6984, %v6983
      %v7097 = vpack.c.bf16 %v6986, %v6985
      %v7098 = vpack.c.bf16 %v6988, %v6987
      %v7099 = vpack.c.bf16 %v6990, %v6989
      %v7100 = vpack.c.bf16 %v6992, %v6991
      %v7101 = vpack.c.bf16 %v6994, %v6993
      %v7102 = vpack.c.bf16 %v6996, %v6995
      %v7103 = vpack.c.bf16 %v6998, %v6997
      %v7104 = vpack.c.bf16 %v7000, %v6999
      %v7105 = vpack.c.bf16 %v7002, %v7001
      %v7106 = vpack.c.bf16 %v7004, %v7003
      %v7107 = vpack.c.bf16 %v7006, %v7005
      %v7108 = vpack.c.bf16 %v7008, %v7007
      %v7109 = vpack.c.bf16 %v7010, %v7009
      %v7110 = vpack.c.bf16 %v7012, %v7011
      %v7111 = vpack.c.bf16 %v7014, %v7013
      %v7112 = vpack.c.bf16 %v7016, %v7015
      %v7113 = vpack.c.bf16 %v7018, %v7017
      %v7114 = vpack.c.bf16 %v7020, %v7019
      %v7115 = vpack.c.bf16 %v7022, %v7021
      %v7116 = vpack.c.bf16 %v7024, %v7023
      %v7117 = vpack.c.bf16 %v7026, %v7025
      %v7118 = vpack.c.bf16 %v7028, %v7027
      %v7119 = vpack.c.bf16 %v7030, %v7029
      %v7120 = vpack.c.bf16 %v7032, %v7031
      %v7121 = vpack.c.bf16 %v7034, %v7033
      %v7122 = vpack.c.bf16 %v7036, %v7035
      %v7123 = vpack.c.bf16 %v7038, %v7037
      %v7124 = vpack.c.bf16 %v7040, %v7039
      %v7125 = vpack.c.bf16 %v7042, %v7041
      %v7126 = vpack.c.bf16 %v7044, %v7043
      %v7127 = vpack.c.bf16 %v7046, %v7045
      %v7128 = vpack.c.bf16 %v7048, %v7047
      %v7129 = vpack.c.bf16 %v7050, %v7049
      %v7130 = vpack.c.bf16 %v7052, %v7051
      %v7131 = vpack.c.bf16 %v7054, %v7053
      %v7132 = vpack.c.bf16 %v7056, %v7055
      %v7133 = vpack.c.bf16 %v7058, %v7057
      %v7134 = vpack.c.bf16 %v7060, %v7059
      %v7135 = vpack.c.bf16 %v7062, %v7061
      %v7136 = vpack.c.bf16 %v7064, %v7063
      %v7137 = vpack.c.bf16 %v7066, %v7065
      %v7138 = vpack.c.bf16 %v7068, %v7067
      %v7139 = vpack.c.bf16 %v7070, %v7069
      %v7140 = vpack.c.bf16 %v7072, %v7071
      %v7141 = vpack.c.bf16 %v7074, %v7073
      %v7142 = vpack.c.bf16 %v7076, %v7075
      %v7143 = vpack.c.bf16 %v7078, %v7077
      %v7144 = vpack.c.bf16 %v7080, %v7079
      %v7209 = vunpack.c.l.b16 %v7081
      %v7210 = vunpack.c.h.b16 %v7081
      %v7211 = vunpack.c.l.b16 %v7082
      %v7212 = vunpack.c.h.b16 %v7082
      %v7213 = vunpack.c.l.b16 %v7083
      %v7214 = vunpack.c.h.b16 %v7083
      %v7215 = vunpack.c.l.b16 %v7084
      %v7216 = vunpack.c.h.b16 %v7084
      %v7217 = vunpack.c.l.b16 %v7085
      %v7218 = vunpack.c.h.b16 %v7085
      %v7219 = vunpack.c.l.b16 %v7086
      %v7220 = vunpack.c.h.b16 %v7086
      %v7221 = vunpack.c.l.b16 %v7087
      %v7222 = vunpack.c.h.b16 %v7087
      %v7223 = vunpack.c.l.b16 %v7088
      %v7224 = vunpack.c.h.b16 %v7088
      %v7225 = vunpack.c.l.b16 %v7089
      %v7226 = vunpack.c.h.b16 %v7089
      %v7227 = vunpack.c.l.b16 %v7090
      %v7228 = vunpack.c.h.b16 %v7090
      %v7229 = vunpack.c.l.b16 %v7091
      %v7230 = vunpack.c.h.b16 %v7091
      %v7231 = vunpack.c.l.b16 %v7092
      %v7232 = vunpack.c.h.b16 %v7092
      %v7233 = vunpack.c.l.b16 %v7093
      %v7234 = vunpack.c.h.b16 %v7093
      %v7235 = vunpack.c.l.b16 %v7094
      %v7236 = vunpack.c.h.b16 %v7094
      %v7237 = vunpack.c.l.b16 %v7095
      %v7238 = vunpack.c.h.b16 %v7095
      %v7239 = vunpack.c.l.b16 %v7096
      %v7240 = vunpack.c.h.b16 %v7096
      %v7241 = vunpack.c.l.b16 %v7097
      %v7242 = vunpack.c.h.b16 %v7097
      %v7243 = vunpack.c.l.b16 %v7098
      %v7244 = vunpack.c.h.b16 %v7098
      %v7245 = vunpack.c.l.b16 %v7099
      %v7246 = vunpack.c.h.b16 %v7099
      %v7247 = vunpack.c.l.b16 %v7100
      %v7248 = vunpack.c.h.b16 %v7100
      %v7249 = vunpack.c.l.b16 %v7101
      %v7250 = vunpack.c.h.b16 %v7101
      %v7251 = vunpack.c.l.b16 %v7102
      %v7252 = vunpack.c.h.b16 %v7102
      %v7253 = vunpack.c.l.b16 %v7103
      %v7254 = vunpack.c.h.b16 %v7103
      %v7255 = vunpack.c.l.b16 %v7104
      %v7256 = vunpack.c.h.b16 %v7104
      %v7257 = vunpack.c.l.b16 %v7105
      %v7258 = vunpack.c.h.b16 %v7105
      %v7259 = vunpack.c.l.b16 %v7106
      %v7260 = vunpack.c.h.b16 %v7106
      %v7261 = vunpack.c.l.b16 %v7107
      %v7262 = vunpack.c.h.b16 %v7107
      %v7263 = vunpack.c.l.b16 %v7108
      %v7264 = vunpack.c.h.b16 %v7108
      %v7265 = vunpack.c.l.b16 %v7109
      %v7266 = vunpack.c.h.b16 %v7109
      %v7267 = vunpack.c.l.b16 %v7110
      %v7268 = vunpack.c.h.b16 %v7110
      %v7269 = vunpack.c.l.b16 %v7111
      %v7270 = vunpack.c.h.b16 %v7111
      %v7271 = vunpack.c.l.b16 %v7112
      %v7272 = vunpack.c.h.b16 %v7112
      %v7273 = vunpack.c.l.b16 %v7113
      %v7274 = vunpack.c.h.b16 %v7113
      %v7275 = vunpack.c.l.b16 %v7114
      %v7276 = vunpack.c.h.b16 %v7114
      %v7277 = vunpack.c.l.b16 %v7115
      %v7278 = vunpack.c.h.b16 %v7115
      %v7279 = vunpack.c.l.b16 %v7116
      %v7280 = vunpack.c.h.b16 %v7116
      %v7281 = vunpack.c.l.b16 %v7117
      %v7282 = vunpack.c.h.b16 %v7117
      %v7283 = vunpack.c.l.b16 %v7118
      %v7284 = vunpack.c.h.b16 %v7118
      %v7285 = vunpack.c.l.b16 %v7119
      %v7286 = vunpack.c.h.b16 %v7119
      %v7287 = vunpack.c.l.b16 %v7120
      %v7288 = vunpack.c.h.b16 %v7120
      %v7289 = vunpack.c.l.b16 %v7121
      %v7290 = vunpack.c.h.b16 %v7121
      %v7291 = vunpack.c.l.b16 %v7122
      %v7292 = vunpack.c.h.b16 %v7122
      %v7293 = vunpack.c.l.b16 %v7123
      %v7294 = vunpack.c.h.b16 %v7123
      %v7295 = vunpack.c.l.b16 %v7124
      %v7296 = vunpack.c.h.b16 %v7124
      %v7297 = vunpack.c.l.b16 %v7125
      %v7298 = vunpack.c.h.b16 %v7125
      %v7299 = vunpack.c.l.b16 %v7126
      %v7300 = vunpack.c.h.b16 %v7126
      %v7301 = vunpack.c.l.b16 %v7127
      %v7302 = vunpack.c.h.b16 %v7127
      %v7303 = vunpack.c.l.b16 %v7128
      %v7304 = vunpack.c.h.b16 %v7128
      %v7305 = vunpack.c.l.b16 %v7129
      %v7306 = vunpack.c.h.b16 %v7129
      %v7307 = vunpack.c.l.b16 %v7130
      %v7308 = vunpack.c.h.b16 %v7130
      %v7309 = vunpack.c.l.b16 %v7131
      %v7310 = vunpack.c.h.b16 %v7131
      %v7311 = vunpack.c.l.b16 %v7132
      %v7312 = vunpack.c.h.b16 %v7132
      %v7313 = vunpack.c.l.b16 %v7133
      %v7314 = vunpack.c.h.b16 %v7133
      %v7315 = vunpack.c.l.b16 %v7134
      %v7316 = vunpack.c.h.b16 %v7134
      %v7317 = vunpack.c.l.b16 %v7135
      %v7318 = vunpack.c.h.b16 %v7135
      %v7319 = vunpack.c.l.b16 %v7136
      %v7320 = vunpack.c.h.b16 %v7136
      %v7321 = vunpack.c.l.b16 %v7137
      %v7322 = vunpack.c.h.b16 %v7137
      %v7323 = vunpack.c.l.b16 %v7138
      %v7324 = vunpack.c.h.b16 %v7138
      %v7325 = vunpack.c.l.b16 %v7139
      %v7326 = vunpack.c.h.b16 %v7139
      %v7327 = vunpack.c.l.b16 %v7140
      %v7328 = vunpack.c.h.b16 %v7140
      %v7329 = vunpack.c.l.b16 %v7141
      %v7330 = vunpack.c.h.b16 %v7141
      %v7331 = vunpack.c.l.b16 %v7142
      %v7332 = vunpack.c.h.b16 %v7142
      %v7333 = vunpack.c.l.b16 %v7143
      %v7334 = vunpack.c.h.b16 %v7143
      %v7335 = vunpack.c.l.b16 %v7144
      %v7336 = vunpack.c.h.b16 %v7144
      %v7337 = vpack.c.b16 %v7209, %v7209
      %v7338 = vpack.c.b16 %v7210, %v7210
      %v7339 = vpack.c.b16 %v7211, %v7211
      %v7340 = vpack.c.b16 %v7212, %v7212
      %v7341 = vpack.c.b16 %v7213, %v7213
      %v7342 = vpack.c.b16 %v7214, %v7214
      %v7343 = vpack.c.b16 %v7215, %v7215
      %v7344 = vpack.c.b16 %v7216, %v7216
      %v7345 = vpack.c.b16 %v7217, %v7217
      %v7346 = vpack.c.b16 %v7218, %v7218
      %v7347 = vpack.c.b16 %v7219, %v7219
      %v7348 = vpack.c.b16 %v7220, %v7220
      %v7349 = vpack.c.b16 %v7221, %v7221
      %v7350 = vpack.c.b16 %v7222, %v7222
      %v7351 = vpack.c.b16 %v7223, %v7223
      %v7352 = vpack.c.b16 %v7224, %v7224
      %v7353 = vpack.c.b16 %v7225, %v7225
      %v7354 = vpack.c.b16 %v7226, %v7226
      %v7355 = vpack.c.b16 %v7227, %v7227
      %v7356 = vpack.c.b16 %v7228, %v7228
      %v7357 = vpack.c.b16 %v7229, %v7229
      %v7358 = vpack.c.b16 %v7230, %v7230
      %v7359 = vpack.c.b16 %v7231, %v7231
      %v7360 = vpack.c.b16 %v7232, %v7232
      %v7361 = vpack.c.b16 %v7233, %v7233
      %v7362 = vpack.c.b16 %v7234, %v7234
      %v7363 = vpack.c.b16 %v7235, %v7235
      %v7364 = vpack.c.b16 %v7236, %v7236
      %v7365 = vpack.c.b16 %v7237, %v7237
      %v7366 = vpack.c.b16 %v7238, %v7238
      %v7367 = vpack.c.b16 %v7239, %v7239
      %v7368 = vpack.c.b16 %v7240, %v7240
      %v7369 = vpack.c.b16 %v7241, %v7241
      %v7370 = vpack.c.b16 %v7242, %v7242
      %v7371 = vpack.c.b16 %v7243, %v7243
      %v7372 = vpack.c.b16 %v7244, %v7244
      %v7373 = vpack.c.b16 %v7245, %v7245
      %v7374 = vpack.c.b16 %v7246, %v7246
      %v7375 = vpack.c.b16 %v7247, %v7247
      %v7376 = vpack.c.b16 %v7248, %v7248
      %v7377 = vpack.c.b16 %v7249, %v7249
      %v7378 = vpack.c.b16 %v7250, %v7250
      %v7379 = vpack.c.b16 %v7251, %v7251
      %v7380 = vpack.c.b16 %v7252, %v7252
      %v7381 = vpack.c.b16 %v7253, %v7253
      %v7382 = vpack.c.b16 %v7254, %v7254
      %v7383 = vpack.c.b16 %v7255, %v7255
      %v7384 = vpack.c.b16 %v7256, %v7256
      %v7385 = vpack.c.b16 %v7257, %v7257
      %v7386 = vpack.c.b16 %v7258, %v7258
      %v7387 = vpack.c.b16 %v7259, %v7259
      %v7388 = vpack.c.b16 %v7260, %v7260
      %v7389 = vpack.c.b16 %v7261, %v7261
      %v7390 = vpack.c.b16 %v7262, %v7262
      %v7391 = vpack.c.b16 %v7263, %v7263
      %v7392 = vpack.c.b16 %v7264, %v7264
      %v7393 = vpack.c.b16 %v7265, %v7265
      %v7394 = vpack.c.b16 %v7266, %v7266
      %v7395 = vpack.c.b16 %v7267, %v7267
      %v7396 = vpack.c.b16 %v7268, %v7268
      %v7397 = vpack.c.b16 %v7269, %v7269
      %v7398 = vpack.c.b16 %v7270, %v7270
      %v7399 = vpack.c.b16 %v7271, %v7271
      %v7400 = vpack.c.b16 %v7272, %v7272
      %v7401 = vpack.c.b16 %v7273, %v7273
      %v7402 = vpack.c.b16 %v7274, %v7274
      %v7403 = vpack.c.b16 %v7275, %v7275
      %v7404 = vpack.c.b16 %v7276, %v7276
      %v7405 = vpack.c.b16 %v7277, %v7277
      %v7406 = vpack.c.b16 %v7278, %v7278
      %v7407 = vpack.c.b16 %v7279, %v7279
      %v7408 = vpack.c.b16 %v7280, %v7280
      %v7409 = vpack.c.b16 %v7281, %v7281
      %v7410 = vpack.c.b16 %v7282, %v7282
      %v7411 = vpack.c.b16 %v7283, %v7283
      %v7412 = vpack.c.b16 %v7284, %v7284
      %v7413 = vpack.c.b16 %v7285, %v7285
      %v7414 = vpack.c.b16 %v7286, %v7286
      %v7415 = vpack.c.b16 %v7287, %v7287
      %v7416 = vpack.c.b16 %v7288, %v7288
      %v7417 = vpack.c.b16 %v7289, %v7289
      %v7418 = vpack.c.b16 %v7290, %v7290
      %v7419 = vpack.c.b16 %v7291, %v7291
      %v7420 = vpack.c.b16 %v7292, %v7292
      %v7421 = vpack.c.b16 %v7293, %v7293
      %v7422 = vpack.c.b16 %v7294, %v7294
      %v7423 = vpack.c.b16 %v7295, %v7295
      %v7424 = vpack.c.b16 %v7296, %v7296
      %v7425 = vpack.c.b16 %v7297, %v7297
      %v7426 = vpack.c.b16 %v7298, %v7298
      %v7427 = vpack.c.b16 %v7299, %v7299
      %v7428 = vpack.c.b16 %v7300, %v7300
      %v7429 = vpack.c.b16 %v7301, %v7301
      %v7430 = vpack.c.b16 %v7302, %v7302
      %v7431 = vpack.c.b16 %v7303, %v7303
      %v7432 = vpack.c.b16 %v7304, %v7304
      %v7433 = vpack.c.b16 %v7305, %v7305
      %v7434 = vpack.c.b16 %v7306, %v7306
      %v7435 = vpack.c.b16 %v7307, %v7307
      %v7436 = vpack.c.b16 %v7308, %v7308
      %v7437 = vpack.c.b16 %v7309, %v7309
      %v7438 = vpack.c.b16 %v7310, %v7310
      %v7439 = vpack.c.b16 %v7311, %v7311
      %v7440 = vpack.c.b16 %v7312, %v7312
      %v7441 = vpack.c.b16 %v7313, %v7313
      %v7442 = vpack.c.b16 %v7314, %v7314
      %v7443 = vpack.c.b16 %v7315, %v7315
      %v7444 = vpack.c.b16 %v7316, %v7316
      %v7445 = vpack.c.b16 %v7317, %v7317
      %v7446 = vpack.c.b16 %v7318, %v7318
      %v7447 = vpack.c.b16 %v7319, %v7319
      %v7448 = vpack.c.b16 %v7320, %v7320
      %v7449 = vpack.c.b16 %v7321, %v7321
      %v7450 = vpack.c.b16 %v7322, %v7322
      %v7451 = vpack.c.b16 %v7323, %v7323
      %v7452 = vpack.c.b16 %v7324, %v7324
      %v7453 = vpack.c.b16 %v7325, %v7325
      %v7454 = vpack.c.b16 %v7326, %v7326
      %v7455 = vpack.c.b16 %v7327, %v7327
      %v7456 = vpack.c.b16 %v7328, %v7328
      %v7457 = vpack.c.b16 %v7329, %v7329
      %v7458 = vpack.c.b16 %v7330, %v7330
      %v7459 = vpack.c.b16 %v7331, %v7331
      %v7460 = vpack.c.b16 %v7332, %v7332
      %v7461 = vpack.c.b16 %v7333, %v7333
      %v7462 = vpack.c.b16 %v7334, %v7334
      %v7463 = vpack.c.b16 %v7335, %v7335
      %v7464 = vpack.c.b16 %v7336, %v7336
      %7593 = vst [vmem:[%s194] sm:$0xf] %v7337
      %7594 = vst [vmem:[%s194 + $0x4] sm:$0xf] %v7338
      %7595 = vst [vmem:[%s194 + $0x8] sm:$0xf] %v7339
      %7596 = vst [vmem:[%s194 + $0xc] sm:$0xf] %v7340
      %7597 = vst [vmem:[%s194 + $0x10] sm:$0xf] %v7341
      %7598 = vst [vmem:[%s194 + $0x14] sm:$0xf] %v7342
      %7599 = vst [vmem:[%s194 + $0x18] sm:$0xf] %v7343
      %7600 = vst [vmem:[%s194 + $0x1c] sm:$0xf] %v7344
      %7601 = vst [vmem:[%s194 + $0x20] sm:$0xf] %v7345
      %7602 = vst [vmem:[%s194 + $0x24] sm:$0xf] %v7346
      %7603 = vst [vmem:[%s194 + $0x28] sm:$0xf] %v7347
      %7604 = vst [vmem:[%s194 + $0x2c] sm:$0xf] %v7348
      %7605 = vst [vmem:[%s194 + $0x30] sm:$0xf] %v7349
      %7606 = vst [vmem:[%s194 + $0x34] sm:$0xf] %v7350
      %7607 = vst [vmem:[%s194 + $0x38] sm:$0xf] %v7351
      %7608 = vst [vmem:[%s194 + $0x3c] sm:$0xf] %v7352
      %7609 = vst [vmem:[%s194 + $0x40] sm:$0xf] %v7353
      %7610 = vst [vmem:[%s194 + $0x44] sm:$0xf] %v7354
      %7611 = vst [vmem:[%s194 + $0x48] sm:$0xf] %v7355
      %7612 = vst [vmem:[%s194 + $0x4c] sm:$0xf] %v7356
      %7613 = vst [vmem:[%s194 + $0x50] sm:$0xf] %v7357
      %7614 = vst [vmem:[%s194 + $0x54] sm:$0xf] %v7358
      %7615 = vst [vmem:[%s194 + $0x58] sm:$0xf] %v7359
      %7616 = vst [vmem:[%s194 + $0x5c] sm:$0xf] %v7360
      %7617 = vst [vmem:[%s194 + $0x60] sm:$0xf] %v7361
      %7618 = vst [vmem:[%s194 + $0x64] sm:$0xf] %v7362
      %7619 = vst [vmem:[%s194 + $0x68] sm:$0xf] %v7363
      %7620 = vst [vmem:[%s194 + $0x6c] sm:$0xf] %v7364
      %7621 = vst [vmem:[%s194 + $0x70] sm:$0xf] %v7365
      %7622 = vst [vmem:[%s194 + $0x74] sm:$0xf] %v7366
      %7623 = vst [vmem:[%s194 + $0x78] sm:$0xf] %v7367
      %7624 = vst [vmem:[%s194 + $0x7c] sm:$0xf] %v7368
      %7625 = vst [vmem:[%s194 + $0x80] sm:$0xf] %v7369
      %7626 = vst [vmem:[%s194 + $0x84] sm:$0xf] %v7370
      %7627 = vst [vmem:[%s194 + $0x88] sm:$0xf] %v7371
      %7628 = vst [vmem:[%s194 + $0x8c] sm:$0xf] %v7372
      %7629 = vst [vmem:[%s194 + $0x90] sm:$0xf] %v7373
      %7630 = vst [vmem:[%s194 + $0x94] sm:$0xf] %v7374
      %7631 = vst [vmem:[%s194 + $0x98] sm:$0xf] %v7375
      %7632 = vst [vmem:[%s194 + $0x9c] sm:$0xf] %v7376
      %7633 = vst [vmem:[%s194 + $0xa0] sm:$0xf] %v7377
      %7634 = vst [vmem:[%s194 + $0xa4] sm:$0xf] %v7378
      %7635 = vst [vmem:[%s194 + $0xa8] sm:$0xf] %v7379
      %7636 = vst [vmem:[%s194 + $0xac] sm:$0xf] %v7380
      %7637 = vst [vmem:[%s194 + $0xb0] sm:$0xf] %v7381
      %7638 = vst [vmem:[%s194 + $0xb4] sm:$0xf] %v7382
      %7639 = vst [vmem:[%s194 + $0xb8] sm:$0xf] %v7383
      %7640 = vst [vmem:[%s194 + $0xbc] sm:$0xf] %v7384
      %7641 = vst [vmem:[%s194 + $0xc0] sm:$0xf] %v7385
      %7642 = vst [vmem:[%s194 + $0xc4] sm:$0xf] %v7386
      %7643 = vst [vmem:[%s194 + $0xc8] sm:$0xf] %v7387
      %7644 = vst [vmem:[%s194 + $0xcc] sm:$0xf] %v7388
      %7645 = vst [vmem:[%s194 + $0xd0] sm:$0xf] %v7389
      %7646 = vst [vmem:[%s194 + $0xd4] sm:$0xf] %v7390
      %7647 = vst [vmem:[%s194 + $0xd8] sm:$0xf] %v7391
      %7648 = vst [vmem:[%s194 + $0xdc] sm:$0xf] %v7392
      %7649 = vst [vmem:[%s194 + $0xe0] sm:$0xf] %v7393
      %7650 = vst [vmem:[%s194 + $0xe4] sm:$0xf] %v7394
      %7651 = vst [vmem:[%s194 + $0xe8] sm:$0xf] %v7395
      %7652 = vst [vmem:[%s194 + $0xec] sm:$0xf] %v7396
      %7653 = vst [vmem:[%s194 + $0xf0] sm:$0xf] %v7397
      %7654 = vst [vmem:[%s194 + $0xf4] sm:$0xf] %v7398
      %7655 = vst [vmem:[%s194 + $0xf8] sm:$0xf] %v7399
      %7656 = vst [vmem:[%s194 + $0xfc] sm:$0xf] %v7400
      %7657 = vst [vmem:[%s194 + $0x100] sm:$0xf] %v7401
      %7658 = vst [vmem:[%s194 + $0x104] sm:$0xf] %v7402
      %7659 = vst [vmem:[%s194 + $0x108] sm:$0xf] %v7403
      %7660 = vst [vmem:[%s194 + $0x10c] sm:$0xf] %v7404
      %7661 = vst [vmem:[%s194 + $0x110] sm:$0xf] %v7405
      %7662 = vst [vmem:[%s194 + $0x114] sm:$0xf] %v7406
      %7663 = vst [vmem:[%s194 + $0x118] sm:$0xf] %v7407
      %7664 = vst [vmem:[%s194 + $0x11c] sm:$0xf] %v7408
      %7665 = vst [vmem:[%s194 + $0x120] sm:$0xf] %v7409
      %7666 = vst [vmem:[%s194 + $0x124] sm:$0xf] %v7410
      %7667 = vst [vmem:[%s194 + $0x128] sm:$0xf] %v7411
      %7668 = vst [vmem:[%s194 + $0x12c] sm:$0xf] %v7412
      %7669 = vst [vmem:[%s194 + $0x130] sm:$0xf] %v7413
      %7670 = vst [vmem:[%s194 + $0x134] sm:$0xf] %v7414
      %7671 = vst [vmem:[%s194 + $0x138] sm:$0xf] %v7415
      %7672 = vst [vmem:[%s194 + $0x13c] sm:$0xf] %v7416
      %7673 = vst [vmem:[%s194 + $0x140] sm:$0xf] %v7417
      %7674 = vst [vmem:[%s194 + $0x144] sm:$0xf] %v7418
      %7675 = vst [vmem:[%s194 + $0x148] sm:$0xf] %v7419
      %7676 = vst [vmem:[%s194 + $0x14c] sm:$0xf] %v7420
      %7677 = vst [vmem:[%s194 + $0x150] sm:$0xf] %v7421
      %7678 = vst [vmem:[%s194 + $0x154] sm:$0xf] %v7422
      %7679 = vst [vmem:[%s194 + $0x158] sm:$0xf] %v7423
      %7680 = vst [vmem:[%s194 + $0x15c] sm:$0xf] %v7424
      %7681 = vst [vmem:[%s194 + $0x160] sm:$0xf] %v7425
      %7682 = vst [vmem:[%s194 + $0x164] sm:$0xf] %v7426
      %7683 = vst [vmem:[%s194 + $0x168] sm:$0xf] %v7427
      %7684 = vst [vmem:[%s194 + $0x16c] sm:$0xf] %v7428
      %7685 = vst [vmem:[%s194 + $0x170] sm:$0xf] %v7429
      %7686 = vst [vmem:[%s194 + $0x174] sm:$0xf] %v7430
      %7687 = vst [vmem:[%s194 + $0x178] sm:$0xf] %v7431
      %7688 = vst [vmem:[%s194 + $0x17c] sm:$0xf] %v7432
      %7689 = vst [vmem:[%s194 + $0x180] sm:$0xf] %v7433
      %7690 = vst [vmem:[%s194 + $0x184] sm:$0xf] %v7434
      %7691 = vst [vmem:[%s194 + $0x188] sm:$0xf] %v7435
      %7692 = vst [vmem:[%s194 + $0x18c] sm:$0xf] %v7436
      %7693 = vst [vmem:[%s194 + $0x190] sm:$0xf] %v7437
      %7694 = vst [vmem:[%s194 + $0x194] sm:$0xf] %v7438
      %7695 = vst [vmem:[%s194 + $0x198] sm:$0xf] %v7439
      %7696 = vst [vmem:[%s194 + $0x19c] sm:$0xf] %v7440
      %7697 = vst [vmem:[%s194 + $0x1a0] sm:$0xf] %v7441
      %7698 = vst [vmem:[%s194 + $0x1a4] sm:$0xf] %v7442
      %7699 = vst [vmem:[%s194 + $0x1a8] sm:$0xf] %v7443
      %7700 = vst [vmem:[%s194 + $0x1ac] sm:$0xf] %v7444
      %7701 = vst [vmem:[%s194 + $0x1b0] sm:$0xf] %v7445
      %7702 = vst [vmem:[%s194 + $0x1b4] sm:$0xf] %v7446
      %7703 = vst [vmem:[%s194 + $0x1b8] sm:$0xf] %v7447
      %7704 = vst [vmem:[%s194 + $0x1bc] sm:$0xf] %v7448
      %7705 = vst [vmem:[%s194 + $0x1c0] sm:$0xf] %v7449
      %7706 = vst [vmem:[%s194 + $0x1c4] sm:$0xf] %v7450
      %7707 = vst [vmem:[%s194 + $0x1c8] sm:$0xf] %v7451
      %7708 = vst [vmem:[%s194 + $0x1cc] sm:$0xf] %v7452
      %7709 = vst [vmem:[%s194 + $0x1d0] sm:$0xf] %v7453
      %7710 = vst [vmem:[%s194 + $0x1d4] sm:$0xf] %v7454
      %7711 = vst [vmem:[%s194 + $0x1d8] sm:$0xf] %v7455
      %7712 = vst [vmem:[%s194 + $0x1dc] sm:$0xf] %v7456
      %7713 = vst [vmem:[%s194 + $0x1e0] sm:$0xf] %v7457
      %7714 = vst [vmem:[%s194 + $0x1e4] sm:$0xf] %v7458
      %7715 = vst [vmem:[%s194 + $0x1e8] sm:$0xf] %v7459
      %7716 = vst [vmem:[%s194 + $0x1ec] sm:$0xf] %v7460
      %7717 = vst [vmem:[%s194 + $0x1f0] sm:$0xf] %v7461
      %7718 = vst [vmem:[%s194 + $0x1f4] sm:$0xf] %v7462
      %7719 = vst [vmem:[%s194 + $0x1f8] sm:$0xf] %v7463
      %7720 = vst [vmem:[%s194 + $0x1fc] sm:$0xf] %v7464
      %s7721 = smul.u32 16, %s19
      %p7722 = scmp.lt.s32.totalorder %s18, 1
      %s7723 = scalar_select %p7722, %s18, 1
      %p7724 = scmp.lt.s32.totalorder %s7721, 15
      %s7725 = scalar_select %p7724, %s7721, 15
      %s7726 = smul.addr %s7725, 2
      %s7727 = smul.addr %s7723, 128
      %s7728 = sadd.s32 %s7726, %s7727
      %s7729 = smul.addr %s7728, 4
      %s7730 = scalar_lea.vmem %s3, %s7729
      // Predicated region
      $region33: #{upsample_forward.1} parent=31 // pred_check
        %p7731 = pneg %p114
      $region34: #{upsample_forward.1} parent=31 // pred_check_branch
        %7733 = sbr.rel (%p7731) target = $region36
      $region35: #{upsample_forward.1} parent=31 // pred_region
        %s7734 = smul.u32 16, %s19
      $region36: #{upsample_forward.1} parent=31 // pred_fallthru
        _
    $region32: #{upsample_forward.1} parent=5 // pred_fallthru
      _
    %p7735 = scmp.le.s32.totalorder 2, %s9
    // Predicated region
    $region37: #{upsample_forward.1} parent=5 // pred_check
      %p7736 = pneg %p7735
    $region38: #{upsample_forward.1} parent=5 // pred_check_branch
      %7738 = sbr.rel (%p7736) target = $region40
    $region39: #{upsample_forward.1} parent=5 // pred_region
      %s7739 = ssub.s32 %s9, 2
      // Predicated region
      $region41: #{upsample_forward.1} parent=39 // pred_check
        %p7740 = pneg %p120
      $region42: #{upsample_forward.1} parent=39 // pred_check_branch
        %7742 = sbr.rel (%p7740) target = $region44
      $region43: #{upsample_forward.1} parent=39 // pred_region
        %s7743 = smul.u32 16, %s21
        %p7744 = scmp.lt.s32.totalorder %s20, 1
        %s7745 = scalar_select %p7744, %s20, 1
        %p7746 = scmp.lt.s32.totalorder %s7743, 15
        %s7747 = scalar_select %p7746, %s7743, 15
        %s7748 = smul.addr %s7747, 2
        %s7749 = smul.addr %s7745, 128
        %s7750 = sadd.s32 %s7748, %s7749
        %s7751 = smul.addr %s7750, 4
        %s7752 = scalar_lea.vmem %s3, %s7751
      $region44: #{upsample_forward.1} parent=39 // pred_fallthru
        _
    $region40: #{upsample_forward.1} parent=5 // pred_fallthru
      _
  $region6: #{upsample_forward.1} parent=0 // loop_footer
    %s13 = sadd.s32 1, %s9
  $region7: #{upsample_forward.1} parent=0 // loop_footer_branch
    %8 = sbr.rel target = $region3
  $region8: #{upsample_forward.1} parent=0 // loop_exit
    _

</llo_original>
